<compile_context>
chip_gen: v7x
topology: tpu7x:2x2x1
jax: 0.10.0
libtpu: 0.0.40
codegen_flags: <defaults>
</compile_context>

<pallas_src>
import functools
import math

import jax
import jax.numpy as jnp
from jax.experimental import pallas as pl
from jax.experimental.pallas import tpu as pltpu


# ---------------------------------------------------------------------------
# Generation-aware budgets (v5e/v6e: 128 MiB VMEM, v7x: 64 MiB per TC).
# ---------------------------------------------------------------------------
def _tpu_vmem_capacity_bytes():
    try:
        return int(pltpu.get_tpu_info().vmem_capacity_bytes)
    except Exception:
        return 64 * 1024 * 1024


_VMEM_CAP = _tpu_vmem_capacity_bytes()
_VMEM_LIMIT = int(min(96 * 1024 * 1024, (_VMEM_CAP * 3) // 4))
_ROW_CAP = 1024 if _VMEM_CAP >= 100 * 1024 * 1024 else 512


# ---------------------------------------------------------------------------
# Pallas kernel: pre-norm transformer encoder layer on a block of G windows.
# ---------------------------------------------------------------------------
def _make_layer_kernel(num_windows, seq, num_heads, head_dim, with_mask,
                       eps=1e-5):
    G, S, Hn, D = num_windows, seq, num_heads, head_dim
    C = Hn * D

    def body(x_ref, bias_ref, mask_ref,
             ln1w_ref, ln1b_ref, wqkv_ref, bqkv_ref, wo_ref, bo_ref,
             ln2w_ref, ln2b_ref, w1_ref, b1_ref, w2_ref, b2_ref, o_ref):
        x = x_ref[...].astype(jnp.float32)                     # (G*S, C)

        # Hoist small constants once per invocation.
        bias = bias_ref[...].astype(jnp.float32)               # (Hn, S, S)
        ln1w, ln1b = ln1w_ref[...], ln1b_ref[...]
        ln2w, ln2b = ln2w_ref[...], ln2b_ref[...]
        bqkv, bo = bqkv_ref[...], bo_ref[...]
        b1, b2 = b1_ref[...], b2_ref[...]

        # ---- LayerNorm 1 (f32) ----
        mu = jnp.mean(x, axis=-1, keepdims=True)
        var = jnp.mean(jnp.square(x - mu), axis=-1, keepdims=True)
        xn = (x - mu) * jax.lax.rsqrt(var + eps) * ln1w + ln1b

        # ---- fused QKV projection (1/sqrt(D) folded into Q weights) ----
        qkv = jnp.dot(xn.astype(jnp.bfloat16), wqkv_ref[...],
                      preferred_element_type=jnp.float32) + bqkv   # (G*S, 3C) f32
        qkv16 = qkv.astype(jnp.bfloat16)

        # Head-major stacks (Hn*G, S, D): heads and windows share the einsum
        # batch axis -> one score einsum, one softmax, one context einsum.
        def split_heads(base):
            parts = [qkv16[:, base + h * D: base + (h + 1) * D].reshape(G, S, D)
                     for h in range(Hn)]
            return jnp.stack(parts, axis=0).reshape(Hn * G, S, D)

        q = split_heads(0)
        k = split_heads(C)
        v = split_heads(2 * C)

        s = jnp.einsum('bqd,bkd->bqk', q, k,
                       preferred_element_type=jnp.float32)         # (Hn*G, S, S)
        s = s.reshape(Hn, G, S, S) + bias[:, None, :, :]           # rel-pos bias
        if mask_ref is not None:
            s = s + mask_ref[...].astype(jnp.float32)[None, :, :, :]   # shift mask
        s = s.reshape(Hn * G, S, S)

        s = s - jnp.max(s, axis=-1, keepdims=True)
        p = jnp.exp(s)
        p = p * pl.reciprocal(jnp.sum(p, axis=-1, keepdims=True), approx=True)

        ctx = jnp.einsum('bqk,bkd->bqd', p.astype(jnp.bfloat16), v,
                         preferred_element_type=jnp.float32)       # (Hn*G, S, D)
        ctx = ctx.reshape(Hn, G, S, D)
        ctx = jnp.concatenate([ctx[h] for h in range(Hn)], axis=-1)   # (G, S, C)

        # Single output projection with full K = C contraction.
        attn = jnp.dot(ctx.reshape(G * S, C).astype(jnp.bfloat16), wo_ref[...],
                       preferred_element_type=jnp.float32) + bo
        x = x + attn                                               # residual 1

        # ---- LayerNorm 2 + GELU MLP ----
        mu2 = jnp.mean(x, axis=-1, keepdims=True)
        var2 = jnp.mean(jnp.square(x - mu2), axis=-1, keepdims=True)
        xn2 = (x - mu2) * jax.lax.rsqrt(var2 + eps) * ln2w + ln2b

        h1 = jnp.dot(xn2.astype(jnp.bfloat16), w1_ref[...],
                     preferred_element_type=jnp.float32) + b1
        # TODO(synk): PyTorch nn.GELU defaults to the exact erf form; the tanh
        # approximation is kept for guaranteed Mosaic lowering (~1e-3 deviation).
        h1 = 0.5 * h1 * (1.0 + jnp.tanh(0.7978845608028654 *
                                        (h1 + 0.044715 * h1 * h1 * h1)))
        h2 = jnp.dot(h1.astype(jnp.bfloat16), w2_ref[...],
                     preferred_element_type=jnp.float32) + b2

        o_ref[...] = (x + h2).astype(o_ref.dtype)                  # residual 2

    if with_mask:
        def kernel(x_ref, bias_ref, mask_ref, *rest):
            body(x_ref, bias_ref, mask_ref, *rest)
    else:
        def kernel(x_ref, bias_ref, *rest):
            body(x_ref, bias_ref, None, *rest)
    return kernel


def transformer_layer_pallas(tokens, bias, mask, params, *, num_heads,
                             num_win_per_block):
    """tokens: (B*N*S, C) f32; bias: (heads, S, S) bf16 (resident);
    mask: None or (Nm, S, S) bf16 additive shift mask, num_win_per_block | Nm."""
    T, C = tokens.shape
    G = num_win_per_block
    Hn, S, _ = bias.shape
    BN = T // S
    assert BN % G == 0
    hidden = params["w1"].shape[1]
    D = C // num_heads
    kernel = _make_layer_kernel(G, S, num_heads, D, with_mask=mask is not None)

    def resident(shape):
        # Constant index_map -> block stays resident across the whole grid.
        return pl.BlockSpec(shape, lambda i, _n=len(shape): (0,) * _n)

    in_specs = [
        pl.BlockSpec((G * S, C), lambda i: (i, 0)),     # token slab of block i
        resident((Hn, S, S)),                           # relative-position bias
    ]
    operands = [tokens, bias]

    if mask is not None:
        assert mask.shape[0] % G == 0
        nblk = mask.shape[0] // G
        if nblk == 1:
            in_specs.append(resident((G, S, S)))
        else:
            in_specs.append(pl.BlockSpec((G, S, S), lambda i: (i % nblk, 0, 0)))
        operands.append(mask)

    in_specs += [
        resident((1, C)), resident((1, C)),             # ln1 gamma/beta
        resident((C, 3 * C)), resident((1, 3 * C)),     # qkv (bf16 w, f32 b)
        resident((C, C)), resident((1, C)),             # out proj
        resident((1, C)), resident((1, C)),             # ln2 gamma/beta
        resident((C, hidden)), resident((1, hidden)),   # mlp fc1
        resident((hidden, C)), resident((1, C)),        # mlp fc2
    ]
    operands += [params["ln1_w"], params["ln1_b"], params["w_qkv"],
                 params["b_qkv"], params["w_o"], params["b_o"],
                 params["ln2_w"], params["ln2_b"], params["w1"], params["b1"],
                 params["w2"], params["b2"]]

    return pl.pallas_call(
        kernel,
        out_shape=jax.ShapeDtypeStruct((T, C), tokens.dtype),
        grid=(BN // G,),
        in_specs=in_specs,
        out_specs=pl.BlockSpec((G * S, C), lambda i: (i, 0)),
        compiler_params=pltpu.CompilerParams(
            dimension_semantics=("parallel",),
            vmem_limit_bytes=_VMEM_LIMIT),
    )(*operands)


# ---------------------------------------------------------------------------
# Plain-JAX glue: token/pixel permutations, shift mask, relative bias.
# ---------------------------------------------------------------------------
def _token_pixel_maps(img_size, M):
    Hh = Ww = img_size
    nw = Ww // M
    S = M * M
    N = (Hh // M) * nw
    p = jnp.arange(Hh * Ww, dtype=jnp.int32)
    pi, pj = p // Ww, p % Ww
    t_of_p = ((pi // M) * nw + (pj // M)) * S + (pi % M) * M + (pj % M)
    t = jnp.arange(N * S, dtype=jnp.int32)
    w, pos = t // S, t % S
    wi, wj = w // nw, w % nw
    qi, qj = pos // M, pos % M
    p_of_t = (wi * M + qi) * Ww + (wj * M + qj)
    return t_of_p, p_of_t


def _shift_pixels(p, shift, img_size):
    i, j = p // img_size, p % img_size
    return ((i + shift) % img_size) * img_size + (j + shift) % img_size


def relative_position_bias(table, M, heads):
    coords = jnp.stack(jnp.meshgrid(jnp.arange(M), jnp.arange(M), indexing="ij"), 0)
    coords = coords.reshape(2, -1)                     # (2, S)
    rel = coords[:, :, None] - coords[:, None, :] + (M - 1)
    idx = rel[0] * (2 * M - 1) + rel[1]                # (S, S)
    bias = table[idx]                                  # (S, S, heads)
    return jnp.transpose(bias, (2, 0, 1)).astype(jnp.bfloat16)    # (heads, S, S)


def shifted_window_mask(img_size, M, shift, p_of_t):
    Hh = Ww = img_size
    nw = Ww // M
    N = (Hh // M) * nw
    S = M * M
    zones = jnp.arange(N, dtype=jnp.int32).reshape(Hh // M, nw)
    zones = jnp.repeat(jnp.repeat(zones, M, axis=0), M, axis=1)   # (H, W)
    zones = zones.at[:, -shift:].add(N)
    zones = zones.at[-shift:, :].add(2 * N)
    patt = zones.reshape(-1)[p_of_t].reshape(N, S)                # window-major
    masked = patt[:, None, :] != patt[:, :, None]                 # True = masked
    return jnp.where(masked, jnp.float32(-1e9), 0.0).astype(jnp.bfloat16)


def prepare_layer_params(p, num_heads):
    """Fold 1/sqrt(head_dim) into the Q projection (in f32); cast MXU weights
    to bf16."""
    C = p["ln1_w"].shape[-1]
    scale = 1.0 / math.sqrt(C // num_heads)
    w_qkv = p["w_qkv"].astype(jnp.float32).at[:, :C].multiply(scale)
    b_qkv = p["b_qkv"].astype(jnp.float32).at[:, :C].multiply(scale)
    q = dict(p)
    q["w_qkv"] = w_qkv.astype(jnp.bfloat16)
    q["b_qkv"] = b_qkv
    q["w_o"] = p["w_o"].astype(jnp.bfloat16)
    q["w1"] = p["w1"].astype(jnp.bfloat16)
    q["w2"] = p["w2"].astype(jnp.bfloat16)
    return q


def _choose_num_windows(total_windows, must_divide, seq, row_cap):
    """Largest G dividing `must_divide` with a sublane-aligned slab <= row_cap
    rows, preferring a grid of >= 2 steps (both v7x TensorCores busy)."""
    cands = [g for g in range(1, must_divide + 1)
             if must_divide % g == 0 and (g * seq) % 8 == 0
             and g * seq <= row_cap]
    pref = [g for g in cands if total_windows // g >= 2]
    if pref:
        return max(pref)
    if cands:
        return max(cands)
    return None   # caller falls back to a single full-array block


# ---------------------------------------------------------------------------
# Full SwinTransformerBlock forward.
# ---------------------------------------------------------------------------
def swin_transformer_block(x, p1, p2, *, img_size, window_size, attn_heads):
    B, C, Hh, Ww = x.shape
    assert Hh == img_size and Ww == img_size
    M = window_size
    N = (Hh // M) * (Ww // M)
    S = M * M
    shift = M // 2

    p1 = prepare_layer_params(p1, attn_heads)
    p2 = prepare_layer_params(p2, attn_heads)

    t_of_p, p_of_t = _token_pixel_maps(img_size, M)
    # window_reverse -> roll(-shift) -> window_partition fused into one
    # token-row permutation; likewise for the exit path.
    perm12 = t_of_p[_shift_pixels(p_of_t, shift, img_size)]
    out_idx = t_of_p[_shift_pixels(jnp.arange(Hh * Ww, dtype=jnp.int32),
                                   -shift, img_size)]

    bias1 = relative_position_bias(p1["rpb_table"], M, attn_heads)   # (H, S, S) bf16
    bias2 = relative_position_bias(p2["rpb_table"], M, attn_heads)
    mask2 = shifted_window_mask(img_size, M, shift, p_of_t)          # (N, S, S) bf16

    G1 = _choose_num_windows(B * N, B * N, S, _ROW_CAP) or (B * N)
    G2 = _choose_num_windows(B * N, N, S, _ROW_CAP)
    if G2 is None:                      # degenerate fallback: one full-array block
        G2 = B * N
        mask2 = jnp.tile(mask2, (B, 1, 1))

    # --- NCHW -> window-major tokens (one transpose + one gather) ---
    x_pix = jnp.transpose(x, (0, 2, 3, 1)).reshape(B, Hh * Ww, C)
    tok = jnp.take(x_pix, p_of_t, axis=1).reshape(B * N * S, C)

    # --- non-shifted window transformer (no mask stream) ---
    tok = transformer_layer_pallas(tok, bias1, None, p1,
                                   num_heads=attn_heads, num_win_per_block=G1)

    # --- cyclic shift + re-windowing as a single gather ---
    tok = jnp.take(tok.reshape(B, N * S, C), perm12, axis=1).reshape(B * N * S, C)

    # --- shifted window transformer (rel bias resident, mask streamed) ---
    tok = transformer_layer_pallas(tok, bias2, mask2, p2,
                                   num_heads=attn_heads, num_win_per_block=G2)

    # --- reverse shift + un-window back to NCHW (one gather + one transpose) ---
    y = jnp.take(tok.reshape(B, N * S, C), out_idx, axis=1)
    return jnp.transpose(y.reshape(B, Hh, Ww, C), (0, 3, 1, 2))


# ---------------------------------------------------------------------------
# Deterministic parameter init (synthetic; shapes implied by the module).
# ---------------------------------------------------------------------------
def init_layer_params(key, C, hidden, heads, M):
    ks = jax.random.split(key, 8)

    def w(k, shape):
        return (0.02 * jax.random.normal(k, shape)).astype(jnp.float32)

    return dict(
        ln1_w=jnp.ones((1, C), jnp.float32), ln1_b=jnp.zeros((1, C), jnp.float32),
        w_qkv=w(ks[0], (C, 3 * C)), b_qkv=w(ks[1], (1, 3 * C)),
        w_o=w(ks[2], (C, C)), b_o=w(ks[3], (1, C)),
        ln2_w=jnp.ones((1, C), jnp.float32), ln2_b=jnp.zeros((1, C), jnp.float32),
        w1=w(ks[4], (C, hidden)), b1=w(ks[5], (1, hidden)),
        w2=w(ks[6], (hidden, C)), b2=jnp.zeros((1, C), jnp.float32),
        rpb_table=w(ks[7], ((2 * M - 1) ** 2, heads)),
    )


if __name__ == "__main__":
    # Small deterministic example: B=2, embed=32, img=8x8, window=4, heads=4,
    # hidden=64  (N=4 windows of S=16 tokens).
    B, C = 2, 32
    IMG = 8
    M = 4
    HEADS = 4
    HIDDEN = 64

    key = jax.random.PRNGKey(0)
    kx, k1, k2 = jax.random.split(key, 3)
    x = jax.random.normal(kx, (B, C, IMG, IMG), jnp.float32)   # NCHW, like PyTorch
    p1 = init_layer_params(k1, C, HIDDEN, HEADS, M)
    p2 = init_layer_params(k2, C, HIDDEN, HEADS, M)

    fwd = functools.partial(swin_transformer_block,
                            img_size=IMG, window_size=M, attn_heads=HEADS)
    out = jax.jit(lambda a: fwd(a, p1, p2))(x)
    out = jax.block_until_ready(out)

    assert out.shape == (B, C, IMG, IMG), out.shape
    assert bool(jnp.all(jnp.isfinite(out)))
    print("KERNEL_OK")
</pallas_src>

<mosaic_0001>
module attributes {stable_mosaic.version = 11 : i64} {
  func.func @kernel(%arg0: i32, %arg1: memref<64x32xf32, #tpu.memory_space<vmem>>, %arg2: memref<4x16x16xbf16, #tpu.memory_space<vmem>>, %arg3: memref<1x32xf32, #tpu.memory_space<vmem>>, %arg4: memref<1x32xf32, #tpu.memory_space<vmem>>, %arg5: memref<32x96xbf16, #tpu.memory_space<vmem>>, %arg6: memref<1x96xf32, #tpu.memory_space<vmem>>, %arg7: memref<32x32xbf16, #tpu.memory_space<vmem>>, %arg8: memref<1x32xf32, #tpu.memory_space<vmem>>, %arg9: memref<1x32xf32, #tpu.memory_space<vmem>>, %arg10: memref<1x32xf32, #tpu.memory_space<vmem>>, %arg11: memref<32x64xbf16, #tpu.memory_space<vmem>>, %arg12: memref<1x64xf32, #tpu.memory_space<vmem>>, %arg13: memref<64x32xbf16, #tpu.memory_space<vmem>>, %arg14: memref<1x32xf32, #tpu.memory_space<vmem>>, %arg15: memref<64x32xf32, #tpu.memory_space<vmem>>) attributes {dimension_semantics = [#tpu.dimension_semantics<parallel>], iteration_bounds = array<i64: 2>, scalar_prefetch = 0 : i64, scratch_operands = 0 : i64, tpu.core_type = #tpu.core_type<tc>, window_params = [{transform_indices = @transform_0, window_bounds = array<i64: 64, 32>}, {pipeline_mode = #tpu.pipeline_mode<synchronous>, transform_indices = @transform_1, window_bounds = array<i64: 4, 16, 16>}, {pipeline_mode = #tpu.pipeline_mode<synchronous>, transform_indices = @transform_2, window_bounds = array<i64: 1, 32>}, {pipeline_mode = #tpu.pipeline_mode<synchronous>, transform_indices = @transform_3, window_bounds = array<i64: 1, 32>}, {pipeline_mode = #tpu.pipeline_mode<synchronous>, transform_indices = @transform_4, window_bounds = array<i64: 32, 96>}, {pipeline_mode = #tpu.pipeline_mode<synchronous>, transform_indices = @transform_5, window_bounds = array<i64: 1, 96>}, {pipeline_mode = #tpu.pipeline_mode<synchronous>, transform_indices = @transform_6, window_bounds = array<i64: 32, 32>}, {pipeline_mode = #tpu.pipeline_mode<synchronous>, transform_indices = @transform_7, window_bounds = array<i64: 1, 32>}, {pipeline_mode = #tpu.pipeline_mode<synchronous>, transform_indices = @transform_8, window_bounds = array<i64: 1, 32>}, {pipeline_mode = #tpu.pipeline_mode<synchronous>, transform_indices = @transform_9, window_bounds = array<i64: 1, 32>}, {pipeline_mode = #tpu.pipeline_mode<synchronous>, transform_indices = @transform_10, window_bounds = array<i64: 32, 64>}, {pipeline_mode = #tpu.pipeline_mode<synchronous>, transform_indices = @transform_11, window_bounds = array<i64: 1, 64>}, {pipeline_mode = #tpu.pipeline_mode<synchronous>, transform_indices = @transform_12, window_bounds = array<i64: 64, 32>}, {pipeline_mode = #tpu.pipeline_mode<synchronous>, transform_indices = @transform_13, window_bounds = array<i64: 1, 32>}, {transform_indices = @transform_14, window_bounds = array<i64: 64, 32>}]} {
    %c0 = arith.constant 0 : index
    %c0_0 = arith.constant 0 : index
    %0 = vector.load %arg1[%c0, %c0_0] : memref<64x32xf32, #tpu.memory_space<vmem>>, vector<64x32xf32>
    %c0_1 = arith.constant 0 : index
    %c0_2 = arith.constant 0 : index
    %c0_3 = arith.constant 0 : index
    %1 = vector.load %arg2[%c0_1, %c0_2, %c0_3] : memref<4x16x16xbf16, #tpu.memory_space<vmem>>, vector<4x16x16xbf16>
    %2 = arith.extf %1 : vector<4x16x16xbf16> to vector<4x16x16xf32>
    %c0_4 = arith.constant 0 : index
    %c0_5 = arith.constant 0 : index
    %3 = vector.load %arg3[%c0_4, %c0_5] : memref<1x32xf32, #tpu.memory_space<vmem>>, vector<1x32xf32>
    %c0_6 = arith.constant 0 : index
    %c0_7 = arith.constant 0 : index
    %4 = vector.load %arg4[%c0_6, %c0_7] : memref<1x32xf32, #tpu.memory_space<vmem>>, vector<1x32xf32>
    %c0_8 = arith.constant 0 : index
    %c0_9 = arith.constant 0 : index
    %5 = vector.load %arg9[%c0_8, %c0_9] : memref<1x32xf32, #tpu.memory_space<vmem>>, vector<1x32xf32>
    %c0_10 = arith.constant 0 : index
    %c0_11 = arith.constant 0 : index
    %6 = vector.load %arg10[%c0_10, %c0_11] : memref<1x32xf32, #tpu.memory_space<vmem>>, vector<1x32xf32>
    %c0_12 = arith.constant 0 : index
    %c0_13 = arith.constant 0 : index
    %7 = vector.load %arg6[%c0_12, %c0_13] : memref<1x96xf32, #tpu.memory_space<vmem>>, vector<1x96xf32>
    %c0_14 = arith.constant 0 : index
    %c0_15 = arith.constant 0 : index
    %8 = vector.load %arg8[%c0_14, %c0_15] : memref<1x32xf32, #tpu.memory_space<vmem>>, vector<1x32xf32>
    %c0_16 = arith.constant 0 : index
    %c0_17 = arith.constant 0 : index
    %9 = vector.load %arg12[%c0_16, %c0_17] : memref<1x64xf32, #tpu.memory_space<vmem>>, vector<1x64xf32>
    %c0_18 = arith.constant 0 : index
    %c0_19 = arith.constant 0 : index
    %10 = vector.load %arg14[%c0_18, %c0_19] : memref<1x32xf32, #tpu.memory_space<vmem>>, vector<1x32xf32>
    %cst = arith.constant dense<0.000000e+00> : vector<64xf32>
    %11 = vector.multi_reduction <add>, %0, %cst [1] : vector<64x32xf32> to vector<64xf32>
    %12 = vector.shape_cast %11 : vector<64xf32> to vector<64x1xf32>
    %cst_20 = arith.constant 3.200000e+01 : f32
    %13 = vector.broadcast %cst_20 : f32 to vector<64x1xf32>
    %14 = arith.divf %12, %13 : vector<64x1xf32>
    %15 = vector.broadcast %14 : vector<64x1xf32> to vector<64x32xf32>
    %16 = arith.subf %0, %15 : vector<64x32xf32>
    %17 = arith.mulf %16, %16 : vector<64x32xf32>
    %cst_21 = arith.constant dense<0.000000e+00> : vector<64xf32>
    %18 = vector.multi_reduction <add>, %17, %cst_21 [1] : vector<64x32xf32> to vector<64xf32>
    %19 = vector.shape_cast %18 : vector<64xf32> to vector<64x1xf32>
    %cst_22 = arith.constant 3.200000e+01 : f32
    %20 = vector.broadcast %cst_22 : f32 to vector<64x1xf32>
    %21 = arith.divf %19, %20 : vector<64x1xf32>
    %22 = vector.broadcast %14 : vector<64x1xf32> to vector<64x32xf32>
    %23 = arith.subf %0, %22 : vector<64x32xf32>
    %cst_23 = arith.constant 9.99999974E-6 : f32
    %24 = vector.broadcast %cst_23 : f32 to vector<64x1xf32>
    %25 = arith.addf %21, %24 : vector<64x1xf32>
    %26 = math.rsqrt %25 : vector<64x1xf32>
    %27 = vector.broadcast %26 : vector<64x1xf32> to vector<64x32xf32>
    %28 = arith.mulf %23, %27 : vector<64x32xf32>
    %29 = vector.broadcast %3 : vector<1x32xf32> to vector<64x32xf32>
    %30 = arith.mulf %28, %29 : vector<64x32xf32>
    %31 = vector.broadcast %4 : vector<1x32xf32> to vector<64x32xf32>
    %32 = arith.addf %30, %31 : vector<64x32xf32>
    %33 = arith.truncf %32 : vector<64x32xf32> to vector<64x32xbf16>
    %c0_24 = arith.constant 0 : index
    %c0_25 = arith.constant 0 : index
    %34 = vector.load %arg5[%c0_24, %c0_25] : memref<32x96xbf16, #tpu.memory_space<vmem>>, vector<32x96xbf16>
    %cst_26 = arith.constant dense<0.000000e+00> : vector<64x96xf32>
    %35 = tpu.matmul %33, %34, %cst_26 {dimension_numbers = #tpu.dot_dimension_numbers<[1], [0], [0], [1], [0, 0, 1, 1], [], []>} : vector<64x32xbf16>, vector<32x96xbf16>, vector<64x96xf32> -> vector<64x96xf32>
    %36 = vector.broadcast %7 : vector<1x96xf32> to vector<64x96xf32>
    %37 = arith.addf %35, %36 : vector<64x96xf32>
    %38 = arith.truncf %37 : vector<64x96xf32> to vector<64x96xbf16>
    %39 = vector.extract_strided_slice %38 {offsets = [0, 0], sizes = [64, 8], strides = [1, 1]} : vector<64x96xbf16> to vector<64x8xbf16>
    %40 = vector.shape_cast %39 : vector<64x8xbf16> to vector<4x16x8xbf16>
    %41 = vector.extract_strided_slice %38 {offsets = [0, 8], sizes = [64, 8], strides = [1, 1]} : vector<64x96xbf16> to vector<64x8xbf16>
    %42 = vector.shape_cast %41 : vector<64x8xbf16> to vector<4x16x8xbf16>
    %43 = vector.extract_strided_slice %38 {offsets = [0, 16], sizes = [64, 8], strides = [1, 1]} : vector<64x96xbf16> to vector<64x8xbf16>
    %44 = vector.shape_cast %43 : vector<64x8xbf16> to vector<4x16x8xbf16>
    %45 = vector.extract_strided_slice %38 {offsets = [0, 24], sizes = [64, 8], strides = [1, 1]} : vector<64x96xbf16> to vector<64x8xbf16>
    %46 = vector.shape_cast %45 : vector<64x8xbf16> to vector<4x16x8xbf16>
    %47 = vector.shape_cast %40 : vector<4x16x8xbf16> to vector<1x4x16x8xbf16>
    %48 = vector.shape_cast %42 : vector<4x16x8xbf16> to vector<1x4x16x8xbf16>
    %49 = vector.shape_cast %44 : vector<4x16x8xbf16> to vector<1x4x16x8xbf16>
    %50 = vector.shape_cast %46 : vector<4x16x8xbf16> to vector<1x4x16x8xbf16>
    %51 = tpu.concatenate %47, %48, %49, %50 in 0 : vector<1x4x16x8xbf16>, vector<1x4x16x8xbf16>, vector<1x4x16x8xbf16>, vector<1x4x16x8xbf16> -> vector<4x4x16x8xbf16>
    %52 = vector.shape_cast %51 : vector<4x4x16x8xbf16> to vector<16x16x8xbf16>
    %53 = vector.extract_strided_slice %38 {offsets = [0, 32], sizes = [64, 8], strides = [1, 1]} : vector<64x96xbf16> to vector<64x8xbf16>
    %54 = vector.shape_cast %53 : vector<64x8xbf16> to vector<4x16x8xbf16>
    %55 = vector.extract_strided_slice %38 {offsets = [0, 40], sizes = [64, 8], strides = [1, 1]} : vector<64x96xbf16> to vector<64x8xbf16>
    %56 = vector.shape_cast %55 : vector<64x8xbf16> to vector<4x16x8xbf16>
    %57 = vector.extract_strided_slice %38 {offsets = [0, 48], sizes = [64, 8], strides = [1, 1]} : vector<64x96xbf16> to vector<64x8xbf16>
    %58 = vector.shape_cast %57 : vector<64x8xbf16> to vector<4x16x8xbf16>
    %59 = vector.extract_strided_slice %38 {offsets = [0, 56], sizes = [64, 8], strides = [1, 1]} : vector<64x96xbf16> to vector<64x8xbf16>
    %60 = vector.shape_cast %59 : vector<64x8xbf16> to vector<4x16x8xbf16>
    %61 = vector.shape_cast %54 : vector<4x16x8xbf16> to vector<1x4x16x8xbf16>
    %62 = vector.shape_cast %56 : vector<4x16x8xbf16> to vector<1x4x16x8xbf16>
    %63 = vector.shape_cast %58 : vector<4x16x8xbf16> to vector<1x4x16x8xbf16>
    %64 = vector.shape_cast %60 : vector<4x16x8xbf16> to vector<1x4x16x8xbf16>
    %65 = tpu.concatenate %61, %62, %63, %64 in 0 : vector<1x4x16x8xbf16>, vector<1x4x16x8xbf16>, vector<1x4x16x8xbf16>, vector<1x4x16x8xbf16> -> vector<4x4x16x8xbf16>
    %66 = vector.shape_cast %65 : vector<4x4x16x8xbf16> to vector<16x16x8xbf16>
    %67 = vector.extract_strided_slice %38 {offsets = [0, 64], sizes = [64, 8], strides = [1, 1]} : vector<64x96xbf16> to vector<64x8xbf16>
    %68 = vector.shape_cast %67 : vector<64x8xbf16> to vector<4x16x8xbf16>
    %69 = vector.extract_strided_slice %38 {offsets = [0, 72], sizes = [64, 8], strides = [1, 1]} : vector<64x96xbf16> to vector<64x8xbf16>
    %70 = vector.shape_cast %69 : vector<64x8xbf16> to vector<4x16x8xbf16>
    %71 = vector.extract_strided_slice %38 {offsets = [0, 80], sizes = [64, 8], strides = [1, 1]} : vector<64x96xbf16> to vector<64x8xbf16>
    %72 = vector.shape_cast %71 : vector<64x8xbf16> to vector<4x16x8xbf16>
    %73 = vector.extract_strided_slice %38 {offsets = [0, 88], sizes = [64, 8], strides = [1, 1]} : vector<64x96xbf16> to vector<64x8xbf16>
    %74 = vector.shape_cast %73 : vector<64x8xbf16> to vector<4x16x8xbf16>
    %75 = vector.shape_cast %68 : vector<4x16x8xbf16> to vector<1x4x16x8xbf16>
    %76 = vector.shape_cast %70 : vector<4x16x8xbf16> to vector<1x4x16x8xbf16>
    %77 = vector.shape_cast %72 : vector<4x16x8xbf16> to vector<1x4x16x8xbf16>
    %78 = vector.shape_cast %74 : vector<4x16x8xbf16> to vector<1x4x16x8xbf16>
    %79 = tpu.concatenate %75, %76, %77, %78 in 0 : vector<1x4x16x8xbf16>, vector<1x4x16x8xbf16>, vector<1x4x16x8xbf16>, vector<1x4x16x8xbf16> -> vector<4x4x16x8xbf16>
    %80 = vector.shape_cast %79 : vector<4x4x16x8xbf16> to vector<16x16x8xbf16>
    "tpu.trace_start"() <{level = 10 : i32, message = "bqd,bkd->bqk"}> : () -> ()
    %cst_27 = arith.constant dense<0.000000e+00> : vector<16x16x16xf32>
    %81 = tpu.matmul %52, %66, %cst_27 {dimension_numbers = #tpu.dot_dimension_numbers<[2], [2], [1], [1], [0, 0, 0, 1, 1, 1], [0], [0]>} : vector<16x16x8xbf16>, vector<16x16x8xbf16>, vector<16x16x16xf32> -> vector<16x16x16xf32>
    "tpu.trace_stop"() : () -> ()
    %82 = vector.shape_cast %81 : vector<16x16x16xf32> to vector<4x4x16x16xf32>
    %83 = vector.shape_cast %2 : vector<4x16x16xf32> to vector<4x1x16x16xf32>
    %84 = vector.broadcast %83 : vector<4x1x16x16xf32> to vector<4x4x16x16xf32>
    %85 = arith.addf %82, %84 : vector<4x4x16x16xf32>
    %86 = vector.shape_cast %85 : vector<4x4x16x16xf32> to vector<16x16x16xf32>
    %cst_28 = arith.constant dense<0xFF800000> : vector<16x16xf32>
    %87 = vector.multi_reduction <maximumf>, %86, %cst_28 [2] : vector<16x16x16xf32> to vector<16x16xf32>
    %88 = vector.shape_cast %87 : vector<16x16xf32> to vector<16x16x1xf32>
    %89 = vector.broadcast %88 : vector<16x16x1xf32> to vector<16x16x16xf32>
    %90 = arith.subf %86, %89 : vector<16x16x16xf32>
    %91 = math.exp %90 : vector<16x16x16xf32>
    %cst_29 = arith.constant dense<0.000000e+00> : vector<16x16xf32>
    %92 = vector.multi_reduction <add>, %91, %cst_29 [2] : vector<16x16x16xf32> to vector<16x16xf32>
    %93 = vector.shape_cast %92 : vector<16x16xf32> to vector<16x16x1xf32>
    %94 = tpu.reciprocal %93 {approx = true} : vector<16x16x1xf32> -> vector<16x16x1xf32>
    %95 = vector.broadcast %94 : vector<16x16x1xf32> to vector<16x16x16xf32>
    %96 = arith.mulf %91, %95 : vector<16x16x16xf32>
    %97 = arith.truncf %96 : vector<16x16x16xf32> to vector<16x16x16xbf16>
    "tpu.trace_start"() <{level = 10 : i32, message = "bqk,bkd->bqd"}> : () -> ()
    %cst_30 = arith.constant dense<0.000000e+00> : vector<16x16x8xf32>
    %98 = tpu.matmul %97, %80, %cst_30 {dimension_numbers = #tpu.dot_dimension_numbers<[2], [1], [1], [2], [0, 0, 0, 1, 1, 2], [0], [0]>} : vector<16x16x16xbf16>, vector<16x16x8xbf16>, vector<16x16x8xf32> -> vector<16x16x8xf32>
    "tpu.trace_stop"() : () -> ()
    %99 = vector.shape_cast %98 : vector<16x16x8xf32> to vector<4x4x16x8xf32>
    %100 = vector.extract_strided_slice %99 {offsets = [0, 0, 0, 0], sizes = [1, 4, 16, 8], strides = [1, 1, 1, 1]} : vector<4x4x16x8xf32> to vector<1x4x16x8xf32>
    %101 = vector.shape_cast %100 : vector<1x4x16x8xf32> to vector<4x16x8xf32>
    %102 = vector.extract_strided_slice %99 {offsets = [1, 0, 0, 0], sizes = [1, 4, 16, 8], strides = [1, 1, 1, 1]} : vector<4x4x16x8xf32> to vector<1x4x16x8xf32>
    %103 = vector.shape_cast %102 : vector<1x4x16x8xf32> to vector<4x16x8xf32>
    %104 = vector.extract_strided_slice %99 {offsets = [2, 0, 0, 0], sizes = [1, 4, 16, 8], strides = [1, 1, 1, 1]} : vector<4x4x16x8xf32> to vector<1x4x16x8xf32>
    %105 = vector.shape_cast %104 : vector<1x4x16x8xf32> to vector<4x16x8xf32>
    %106 = vector.extract_strided_slice %99 {offsets = [3, 0, 0, 0], sizes = [1, 4, 16, 8], strides = [1, 1, 1, 1]} : vector<4x4x16x8xf32> to vector<1x4x16x8xf32>
    %107 = vector.shape_cast %106 : vector<1x4x16x8xf32> to vector<4x16x8xf32>
    %108 = tpu.concatenate %101, %103, %105, %107 in 2 : vector<4x16x8xf32>, vector<4x16x8xf32>, vector<4x16x8xf32>, vector<4x16x8xf32> -> vector<4x16x32xf32>
    %109 = vector.shape_cast %108 : vector<4x16x32xf32> to vector<64x32xf32>
    %110 = arith.truncf %109 : vector<64x32xf32> to vector<64x32xbf16>
    %c0_31 = arith.constant 0 : index
    %c0_32 = arith.constant 0 : index
    %111 = vector.load %arg7[%c0_31, %c0_32] : memref<32x32xbf16, #tpu.memory_space<vmem>>, vector<32x32xbf16>
    %cst_33 = arith.constant dense<0.000000e+00> : vector<64x32xf32>
    %112 = tpu.matmul %110, %111, %cst_33 {dimension_numbers = #tpu.dot_dimension_numbers<[1], [0], [0], [1], [0, 0, 1, 1], [], []>} : vector<64x32xbf16>, vector<32x32xbf16>, vector<64x32xf32> -> vector<64x32xf32>
    %113 = vector.broadcast %8 : vector<1x32xf32> to vector<64x32xf32>
    %114 = arith.addf %112, %113 : vector<64x32xf32>
    %115 = arith.addf %0, %114 : vector<64x32xf32>
    %cst_34 = arith.constant dense<0.000000e+00> : vector<64xf32>
    %116 = vector.multi_reduction <add>, %115, %cst_34 [1] : vector<64x32xf32> to vector<64xf32>
    %117 = vector.shape_cast %116 : vector<64xf32> to vector<64x1xf32>
    %cst_35 = arith.constant 3.200000e+01 : f32
    %118 = vector.broadcast %cst_35 : f32 to vector<64x1xf32>
    %119 = arith.divf %117, %118 : vector<64x1xf32>
    %120 = vector.broadcast %119 : vector<64x1xf32> to vector<64x32xf32>
    %121 = arith.subf %115, %120 : vector<64x32xf32>
    %122 = arith.mulf %121, %121 : vector<64x32xf32>
    %cst_36 = arith.constant dense<0.000000e+00> : vector<64xf32>
    %123 = vector.multi_reduction <add>, %122, %cst_36 [1] : vector<64x32xf32> to vector<64xf32>
    %124 = vector.shape_cast %123 : vector<64xf32> to vector<64x1xf32>
    %cst_37 = arith.constant 3.200000e+01 : f32
    %125 = vector.broadcast %cst_37 : f32 to vector<64x1xf32>
    %126 = arith.divf %124, %125 : vector<64x1xf32>
    %127 = vector.broadcast %119 : vector<64x1xf32> to vector<64x32xf32>
    %128 = arith.subf %115, %127 : vector<64x32xf32>
    %cst_38 = arith.constant 9.99999974E-6 : f32
    %129 = vector.broadcast %cst_38 : f32 to vector<64x1xf32>
    %130 = arith.addf %126, %129 : vector<64x1xf32>
    %131 = math.rsqrt %130 : vector<64x1xf32>
    %132 = vector.broadcast %131 : vector<64x1xf32> to vector<64x32xf32>
    %133 = arith.mulf %128, %132 : vector<64x32xf32>
    %134 = vector.broadcast %5 : vector<1x32xf32> to vector<64x32xf32>
    %135 = arith.mulf %133, %134 : vector<64x32xf32>
    %136 = vector.broadcast %6 : vector<1x32xf32> to vector<64x32xf32>
    %137 = arith.addf %135, %136 : vector<64x32xf32>
    %138 = arith.truncf %137 : vector<64x32xf32> to vector<64x32xbf16>
    %c0_39 = arith.constant 0 : index
    %c0_40 = arith.constant 0 : index
    %139 = vector.load %arg11[%c0_39, %c0_40] : memref<32x64xbf16, #tpu.memory_space<vmem>>, vector<32x64xbf16>
    %cst_41 = arith.constant dense<0.000000e+00> : vector<64x64xf32>
    %140 = tpu.matmul %138, %139, %cst_41 {dimension_numbers = #tpu.dot_dimension_numbers<[1], [0], [0], [1], [0, 0, 1, 1], [], []>} : vector<64x32xbf16>, vector<32x64xbf16>, vector<64x64xf32> -> vector<64x64xf32>
    %141 = vector.broadcast %9 : vector<1x64xf32> to vector<64x64xf32>
    %142 = arith.addf %140, %141 : vector<64x64xf32>
    %cst_42 = arith.constant 5.000000e-01 : f32
    %143 = vector.broadcast %cst_42 : f32 to vector<64x64xf32>
    %144 = arith.mulf %143, %142 : vector<64x64xf32>
    %cst_43 = arith.constant 4.471500e-02 : f32
    %145 = vector.broadcast %cst_43 : f32 to vector<64x64xf32>
    %146 = arith.mulf %145, %142 : vector<64x64xf32>
    %147 = arith.mulf %146, %142 : vector<64x64xf32>
    %148 = arith.mulf %147, %142 : vector<64x64xf32>
    %149 = arith.addf %142, %148 : vector<64x64xf32>
    %cst_44 = arith.constant 0.797884583 : f32
    %150 = vector.broadcast %cst_44 : f32 to vector<64x64xf32>
    %151 = arith.mulf %150, %149 : vector<64x64xf32>
    %152 = math.tanh %151 : vector<64x64xf32>
    %cst_45 = arith.constant 1.000000e+00 : f32
    %153 = vector.broadcast %cst_45 : f32 to vector<64x64xf32>
    %154 = arith.addf %153, %152 : vector<64x64xf32>
    %155 = arith.mulf %144, %154 : vector<64x64xf32>
    %156 = arith.truncf %155 : vector<64x64xf32> to vector<64x64xbf16>
    %c0_46 = arith.constant 0 : index
    %c0_47 = arith.constant 0 : index
    %157 = vector.load %arg13[%c0_46, %c0_47] : memref<64x32xbf16, #tpu.memory_space<vmem>>, vector<64x32xbf16>
    %cst_48 = arith.constant dense<0.000000e+00> : vector<64x32xf32>
    %158 = tpu.matmul %156, %157, %cst_48 {dimension_numbers = #tpu.dot_dimension_numbers<[1], [0], [0], [1], [0, 0, 1, 1], [], []>} : vector<64x64xbf16>, vector<64x32xbf16>, vector<64x32xf32> -> vector<64x32xf32>
    %159 = vector.broadcast %10 : vector<1x32xf32> to vector<64x32xf32>
    %160 = arith.addf %158, %159 : vector<64x32xf32>
    %161 = arith.addf %115, %160 : vector<64x32xf32>
    %c0_49 = arith.constant 0 : index
    %c0_50 = arith.constant 0 : index
    %162 = vector.load %arg15[%c0_49, %c0_50] : memref<64x32xf32, #tpu.memory_space<vmem>>, vector<64x32xf32>
    tpu.vector_store %arg15[%c0_49, %c0_50], %161 {strides = array<i32>} : memref<64x32xf32, #tpu.memory_space<vmem>>, vector<64x32xf32>,
    return
  }
  func.func @transform_0(%arg0: i32) -> (i32, i32) {
    %c0_i32 = arith.constant 0 : i32
    %c0_i32_0 = arith.constant 0 : i32
    return %arg0, %c0_i32 : i32, i32
  }
  func.func @transform_1(%arg0: i32) -> (i32, i32, i32) {
    %c0_i32 = arith.constant 0 : i32
    %c0_i32_0 = arith.constant 0 : i32
    %c0_i32_1 = arith.constant 0 : i32
    %c0_i32_2 = arith.constant 0 : i32
    return %c0_i32, %c0_i32_0, %c0_i32_1 : i32, i32, i32
  }
  func.func @transform_2(%arg0: i32) -> (i32, i32) {
    %c0_i32 = arith.constant 0 : i32
    %c0_i32_0 = arith.constant 0 : i32
    %c0_i32_1 = arith.constant 0 : i32
    return %c0_i32, %c0_i32_0 : i32, i32
  }
  func.func @transform_3(%arg0: i32) -> (i32, i32) {
    %c0_i32 = arith.constant 0 : i32
    %c0_i32_0 = arith.constant 0 : i32
    %c0_i32_1 = arith.constant 0 : i32
    return %c0_i32, %c0_i32_0 : i32, i32
  }
  func.func @transform_4(%arg0: i32) -> (i32, i32) {
    %c0_i32 = arith.constant 0 : i32
    %c0_i32_0 = arith.constant 0 : i32
    %c0_i32_1 = arith.constant 0 : i32
    return %c0_i32, %c0_i32_0 : i32, i32
  }
  func.func @transform_5(%arg0: i32) -> (i32, i32) {
    %c0_i32 = arith.constant 0 : i32
    %c0_i32_0 = arith.constant 0 : i32
    %c0_i32_1 = arith.constant 0 : i32
    return %c0_i32, %c0_i32_0 : i32, i32
  }
  func.func @transform_6(%arg0: i32) -> (i32, i32) {
    %c0_i32 = arith.constant 0 : i32
    %c0_i32_0 = arith.constant 0 : i32
    %c0_i32_1 = arith.constant 0 : i32
    return %c0_i32, %c0_i32_0 : i32, i32
  }
  func.func @transform_7(%arg0: i32) -> (i32, i32) {
    %c0_i32 = arith.constant 0 : i32
    %c0_i32_0 = arith.constant 0 : i32
    %c0_i32_1 = arith.constant 0 : i32
    return %c0_i32, %c0_i32_0 : i32, i32
  }
  func.func @transform_8(%arg0: i32) -> (i32, i32) {
    %c0_i32 = arith.constant 0 : i32
    %c0_i32_0 = arith.constant 0 : i32
    %c0_i32_1 = arith.constant 0 : i32
    return %c0_i32, %c0_i32_0 : i32, i32
  }
  func.func @transform_9(%arg0: i32) -> (i32, i32) {
    %c0_i32 = arith.constant 0 : i32
    %c0_i32_0 = arith.constant 0 : i32
    %c0_i32_1 = arith.constant 0 : i32
    return %c0_i32, %c0_i32_0 : i32, i32
  }
  func.func @transform_10(%arg0: i32) -> (i32, i32) {
    %c0_i32 = arith.constant 0 : i32
    %c0_i32_0 = arith.constant 0 : i32
    %c0_i32_1 = arith.constant 0 : i32
    return %c0_i32, %c0_i32_0 : i32, i32
  }
  func.func @transform_11(%arg0: i32) -> (i32, i32) {
    %c0_i32 = arith.constant 0 : i32
    %c0_i32_0 = arith.constant 0 : i32
    %c0_i32_1 = arith.constant 0 : i32
    return %c0_i32, %c0_i32_0 : i32, i32
  }
  func.func @transform_12(%arg0: i32) -> (i32, i32) {
    %c0_i32 = arith.constant 0 : i32
    %c0_i32_0 = arith.constant 0 : i32
    %c0_i32_1 = arith.constant 0 : i32
    return %c0_i32, %c0_i32_0 : i32, i32
  }
  func.func @transform_13(%arg0: i32) -> (i32, i32) {
    %c0_i32 = arith.constant 0 : i32
    %c0_i32_0 = arith.constant 0 : i32
    %c0_i32_1 = arith.constant 0 : i32
    return %c0_i32, %c0_i32_0 : i32, i32
  }
  func.func @transform_14(%arg0: i32) -> (i32, i32) {
    %c0_i32 = arith.constant 0 : i32
    %c0_i32_0 = arith.constant 0 : i32
    return %arg0, %c0_i32 : i32, i32
  }
}

module attributes {stable_mosaic.version = 11 : i64} {
  func.func @kernel(%arg0: i32, %arg1: memref<64x32xf32, #tpu.memory_space<vmem>>, %arg2: memref<4x16x16xbf16, #tpu.memory_space<vmem>>, %arg3: memref<4x16x16xbf16, #tpu.memory_space<vmem>>, %arg4: memref<1x32xf32, #tpu.memory_space<vmem>>, %arg5: memref<1x32xf32, #tpu.memory_space<vmem>>, %arg6: memref<32x96xbf16, #tpu.memory_space<vmem>>, %arg7: memref<1x96xf32, #tpu.memory_space<vmem>>, %arg8: memref<32x32xbf16, #tpu.memory_space<vmem>>, %arg9: memref<1x32xf32, #tpu.memory_space<vmem>>, %arg10: memref<1x32xf32, #tpu.memory_space<vmem>>, %arg11: memref<1x32xf32, #tpu.memory_space<vmem>>, %arg12: memref<32x64xbf16, #tpu.memory_space<vmem>>, %arg13: memref<1x64xf32, #tpu.memory_space<vmem>>, %arg14: memref<64x32xbf16, #tpu.memory_space<vmem>>, %arg15: memref<1x32xf32, #tpu.memory_space<vmem>>, %arg16: memref<64x32xf32, #tpu.memory_space<vmem>>) attributes {dimension_semantics = [#tpu.dimension_semantics<parallel>], iteration_bounds = array<i64: 2>, scalar_prefetch = 0 : i64, scratch_operands = 0 : i64, tpu.core_type = #tpu.core_type<tc>, window_params = [{transform_indices = @transform_0, window_bounds = array<i64: 64, 32>}, {pipeline_mode = #tpu.pipeline_mode<synchronous>, transform_indices = @transform_1, window_bounds = array<i64: 4, 16, 16>}, {pipeline_mode = #tpu.pipeline_mode<synchronous>, transform_indices = @transform_2, window_bounds = array<i64: 4, 16, 16>}, {pipeline_mode = #tpu.pipeline_mode<synchronous>, transform_indices = @transform_3, window_bounds = array<i64: 1, 32>}, {pipeline_mode = #tpu.pipeline_mode<synchronous>, transform_indices = @transform_4, window_bounds = array<i64: 1, 32>}, {pipeline_mode = #tpu.pipeline_mode<synchronous>, transform_indices = @transform_5, window_bounds = array<i64: 32, 96>}, {pipeline_mode = #tpu.pipeline_mode<synchronous>, transform_indices = @transform_6, window_bounds = array<i64: 1, 96>}, {pipeline_mode = #tpu.pipeline_mode<synchronous>, transform_indices = @transform_7, window_bounds = array<i64: 32, 32>}, {pipeline_mode = #tpu.pipeline_mode<synchronous>, transform_indices = @transform_8, window_bounds = array<i64: 1, 32>}, {pipeline_mode = #tpu.pipeline_mode<synchronous>, transform_indices = @transform_9, window_bounds = array<i64: 1, 32>}, {pipeline_mode = #tpu.pipeline_mode<synchronous>, transform_indices = @transform_10, window_bounds = array<i64: 1, 32>}, {pipeline_mode = #tpu.pipeline_mode<synchronous>, transform_indices = @transform_11, window_bounds = array<i64: 32, 64>}, {pipeline_mode = #tpu.pipeline_mode<synchronous>, transform_indices = @transform_12, window_bounds = array<i64: 1, 64>}, {pipeline_mode = #tpu.pipeline_mode<synchronous>, transform_indices = @transform_13, window_bounds = array<i64: 64, 32>}, {pipeline_mode = #tpu.pipeline_mode<synchronous>, transform_indices = @transform_14, window_bounds = array<i64: 1, 32>}, {transform_indices = @transform_15, window_bounds = array<i64: 64, 32>}]} {
    %c0 = arith.constant 0 : index
    %c0_0 = arith.constant 0 : index
    %0 = vector.load %arg1[%c0, %c0_0] : memref<64x32xf32, #tpu.memory_space<vmem>>, vector<64x32xf32>
    %c0_1 = arith.constant 0 : index
    %c0_2 = arith.constant 0 : index
    %c0_3 = arith.constant 0 : index
    %1 = vector.load %arg2[%c0_1, %c0_2, %c0_3] : memref<4x16x16xbf16, #tpu.memory_space<vmem>>, vector<4x16x16xbf16>
    %2 = arith.extf %1 : vector<4x16x16xbf16> to vector<4x16x16xf32>
    %c0_4 = arith.constant 0 : index
    %c0_5 = arith.constant 0 : index
    %3 = vector.load %arg4[%c0_4, %c0_5] : memref<1x32xf32, #tpu.memory_space<vmem>>, vector<1x32xf32>
    %c0_6 = arith.constant 0 : index
    %c0_7 = arith.constant 0 : index
    %4 = vector.load %arg5[%c0_6, %c0_7] : memref<1x32xf32, #tpu.memory_space<vmem>>, vector<1x32xf32>
    %c0_8 = arith.constant 0 : index
    %c0_9 = arith.constant 0 : index
    %5 = vector.load %arg10[%c0_8, %c0_9] : memref<1x32xf32, #tpu.memory_space<vmem>>, vector<1x32xf32>
    %c0_10 = arith.constant 0 : index
    %c0_11 = arith.constant 0 : index
    %6 = vector.load %arg11[%c0_10, %c0_11] : memref<1x32xf32, #tpu.memory_space<vmem>>, vector<1x32xf32>
    %c0_12 = arith.constant 0 : index
    %c0_13 = arith.constant 0 : index
    %7 = vector.load %arg7[%c0_12, %c0_13] : memref<1x96xf32, #tpu.memory_space<vmem>>, vector<1x96xf32>
    %c0_14 = arith.constant 0 : index
    %c0_15 = arith.constant 0 : index
    %8 = vector.load %arg9[%c0_14, %c0_15] : memref<1x32xf32, #tpu.memory_space<vmem>>, vector<1x32xf32>
    %c0_16 = arith.constant 0 : index
    %c0_17 = arith.constant 0 : index
    %9 = vector.load %arg13[%c0_16, %c0_17] : memref<1x64xf32, #tpu.memory_space<vmem>>, vector<1x64xf32>
    %c0_18 = arith.constant 0 : index
    %c0_19 = arith.constant 0 : index
    %10 = vector.load %arg15[%c0_18, %c0_19] : memref<1x32xf32, #tpu.memory_space<vmem>>, vector<1x32xf32>
    %cst = arith.constant dense<0.000000e+00> : vector<64xf32>
    %11 = vector.multi_reduction <add>, %0, %cst [1] : vector<64x32xf32> to vector<64xf32>
    %12 = vector.shape_cast %11 : vector<64xf32> to vector<64x1xf32>
    %cst_20 = arith.constant 3.200000e+01 : f32
    %13 = vector.broadcast %cst_20 : f32 to vector<64x1xf32>
    %14 = arith.divf %12, %13 : vector<64x1xf32>
    %15 = vector.broadcast %14 : vector<64x1xf32> to vector<64x32xf32>
    %16 = arith.subf %0, %15 : vector<64x32xf32>
    %17 = arith.mulf %16, %16 : vector<64x32xf32>
    %cst_21 = arith.constant dense<0.000000e+00> : vector<64xf32>
    %18 = vector.multi_reduction <add>, %17, %cst_21 [1] : vector<64x32xf32> to vector<64xf32>
    %19 = vector.shape_cast %18 : vector<64xf32> to vector<64x1xf32>
    %cst_22 = arith.constant 3.200000e+01 : f32
    %20 = vector.broadcast %cst_22 : f32 to vector<64x1xf32>
    %21 = arith.divf %19, %20 : vector<64x1xf32>
    %22 = vector.broadcast %14 : vector<64x1xf32> to vector<64x32xf32>
    %23 = arith.subf %0, %22 : vector<64x32xf32>
    %cst_23 = arith.constant 9.99999974E-6 : f32
    %24 = vector.broadcast %cst_23 : f32 to vector<64x1xf32>
    %25 = arith.addf %21, %24 : vector<64x1xf32>
    %26 = math.rsqrt %25 : vector<64x1xf32>
    %27 = vector.broadcast %26 : vector<64x1xf32> to vector<64x32xf32>
    %28 = arith.mulf %23, %27 : vector<64x32xf32>
    %29 = vector.broadcast %3 : vector<1x32xf32> to vector<64x32xf32>
    %30 = arith.mulf %28, %29 : vector<64x32xf32>
    %31 = vector.broadcast %4 : vector<1x32xf32> to vector<64x32xf32>
    %32 = arith.addf %30, %31 : vector<64x32xf32>
    %33 = arith.truncf %32 : vector<64x32xf32> to vector<64x32xbf16>
    %c0_24 = arith.constant 0 : index
    %c0_25 = arith.constant 0 : index
    %34 = vector.load %arg6[%c0_24, %c0_25] : memref<32x96xbf16, #tpu.memory_space<vmem>>, vector<32x96xbf16>
    %cst_26 = arith.constant dense<0.000000e+00> : vector<64x96xf32>
    %35 = tpu.matmul %33, %34, %cst_26 {dimension_numbers = #tpu.dot_dimension_numbers<[1], [0], [0], [1], [0, 0, 1, 1], [], []>} : vector<64x32xbf16>, vector<32x96xbf16>, vector<64x96xf32> -> vector<64x96xf32>
    %36 = vector.broadcast %7 : vector<1x96xf32> to vector<64x96xf32>
    %37 = arith.addf %35, %36 : vector<64x96xf32>
    %38 = arith.truncf %37 : vector<64x96xf32> to vector<64x96xbf16>
    %39 = vector.extract_strided_slice %38 {offsets = [0, 0], sizes = [64, 8], strides = [1, 1]} : vector<64x96xbf16> to vector<64x8xbf16>
    %40 = vector.shape_cast %39 : vector<64x8xbf16> to vector<4x16x8xbf16>
    %41 = vector.extract_strided_slice %38 {offsets = [0, 8], sizes = [64, 8], strides = [1, 1]} : vector<64x96xbf16> to vector<64x8xbf16>
    %42 = vector.shape_cast %41 : vector<64x8xbf16> to vector<4x16x8xbf16>
    %43 = vector.extract_strided_slice %38 {offsets = [0, 16], sizes = [64, 8], strides = [1, 1]} : vector<64x96xbf16> to vector<64x8xbf16>
    %44 = vector.shape_cast %43 : vector<64x8xbf16> to vector<4x16x8xbf16>
    %45 = vector.extract_strided_slice %38 {offsets = [0, 24], sizes = [64, 8], strides = [1, 1]} : vector<64x96xbf16> to vector<64x8xbf16>
    %46 = vector.shape_cast %45 : vector<64x8xbf16> to vector<4x16x8xbf16>
    %47 = vector.shape_cast %40 : vector<4x16x8xbf16> to vector<1x4x16x8xbf16>
    %48 = vector.shape_cast %42 : vector<4x16x8xbf16> to vector<1x4x16x8xbf16>
    %49 = vector.shape_cast %44 : vector<4x16x8xbf16> to vector<1x4x16x8xbf16>
    %50 = vector.shape_cast %46 : vector<4x16x8xbf16> to vector<1x4x16x8xbf16>
    %51 = tpu.concatenate %47, %48, %49, %50 in 0 : vector<1x4x16x8xbf16>, vector<1x4x16x8xbf16>, vector<1x4x16x8xbf16>, vector<1x4x16x8xbf16> -> vector<4x4x16x8xbf16>
    %52 = vector.shape_cast %51 : vector<4x4x16x8xbf16> to vector<16x16x8xbf16>
    %53 = vector.extract_strided_slice %38 {offsets = [0, 32], sizes = [64, 8], strides = [1, 1]} : vector<64x96xbf16> to vector<64x8xbf16>
    %54 = vector.shape_cast %53 : vector<64x8xbf16> to vector<4x16x8xbf16>
    %55 = vector.extract_strided_slice %38 {offsets = [0, 40], sizes = [64, 8], strides = [1, 1]} : vector<64x96xbf16> to vector<64x8xbf16>
    %56 = vector.shape_cast %55 : vector<64x8xbf16> to vector<4x16x8xbf16>
    %57 = vector.extract_strided_slice %38 {offsets = [0, 48], sizes = [64, 8], strides = [1, 1]} : vector<64x96xbf16> to vector<64x8xbf16>
    %58 = vector.shape_cast %57 : vector<64x8xbf16> to vector<4x16x8xbf16>
    %59 = vector.extract_strided_slice %38 {offsets = [0, 56], sizes = [64, 8], strides = [1, 1]} : vector<64x96xbf16> to vector<64x8xbf16>
    %60 = vector.shape_cast %59 : vector<64x8xbf16> to vector<4x16x8xbf16>
    %61 = vector.shape_cast %54 : vector<4x16x8xbf16> to vector<1x4x16x8xbf16>
    %62 = vector.shape_cast %56 : vector<4x16x8xbf16> to vector<1x4x16x8xbf16>
    %63 = vector.shape_cast %58 : vector<4x16x8xbf16> to vector<1x4x16x8xbf16>
    %64 = vector.shape_cast %60 : vector<4x16x8xbf16> to vector<1x4x16x8xbf16>
    %65 = tpu.concatenate %61, %62, %63, %64 in 0 : vector<1x4x16x8xbf16>, vector<1x4x16x8xbf16>, vector<1x4x16x8xbf16>, vector<1x4x16x8xbf16> -> vector<4x4x16x8xbf16>
    %66 = vector.shape_cast %65 : vector<4x4x16x8xbf16> to vector<16x16x8xbf16>
    %67 = vector.extract_strided_slice %38 {offsets = [0, 64], sizes = [64, 8], strides = [1, 1]} : vector<64x96xbf16> to vector<64x8xbf16>
    %68 = vector.shape_cast %67 : vector<64x8xbf16> to vector<4x16x8xbf16>
    %69 = vector.extract_strided_slice %38 {offsets = [0, 72], sizes = [64, 8], strides = [1, 1]} : vector<64x96xbf16> to vector<64x8xbf16>
    %70 = vector.shape_cast %69 : vector<64x8xbf16> to vector<4x16x8xbf16>
    %71 = vector.extract_strided_slice %38 {offsets = [0, 80], sizes = [64, 8], strides = [1, 1]} : vector<64x96xbf16> to vector<64x8xbf16>
    %72 = vector.shape_cast %71 : vector<64x8xbf16> to vector<4x16x8xbf16>
    %73 = vector.extract_strided_slice %38 {offsets = [0, 88], sizes = [64, 8], strides = [1, 1]} : vector<64x96xbf16> to vector<64x8xbf16>
    %74 = vector.shape_cast %73 : vector<64x8xbf16> to vector<4x16x8xbf16>
    %75 = vector.shape_cast %68 : vector<4x16x8xbf16> to vector<1x4x16x8xbf16>
    %76 = vector.shape_cast %70 : vector<4x16x8xbf16> to vector<1x4x16x8xbf16>
    %77 = vector.shape_cast %72 : vector<4x16x8xbf16> to vector<1x4x16x8xbf16>
    %78 = vector.shape_cast %74 : vector<4x16x8xbf16> to vector<1x4x16x8xbf16>
    %79 = tpu.concatenate %75, %76, %77, %78 in 0 : vector<1x4x16x8xbf16>, vector<1x4x16x8xbf16>, vector<1x4x16x8xbf16>, vector<1x4x16x8xbf16> -> vector<4x4x16x8xbf16>
    %80 = vector.shape_cast %79 : vector<4x4x16x8xbf16> to vector<16x16x8xbf16>
    "tpu.trace_start"() <{level = 10 : i32, message = "bqd,bkd->bqk"}> : () -> ()
    %cst_27 = arith.constant dense<0.000000e+00> : vector<16x16x16xf32>
    %81 = tpu.matmul %52, %66, %cst_27 {dimension_numbers = #tpu.dot_dimension_numbers<[2], [2], [1], [1], [0, 0, 0, 1, 1, 1], [0], [0]>} : vector<16x16x8xbf16>, vector<16x16x8xbf16>, vector<16x16x16xf32> -> vector<16x16x16xf32>
    "tpu.trace_stop"() : () -> ()
    %82 = vector.shape_cast %81 : vector<16x16x16xf32> to vector<4x4x16x16xf32>
    %83 = vector.shape_cast %2 : vector<4x16x16xf32> to vector<4x1x16x16xf32>
    %84 = vector.broadcast %83 : vector<4x1x16x16xf32> to vector<4x4x16x16xf32>
    %85 = arith.addf %82, %84 : vector<4x4x16x16xf32>
    %c0_28 = arith.constant 0 : index
    %c0_29 = arith.constant 0 : index
    %c0_30 = arith.constant 0 : index
    %86 = vector.load %arg3[%c0_28, %c0_29, %c0_30] : memref<4x16x16xbf16, #tpu.memory_space<vmem>>, vector<4x16x16xbf16>
    %87 = arith.extf %86 : vector<4x16x16xbf16> to vector<4x16x16xf32>
    %88 = vector.shape_cast %87 : vector<4x16x16xf32> to vector<1x4x16x16xf32>
    %89 = vector.broadcast %88 : vector<1x4x16x16xf32> to vector<4x4x16x16xf32>
    %90 = arith.addf %85, %89 : vector<4x4x16x16xf32>
    %91 = vector.shape_cast %90 : vector<4x4x16x16xf32> to vector<16x16x16xf32>
    %cst_31 = arith.constant dense<0xFF800000> : vector<16x16xf32>
    %92 = vector.multi_reduction <maximumf>, %91, %cst_31 [2] : vector<16x16x16xf32> to vector<16x16xf32>
    %93 = vector.shape_cast %92 : vector<16x16xf32> to vector<16x16x1xf32>
    %94 = vector.broadcast %93 : vector<16x16x1xf32> to vector<16x16x16xf32>
    %95 = arith.subf %91, %94 : vector<16x16x16xf32>
    %96 = math.exp %95 : vector<16x16x16xf32>
    %cst_32 = arith.constant dense<0.000000e+00> : vector<16x16xf32>
    %97 = vector.multi_reduction <add>, %96, %cst_32 [2] : vector<16x16x16xf32> to vector<16x16xf32>
    %98 = vector.shape_cast %97 : vector<16x16xf32> to vector<16x16x1xf32>
    %99 = tpu.reciprocal %98 {approx = true} : vector<16x16x1xf32> -> vector<16x16x1xf32>
    %100 = vector.broadcast %99 : vector<16x16x1xf32> to vector<16x16x16xf32>
    %101 = arith.mulf %96, %100 : vector<16x16x16xf32>
    %102 = arith.truncf %101 : vector<16x16x16xf32> to vector<16x16x16xbf16>
    "tpu.trace_start"() <{level = 10 : i32, message = "bqk,bkd->bqd"}> : () -> ()
    %cst_33 = arith.constant dense<0.000000e+00> : vector<16x16x8xf32>
    %103 = tpu.matmul %102, %80, %cst_33 {dimension_numbers = #tpu.dot_dimension_numbers<[2], [1], [1], [2], [0, 0, 0, 1, 1, 2], [0], [0]>} : vector<16x16x16xbf16>, vector<16x16x8xbf16>, vector<16x16x8xf32> -> vector<16x16x8xf32>
    "tpu.trace_stop"() : () -> ()
    %104 = vector.shape_cast %103 : vector<16x16x8xf32> to vector<4x4x16x8xf32>
    %105 = vector.extract_strided_slice %104 {offsets = [0, 0, 0, 0], sizes = [1, 4, 16, 8], strides = [1, 1, 1, 1]} : vector<4x4x16x8xf32> to vector<1x4x16x8xf32>
    %106 = vector.shape_cast %105 : vector<1x4x16x8xf32> to vector<4x16x8xf32>
    %107 = vector.extract_strided_slice %104 {offsets = [1, 0, 0, 0], sizes = [1, 4, 16, 8], strides = [1, 1, 1, 1]} : vector<4x4x16x8xf32> to vector<1x4x16x8xf32>
    %108 = vector.shape_cast %107 : vector<1x4x16x8xf32> to vector<4x16x8xf32>
    %109 = vector.extract_strided_slice %104 {offsets = [2, 0, 0, 0], sizes = [1, 4, 16, 8], strides = [1, 1, 1, 1]} : vector<4x4x16x8xf32> to vector<1x4x16x8xf32>
    %110 = vector.shape_cast %109 : vector<1x4x16x8xf32> to vector<4x16x8xf32>
    %111 = vector.extract_strided_slice %104 {offsets = [3, 0, 0, 0], sizes = [1, 4, 16, 8], strides = [1, 1, 1, 1]} : vector<4x4x16x8xf32> to vector<1x4x16x8xf32>
    %112 = vector.shape_cast %111 : vector<1x4x16x8xf32> to vector<4x16x8xf32>
    %113 = tpu.concatenate %106, %108, %110, %112 in 2 : vector<4x16x8xf32>, vector<4x16x8xf32>, vector<4x16x8xf32>, vector<4x16x8xf32> -> vector<4x16x32xf32>
    %114 = vector.shape_cast %113 : vector<4x16x32xf32> to vector<64x32xf32>
    %115 = arith.truncf %114 : vector<64x32xf32> to vector<64x32xbf16>
    %c0_34 = arith.constant 0 : index
    %c0_35 = arith.constant 0 : index
    %116 = vector.load %arg8[%c0_34, %c0_35] : memref<32x32xbf16, #tpu.memory_space<vmem>>, vector<32x32xbf16>
    %cst_36 = arith.constant dense<0.000000e+00> : vector<64x32xf32>
    %117 = tpu.matmul %115, %116, %cst_36 {dimension_numbers = #tpu.dot_dimension_numbers<[1], [0], [0], [1], [0, 0, 1, 1], [], []>} : vector<64x32xbf16>, vector<32x32xbf16>, vector<64x32xf32> -> vector<64x32xf32>
    %118 = vector.broadcast %8 : vector<1x32xf32> to vector<64x32xf32>
    %119 = arith.addf %117, %118 : vector<64x32xf32>
    %120 = arith.addf %0, %119 : vector<64x32xf32>
    %cst_37 = arith.constant dense<0.000000e+00> : vector<64xf32>
    %121 = vector.multi_reduction <add>, %120, %cst_37 [1] : vector<64x32xf32> to vector<64xf32>
    %122 = vector.shape_cast %121 : vector<64xf32> to vector<64x1xf32>
    %cst_38 = arith.constant 3.200000e+01 : f32
    %123 = vector.broadcast %cst_38 : f32 to vector<64x1xf32>
    %124 = arith.divf %122, %123 : vector<64x1xf32>
    %125 = vector.broadcast %124 : vector<64x1xf32> to vector<64x32xf32>
    %126 = arith.subf %120, %125 : vector<64x32xf32>
    %127 = arith.mulf %126, %126 : vector<64x32xf32>
    %cst_39 = arith.constant dense<0.000000e+00> : vector<64xf32>
    %128 = vector.multi_reduction <add>, %127, %cst_39 [1] : vector<64x32xf32> to vector<64xf32>
    %129 = vector.shape_cast %128 : vector<64xf32> to vector<64x1xf32>
    %cst_40 = arith.constant 3.200000e+01 : f32
    %130 = vector.broadcast %cst_40 : f32 to vector<64x1xf32>
    %131 = arith.divf %129, %130 : vector<64x1xf32>
    %132 = vector.broadcast %124 : vector<64x1xf32> to vector<64x32xf32>
    %133 = arith.subf %120, %132 : vector<64x32xf32>
    %cst_41 = arith.constant 9.99999974E-6 : f32
    %134 = vector.broadcast %cst_41 : f32 to vector<64x1xf32>
    %135 = arith.addf %131, %134 : vector<64x1xf32>
    %136 = math.rsqrt %135 : vector<64x1xf32>
    %137 = vector.broadcast %136 : vector<64x1xf32> to vector<64x32xf32>
    %138 = arith.mulf %133, %137 : vector<64x32xf32>
    %139 = vector.broadcast %5 : vector<1x32xf32> to vector<64x32xf32>
    %140 = arith.mulf %138, %139 : vector<64x32xf32>
    %141 = vector.broadcast %6 : vector<1x32xf32> to vector<64x32xf32>
    %142 = arith.addf %140, %141 : vector<64x32xf32>
    %143 = arith.truncf %142 : vector<64x32xf32> to vector<64x32xbf16>
    %c0_42 = arith.constant 0 : index
    %c0_43 = arith.constant 0 : index
    %144 = vector.load %arg12[%c0_42, %c0_43] : memref<32x64xbf16, #tpu.memory_space<vmem>>, vector<32x64xbf16>
    %cst_44 = arith.constant dense<0.000000e+00> : vector<64x64xf32>
    %145 = tpu.matmul %143, %144, %cst_44 {dimension_numbers = #tpu.dot_dimension_numbers<[1], [0], [0], [1], [0, 0, 1, 1], [], []>} : vector<64x32xbf16>, vector<32x64xbf16>, vector<64x64xf32> -> vector<64x64xf32>
    %146 = vector.broadcast %9 : vector<1x64xf32> to vector<64x64xf32>
    %147 = arith.addf %145, %146 : vector<64x64xf32>
    %cst_45 = arith.constant 5.000000e-01 : f32
    %148 = vector.broadcast %cst_45 : f32 to vector<64x64xf32>
    %149 = arith.mulf %148, %147 : vector<64x64xf32>
    %cst_46 = arith.constant 4.471500e-02 : f32
    %150 = vector.broadcast %cst_46 : f32 to vector<64x64xf32>
    %151 = arith.mulf %150, %147 : vector<64x64xf32>
    %152 = arith.mulf %151, %147 : vector<64x64xf32>
    %153 = arith.mulf %152, %147 : vector<64x64xf32>
    %154 = arith.addf %147, %153 : vector<64x64xf32>
    %cst_47 = arith.constant 0.797884583 : f32
    %155 = vector.broadcast %cst_47 : f32 to vector<64x64xf32>
    %156 = arith.mulf %155, %154 : vector<64x64xf32>
    %157 = math.tanh %156 : vector<64x64xf32>
    %cst_48 = arith.constant 1.000000e+00 : f32
    %158 = vector.broadcast %cst_48 : f32 to vector<64x64xf32>
    %159 = arith.addf %158, %157 : vector<64x64xf32>
    %160 = arith.mulf %149, %159 : vector<64x64xf32>
    %161 = arith.truncf %160 : vector<64x64xf32> to vector<64x64xbf16>
    %c0_49 = arith.constant 0 : index
    %c0_50 = arith.constant 0 : index
    %162 = vector.load %arg14[%c0_49, %c0_50] : memref<64x32xbf16, #tpu.memory_space<vmem>>, vector<64x32xbf16>
    %cst_51 = arith.constant dense<0.000000e+00> : vector<64x32xf32>
    %163 = tpu.matmul %161, %162, %cst_51 {dimension_numbers = #tpu.dot_dimension_numbers<[1], [0], [0], [1], [0, 0, 1, 1], [], []>} : vector<64x64xbf16>, vector<64x32xbf16>, vector<64x32xf32> -> vector<64x32xf32>
    %164 = vector.broadcast %10 : vector<1x32xf32> to vector<64x32xf32>
    %165 = arith.addf %163, %164 : vector<64x32xf32>
    %166 = arith.addf %120, %165 : vector<64x32xf32>
    %c0_52 = arith.constant 0 : index
    %c0_53 = arith.constant 0 : index
    %167 = vector.load %arg16[%c0_52, %c0_53] : memref<64x32xf32, #tpu.memory_space<vmem>>, vector<64x32xf32>
    tpu.vector_store %arg16[%c0_52, %c0_53], %166 {strides = array<i32>} : memref<64x32xf32, #tpu.memory_space<vmem>>, vector<64x32xf32>,
    return
  }
  func.func @transform_0(%arg0: i32) -> (i32, i32) {
    %c0_i32 = arith.constant 0 : i32
    %c0_i32_0 = arith.constant 0 : i32
    return %arg0, %c0_i32 : i32, i32
  }
  func.func @transform_1(%arg0: i32) -> (i32, i32, i32) {
    %c0_i32 = arith.constant 0 : i32
    %c0_i32_0 = arith.constant 0 : i32
    %c0_i32_1 = arith.constant 0 : i32
    %c0_i32_2 = arith.constant 0 : i32
    return %c0_i32, %c0_i32_0, %c0_i32_1 : i32, i32, i32
  }
  func.func @transform_2(%arg0: i32) -> (i32, i32, i32) {
    %c0_i32 = arith.constant 0 : i32
    %c0_i32_0 = arith.constant 0 : i32
    %c0_i32_1 = arith.constant 0 : i32
    %c0_i32_2 = arith.constant 0 : i32
    return %c0_i32, %c0_i32_0, %c0_i32_1 : i32, i32, i32
  }
  func.func @transform_3(%arg0: i32) -> (i32, i32) {
    %c0_i32 = arith.constant 0 : i32
    %c0_i32_0 = arith.constant 0 : i32
    %c0_i32_1 = arith.constant 0 : i32
    return %c0_i32, %c0_i32_0 : i32, i32
  }
  func.func @transform_4(%arg0: i32) -> (i32, i32) {
    %c0_i32 = arith.constant 0 : i32
    %c0_i32_0 = arith.constant 0 : i32
    %c0_i32_1 = arith.constant 0 : i32
    return %c0_i32, %c0_i32_0 : i32, i32
  }
  func.func @transform_5(%arg0: i32) -> (i32, i32) {
    %c0_i32 = arith.constant 0 : i32
    %c0_i32_0 = arith.constant 0 : i32
    %c0_i32_1 = arith.constant 0 : i32
    return %c0_i32, %c0_i32_0 : i32, i32
  }
  func.func @transform_6(%arg0: i32) -> (i32, i32) {
    %c0_i32 = arith.constant 0 : i32
    %c0_i32_0 = arith.constant 0 : i32
    %c0_i32_1 = arith.constant 0 : i32
    return %c0_i32, %c0_i32_0 : i32, i32
  }
  func.func @transform_7(%arg0: i32) -> (i32, i32) {
    %c0_i32 = arith.constant 0 : i32
    %c0_i32_0 = arith.constant 0 : i32
    %c0_i32_1 = arith.constant 0 : i32
    return %c0_i32, %c0_i32_0 : i32, i32
  }
  func.func @transform_8(%arg0: i32) -> (i32, i32) {
    %c0_i32 = arith.constant 0 : i32
    %c0_i32_0 = arith.constant 0 : i32
    %c0_i32_1 = arith.constant 0 : i32
    return %c0_i32, %c0_i32_0 : i32, i32
  }
  func.func @transform_9(%arg0: i32) -> (i32, i32) {
    %c0_i32 = arith.constant 0 : i32
    %c0_i32_0 = arith.constant 0 : i32
    %c0_i32_1 = arith.constant 0 : i32
    return %c0_i32, %c0_i32_0 : i32, i32
  }
  func.func @transform_10(%arg0: i32) -> (i32, i32) {
    %c0_i32 = arith.constant 0 : i32
    %c0_i32_0 = arith.constant 0 : i32
    %c0_i32_1 = arith.constant 0 : i32
    return %c0_i32, %c0_i32_0 : i32, i32
  }
  func.func @transform_11(%arg0: i32) -> (i32, i32) {
    %c0_i32 = arith.constant 0 : i32
    %c0_i32_0 = arith.constant 0 : i32
    %c0_i32_1 = arith.constant 0 : i32
    return %c0_i32, %c0_i32_0 : i32, i32
  }
  func.func @transform_12(%arg0: i32) -> (i32, i32) {
    %c0_i32 = arith.constant 0 : i32
    %c0_i32_0 = arith.constant 0 : i32
    %c0_i32_1 = arith.constant 0 : i32
    return %c0_i32, %c0_i32_0 : i32, i32
  }
  func.func @transform_13(%arg0: i32) -> (i32, i32) {
    %c0_i32 = arith.constant 0 : i32
    %c0_i32_0 = arith.constant 0 : i32
    %c0_i32_1 = arith.constant 0 : i32
    return %c0_i32, %c0_i32_0 : i32, i32
  }
  func.func @transform_14(%arg0: i32) -> (i32, i32) {
    %c0_i32 = arith.constant 0 : i32
    %c0_i32_0 = arith.constant 0 : i32
    %c0_i32_1 = arith.constant 0 : i32
    return %c0_i32, %c0_i32_0 : i32, i32
  }
  func.func @transform_15(%arg0: i32) -> (i32, i32) {
    %c0_i32 = arith.constant 0 : i32
    %c0_i32_0 = arith.constant 0 : i32
    return %arg0, %c0_i32 : i32, i32
  }
}

</mosaic_0001>

<llo_original>
// kernel: sub.19
$region0: #{sub.19}
  %s0 = inlined_call_operand.vmem [shape: s32[2,4,4], index: 0, kind: input, shape index: {}]
  %s1 = inlined_call_operand.vmem [shape: s32[2,16], index: 1, kind: output, shape index: {}]
  $region1: #{sub.19} parent=0
    #allocation0 [shape = 'u8[4096]{0}', space=vmem, size = 0x1000, scoped, tag = 'scoped mem for output reshape']
    #allocation1 [shape = 'u8[8192]{0}', space=vmem, size = 0x2000, scoped, tag = 'scoped mem for input reshape']
    %s3 = sshllo.u32 0, 4
    %s4 = scalar_lea.vmem %s0, 4
    %v5 = vld [vmem:[%s4] sm:%s3]
    %s6 = scalar_lea.vmem [#allocation1], 8
    %7 = vst [vmem:[%s6] sm:%s3] %v5
    %v8 = vld [vmem:[%s0] sm:%s3]
    %9 = vst [vmem:[#allocation1] sm:%s3] %v8
    %s10 = smov 3
    %v11 = vld [vmem:[#allocation1] ss:$8 sm:%s10]
    %vm12 = vcmask 31744
    %13 = vst.msk [vmem:[#allocation0] sm:$0x3] %vm12, %v11
    %s14 = scalar_lea.vmem [#allocation1], 3
    %s15 = smov 3
    %v16 = vld [vmem:[%s14] ss:$8 sm:%s15]
    %17 = vrot.lane.b32.xlu0 %v16, 12
    %v18 = vpop.permute.xlu0 %17
    %vm19 = vcmask 130144
    %20 = vst.msk [vmem:[#allocation0] sm:$0x3] %vm19, %v18
    %s21 = scalar_lea.vmem [#allocation1], 2
    %s22 = smov 3
    %v23 = vld [vmem:[%s21] ss:$8 sm:%s22]
    %24 = vrot.lane.b32.xlu0 %v23, 8
    %v25 = vpop.permute.xlu0 %24
    %vm26 = vcmask 97344
    %27 = vst.msk [vmem:[#allocation0] sm:$0x3] %vm26, %v25
    %s28 = scalar_lea.vmem [#allocation1], 1
    %s29 = smov 3
    %v30 = vld [vmem:[%s28] ss:$8 sm:%s29]
    %31 = vrot.lane.b32.xlu0 %v30, 4
    %v32 = vpop.permute.xlu0 %31
    %vm33 = vcmask 64544
    %34 = vst.msk [vmem:[#allocation0] sm:$0x3] %vm33, %v32
    %s36 = sshllo.u32 0, 2
    %v38 = vld [vmem:[#allocation0] sm:%s36]
    %s39 = sshllo.u32 0, 2
    %40 = vst [vmem:[%s1] sm:%s39] %v38

// kernel: ne.22
$region0: #{ne.22}
  %s0 = inlined_call_operand.vmem [shape: s32[64], index: 0, kind: input, shape index: {}]
  %s1 = inlined_call_operand.vmem [shape: s32[4,16], index: 1, kind: output, shape index: {}]
  $region1: #{ne.22} parent=0
    #allocation0 [shape = 'u8[4096]{0}', space=vmem, size = 0x1000, scoped, tag = 'scoped mem for output reshape']
    #allocation1 [shape = 'u8[4096]{0}', space=vmem, size = 0x1000, scoped, tag = 'scoped mem for input reshape']
    %s3 = sshllo.u32 0, 1
    %v4 = vld [vmem:[%s0] sm:%s3]
    %5 = vst [vmem:[#allocation1] sm:%s3] %v4
    %v6 = vld [vmem:[#allocation1] sm:$0x1]
    %vm7 = vcmask 130048
    %8 = vst.msk [vmem:[#allocation0] sm:$0x1] %vm7, %v6
    %v9 = vld [vmem:[#allocation1] sm:$0x1]
    %10 = vrot.lane.b32.xlu0 %v9, 112
    %v11 = vpop.permute.xlu0 %10
    %vm12 = vcmask 130048
    %s13 = scalar_lea.vmem [#allocation0], 1
    %14 = vst.msk [vmem:[%s13] sm:$0x1] %vm12, %v11
    %v15 = vld [vmem:[#allocation1] sm:$0x1]
    %16 = vrot.lane.b32.xlu0 %v15, 96
    %v17 = vpop.permute.xlu0 %16
    %vm18 = vcmask 130048
    %s19 = scalar_lea.vmem [#allocation0], 2
    %20 = vst.msk [vmem:[%s19] sm:$0x1] %vm18, %v17
    %v21 = vld [vmem:[#allocation1] sm:$0x1]
    %22 = vrot.lane.b32.xlu0 %v21, 80
    %v23 = vpop.permute.xlu0 %22
    %vm24 = vcmask 130048
    %s25 = scalar_lea.vmem [#allocation0], 3
    %26 = vst.msk [vmem:[%s25] sm:$0x1] %vm24, %v23
    %s28 = sshllo.u32 0, 4
    %v30 = vld [vmem:[#allocation0] sm:%s28]
    %s31 = sshllo.u32 0, 4
    %32 = vst [vmem:[%s1] sm:%s31] %v30

// kernel: _lambda_.2
$region0: #{_lambda_.2}
  #allocation0 [shape = 'u32[]', space=smem, size = 0x4, offset = 0x4, fixed_abs, tag = 'smem constant byte address 0x4 - core index']
  #allocation1 [shape = 'u32[144,128]{1,0:T(1,128)}', space=vmem, size = 0x12000, scoped, tag = 'internal scratch']
  %s0 = inlined_call_operand.vmem [shape: f32[128,32], index: 0, kind: input, shape index: {}]
  %s1 = inlined_call_operand.vmem [shape: bf16[4,16,16], index: 1, kind: input, shape index: {}]
  %s2 = inlined_call_operand.vmem [shape: f32[1,32], index: 2, kind: input, shape index: {}, may-alias: {2,8}]
  %s3 = inlined_call_operand.vmem [shape: f32[1,32], index: 3, kind: input, shape index: {}, may-alias: {3,9,13}]
  %s4 = inlined_call_operand.vmem [shape: bf16[32,96], index: 4, kind: input, shape index: {}]
  %s5 = inlined_call_operand.vmem [shape: f32[1,96], index: 5, kind: input, shape index: {}]
  %s6 = inlined_call_operand.vmem [shape: bf16[32,32], index: 6, kind: input, shape index: {}]
  %s7 = inlined_call_operand.vmem [shape: f32[1,32], index: 7, kind: input, shape index: {}]
  %s8 = inlined_call_operand.vmem [shape: f32[1,32], index: 8, kind: input, shape index: {}, may-alias: {2,8}]
  %s9 = inlined_call_operand.vmem [shape: f32[1,32], index: 9, kind: input, shape index: {}, may-alias: {3,9,13}]
  %s10 = inlined_call_operand.vmem [shape: bf16[32,64], index: 10, kind: input, shape index: {}]
  %s11 = inlined_call_operand.vmem [shape: f32[1,64], index: 11, kind: input, shape index: {}]
  %s12 = inlined_call_operand.vmem [shape: bf16[64,32], index: 12, kind: input, shape index: {}]
  %s13 = inlined_call_operand.vmem [shape: f32[1,32], index: 13, kind: input, shape index: {}, may-alias: {3,9,13}]
  %s14 = inlined_call_operand.vmem [shape: f32[128,32], index: 14, kind: output, shape index: {}]
  %s15 = sld [smem:[#allocation0]]
  $region89: #{_lambda_.2} parent=0
    _
  %s17 = ssub.s32 1, %s15
  %s18 = scalar_select 0, %s17, %s15
  loop: start=0, step=1, limit=4
  $region2: #{_lambda_.2} parent=0 // loop_pre_header
    _
  $region3: #{_lambda_.2} parent=0 // loop_header
    %s20 = sphi 0, %s24
    %p21 = scmp.ge.s32.totalorder %s20, 4
    %s30 = sphi 0, %s32
    %s33 = sphi 0, %s30
    %s34 = sphi 0, %s33
    %s50 = sphi 0, %s34
    %s54 = sphi 0, %s54
    %s56 = sphi 0, %s54
    %s57 = sphi 0, %s56
    %s71 = sphi 0, %s57
    %s75 = sphi 0, %s75
    %s77 = sphi 0, %s75
    %s78 = sphi 0, %s77
    %s92 = sphi 0, %s78
    %s96 = sphi 0, %s96
    %s98 = sphi 0, %s96
    %s99 = sphi 0, %s98
    %s113 = sphi 0, %s99
    %s117 = sphi 0, %s117
    %s119 = sphi 0, %s117
    %s120 = sphi 0, %s119
    %s134 = sphi 0, %s120
    %s138 = sphi 0, %s138
    %s140 = sphi 0, %s138
    %s141 = sphi 0, %s140
    %s155 = sphi 0, %s141
    %s159 = sphi 0, %s159
    %s161 = sphi 0, %s159
    %s162 = sphi 0, %s161
    %s176 = sphi 0, %s162
    %s180 = sphi 0, %s180
    %s182 = sphi 0, %s180
    %s183 = sphi 0, %s182
    %s197 = sphi 0, %s183
    %s201 = sphi 0, %s201
    %s203 = sphi 0, %s201
    %s204 = sphi 0, %s203
    %s218 = sphi 0, %s204
    %s222 = sphi 0, %s222
    %s224 = sphi 0, %s222
    %s225 = sphi 0, %s224
    %s239 = sphi 0, %s225
    %s243 = sphi 0, %s243
    %s245 = sphi 0, %s243
    %s246 = sphi 0, %s245
    %s260 = sphi 0, %s246
    %s264 = sphi 0, %s264
    %s266 = sphi 0, %s264
    %s267 = sphi 0, %s266
    %s281 = sphi 0, %s267
    %s285 = sphi 0, %s285
    %s287 = sphi 0, %s285
    %s288 = sphi 0, %s287
    %s302 = sphi 0, %s288
    %s306 = sphi 0, %s306
    %s308 = sphi 0, %s306
    %s309 = sphi 0, %s308
    %s323 = sphi 0, %s309
    %s329 = sphi 0, %s331
    %s332 = sphi 0, %s329
    %s333 = sphi 0, %s332
    %s349 = sphi 0, %s333
  $region4: #{_lambda_.2} parent=0 // loop_header_branch
    %23 = sbr.rel (%p21) target = $region8
  $region5: #{_lambda_.2} parent=0 // loop_body
    %s25 = ssub.s32 %s20, 1
    %s26 = ssub.s32 %s20, 2
    %s27 = sadd.s32 %s20, 1
    %s28 = ssub.s32 %s20, %s27
    %p29 = scmp.eq.s32.totalorder %s28, 0
    %s31 = sadd.s32 %s30, 1
    %s32 = scalar_select %p29, %s30, %s31
    %p35 = pneg %p29
    %p36 = scmp.eq.s32.totalorder %s20, 1
    %p37 = por %p35, %p36
    %p38 = scmp.ne.s32.totalorder %s30, %s33
    %p39 = scmp.eq.s32.totalorder %s20, 0
    %p40 = por %p38, %p39
    %p41 = scmp.ne.s32.totalorder %s30, %s33
    %p42 = scmp.eq.s32.totalorder %s25, 1
    %p43 = por %p41, %p42
    %p44 = scmp.ne.s32.totalorder %s33, %s34
    %p45 = scmp.eq.s32.totalorder %s25, 0
    %p46 = por %p44, %p45
    %p47 = scmp.ne.s32.totalorder %s33, %s34
    %p48 = scmp.eq.s32.totalorder %s26, 1
    %p49 = por %p47, %p48
    %p51 = scmp.ne.s32.totalorder %s34, %s50
    %p52 = scmp.eq.s32.totalorder %s26, 0
    %p53 = por %p51, %p52
    %s55 = sadd.s32 %s54, 1
    %p58 = scmp.eq.s32.totalorder %s20, 1
    %p59 = scmp.ne.s32.totalorder %s54, %s56
    %p60 = scmp.eq.s32.totalorder %s20, 0
    %p61 = por %p59, %p60
    %p62 = scmp.ne.s32.totalorder %s54, %s56
    %p63 = scmp.eq.s32.totalorder %s25, 1
    %p64 = por %p62, %p63
    %p65 = scmp.ne.s32.totalorder %s56, %s57
    %p66 = scmp.eq.s32.totalorder %s25, 0
    %p67 = por %p65, %p66
    %p68 = scmp.ne.s32.totalorder %s56, %s57
    %p69 = scmp.eq.s32.totalorder %s26, 1
    %p70 = por %p68, %p69
    %p72 = scmp.ne.s32.totalorder %s57, %s71
    %p73 = scmp.eq.s32.totalorder %s26, 0
    %p74 = por %p72, %p73
    %s76 = sadd.s32 %s75, 1
    %p79 = scmp.eq.s32.totalorder %s20, 1
    %p80 = scmp.ne.s32.totalorder %s75, %s77
    %p81 = scmp.eq.s32.totalorder %s20, 0
    %p82 = por %p80, %p81
    %p83 = scmp.ne.s32.totalorder %s75, %s77
    %p84 = scmp.eq.s32.totalorder %s25, 1
    %p85 = por %p83, %p84
    %p86 = scmp.ne.s32.totalorder %s77, %s78
    %p87 = scmp.eq.s32.totalorder %s25, 0
    %p88 = por %p86, %p87
    %p89 = scmp.ne.s32.totalorder %s77, %s78
    %p90 = scmp.eq.s32.totalorder %s26, 1
    %p91 = por %p89, %p90
    %p93 = scmp.ne.s32.totalorder %s78, %s92
    %p94 = scmp.eq.s32.totalorder %s26, 0
    %p95 = por %p93, %p94
    %s97 = sadd.s32 %s96, 1
    %p100 = scmp.eq.s32.totalorder %s20, 1
    %p101 = scmp.ne.s32.totalorder %s96, %s98
    %p102 = scmp.eq.s32.totalorder %s20, 0
    %p103 = por %p101, %p102
    %p104 = scmp.ne.s32.totalorder %s96, %s98
    %p105 = scmp.eq.s32.totalorder %s25, 1
    %p106 = por %p104, %p105
    %p107 = scmp.ne.s32.totalorder %s98, %s99
    %p108 = scmp.eq.s32.totalorder %s25, 0
    %p109 = por %p107, %p108
    %p110 = scmp.ne.s32.totalorder %s98, %s99
    %p111 = scmp.eq.s32.totalorder %s26, 1
    %p112 = por %p110, %p111
    %p114 = scmp.ne.s32.totalorder %s99, %s113
    %p115 = scmp.eq.s32.totalorder %s26, 0
    %p116 = por %p114, %p115
    %s118 = sadd.s32 %s117, 1
    %p121 = scmp.eq.s32.totalorder %s20, 1
    %p122 = scmp.ne.s32.totalorder %s117, %s119
    %p123 = scmp.eq.s32.totalorder %s20, 0
    %p124 = por %p122, %p123
    %p125 = scmp.ne.s32.totalorder %s117, %s119
    %p126 = scmp.eq.s32.totalorder %s25, 1
    %p127 = por %p125, %p126
    %p128 = scmp.ne.s32.totalorder %s119, %s120
    %p129 = scmp.eq.s32.totalorder %s25, 0
    %p130 = por %p128, %p129
    %p131 = scmp.ne.s32.totalorder %s119, %s120
    %p132 = scmp.eq.s32.totalorder %s26, 1
    %p133 = por %p131, %p132
    %p135 = scmp.ne.s32.totalorder %s120, %s134
    %p136 = scmp.eq.s32.totalorder %s26, 0
    %p137 = por %p135, %p136
    %s139 = sadd.s32 %s138, 1
    %p142 = scmp.eq.s32.totalorder %s20, 1
    %p143 = scmp.ne.s32.totalorder %s138, %s140
    %p144 = scmp.eq.s32.totalorder %s20, 0
    %p145 = por %p143, %p144
    %p146 = scmp.ne.s32.totalorder %s138, %s140
    %p147 = scmp.eq.s32.totalorder %s25, 1
    %p148 = por %p146, %p147
    %p149 = scmp.ne.s32.totalorder %s140, %s141
    %p150 = scmp.eq.s32.totalorder %s25, 0
    %p151 = por %p149, %p150
    %p152 = scmp.ne.s32.totalorder %s140, %s141
    %p153 = scmp.eq.s32.totalorder %s26, 1
    %p154 = por %p152, %p153
    %p156 = scmp.ne.s32.totalorder %s141, %s155
    %p157 = scmp.eq.s32.totalorder %s26, 0
    %p158 = por %p156, %p157
    %s160 = sadd.s32 %s159, 1
    %p163 = scmp.eq.s32.totalorder %s20, 1
    %p164 = scmp.ne.s32.totalorder %s159, %s161
    %p165 = scmp.eq.s32.totalorder %s20, 0
    %p166 = por %p164, %p165
    %p167 = scmp.ne.s32.totalorder %s159, %s161
    %p168 = scmp.eq.s32.totalorder %s25, 1
    %p169 = por %p167, %p168
    %p170 = scmp.ne.s32.totalorder %s161, %s162
    %p171 = scmp.eq.s32.totalorder %s25, 0
    %p172 = por %p170, %p171
    %p173 = scmp.ne.s32.totalorder %s161, %s162
    %p174 = scmp.eq.s32.totalorder %s26, 1
    %p175 = por %p173, %p174
    %p177 = scmp.ne.s32.totalorder %s162, %s176
    %p178 = scmp.eq.s32.totalorder %s26, 0
    %p179 = por %p177, %p178
    %s181 = sadd.s32 %s180, 1
    %p184 = scmp.eq.s32.totalorder %s20, 1
    %p185 = scmp.ne.s32.totalorder %s180, %s182
    %p186 = scmp.eq.s32.totalorder %s20, 0
    %p187 = por %p185, %p186
    %p188 = scmp.ne.s32.totalorder %s180, %s182
    %p189 = scmp.eq.s32.totalorder %s25, 1
    %p190 = por %p188, %p189
    %p191 = scmp.ne.s32.totalorder %s182, %s183
    %p192 = scmp.eq.s32.totalorder %s25, 0
    %p193 = por %p191, %p192
    %p194 = scmp.ne.s32.totalorder %s182, %s183
    %p195 = scmp.eq.s32.totalorder %s26, 1
    %p196 = por %p194, %p195
    %p198 = scmp.ne.s32.totalorder %s183, %s197
    %p199 = scmp.eq.s32.totalorder %s26, 0
    %p200 = por %p198, %p199
    %s202 = sadd.s32 %s201, 1
    %p205 = scmp.eq.s32.totalorder %s20, 1
    %p206 = scmp.ne.s32.totalorder %s201, %s203
    %p207 = scmp.eq.s32.totalorder %s20, 0
    %p208 = por %p206, %p207
    %p209 = scmp.ne.s32.totalorder %s201, %s203
    %p210 = scmp.eq.s32.totalorder %s25, 1
    %p211 = por %p209, %p210
    %p212 = scmp.ne.s32.totalorder %s203, %s204
    %p213 = scmp.eq.s32.totalorder %s25, 0
    %p214 = por %p212, %p213
    %p215 = scmp.ne.s32.totalorder %s203, %s204
    %p216 = scmp.eq.s32.totalorder %s26, 1
    %p217 = por %p215, %p216
    %p219 = scmp.ne.s32.totalorder %s204, %s218
    %p220 = scmp.eq.s32.totalorder %s26, 0
    %p221 = por %p219, %p220
    %s223 = sadd.s32 %s222, 1
    %p226 = scmp.eq.s32.totalorder %s20, 1
    %p227 = scmp.ne.s32.totalorder %s222, %s224
    %p228 = scmp.eq.s32.totalorder %s20, 0
    %p229 = por %p227, %p228
    %p230 = scmp.ne.s32.totalorder %s222, %s224
    %p231 = scmp.eq.s32.totalorder %s25, 1
    %p232 = por %p230, %p231
    %p233 = scmp.ne.s32.totalorder %s224, %s225
    %p234 = scmp.eq.s32.totalorder %s25, 0
    %p235 = por %p233, %p234
    %p236 = scmp.ne.s32.totalorder %s224, %s225
    %p237 = scmp.eq.s32.totalorder %s26, 1
    %p238 = por %p236, %p237
    %p240 = scmp.ne.s32.totalorder %s225, %s239
    %p241 = scmp.eq.s32.totalorder %s26, 0
    %p242 = por %p240, %p241
    %s244 = sadd.s32 %s243, 1
    %p247 = scmp.eq.s32.totalorder %s20, 1
    %p248 = scmp.ne.s32.totalorder %s243, %s245
    %p249 = scmp.eq.s32.totalorder %s20, 0
    %p250 = por %p248, %p249
    %p251 = scmp.ne.s32.totalorder %s243, %s245
    %p252 = scmp.eq.s32.totalorder %s25, 1
    %p253 = por %p251, %p252
    %p254 = scmp.ne.s32.totalorder %s245, %s246
    %p255 = scmp.eq.s32.totalorder %s25, 0
    %p256 = por %p254, %p255
    %p257 = scmp.ne.s32.totalorder %s245, %s246
    %p258 = scmp.eq.s32.totalorder %s26, 1
    %p259 = por %p257, %p258
    %p261 = scmp.ne.s32.totalorder %s246, %s260
    %p262 = scmp.eq.s32.totalorder %s26, 0
    %p263 = por %p261, %p262
    %s265 = sadd.s32 %s264, 1
    %p268 = scmp.eq.s32.totalorder %s20, 1
    %p269 = scmp.ne.s32.totalorder %s264, %s266
    %p270 = scmp.eq.s32.totalorder %s20, 0
    %p271 = por %p269, %p270
    %p272 = scmp.ne.s32.totalorder %s264, %s266
    %p273 = scmp.eq.s32.totalorder %s25, 1
    %p274 = por %p272, %p273
    %p275 = scmp.ne.s32.totalorder %s266, %s267
    %p276 = scmp.eq.s32.totalorder %s25, 0
    %p277 = por %p275, %p276
    %p278 = scmp.ne.s32.totalorder %s266, %s267
    %p279 = scmp.eq.s32.totalorder %s26, 1
    %p280 = por %p278, %p279
    %p282 = scmp.ne.s32.totalorder %s267, %s281
    %p283 = scmp.eq.s32.totalorder %s26, 0
    %p284 = por %p282, %p283
    %s286 = sadd.s32 %s285, 1
    %p289 = scmp.eq.s32.totalorder %s20, 1
    %p290 = scmp.ne.s32.totalorder %s285, %s287
    %p291 = scmp.eq.s32.totalorder %s20, 0
    %p292 = por %p290, %p291
    %p293 = scmp.ne.s32.totalorder %s285, %s287
    %p294 = scmp.eq.s32.totalorder %s25, 1
    %p295 = por %p293, %p294
    %p296 = scmp.ne.s32.totalorder %s287, %s288
    %p297 = scmp.eq.s32.totalorder %s25, 0
    %p298 = por %p296, %p297
    %p299 = scmp.ne.s32.totalorder %s287, %s288
    %p300 = scmp.eq.s32.totalorder %s26, 1
    %p301 = por %p299, %p300
    %p303 = scmp.ne.s32.totalorder %s288, %s302
    %p304 = scmp.eq.s32.totalorder %s26, 0
    %p305 = por %p303, %p304
    %s307 = sadd.s32 %s306, 1
    %p310 = scmp.eq.s32.totalorder %s20, 1
    %p311 = scmp.ne.s32.totalorder %s306, %s308
    %p312 = scmp.eq.s32.totalorder %s20, 0
    %p313 = por %p311, %p312
    %p314 = scmp.ne.s32.totalorder %s306, %s308
    %p315 = scmp.eq.s32.totalorder %s25, 1
    %p316 = por %p314, %p315
    %p317 = scmp.ne.s32.totalorder %s308, %s309
    %p318 = scmp.eq.s32.totalorder %s25, 0
    %p319 = por %p317, %p318
    %p320 = scmp.ne.s32.totalorder %s308, %s309
    %p321 = scmp.eq.s32.totalorder %s26, 1
    %p322 = por %p320, %p321
    %p324 = scmp.ne.s32.totalorder %s309, %s323
    %p325 = scmp.eq.s32.totalorder %s26, 0
    %p326 = por %p324, %p325
    %s327 = ssub.s32 %s20, %s27
    %p328 = scmp.eq.s32.totalorder %s327, 0
    %s330 = sadd.s32 %s329, 1
    %s331 = scalar_select %p328, %s329, %s330
    %p334 = pneg %p328
    %p335 = scmp.eq.s32.totalorder %s20, 1
    %p336 = por %p334, %p335
    %p337 = scmp.ne.s32.totalorder %s329, %s332
    %p338 = scmp.eq.s32.totalorder %s20, 0
    %p339 = por %p337, %p338
    %p340 = scmp.ne.s32.totalorder %s329, %s332
    %p341 = scmp.eq.s32.totalorder %s25, 1
    %p342 = por %p340, %p341
    %p343 = scmp.ne.s32.totalorder %s332, %s333
    %p344 = scmp.eq.s32.totalorder %s25, 0
    %p345 = por %p343, %p344
    %p346 = scmp.ne.s32.totalorder %s332, %s333
    %p347 = scmp.eq.s32.totalorder %s26, 1
    %p348 = por %p346, %p347
    %p350 = scmp.ne.s32.totalorder %s333, %s349
    %p351 = scmp.eq.s32.totalorder %s26, 0
    %p352 = por %p350, %p351
    %p353 = scmp.le.s32.totalorder 1, %s20
    %p354 = scmp.lt.s32.totalorder %s20, 3
    %p355 = pnand %p353, %p354
    %p356 = pneg %p355
    // Predicated region
    $region9: #{_lambda_.2} parent=5 // pred_check
      _
    $region10: #{_lambda_.2} parent=5 // pred_check_branch
      %358 = sbr.rel (%p355) target = $region12
    $region11: #{_lambda_.2} parent=5 // pred_region
      %s359 = ssub.s32 %s20, 1
      // Predicated region
      $region13: #{_lambda_.2} parent=11 // pred_check
        %p360 = pneg %p67
      $region14: #{_lambda_.2} parent=11 // pred_check_branch
        %362 = sbr.rel (%p360) target = $region16
      $region15: #{_lambda_.2} parent=11 // pred_region
        _
      $region16: #{_lambda_.2} parent=11 // pred_fallthru
        _
      // Predicated region
      $region17: #{_lambda_.2} parent=11 // pred_check
        %p363 = pneg %p88
      $region18: #{_lambda_.2} parent=11 // pred_check_branch
        %365 = sbr.rel (%p363) target = $region20
      $region19: #{_lambda_.2} parent=11 // pred_region
        _
      $region20: #{_lambda_.2} parent=11 // pred_fallthru
        _
      // Predicated region
      $region21: #{_lambda_.2} parent=11 // pred_check
        %p366 = pneg %p109
      $region22: #{_lambda_.2} parent=11 // pred_check_branch
        %368 = sbr.rel (%p366) target = $region24
      $region23: #{_lambda_.2} parent=11 // pred_region
        _
      $region24: #{_lambda_.2} parent=11 // pred_fallthru
        _
      // Predicated region
      $region25: #{_lambda_.2} parent=11 // pred_check
        %p369 = pneg %p130
      $region26: #{_lambda_.2} parent=11 // pred_check_branch
        %371 = sbr.rel (%p369) target = $region28
      $region27: #{_lambda_.2} parent=11 // pred_region
        _
      $region28: #{_lambda_.2} parent=11 // pred_fallthru
        _
      // Predicated region
      $region29: #{_lambda_.2} parent=11 // pred_check
        %p372 = pneg %p151
      $region30: #{_lambda_.2} parent=11 // pred_check_branch
        %374 = sbr.rel (%p372) target = $region32
      $region31: #{_lambda_.2} parent=11 // pred_region
        _
      $region32: #{_lambda_.2} parent=11 // pred_fallthru
        _
      // Predicated region
      $region33: #{_lambda_.2} parent=11 // pred_check
        %p375 = pneg %p172
      $region34: #{_lambda_.2} parent=11 // pred_check_branch
        %377 = sbr.rel (%p375) target = $region36
      $region35: #{_lambda_.2} parent=11 // pred_region
        _
      $region36: #{_lambda_.2} parent=11 // pred_fallthru
        _
      // Predicated region
      $region37: #{_lambda_.2} parent=11 // pred_check
        %p378 = pneg %p193
      $region38: #{_lambda_.2} parent=11 // pred_check_branch
        %380 = sbr.rel (%p378) target = $region40
      $region39: #{_lambda_.2} parent=11 // pred_region
        _
      $region40: #{_lambda_.2} parent=11 // pred_fallthru
        _
      // Predicated region
      $region41: #{_lambda_.2} parent=11 // pred_check
        %p381 = pneg %p214
      $region42: #{_lambda_.2} parent=11 // pred_check_branch
        %383 = sbr.rel (%p381) target = $region44
      $region43: #{_lambda_.2} parent=11 // pred_region
        _
      $region44: #{_lambda_.2} parent=11 // pred_fallthru
        _
      // Predicated region
      $region45: #{_lambda_.2} parent=11 // pred_check
        %p384 = pneg %p235
      $region46: #{_lambda_.2} parent=11 // pred_check_branch
        %386 = sbr.rel (%p384) target = $region48
      $region47: #{_lambda_.2} parent=11 // pred_region
        _
      $region48: #{_lambda_.2} parent=11 // pred_fallthru
        _
      // Predicated region
      $region49: #{_lambda_.2} parent=11 // pred_check
        %p387 = pneg %p256
      $region50: #{_lambda_.2} parent=11 // pred_check_branch
        %389 = sbr.rel (%p387) target = $region52
      $region51: #{_lambda_.2} parent=11 // pred_region
        _
      $region52: #{_lambda_.2} parent=11 // pred_fallthru
        _
      // Predicated region
      $region53: #{_lambda_.2} parent=11 // pred_check
        %p390 = pneg %p277
      $region54: #{_lambda_.2} parent=11 // pred_check_branch
        %392 = sbr.rel (%p390) target = $region56
      $region55: #{_lambda_.2} parent=11 // pred_region
        _
      $region56: #{_lambda_.2} parent=11 // pred_fallthru
        _
      // Predicated region
      $region57: #{_lambda_.2} parent=11 // pred_check
        %p393 = pneg %p298
      $region58: #{_lambda_.2} parent=11 // pred_check_branch
        %395 = sbr.rel (%p393) target = $region60
      $region59: #{_lambda_.2} parent=11 // pred_region
        _
      $region60: #{_lambda_.2} parent=11 // pred_fallthru
        _
      // Predicated region
      $region61: #{_lambda_.2} parent=11 // pred_check
        %p396 = pneg %p319
      $region62: #{_lambda_.2} parent=11 // pred_check_branch
        %398 = sbr.rel (%p396) target = $region64
      $region63: #{_lambda_.2} parent=11 // pred_region
        _
      $region64: #{_lambda_.2} parent=11 // pred_fallthru
        _
    $region12: #{_lambda_.2} parent=5 // pred_fallthru
      _
    %p399 = scmp.lt.s32.totalorder %s20, 2
    // Predicated region
    $region65: #{_lambda_.2} parent=5 // pred_check
      %p400 = pneg %p399
    $region66: #{_lambda_.2} parent=5 // pred_check_branch
      %402 = sbr.rel (%p400) target = $region68
    $region67: #{_lambda_.2} parent=5 // pred_region
      // Predicated region
      $region69: #{_lambda_.2} parent=67 // pred_check
        %p403 = pneg %p40
      $region70: #{_lambda_.2} parent=67 // pred_check_branch
        %405 = sbr.rel (%p403) target = $region72
      $region71: #{_lambda_.2} parent=67 // pred_region
        %s406 = smul.u32 8, %s20
        %p407 = scmp.lt.s32.totalorder %s406, 15
        %s408 = scalar_select %p407, %s406, 15
        %s409 = smul.addr %s408, 8
        %s410 = scalar_lea.vmem %s0, %s409
        %s411 = smul.u32 8, %s20
      $region72: #{_lambda_.2} parent=67 // pred_fallthru
        _
    $region68: #{_lambda_.2} parent=5 // pred_fallthru
      _
    %p412 = scmp.le.s32.totalorder 1, %s20
    %p413 = scmp.lt.s32.totalorder %s20, 3
    %p414 = pnand %p412, %p413
    %p415 = pneg %p414
    // Predicated region
    $region73: #{_lambda_.2} parent=5 // pred_check
      _
    $region74: #{_lambda_.2} parent=5 // pred_check_branch
      %417 = sbr.rel (%p414) target = $region76
    $region75: #{_lambda_.2} parent=5 // pred_region
      %s418 = ssub.s32 %s20, 1
      %s419 = smul.u32 8, %s25
      %p420 = scmp.lt.s32.totalorder %s419, 15
      %s421 = scalar_select %p420, %s419, 15
      %s422 = smul.addr %s421, 8
      %s423 = scalar_lea.vmem %s0, %s422
      %p424 = pneg %p46
      %p425 = pneg %p43
      %p426 = pneg %p67
      %p427 = pneg %p64
      %p428 = pneg %p88
      %p429 = pneg %p85
      %p430 = pneg %p109
      %p431 = pneg %p106
      %p432 = pneg %p130
      %p433 = pneg %p127
      %p434 = pneg %p151
      %p435 = pneg %p148
      %p436 = pneg %p172
      %p437 = pneg %p169
      %p438 = pneg %p193
      %p439 = pneg %p190
      %p440 = pneg %p214
      %p441 = pneg %p211
      %p442 = pneg %p235
      %p443 = pneg %p232
      %p444 = pneg %p256
      %p445 = pneg %p253
      %p446 = pneg %p277
      %p447 = pneg %p274
      %p448 = pneg %p298
      %p449 = pneg %p295
      %p450 = pneg %p319
      %p451 = pneg %p316
      %p452 = pneg %p345
      %p453 = pneg %p342
      %s454 = smul.u32 8, %s25
      %p455 = scmp.lt.s32.totalorder %s454, 15
      %s456 = scalar_select %p455, %s454, 15
      %s457 = smul.addr %s456, 8
      %s458 = scalar_lea.vmem %s14, %s457
      %s459 = smul.u32 8, %s25
      %p460 = scmp.lt.s32.totalorder %s459, 15
      %s461 = scalar_select %p460, %s459, 15
      %s462 = smul.addr %s461, 8
      %s463 = scalar_lea.vmem %s0, %s462
      %s464 = smul.u32 8, %s25
      %s465 = smul.u32 8, %s25
      %p466 = scmp.lt.s32.totalorder %s465, 15
      %s467 = scalar_select %p466, %s465, 15
      %s468 = smul.addr %s467, 8
      %s469 = scalar_lea.vmem %s14, %s468
      %s470 = smul.u32 8, %s25
      %v472 = vld [vmem:[%s463] sm:$0xff]
      %v473 = vld [vmem:[%s463 + $0x8] sm:$0xff]
      %v474 = vld [vmem:[%s463 + $0x10] sm:$0xff]
      %v475 = vld [vmem:[%s463 + $0x18] sm:$0xff]
      %v476 = vld [vmem:[%s463 + $0x20] sm:$0xff]
      %v477 = vld [vmem:[%s463 + $0x28] sm:$0xff]
      %v478 = vld [vmem:[%s463 + $0x30] sm:$0xff]
      %v479 = vld [vmem:[%s463 + $0x38] sm:$0xff]
      %v480 = vld [vmem:[%s1] sm:$0xf]
      %v481 = vld [vmem:[%s1 + $0x4] sm:$0xf]
      %v482 = vld [vmem:[%s1 + $0x8] sm:$0xf]
      %v483 = vld [vmem:[%s1 + $0xc] sm:$0xf]
      %v484 = vld [vmem:[%s1 + $0x10] sm:$0xf]
      %v485 = vld [vmem:[%s1 + $0x14] sm:$0xf]
      %v486 = vld [vmem:[%s1 + $0x18] sm:$0xf]
      %v487 = vld [vmem:[%s1 + $0x1c] sm:$0xf]
      %v488 = vunpack.c.l.bf16 %v480
      %v489 = vunpack.c.l.bf16 %v481
      %v490 = vunpack.c.l.bf16 %v482
      %v491 = vunpack.c.l.bf16 %v483
      %v492 = vunpack.c.l.bf16 %v484
      %v493 = vunpack.c.l.bf16 %v485
      %v494 = vunpack.c.l.bf16 %v486
      %v495 = vunpack.c.l.bf16 %v487
      %v496 = vld [vmem:[%s2] sm:$0x1]
      %v497 = vld [vmem:[%s3] sm:$0x1]
      %v498 = vld [vmem:[%s8] sm:$0x1]
      %v499 = vld [vmem:[%s9] sm:$0x1]
      %v500 = vld [vmem:[%s5] sm:$0x1]
      %v501 = vld [vmem:[%s7] sm:$0x1]
      %v502 = vld [vmem:[%s11] sm:$0x1]
      %v503 = vld [vmem:[%s13] sm:$0x1]
      %vm504 = vcmask 261120
      %v505 = vsel %vm504, %v472, 0.0
      %506 = vadd.xlane.f32.xlu0 %v505
      %v507 = vpop.xlane.xlu0 %506
      %v508 = vsel %vm504, %v473, 0.0
      %509 = vadd.xlane.f32.xlu0 %v508
      %v510 = vpop.xlane.xlu0 %509
      %v511 = vsel %vm504, %v474, 0.0
      %512 = vadd.xlane.f32.xlu0 %v511
      %v513 = vpop.xlane.xlu0 %512
      %v514 = vsel %vm504, %v475, 0.0
      %515 = vadd.xlane.f32.xlu0 %v514
      %v516 = vpop.xlane.xlu0 %515
      %v517 = vsel %vm504, %v476, 0.0
      %518 = vadd.xlane.f32.xlu0 %v517
      %v519 = vpop.xlane.xlu0 %518
      %v520 = vsel %vm504, %v477, 0.0
      %521 = vadd.xlane.f32.xlu0 %v520
      %v522 = vpop.xlane.xlu0 %521
      %v523 = vsel %vm504, %v478, 0.0
      %524 = vadd.xlane.f32.xlu0 %v523
      %v525 = vpop.xlane.xlu0 %524
      %v526 = vsel %vm504, %v479, 0.0
      %527 = vadd.xlane.f32.xlu0 %v526
      %v528 = vpop.xlane.xlu0 %527
      %v529 = vrcp.pop 32.0
      %v530 = vmul.f32 %v507, %v529
      %v531 = vmul.f32 %v510, %v529
      %v532 = vmul.f32 %v513, %v529
      %v533 = vmul.f32 %v516, %v529
      %v534 = vmul.f32 %v519, %v529
      %v535 = vmul.f32 %v522, %v529
      %v536 = vmul.f32 %v525, %v529
      %v537 = vmul.f32 %v528, %v529
      %v538 = vsub.f32 %v472, %v530
      %v539 = vsub.f32 %v473, %v531
      %v540 = vsub.f32 %v474, %v532
      %v541 = vsub.f32 %v475, %v533
      %v542 = vsub.f32 %v476, %v534
      %v543 = vsub.f32 %v477, %v535
      %v544 = vsub.f32 %v478, %v536
      %v545 = vsub.f32 %v479, %v537
      %v546 = vmul.f32 %v538, %v538
      %v547 = vmul.f32 %v539, %v539
      %v548 = vmul.f32 %v540, %v540
      %v549 = vmul.f32 %v541, %v541
      %v550 = vmul.f32 %v542, %v542
      %v551 = vmul.f32 %v543, %v543
      %v552 = vmul.f32 %v544, %v544
      %v553 = vmul.f32 %v545, %v545
      %v554 = vsel %vm504, %v546, 0.0
      %555 = vadd.xlane.f32.xlu0 %v554
      %v556 = vpop.xlane.xlu0 %555
      %v557 = vsel %vm504, %v547, 0.0
      %558 = vadd.xlane.f32.xlu0 %v557
      %v559 = vpop.xlane.xlu0 %558
      %v560 = vsel %vm504, %v548, 0.0
      %561 = vadd.xlane.f32.xlu0 %v560
      %v562 = vpop.xlane.xlu0 %561
      %v563 = vsel %vm504, %v549, 0.0
      %564 = vadd.xlane.f32.xlu0 %v563
      %v565 = vpop.xlane.xlu0 %564
      %v566 = vsel %vm504, %v550, 0.0
      %567 = vadd.xlane.f32.xlu0 %v566
      %v568 = vpop.xlane.xlu0 %567
      %v569 = vsel %vm504, %v551, 0.0
      %570 = vadd.xlane.f32.xlu0 %v569
      %v571 = vpop.xlane.xlu0 %570
      %v572 = vsel %vm504, %v552, 0.0
      %573 = vadd.xlane.f32.xlu0 %v572
      %v574 = vpop.xlane.xlu0 %573
      %v575 = vsel %vm504, %v553, 0.0
      %576 = vadd.xlane.f32.xlu0 %v575
      %v577 = vpop.xlane.xlu0 %576
      %v578 = vmul.f32 %v556, %v529
      %v579 = vmul.f32 %v559, %v529
      %v580 = vmul.f32 %v562, %v529
      %v581 = vmul.f32 %v565, %v529
      %v582 = vmul.f32 %v568, %v529
      %v583 = vmul.f32 %v571, %v529
      %v584 = vmul.f32 %v574, %v529
      %v585 = vmul.f32 %v577, %v529
      %v586 = vadd.f32 %v578, 1e-05
      %v587 = vadd.f32 %v579, 1e-05
      %v588 = vadd.f32 %v580, 1e-05
      %v589 = vadd.f32 %v581, 1e-05
      %v590 = vadd.f32 %v582, 1e-05
      %v591 = vadd.f32 %v583, 1e-05
      %v592 = vadd.f32 %v584, 1e-05
      %v593 = vadd.f32 %v585, 1e-05
      %v594 = vrsqrt.pop %v586
      %v595 = vrsqrt.pop %v587
      %v596 = vrsqrt.pop %v588
      %v597 = vrsqrt.pop %v589
      %v598 = vrsqrt.pop %v590
      %v599 = vrsqrt.pop %v591
      %v600 = vrsqrt.pop %v592
      %v601 = vrsqrt.pop %v593
      %v602 = vmul.f32 %v538, %v594
      %v603 = vmul.f32 %v539, %v595
      %v604 = vmul.f32 %v540, %v596
      %v605 = vmul.f32 %v541, %v597
      %v606 = vmul.f32 %v542, %v598
      %v607 = vmul.f32 %v543, %v599
      %v608 = vmul.f32 %v544, %v600
      %v609 = vmul.f32 %v545, %v601
      %v611 = vlaneseq
      %v612 = vshrl.u32 %v611, 7
      %v613 = vsub.s32 0, %v612
      %v614 = vrot.slane %v496, %v613
      %v616 = vmul.f32 %v602, %v614
      %v617 = vmul.f32 %v603, %v614
      %v618 = vmul.f32 %v604, %v614
      %v619 = vmul.f32 %v605, %v614
      %v620 = vmul.f32 %v606, %v614
      %v621 = vmul.f32 %v607, %v614
      %v622 = vmul.f32 %v608, %v614
      %v623 = vmul.f32 %v609, %v614
      %v625 = vlaneseq
      %v626 = vshrl.u32 %v625, 7
      %v627 = vsub.s32 0, %v626
      %v628 = vrot.slane %v497, %v627
      %v630 = vadd.f32 %v616, %v628
      %v631 = vadd.f32 %v617, %v628
      %v632 = vadd.f32 %v618, %v628
      %v633 = vadd.f32 %v619, %v628
      %v634 = vadd.f32 %v620, %v628
      %v635 = vadd.f32 %v621, %v628
      %v636 = vadd.f32 %v622, %v628
      %v637 = vadd.f32 %v623, %v628
      %v638 = vpack.c.bf16 %v631, %v630
      %v639 = vpack.c.bf16 %v633, %v632
      %v640 = vpack.c.bf16 %v635, %v634
      %v641 = vpack.c.bf16 %v637, %v636
      %v642 = vld [vmem:[%s4] sm:$0xf]
      %v643 = vld [vmem:[%s4 + $0x4] sm:$0xf]
      %v644 = vld [vmem:[%s4 + $0x8] sm:$0xf]
      %v645 = vld [vmem:[%s4 + $0xc] sm:$0xf]
      %v647 = vlaneseq
      %v648 = vshrl.u32 %v647, 7
      %v649 = vsub.s32 0, %v648
      %v650 = vrot.slane %v500, %v649
      %v656 = vunpack.c.l.b16 %v642
      %v657 = vunpack.c.l.b16 %v643
      %v658 = vunpack.c.l.b16 %v644
      %v659 = vunpack.c.l.b16 %v645
      %v660 = vpack.c.b16 %v657, %v656
      %v661 = vpack.c.b16 %v659, %v658
      %v665 = vsel %vm504, %v638, 0
      %v668 = vsel %vm504, %v639, 0
      %v671 = vsel %vm504, %v640, 0
      %v674 = vsel %vm504, %v641, 0
      %676 = vmatprep.subr.bf16.mxu0 0
      %677 = vmatpush1.bf16.msra.mxu0 %v660
      %678 = vmatprep.subr.bf16.mxu0 0
      %679 = vmatpush1.bf16.msra.mxu0 %v661
      %680 = vmatprep.subr.bf16.mxu0 0
      %681 = vmatpush1.bf16.msra.mxu0 0
      %682 = vmatprep.subr.bf16.mxu0 0
      %683 = vmatpush1.bf16.msra.mxu0 0
      %684 = vmatprep.subr.bf16.mxu0 0
      %685 = vmatpush1.bf16.msra.mxu0 0
      %686 = vmatprep.subr.bf16.mxu0 0
      %687 = vmatpush1.bf16.msra.mxu0 0
      %688 = vmatprep.subr.bf16.mxu0 0
      %689 = vmatpush1.bf16.msra.mxu0 0
      %690 = vmatprep.subr.bf16.mxu0 0
      %691 = vmatpush1.bf16.msra.mxu0 0
      %692 = vmatprep.subr.bf16.mxu0 0
      %693 = vmatpush1.bf16.msra.mxu0 0
      %694 = vmatprep.subr.bf16.mxu0 0
      %695 = vmatpush1.bf16.msra.mxu0 0
      %696 = vmatprep.subr.bf16.mxu0 0
      %697 = vmatpush1.bf16.msra.mxu0 0
      %698 = vmatprep.subr.bf16.mxu0 0
      %699 = vmatpush1.bf16.msra.mxu0 0
      %700 = vmatprep.subr.bf16.mxu0 0
      %701 = vmatpush1.bf16.msra.mxu0 0
      %702 = vmatprep.subr.bf16.mxu0 0
      %703 = vmatpush1.bf16.msra.mxu0 0
      %704 = vmatprep.subr.bf16.mxu0 0
      %705 = vmatpush1.bf16.msra.mxu0 0
      %706 = vmatprep.subr.bf16.mxu0 0
      %707 = vmatpush1.bf16.msra.mxu0 0
      %708 = vmatprep.mubr.bf16.mxu0 0
      %709 = vmatmul.mubr.bf16.gmra.mrb[0].mxu0 %v665
      %v710 = vpop.f32.mrb[0].mxu0
      %v711 = vadd.f32 %v650, %v710
      %v712 = vpop.f32.mrb[0].mxu0
      %v713 = vpop.f32.mrb[0].mxu0
      %v714 = vadd.f32 %v650, %v713
      %v715 = vpop.f32.mrb[0].mxu0
      %716 = vmatprep.mubr.bf16.mxu0 0
      %717 = vmatmul.mubr.bf16.gmra.mrb[0].mxu0 %v668
      %v718 = vpop.f32.mrb[0].mxu0
      %v719 = vadd.f32 %v650, %v718
      %v720 = vpop.f32.mrb[0].mxu0
      %v721 = vpop.f32.mrb[0].mxu0
      %v722 = vadd.f32 %v650, %v721
      %v723 = vpop.f32.mrb[0].mxu0
      %724 = vmatprep.mubr.bf16.mxu0 0
      %725 = vmatmul.mubr.bf16.gmra.mrb[0].mxu0 %v671
      %v726 = vpop.f32.mrb[0].mxu0
      %v727 = vadd.f32 %v650, %v726
      %v728 = vpop.f32.mrb[0].mxu0
      %v729 = vpop.f32.mrb[0].mxu0
      %v730 = vadd.f32 %v650, %v729
      %v731 = vpop.f32.mrb[0].mxu0
      %732 = vmatprep.mubr.bf16.mxu0 0
      %733 = vmatmul.mubr.bf16.gmra.mrb[0].mxu0 %v674
      %v734 = vpop.f32.mrb[0].mxu0
      %v735 = vadd.f32 %v650, %v734
      %v736 = vpop.f32.mrb[0].mxu0
      %v737 = vpop.f32.mrb[0].mxu0
      %v738 = vadd.f32 %v650, %v737
      %v739 = vpop.f32.mrb[0].mxu0
      %740 = vdwg.mxu0
      %v741 = vpack.c.bf16 %v714, %v711
      %v742 = vpack.c.bf16 %v722, %v719
      %v743 = vpack.c.bf16 %v730, %v727
      %v744 = vpack.c.bf16 %v738, %v735
      %749 = vrot.lane.b32.xlu0 %v741, 120
      %v750 = vpop.permute.xlu0 %749
      %751 = vrot.lane.b32.xlu0 %v742, 120
      %v752 = vpop.permute.xlu0 %751
      %753 = vrot.lane.b32.xlu0 %v743, 120
      %v754 = vpop.permute.xlu0 %753
      %755 = vrot.lane.b32.xlu0 %v744, 120
      %v756 = vpop.permute.xlu0 %755
      %757 = vrot.lane.b32.xlu0 %v741, 112
      %v758 = vpop.permute.xlu0 %757
      %759 = vrot.lane.b32.xlu0 %v742, 112
      %v760 = vpop.permute.xlu0 %759
      %761 = vrot.lane.b32.xlu0 %v743, 112
      %v762 = vpop.permute.xlu0 %761
      %763 = vrot.lane.b32.xlu0 %v744, 112
      %v764 = vpop.permute.xlu0 %763
      %765 = vrot.lane.b32.xlu0 %v741, 104
      %v766 = vpop.permute.xlu0 %765
      %767 = vrot.lane.b32.xlu0 %v742, 104
      %v768 = vpop.permute.xlu0 %767
      %769 = vrot.lane.b32.xlu0 %v743, 104
      %v770 = vpop.permute.xlu0 %769
      %771 = vrot.lane.b32.xlu0 %v744, 104
      %v772 = vpop.permute.xlu0 %771
      %773 = vrot.lane.b32.xlu0 %v741, 96
      %v774 = vpop.permute.xlu0 %773
      %vm775 = vcmask 64512
      %v777 = vsel %vm775, %v741, 0
      %v780 = vsel %vm775, %v774, 0
      %782 = vmatprep.subr.bf16.mxu0 0
      %783 = vmatpush1.bf16.xpose.msra.mxu0 %v780
      %784 = vmatprep.subr.bf16.mxu0 0
      %785 = vmatpush1.bf16.xpose.msra.mxu0 0
      %786 = vmatprep.subr.bf16.mxu0 0
      %787 = vmatpush1.bf16.xpose.msra.mxu0 0
      %788 = vmatprep.subr.bf16.mxu0 0
      %789 = vmatpush1.bf16.xpose.msra.mxu0 0
      %790 = vmatprep.subr.bf16.mxu0 0
      %791 = vmatpush1.bf16.xpose.msra.mxu0 0
      %792 = vmatprep.subr.bf16.mxu0 0
      %793 = vmatpush1.bf16.xpose.msra.mxu0 0
      %794 = vmatprep.subr.bf16.mxu0 0
      %795 = vmatpush1.bf16.xpose.msra.mxu0 0
      %796 = vmatprep.subr.bf16.mxu0 0
      %797 = vmatpush1.bf16.xpose.msra.mxu0 0
      %798 = vmatprep.subr.bf16.mxu0 0
      %799 = vmatpush1.bf16.xpose.msra.mxu0 0
      %800 = vmatprep.subr.bf16.mxu0 0
      %801 = vmatpush1.bf16.xpose.msra.mxu0 0
      %802 = vmatprep.subr.bf16.mxu0 0
      %803 = vmatpush1.bf16.xpose.msra.mxu0 0
      %804 = vmatprep.subr.bf16.mxu0 0
      %805 = vmatpush1.bf16.xpose.msra.mxu0 0
      %806 = vmatprep.subr.bf16.mxu0 0
      %807 = vmatpush1.bf16.xpose.msra.mxu0 0
      %808 = vmatprep.subr.bf16.mxu0 0
      %809 = vmatpush1.bf16.xpose.msra.mxu0 0
      %810 = vmatprep.subr.bf16.mxu0 0
      %811 = vmatpush1.bf16.xpose.msra.mxu0 0
      %812 = vmatprep.subr.bf16.mxu0 0
      %813 = vmatpush1.bf16.xpose.msra.mxu0 0
      %814 = vmatprep.mubr.bf16.mxu0 0
      %815 = vmatmul.mubr.bf16.gmra.mrb[0].mxu0 %v777
      %v816 = vpop.f32.mrb[0].mxu0
      %v817 = vadd.f32 0.0, %v816
      %v818 = vpop.f32.mrb[0].mxu0
      %v819 = vpop.f32.mrb[0].mxu0
      %v820 = vadd.f32 0.0, %v819
      %v821 = vpop.f32.mrb[0].mxu0
      %822 = vdwg.mxu0
      %823 = vrot.lane.b32.xlu0 %v742, 96
      %v824 = vpop.permute.xlu0 %823
      %v826 = vsel %vm775, %v742, 0
      %v829 = vsel %vm775, %v824, 0
      %831 = vmatprep.subr.bf16.mxu0 0
      %832 = vmatpush1.bf16.xpose.msra.mxu0 %v829
      %833 = vmatprep.subr.bf16.mxu0 0
      %834 = vmatpush1.bf16.xpose.msra.mxu0 0
      %835 = vmatprep.subr.bf16.mxu0 0
      %836 = vmatpush1.bf16.xpose.msra.mxu0 0
      %837 = vmatprep.subr.bf16.mxu0 0
      %838 = vmatpush1.bf16.xpose.msra.mxu0 0
      %839 = vmatprep.subr.bf16.mxu0 0
      %840 = vmatpush1.bf16.xpose.msra.mxu0 0
      %841 = vmatprep.subr.bf16.mxu0 0
      %842 = vmatpush1.bf16.xpose.msra.mxu0 0
      %843 = vmatprep.subr.bf16.mxu0 0
      %844 = vmatpush1.bf16.xpose.msra.mxu0 0
      %845 = vmatprep.subr.bf16.mxu0 0
      %846 = vmatpush1.bf16.xpose.msra.mxu0 0
      %847 = vmatprep.subr.bf16.mxu0 0
      %848 = vmatpush1.bf16.xpose.msra.mxu0 0
      %849 = vmatprep.subr.bf16.mxu0 0
      %850 = vmatpush1.bf16.xpose.msra.mxu0 0
      %851 = vmatprep.subr.bf16.mxu0 0
      %852 = vmatpush1.bf16.xpose.msra.mxu0 0
      %853 = vmatprep.subr.bf16.mxu0 0
      %854 = vmatpush1.bf16.xpose.msra.mxu0 0
      %855 = vmatprep.subr.bf16.mxu0 0
      %856 = vmatpush1.bf16.xpose.msra.mxu0 0
      %857 = vmatprep.subr.bf16.mxu0 0
      %858 = vmatpush1.bf16.xpose.msra.mxu0 0
      %859 = vmatprep.subr.bf16.mxu0 0
      %860 = vmatpush1.bf16.xpose.msra.mxu0 0
      %861 = vmatprep.subr.bf16.mxu0 0
      %862 = vmatpush1.bf16.xpose.msra.mxu0 0
      %863 = vmatprep.mubr.bf16.mxu0 0
      %864 = vmatmul.mubr.bf16.gmra.mrb[0].mxu0 %v826
      %v865 = vpop.f32.mrb[0].mxu0
      %v866 = vadd.f32 0.0, %v865
      %v867 = vpop.f32.mrb[0].mxu0
      %v868 = vpop.f32.mrb[0].mxu0
      %v869 = vadd.f32 0.0, %v868
      %v870 = vpop.f32.mrb[0].mxu0
      %871 = vdwg.mxu0
      %872 = vrot.lane.b32.xlu0 %v743, 96
      %v873 = vpop.permute.xlu0 %872
      %v875 = vsel %vm775, %v743, 0
      %v878 = vsel %vm775, %v873, 0
      %880 = vmatprep.subr.bf16.mxu0 0
      %881 = vmatpush1.bf16.xpose.msra.mxu0 %v878
      %882 = vmatprep.subr.bf16.mxu0 0
      %883 = vmatpush1.bf16.xpose.msra.mxu0 0
      %884 = vmatprep.subr.bf16.mxu0 0
      %885 = vmatpush1.bf16.xpose.msra.mxu0 0
      %886 = vmatprep.subr.bf16.mxu0 0
      %887 = vmatpush1.bf16.xpose.msra.mxu0 0
      %888 = vmatprep.subr.bf16.mxu0 0
      %889 = vmatpush1.bf16.xpose.msra.mxu0 0
      %890 = vmatprep.subr.bf16.mxu0 0
      %891 = vmatpush1.bf16.xpose.msra.mxu0 0
      %892 = vmatprep.subr.bf16.mxu0 0
      %893 = vmatpush1.bf16.xpose.msra.mxu0 0
      %894 = vmatprep.subr.bf16.mxu0 0
      %895 = vmatpush1.bf16.xpose.msra.mxu0 0
      %896 = vmatprep.subr.bf16.mxu0 0
      %897 = vmatpush1.bf16.xpose.msra.mxu0 0
      %898 = vmatprep.subr.bf16.mxu0 0
      %899 = vmatpush1.bf16.xpose.msra.mxu0 0
      %900 = vmatprep.subr.bf16.mxu0 0
      %901 = vmatpush1.bf16.xpose.msra.mxu0 0
      %902 = vmatprep.subr.bf16.mxu0 0
      %903 = vmatpush1.bf16.xpose.msra.mxu0 0
      %904 = vmatprep.subr.bf16.mxu0 0
      %905 = vmatpush1.bf16.xpose.msra.mxu0 0
      %906 = vmatprep.subr.bf16.mxu0 0
      %907 = vmatpush1.bf16.xpose.msra.mxu0 0
      %908 = vmatprep.subr.bf16.mxu0 0
      %909 = vmatpush1.bf16.xpose.msra.mxu0 0
      %910 = vmatprep.subr.bf16.mxu0 0
      %911 = vmatpush1.bf16.xpose.msra.mxu0 0
      %912 = vmatprep.mubr.bf16.mxu0 0
      %913 = vmatmul.mubr.bf16.gmra.mrb[0].mxu0 %v875
      %v914 = vpop.f32.mrb[0].mxu0
      %v915 = vadd.f32 0.0, %v914
      %v916 = vpop.f32.mrb[0].mxu0
      %v917 = vpop.f32.mrb[0].mxu0
      %v918 = vadd.f32 0.0, %v917
      %v919 = vpop.f32.mrb[0].mxu0
      %920 = vdwg.mxu0
      %921 = vrot.lane.b32.xlu0 %v744, 96
      %v922 = vpop.permute.xlu0 %921
      %v924 = vsel %vm775, %v744, 0
      %v927 = vsel %vm775, %v922, 0
      %929 = vmatprep.subr.bf16.mxu0 0
      %930 = vmatpush1.bf16.xpose.msra.mxu0 %v927
      %931 = vmatprep.subr.bf16.mxu0 0
      %932 = vmatpush1.bf16.xpose.msra.mxu0 0
      %933 = vmatprep.subr.bf16.mxu0 0
      %934 = vmatpush1.bf16.xpose.msra.mxu0 0
      %935 = vmatprep.subr.bf16.mxu0 0
      %936 = vmatpush1.bf16.xpose.msra.mxu0 0
      %937 = vmatprep.subr.bf16.mxu0 0
      %938 = vmatpush1.bf16.xpose.msra.mxu0 0
      %939 = vmatprep.subr.bf16.mxu0 0
      %940 = vmatpush1.bf16.xpose.msra.mxu0 0
      %941 = vmatprep.subr.bf16.mxu0 0
      %942 = vmatpush1.bf16.xpose.msra.mxu0 0
      %943 = vmatprep.subr.bf16.mxu0 0
      %944 = vmatpush1.bf16.xpose.msra.mxu0 0
      %945 = vmatprep.subr.bf16.mxu0 0
      %946 = vmatpush1.bf16.xpose.msra.mxu0 0
      %947 = vmatprep.subr.bf16.mxu0 0
      %948 = vmatpush1.bf16.xpose.msra.mxu0 0
      %949 = vmatprep.subr.bf16.mxu0 0
      %950 = vmatpush1.bf16.xpose.msra.mxu0 0
      %951 = vmatprep.subr.bf16.mxu0 0
      %952 = vmatpush1.bf16.xpose.msra.mxu0 0
      %953 = vmatprep.subr.bf16.mxu0 0
      %954 = vmatpush1.bf16.xpose.msra.mxu0 0
      %955 = vmatprep.subr.bf16.mxu0 0
      %956 = vmatpush1.bf16.xpose.msra.mxu0 0
      %957 = vmatprep.subr.bf16.mxu0 0
      %958 = vmatpush1.bf16.xpose.msra.mxu0 0
      %959 = vmatprep.subr.bf16.mxu0 0
      %960 = vmatpush1.bf16.xpose.msra.mxu0 0
      %961 = vmatprep.mubr.bf16.mxu0 0
      %962 = vmatmul.mubr.bf16.gmra.mrb[0].mxu0 %v924
      %v963 = vpop.f32.mrb[0].mxu0
      %v964 = vadd.f32 0.0, %v963
      %v965 = vpop.f32.mrb[0].mxu0
      %v966 = vpop.f32.mrb[0].mxu0
      %v967 = vadd.f32 0.0, %v966
      %v968 = vpop.f32.mrb[0].mxu0
      %969 = vdwg.mxu0
      %970 = vrot.lane.b32.xlu0 %v750, 96
      %v971 = vpop.permute.xlu0 %970
      %v973 = vsel %vm775, %v750, 0
      %v976 = vsel %vm775, %v971, 0
      %978 = vmatprep.subr.bf16.mxu0 0
      %979 = vmatpush1.bf16.xpose.msra.mxu0 %v976
      %980 = vmatprep.subr.bf16.mxu0 0
      %981 = vmatpush1.bf16.xpose.msra.mxu0 0
      %982 = vmatprep.subr.bf16.mxu0 0
      %983 = vmatpush1.bf16.xpose.msra.mxu0 0
      %984 = vmatprep.subr.bf16.mxu0 0
      %985 = vmatpush1.bf16.xpose.msra.mxu0 0
      %986 = vmatprep.subr.bf16.mxu0 0
      %987 = vmatpush1.bf16.xpose.msra.mxu0 0
      %988 = vmatprep.subr.bf16.mxu0 0
      %989 = vmatpush1.bf16.xpose.msra.mxu0 0
      %990 = vmatprep.subr.bf16.mxu0 0
      %991 = vmatpush1.bf16.xpose.msra.mxu0 0
      %992 = vmatprep.subr.bf16.mxu0 0
      %993 = vmatpush1.bf16.xpose.msra.mxu0 0
      %994 = vmatprep.subr.bf16.mxu0 0
      %995 = vmatpush1.bf16.xpose.msra.mxu0 0
      %996 = vmatprep.subr.bf16.mxu0 0
      %997 = vmatpush1.bf16.xpose.msra.mxu0 0
      %998 = vmatprep.subr.bf16.mxu0 0
      %999 = vmatpush1.bf16.xpose.msra.mxu0 0
      %1000 = vmatprep.subr.bf16.mxu0 0
      %1001 = vmatpush1.bf16.xpose.msra.mxu0 0
      %1002 = vmatprep.subr.bf16.mxu0 0
      %1003 = vmatpush1.bf16.xpose.msra.mxu0 0
      %1004 = vmatprep.subr.bf16.mxu0 0
      %1005 = vmatpush1.bf16.xpose.msra.mxu0 0
      %1006 = vmatprep.subr.bf16.mxu0 0
      %1007 = vmatpush1.bf16.xpose.msra.mxu0 0
      %1008 = vmatprep.subr.bf16.mxu0 0
      %1009 = vmatpush1.bf16.xpose.msra.mxu0 0
      %1010 = vmatprep.mubr.bf16.mxu0 0
      %1011 = vmatmul.mubr.bf16.gmra.mrb[0].mxu0 %v973
      %v1012 = vpop.f32.mrb[0].mxu0
      %v1013 = vadd.f32 0.0, %v1012
      %v1014 = vpop.f32.mrb[0].mxu0
      %v1015 = vpop.f32.mrb[0].mxu0
      %v1016 = vadd.f32 0.0, %v1015
      %v1017 = vpop.f32.mrb[0].mxu0
      %1018 = vdwg.mxu0
      %1019 = vrot.lane.b32.xlu0 %v752, 96
      %v1020 = vpop.permute.xlu0 %1019
      %v1022 = vsel %vm775, %v752, 0
      %v1025 = vsel %vm775, %v1020, 0
      %1027 = vmatprep.subr.bf16.mxu0 0
      %1028 = vmatpush1.bf16.xpose.msra.mxu0 %v1025
      %1029 = vmatprep.subr.bf16.mxu0 0
      %1030 = vmatpush1.bf16.xpose.msra.mxu0 0
      %1031 = vmatprep.subr.bf16.mxu0 0
      %1032 = vmatpush1.bf16.xpose.msra.mxu0 0
      %1033 = vmatprep.subr.bf16.mxu0 0
      %1034 = vmatpush1.bf16.xpose.msra.mxu0 0
      %1035 = vmatprep.subr.bf16.mxu0 0
      %1036 = vmatpush1.bf16.xpose.msra.mxu0 0
      %1037 = vmatprep.subr.bf16.mxu0 0
      %1038 = vmatpush1.bf16.xpose.msra.mxu0 0
      %1039 = vmatprep.subr.bf16.mxu0 0
      %1040 = vmatpush1.bf16.xpose.msra.mxu0 0
      %1041 = vmatprep.subr.bf16.mxu0 0
      %1042 = vmatpush1.bf16.xpose.msra.mxu0 0
      %1043 = vmatprep.subr.bf16.mxu0 0
      %1044 = vmatpush1.bf16.xpose.msra.mxu0 0
      %1045 = vmatprep.subr.bf16.mxu0 0
      %1046 = vmatpush1.bf16.xpose.msra.mxu0 0
      %1047 = vmatprep.subr.bf16.mxu0 0
      %1048 = vmatpush1.bf16.xpose.msra.mxu0 0
      %1049 = vmatprep.subr.bf16.mxu0 0
      %1050 = vmatpush1.bf16.xpose.msra.mxu0 0
      %1051 = vmatprep.subr.bf16.mxu0 0
      %1052 = vmatpush1.bf16.xpose.msra.mxu0 0
      %1053 = vmatprep.subr.bf16.mxu0 0
      %1054 = vmatpush1.bf16.xpose.msra.mxu0 0
      %1055 = vmatprep.subr.bf16.mxu0 0
      %1056 = vmatpush1.bf16.xpose.msra.mxu0 0
      %1057 = vmatprep.subr.bf16.mxu0 0
      %1058 = vmatpush1.bf16.xpose.msra.mxu0 0
      %1059 = vmatprep.mubr.bf16.mxu0 0
      %1060 = vmatmul.mubr.bf16.gmra.mrb[0].mxu0 %v1022
      %v1061 = vpop.f32.mrb[0].mxu0
      %v1062 = vadd.f32 0.0, %v1061
      %v1063 = vpop.f32.mrb[0].mxu0
      %v1064 = vpop.f32.mrb[0].mxu0
      %v1065 = vadd.f32 0.0, %v1064
      %v1066 = vpop.f32.mrb[0].mxu0
      %1067 = vdwg.mxu0
      %1068 = vrot.lane.b32.xlu0 %v754, 96
      %v1069 = vpop.permute.xlu0 %1068
      %v1071 = vsel %vm775, %v754, 0
      %v1074 = vsel %vm775, %v1069, 0
      %1076 = vmatprep.subr.bf16.mxu0 0
      %1077 = vmatpush1.bf16.xpose.msra.mxu0 %v1074
      %1078 = vmatprep.subr.bf16.mxu0 0
      %1079 = vmatpush1.bf16.xpose.msra.mxu0 0
      %1080 = vmatprep.subr.bf16.mxu0 0
      %1081 = vmatpush1.bf16.xpose.msra.mxu0 0
      %1082 = vmatprep.subr.bf16.mxu0 0
      %1083 = vmatpush1.bf16.xpose.msra.mxu0 0
      %1084 = vmatprep.subr.bf16.mxu0 0
      %1085 = vmatpush1.bf16.xpose.msra.mxu0 0
      %1086 = vmatprep.subr.bf16.mxu0 0
      %1087 = vmatpush1.bf16.xpose.msra.mxu0 0
      %1088 = vmatprep.subr.bf16.mxu0 0
      %1089 = vmatpush1.bf16.xpose.msra.mxu0 0
      %1090 = vmatprep.subr.bf16.mxu0 0
      %1091 = vmatpush1.bf16.xpose.msra.mxu0 0
      %1092 = vmatprep.subr.bf16.mxu0 0
      %1093 = vmatpush1.bf16.xpose.msra.mxu0 0
      %1094 = vmatprep.subr.bf16.mxu0 0
      %1095 = vmatpush1.bf16.xpose.msra.mxu0 0
      %1096 = vmatprep.subr.bf16.mxu0 0
      %1097 = vmatpush1.bf16.xpose.msra.mxu0 0
      %1098 = vmatprep.subr.bf16.mxu0 0
      %1099 = vmatpush1.bf16.xpose.msra.mxu0 0
      %1100 = vmatprep.subr.bf16.mxu0 0
      %1101 = vmatpush1.bf16.xpose.msra.mxu0 0
      %1102 = vmatprep.subr.bf16.mxu0 0
      %1103 = vmatpush1.bf16.xpose.msra.mxu0 0
      %1104 = vmatprep.subr.bf16.mxu0 0
      %1105 = vmatpush1.bf16.xpose.msra.mxu0 0
      %1106 = vmatprep.subr.bf16.mxu0 0
      %1107 = vmatpush1.bf16.xpose.msra.mxu0 0
      %1108 = vmatprep.mubr.bf16.mxu0 0
      %1109 = vmatmul.mubr.bf16.gmra.mrb[0].mxu0 %v1071
      %v1110 = vpop.f32.mrb[0].mxu0
      %v1111 = vadd.f32 0.0, %v1110
      %v1112 = vpop.f32.mrb[0].mxu0
      %v1113 = vpop.f32.mrb[0].mxu0
      %v1114 = vadd.f32 0.0, %v1113
      %v1115 = vpop.f32.mrb[0].mxu0
      %1116 = vdwg.mxu0
      %1117 = vrot.lane.b32.xlu0 %v756, 96
      %v1118 = vpop.permute.xlu0 %1117
      %v1120 = vsel %vm775, %v756, 0
      %v1123 = vsel %vm775, %v1118, 0
      %1125 = vmatprep.subr.bf16.mxu0 0
      %1126 = vmatpush1.bf16.xpose.msra.mxu0 %v1123
      %1127 = vmatprep.subr.bf16.mxu0 0
      %1128 = vmatpush1.bf16.xpose.msra.mxu0 0
      %1129 = vmatprep.subr.bf16.mxu0 0
      %1130 = vmatpush1.bf16.xpose.msra.mxu0 0
      %1131 = vmatprep.subr.bf16.mxu0 0
      %1132 = vmatpush1.bf16.xpose.msra.mxu0 0
      %1133 = vmatprep.subr.bf16.mxu0 0
      %1134 = vmatpush1.bf16.xpose.msra.mxu0 0
      %1135 = vmatprep.subr.bf16.mxu0 0
      %1136 = vmatpush1.bf16.xpose.msra.mxu0 0
      %1137 = vmatprep.subr.bf16.mxu0 0
      %1138 = vmatpush1.bf16.xpose.msra.mxu0 0
      %1139 = vmatprep.subr.bf16.mxu0 0
      %1140 = vmatpush1.bf16.xpose.msra.mxu0 0
      %1141 = vmatprep.subr.bf16.mxu0 0
      %1142 = vmatpush1.bf16.xpose.msra.mxu0 0
      %1143 = vmatprep.subr.bf16.mxu0 0
      %1144 = vmatpush1.bf16.xpose.msra.mxu0 0
      %1145 = vmatprep.subr.bf16.mxu0 0
      %1146 = vmatpush1.bf16.xpose.msra.mxu0 0
      %1147 = vmatprep.subr.bf16.mxu0 0
      %1148 = vmatpush1.bf16.xpose.msra.mxu0 0
      %1149 = vmatprep.subr.bf16.mxu0 0
      %1150 = vmatpush1.bf16.xpose.msra.mxu0 0
      %1151 = vmatprep.subr.bf16.mxu0 0
      %1152 = vmatpush1.bf16.xpose.msra.mxu0 0
      %1153 = vmatprep.subr.bf16.mxu0 0
      %1154 = vmatpush1.bf16.xpose.msra.mxu0 0
      %1155 = vmatprep.subr.bf16.mxu0 0
      %1156 = vmatpush1.bf16.xpose.msra.mxu0 0
      %1157 = vmatprep.mubr.bf16.mxu0 0
      %1158 = vmatmul.mubr.bf16.gmra.mrb[0].mxu0 %v1120
      %v1159 = vpop.f32.mrb[0].mxu0
      %v1160 = vadd.f32 0.0, %v1159
      %v1161 = vpop.f32.mrb[0].mxu0
      %v1162 = vpop.f32.mrb[0].mxu0
      %v1163 = vadd.f32 0.0, %v1162
      %v1164 = vpop.f32.mrb[0].mxu0
      %1165 = vdwg.mxu0
      %1166 = vrot.lane.b32.xlu0 %v758, 96
      %v1167 = vpop.permute.xlu0 %1166
      %v1169 = vsel %vm775, %v758, 0
      %v1172 = vsel %vm775, %v1167, 0
      %1174 = vmatprep.subr.bf16.mxu0 0
      %1175 = vmatpush1.bf16.xpose.msra.mxu0 %v1172
      %1176 = vmatprep.subr.bf16.mxu0 0
      %1177 = vmatpush1.bf16.xpose.msra.mxu0 0
      %1178 = vmatprep.subr.bf16.mxu0 0
      %1179 = vmatpush1.bf16.xpose.msra.mxu0 0
      %1180 = vmatprep.subr.bf16.mxu0 0
      %1181 = vmatpush1.bf16.xpose.msra.mxu0 0
      %1182 = vmatprep.subr.bf16.mxu0 0
      %1183 = vmatpush1.bf16.xpose.msra.mxu0 0
      %1184 = vmatprep.subr.bf16.mxu0 0
      %1185 = vmatpush1.bf16.xpose.msra.mxu0 0
      %1186 = vmatprep.subr.bf16.mxu0 0
      %1187 = vmatpush1.bf16.xpose.msra.mxu0 0
      %1188 = vmatprep.subr.bf16.mxu0 0
      %1189 = vmatpush1.bf16.xpose.msra.mxu0 0
      %1190 = vmatprep.subr.bf16.mxu0 0
      %1191 = vmatpush1.bf16.xpose.msra.mxu0 0
      %1192 = vmatprep.subr.bf16.mxu0 0
      %1193 = vmatpush1.bf16.xpose.msra.mxu0 0
      %1194 = vmatprep.subr.bf16.mxu0 0
      %1195 = vmatpush1.bf16.xpose.msra.mxu0 0
      %1196 = vmatprep.subr.bf16.mxu0 0
      %1197 = vmatpush1.bf16.xpose.msra.mxu0 0
      %1198 = vmatprep.subr.bf16.mxu0 0
      %1199 = vmatpush1.bf16.xpose.msra.mxu0 0
      %1200 = vmatprep.subr.bf16.mxu0 0
      %1201 = vmatpush1.bf16.xpose.msra.mxu0 0
      %1202 = vmatprep.subr.bf16.mxu0 0
      %1203 = vmatpush1.bf16.xpose.msra.mxu0 0
      %1204 = vmatprep.subr.bf16.mxu0 0
      %1205 = vmatpush1.bf16.xpose.msra.mxu0 0
      %1206 = vmatprep.mubr.bf16.mxu0 0
      %1207 = vmatmul.mubr.bf16.gmra.mrb[0].mxu0 %v1169
      %v1208 = vpop.f32.mrb[0].mxu0
      %v1209 = vadd.f32 0.0, %v1208
      %v1210 = vpop.f32.mrb[0].mxu0
      %v1211 = vpop.f32.mrb[0].mxu0
      %v1212 = vadd.f32 0.0, %v1211
      %v1213 = vpop.f32.mrb[0].mxu0
      %1214 = vdwg.mxu0
      %1215 = vrot.lane.b32.xlu0 %v760, 96
      %v1216 = vpop.permute.xlu0 %1215
      %v1218 = vsel %vm775, %v760, 0
      %v1221 = vsel %vm775, %v1216, 0
      %1223 = vmatprep.subr.bf16.mxu0 0
      %1224 = vmatpush1.bf16.xpose.msra.mxu0 %v1221
      %1225 = vmatprep.subr.bf16.mxu0 0
      %1226 = vmatpush1.bf16.xpose.msra.mxu0 0
      %1227 = vmatprep.subr.bf16.mxu0 0
      %1228 = vmatpush1.bf16.xpose.msra.mxu0 0
      %1229 = vmatprep.subr.bf16.mxu0 0
      %1230 = vmatpush1.bf16.xpose.msra.mxu0 0
      %1231 = vmatprep.subr.bf16.mxu0 0
      %1232 = vmatpush1.bf16.xpose.msra.mxu0 0
      %1233 = vmatprep.subr.bf16.mxu0 0
      %1234 = vmatpush1.bf16.xpose.msra.mxu0 0
      %1235 = vmatprep.subr.bf16.mxu0 0
      %1236 = vmatpush1.bf16.xpose.msra.mxu0 0
      %1237 = vmatprep.subr.bf16.mxu0 0
      %1238 = vmatpush1.bf16.xpose.msra.mxu0 0
      %1239 = vmatprep.subr.bf16.mxu0 0
      %1240 = vmatpush1.bf16.xpose.msra.mxu0 0
      %1241 = vmatprep.subr.bf16.mxu0 0
      %1242 = vmatpush1.bf16.xpose.msra.mxu0 0
      %1243 = vmatprep.subr.bf16.mxu0 0
      %1244 = vmatpush1.bf16.xpose.msra.mxu0 0
      %1245 = vmatprep.subr.bf16.mxu0 0
      %1246 = vmatpush1.bf16.xpose.msra.mxu0 0
      %1247 = vmatprep.subr.bf16.mxu0 0
      %1248 = vmatpush1.bf16.xpose.msra.mxu0 0
      %1249 = vmatprep.subr.bf16.mxu0 0
      %1250 = vmatpush1.bf16.xpose.msra.mxu0 0
      %1251 = vmatprep.subr.bf16.mxu0 0
      %1252 = vmatpush1.bf16.xpose.msra.mxu0 0
      %1253 = vmatprep.subr.bf16.mxu0 0
      %1254 = vmatpush1.bf16.xpose.msra.mxu0 0
      %1255 = vmatprep.mubr.bf16.mxu0 0
      %1256 = vmatmul.mubr.bf16.gmra.mrb[0].mxu0 %v1218
      %v1257 = vpop.f32.mrb[0].mxu0
      %v1258 = vadd.f32 0.0, %v1257
      %v1259 = vpop.f32.mrb[0].mxu0
      %v1260 = vpop.f32.mrb[0].mxu0
      %v1261 = vadd.f32 0.0, %v1260
      %v1262 = vpop.f32.mrb[0].mxu0
      %1263 = vdwg.mxu0
      %1264 = vrot.lane.b32.xlu0 %v762, 96
      %v1265 = vpop.permute.xlu0 %1264
      %v1267 = vsel %vm775, %v762, 0
      %v1270 = vsel %vm775, %v1265, 0
      %1272 = vmatprep.subr.bf16.mxu0 0
      %1273 = vmatpush1.bf16.xpose.msra.mxu0 %v1270
      %1274 = vmatprep.subr.bf16.mxu0 0
      %1275 = vmatpush1.bf16.xpose.msra.mxu0 0
      %1276 = vmatprep.subr.bf16.mxu0 0
      %1277 = vmatpush1.bf16.xpose.msra.mxu0 0
      %1278 = vmatprep.subr.bf16.mxu0 0
      %1279 = vmatpush1.bf16.xpose.msra.mxu0 0
      %1280 = vmatprep.subr.bf16.mxu0 0
      %1281 = vmatpush1.bf16.xpose.msra.mxu0 0
      %1282 = vmatprep.subr.bf16.mxu0 0
      %1283 = vmatpush1.bf16.xpose.msra.mxu0 0
      %1284 = vmatprep.subr.bf16.mxu0 0
      %1285 = vmatpush1.bf16.xpose.msra.mxu0 0
      %1286 = vmatprep.subr.bf16.mxu0 0
      %1287 = vmatpush1.bf16.xpose.msra.mxu0 0
      %1288 = vmatprep.subr.bf16.mxu0 0
      %1289 = vmatpush1.bf16.xpose.msra.mxu0 0
      %1290 = vmatprep.subr.bf16.mxu0 0
      %1291 = vmatpush1.bf16.xpose.msra.mxu0 0
      %1292 = vmatprep.subr.bf16.mxu0 0
      %1293 = vmatpush1.bf16.xpose.msra.mxu0 0
      %1294 = vmatprep.subr.bf16.mxu0 0
      %1295 = vmatpush1.bf16.xpose.msra.mxu0 0
      %1296 = vmatprep.subr.bf16.mxu0 0
      %1297 = vmatpush1.bf16.xpose.msra.mxu0 0
      %1298 = vmatprep.subr.bf16.mxu0 0
      %1299 = vmatpush1.bf16.xpose.msra.mxu0 0
      %1300 = vmatprep.subr.bf16.mxu0 0
      %1301 = vmatpush1.bf16.xpose.msra.mxu0 0
      %1302 = vmatprep.subr.bf16.mxu0 0
      %1303 = vmatpush1.bf16.xpose.msra.mxu0 0
      %1304 = vmatprep.mubr.bf16.mxu0 0
      %1305 = vmatmul.mubr.bf16.gmra.mrb[0].mxu0 %v1267
      %v1306 = vpop.f32.mrb[0].mxu0
      %v1307 = vadd.f32 0.0, %v1306
      %v1308 = vpop.f32.mrb[0].mxu0
      %v1309 = vpop.f32.mrb[0].mxu0
      %v1310 = vadd.f32 0.0, %v1309
      %v1311 = vpop.f32.mrb[0].mxu0
      %1312 = vdwg.mxu0
      %1313 = vrot.lane.b32.xlu0 %v764, 96
      %v1314 = vpop.permute.xlu0 %1313
      %v1316 = vsel %vm775, %v764, 0
      %v1319 = vsel %vm775, %v1314, 0
      %1321 = vmatprep.subr.bf16.mxu0 0
      %1322 = vmatpush1.bf16.xpose.msra.mxu0 %v1319
      %1323 = vmatprep.subr.bf16.mxu0 0
      %1324 = vmatpush1.bf16.xpose.msra.mxu0 0
      %1325 = vmatprep.subr.bf16.mxu0 0
      %1326 = vmatpush1.bf16.xpose.msra.mxu0 0
      %1327 = vmatprep.subr.bf16.mxu0 0
      %1328 = vmatpush1.bf16.xpose.msra.mxu0 0
      %1329 = vmatprep.subr.bf16.mxu0 0
      %1330 = vmatpush1.bf16.xpose.msra.mxu0 0
      %1331 = vmatprep.subr.bf16.mxu0 0
      %1332 = vmatpush1.bf16.xpose.msra.mxu0 0
      %1333 = vmatprep.subr.bf16.mxu0 0
      %1334 = vmatpush1.bf16.xpose.msra.mxu0 0
      %1335 = vmatprep.subr.bf16.mxu0 0
      %1336 = vmatpush1.bf16.xpose.msra.mxu0 0
      %1337 = vmatprep.subr.bf16.mxu0 0
      %1338 = vmatpush1.bf16.xpose.msra.mxu0 0
      %1339 = vmatprep.subr.bf16.mxu0 0
      %1340 = vmatpush1.bf16.xpose.msra.mxu0 0
      %1341 = vmatprep.subr.bf16.mxu0 0
      %1342 = vmatpush1.bf16.xpose.msra.mxu0 0
      %1343 = vmatprep.subr.bf16.mxu0 0
      %1344 = vmatpush1.bf16.xpose.msra.mxu0 0
      %1345 = vmatprep.subr.bf16.mxu0 0
      %1346 = vmatpush1.bf16.xpose.msra.mxu0 0
      %1347 = vmatprep.subr.bf16.mxu0 0
      %1348 = vmatpush1.bf16.xpose.msra.mxu0 0
      %1349 = vmatprep.subr.bf16.mxu0 0
      %1350 = vmatpush1.bf16.xpose.msra.mxu0 0
      %1351 = vmatprep.subr.bf16.mxu0 0
      %1352 = vmatpush1.bf16.xpose.msra.mxu0 0
      %1353 = vmatprep.mubr.bf16.mxu0 0
      %1354 = vmatmul.mubr.bf16.gmra.mrb[0].mxu0 %v1316
      %v1355 = vpop.f32.mrb[0].mxu0
      %v1356 = vadd.f32 0.0, %v1355
      %v1357 = vpop.f32.mrb[0].mxu0
      %v1358 = vpop.f32.mrb[0].mxu0
      %v1359 = vadd.f32 0.0, %v1358
      %v1360 = vpop.f32.mrb[0].mxu0
      %1361 = vdwg.mxu0
      %1362 = vrot.lane.b32.xlu0 %v766, 96
      %v1363 = vpop.permute.xlu0 %1362
      %v1365 = vsel %vm775, %v766, 0
      %v1368 = vsel %vm775, %v1363, 0
      %1370 = vmatprep.subr.bf16.mxu0 0
      %1371 = vmatpush1.bf16.xpose.msra.mxu0 %v1368
      %1372 = vmatprep.subr.bf16.mxu0 0
      %1373 = vmatpush1.bf16.xpose.msra.mxu0 0
      %1374 = vmatprep.subr.bf16.mxu0 0
      %1375 = vmatpush1.bf16.xpose.msra.mxu0 0
      %1376 = vmatprep.subr.bf16.mxu0 0
      %1377 = vmatpush1.bf16.xpose.msra.mxu0 0
      %1378 = vmatprep.subr.bf16.mxu0 0
      %1379 = vmatpush1.bf16.xpose.msra.mxu0 0
      %1380 = vmatprep.subr.bf16.mxu0 0
      %1381 = vmatpush1.bf16.xpose.msra.mxu0 0
      %1382 = vmatprep.subr.bf16.mxu0 0
      %1383 = vmatpush1.bf16.xpose.msra.mxu0 0
      %1384 = vmatprep.subr.bf16.mxu0 0
      %1385 = vmatpush1.bf16.xpose.msra.mxu0 0
      %1386 = vmatprep.subr.bf16.mxu0 0
      %1387 = vmatpush1.bf16.xpose.msra.mxu0 0
      %1388 = vmatprep.subr.bf16.mxu0 0
      %1389 = vmatpush1.bf16.xpose.msra.mxu0 0
      %1390 = vmatprep.subr.bf16.mxu0 0
      %1391 = vmatpush1.bf16.xpose.msra.mxu0 0
      %1392 = vmatprep.subr.bf16.mxu0 0
      %1393 = vmatpush1.bf16.xpose.msra.mxu0 0
      %1394 = vmatprep.subr.bf16.mxu0 0
      %1395 = vmatpush1.bf16.xpose.msra.mxu0 0
      %1396 = vmatprep.subr.bf16.mxu0 0
      %1397 = vmatpush1.bf16.xpose.msra.mxu0 0
      %1398 = vmatprep.subr.bf16.mxu0 0
      %1399 = vmatpush1.bf16.xpose.msra.mxu0 0
      %1400 = vmatprep.subr.bf16.mxu0 0
      %1401 = vmatpush1.bf16.xpose.msra.mxu0 0
      %1402 = vmatprep.mubr.bf16.mxu0 0
      %1403 = vmatmul.mubr.bf16.gmra.mrb[0].mxu0 %v1365
      %v1404 = vpop.f32.mrb[0].mxu0
      %v1405 = vadd.f32 0.0, %v1404
      %v1406 = vpop.f32.mrb[0].mxu0
      %v1407 = vpop.f32.mrb[0].mxu0
      %v1408 = vadd.f32 0.0, %v1407
      %v1409 = vpop.f32.mrb[0].mxu0
      %1410 = vdwg.mxu0
      %1411 = vrot.lane.b32.xlu0 %v768, 96
      %v1412 = vpop.permute.xlu0 %1411
      %v1414 = vsel %vm775, %v768, 0
      %v1417 = vsel %vm775, %v1412, 0
      %1419 = vmatprep.subr.bf16.mxu0 0
      %1420 = vmatpush1.bf16.xpose.msra.mxu0 %v1417
      %1421 = vmatprep.subr.bf16.mxu0 0
      %1422 = vmatpush1.bf16.xpose.msra.mxu0 0
      %1423 = vmatprep.subr.bf16.mxu0 0
      %1424 = vmatpush1.bf16.xpose.msra.mxu0 0
      %1425 = vmatprep.subr.bf16.mxu0 0
      %1426 = vmatpush1.bf16.xpose.msra.mxu0 0
      %1427 = vmatprep.subr.bf16.mxu0 0
      %1428 = vmatpush1.bf16.xpose.msra.mxu0 0
      %1429 = vmatprep.subr.bf16.mxu0 0
      %1430 = vmatpush1.bf16.xpose.msra.mxu0 0
      %1431 = vmatprep.subr.bf16.mxu0 0
      %1432 = vmatpush1.bf16.xpose.msra.mxu0 0
      %1433 = vmatprep.subr.bf16.mxu0 0
      %1434 = vmatpush1.bf16.xpose.msra.mxu0 0
      %1435 = vmatprep.subr.bf16.mxu0 0
      %1436 = vmatpush1.bf16.xpose.msra.mxu0 0
      %1437 = vmatprep.subr.bf16.mxu0 0
      %1438 = vmatpush1.bf16.xpose.msra.mxu0 0
      %1439 = vmatprep.subr.bf16.mxu0 0
      %1440 = vmatpush1.bf16.xpose.msra.mxu0 0
      %1441 = vmatprep.subr.bf16.mxu0 0
      %1442 = vmatpush1.bf16.xpose.msra.mxu0 0
      %1443 = vmatprep.subr.bf16.mxu0 0
      %1444 = vmatpush1.bf16.xpose.msra.mxu0 0
      %1445 = vmatprep.subr.bf16.mxu0 0
      %1446 = vmatpush1.bf16.xpose.msra.mxu0 0
      %1447 = vmatprep.subr.bf16.mxu0 0
      %1448 = vmatpush1.bf16.xpose.msra.mxu0 0
      %1449 = vmatprep.subr.bf16.mxu0 0
      %1450 = vmatpush1.bf16.xpose.msra.mxu0 0
      %1451 = vmatprep.mubr.bf16.mxu0 0
      %1452 = vmatmul.mubr.bf16.gmra.mrb[0].mxu0 %v1414
      %v1453 = vpop.f32.mrb[0].mxu0
      %v1454 = vadd.f32 0.0, %v1453
      %v1455 = vpop.f32.mrb[0].mxu0
      %v1456 = vpop.f32.mrb[0].mxu0
      %v1457 = vadd.f32 0.0, %v1456
      %v1458 = vpop.f32.mrb[0].mxu0
      %1459 = vdwg.mxu0
      %1460 = vrot.lane.b32.xlu0 %v770, 96
      %v1461 = vpop.permute.xlu0 %1460
      %v1463 = vsel %vm775, %v770, 0
      %v1466 = vsel %vm775, %v1461, 0
      %1468 = vmatprep.subr.bf16.mxu0 0
      %1469 = vmatpush1.bf16.xpose.msra.mxu0 %v1466
      %1470 = vmatprep.subr.bf16.mxu0 0
      %1471 = vmatpush1.bf16.xpose.msra.mxu0 0
      %1472 = vmatprep.subr.bf16.mxu0 0
      %1473 = vmatpush1.bf16.xpose.msra.mxu0 0
      %1474 = vmatprep.subr.bf16.mxu0 0
      %1475 = vmatpush1.bf16.xpose.msra.mxu0 0
      %1476 = vmatprep.subr.bf16.mxu0 0
      %1477 = vmatpush1.bf16.xpose.msra.mxu0 0
      %1478 = vmatprep.subr.bf16.mxu0 0
      %1479 = vmatpush1.bf16.xpose.msra.mxu0 0
      %1480 = vmatprep.subr.bf16.mxu0 0
      %1481 = vmatpush1.bf16.xpose.msra.mxu0 0
      %1482 = vmatprep.subr.bf16.mxu0 0
      %1483 = vmatpush1.bf16.xpose.msra.mxu0 0
      %1484 = vmatprep.subr.bf16.mxu0 0
      %1485 = vmatpush1.bf16.xpose.msra.mxu0 0
      %1486 = vmatprep.subr.bf16.mxu0 0
      %1487 = vmatpush1.bf16.xpose.msra.mxu0 0
      %1488 = vmatprep.subr.bf16.mxu0 0
      %1489 = vmatpush1.bf16.xpose.msra.mxu0 0
      %1490 = vmatprep.subr.bf16.mxu0 0
      %1491 = vmatpush1.bf16.xpose.msra.mxu0 0
      %1492 = vmatprep.subr.bf16.mxu0 0
      %1493 = vmatpush1.bf16.xpose.msra.mxu0 0
      %1494 = vmatprep.subr.bf16.mxu0 0
      %1495 = vmatpush1.bf16.xpose.msra.mxu0 0
      %1496 = vmatprep.subr.bf16.mxu0 0
      %1497 = vmatpush1.bf16.xpose.msra.mxu0 0
      %1498 = vmatprep.subr.bf16.mxu0 0
      %1499 = vmatpush1.bf16.xpose.msra.mxu0 0
      %1500 = vmatprep.mubr.bf16.mxu0 0
      %1501 = vmatmul.mubr.bf16.gmra.mrb[0].mxu0 %v1463
      %v1502 = vpop.f32.mrb[0].mxu0
      %v1503 = vadd.f32 0.0, %v1502
      %v1504 = vpop.f32.mrb[0].mxu0
      %v1505 = vpop.f32.mrb[0].mxu0
      %v1506 = vadd.f32 0.0, %v1505
      %v1507 = vpop.f32.mrb[0].mxu0
      %1508 = vdwg.mxu0
      %1509 = vrot.lane.b32.xlu0 %v772, 96
      %v1510 = vpop.permute.xlu0 %1509
      %v1512 = vsel %vm775, %v772, 0
      %v1515 = vsel %vm775, %v1510, 0
      %1517 = vmatprep.subr.bf16.mxu0 0
      %1518 = vmatpush1.bf16.xpose.msra.mxu0 %v1515
      %1519 = vmatprep.subr.bf16.mxu0 0
      %1520 = vmatpush1.bf16.xpose.msra.mxu0 0
      %1521 = vmatprep.subr.bf16.mxu0 0
      %1522 = vmatpush1.bf16.xpose.msra.mxu0 0
      %1523 = vmatprep.subr.bf16.mxu0 0
      %1524 = vmatpush1.bf16.xpose.msra.mxu0 0
      %1525 = vmatprep.subr.bf16.mxu0 0
      %1526 = vmatpush1.bf16.xpose.msra.mxu0 0
      %1527 = vmatprep.subr.bf16.mxu0 0
      %1528 = vmatpush1.bf16.xpose.msra.mxu0 0
      %1529 = vmatprep.subr.bf16.mxu0 0
      %1530 = vmatpush1.bf16.xpose.msra.mxu0 0
      %1531 = vmatprep.subr.bf16.mxu0 0
      %1532 = vmatpush1.bf16.xpose.msra.mxu0 0
      %1533 = vmatprep.subr.bf16.mxu0 0
      %1534 = vmatpush1.bf16.xpose.msra.mxu0 0
      %1535 = vmatprep.subr.bf16.mxu0 0
      %1536 = vmatpush1.bf16.xpose.msra.mxu0 0
      %1537 = vmatprep.subr.bf16.mxu0 0
      %1538 = vmatpush1.bf16.xpose.msra.mxu0 0
      %1539 = vmatprep.subr.bf16.mxu0 0
      %1540 = vmatpush1.bf16.xpose.msra.mxu0 0
      %1541 = vmatprep.subr.bf16.mxu0 0
      %1542 = vmatpush1.bf16.xpose.msra.mxu0 0
      %1543 = vmatprep.subr.bf16.mxu0 0
      %1544 = vmatpush1.bf16.xpose.msra.mxu0 0
      %1545 = vmatprep.subr.bf16.mxu0 0
      %1546 = vmatpush1.bf16.xpose.msra.mxu0 0
      %1547 = vmatprep.subr.bf16.mxu0 0
      %1548 = vmatpush1.bf16.xpose.msra.mxu0 0
      %1549 = vmatprep.mubr.bf16.mxu0 0
      %1550 = vmatmul.mubr.bf16.gmra.mrb[0].mxu0 %v1512
      %v1551 = vpop.f32.mrb[0].mxu0
      %v1552 = vadd.f32 0.0, %v1551
      %v1553 = vpop.f32.mrb[0].mxu0
      %v1554 = vpop.f32.mrb[0].mxu0
      %v1555 = vadd.f32 0.0, %v1554
      %v1556 = vpop.f32.mrb[0].mxu0
      %1557 = vdwg.mxu0
      %v1558 = vadd.f32 %v817, %v488
      %v1559 = vadd.f32 %v820, %v489
      %v1560 = vadd.f32 %v866, %v488
      %v1561 = vadd.f32 %v869, %v489
      %v1562 = vadd.f32 %v915, %v488
      %v1563 = vadd.f32 %v918, %v489
      %v1564 = vadd.f32 %v964, %v488
      %v1565 = vadd.f32 %v967, %v489
      %v1566 = vadd.f32 %v1013, %v490
      %v1567 = vadd.f32 %v1016, %v491
      %v1568 = vadd.f32 %v1062, %v490
      %v1569 = vadd.f32 %v1065, %v491
      %v1570 = vadd.f32 %v1111, %v490
      %v1571 = vadd.f32 %v1114, %v491
      %v1572 = vadd.f32 %v1160, %v490
      %v1573 = vadd.f32 %v1163, %v491
      %v1574 = vadd.f32 %v1209, %v492
      %v1575 = vadd.f32 %v1212, %v493
      %v1576 = vadd.f32 %v1258, %v492
      %v1577 = vadd.f32 %v1261, %v493
      %v1578 = vadd.f32 %v1307, %v492
      %v1579 = vadd.f32 %v1310, %v493
      %v1580 = vadd.f32 %v1356, %v492
      %v1581 = vadd.f32 %v1359, %v493
      %v1582 = vadd.f32 %v1405, %v494
      %v1583 = vadd.f32 %v1408, %v495
      %v1584 = vadd.f32 %v1454, %v494
      %v1585 = vadd.f32 %v1457, %v495
      %v1586 = vadd.f32 %v1503, %v494
      %v1587 = vadd.f32 %v1506, %v495
      %v1588 = vadd.f32 %v1552, %v494
      %v1589 = vadd.f32 %v1555, %v495
      %vm1590 = vcmask 130048
      %v1591 = vsel %vm1590, %v1558, -inf
      %1592 = vmax.xlane.f32.xlu0 %v1591
      %v1593 = vpop.xlane.xlu0 %1592
      %v1594 = vsel %vm1590, %v1559, -inf
      %1595 = vmax.xlane.f32.xlu0 %v1594
      %v1596 = vpop.xlane.xlu0 %1595
      %v1597 = vsel %vm1590, %v1560, -inf
      %1598 = vmax.xlane.f32.xlu0 %v1597
      %v1599 = vpop.xlane.xlu0 %1598
      %v1600 = vsel %vm1590, %v1561, -inf
      %1601 = vmax.xlane.f32.xlu0 %v1600
      %v1602 = vpop.xlane.xlu0 %1601
      %v1603 = vsel %vm1590, %v1562, -inf
      %1604 = vmax.xlane.f32.xlu0 %v1603
      %v1605 = vpop.xlane.xlu0 %1604
      %v1606 = vsel %vm1590, %v1563, -inf
      %1607 = vmax.xlane.f32.xlu0 %v1606
      %v1608 = vpop.xlane.xlu0 %1607
      %v1609 = vsel %vm1590, %v1564, -inf
      %1610 = vmax.xlane.f32.xlu0 %v1609
      %v1611 = vpop.xlane.xlu0 %1610
      %v1612 = vsel %vm1590, %v1565, -inf
      %1613 = vmax.xlane.f32.xlu0 %v1612
      %v1614 = vpop.xlane.xlu0 %1613
      %v1615 = vsel %vm1590, %v1566, -inf
      %1616 = vmax.xlane.f32.xlu0 %v1615
      %v1617 = vpop.xlane.xlu0 %1616
      %v1618 = vsel %vm1590, %v1567, -inf
      %1619 = vmax.xlane.f32.xlu0 %v1618
      %v1620 = vpop.xlane.xlu0 %1619
      %v1621 = vsel %vm1590, %v1568, -inf
      %1622 = vmax.xlane.f32.xlu0 %v1621
      %v1623 = vpop.xlane.xlu0 %1622
      %v1624 = vsel %vm1590, %v1569, -inf
      %1625 = vmax.xlane.f32.xlu0 %v1624
      %v1626 = vpop.xlane.xlu0 %1625
      %v1627 = vsel %vm1590, %v1570, -inf
      %1628 = vmax.xlane.f32.xlu0 %v1627
      %v1629 = vpop.xlane.xlu0 %1628
      %v1630 = vsel %vm1590, %v1571, -inf
      %1631 = vmax.xlane.f32.xlu0 %v1630
      %v1632 = vpop.xlane.xlu0 %1631
      %v1633 = vsel %vm1590, %v1572, -inf
      %1634 = vmax.xlane.f32.xlu0 %v1633
      %v1635 = vpop.xlane.xlu0 %1634
      %v1636 = vsel %vm1590, %v1573, -inf
      %1637 = vmax.xlane.f32.xlu0 %v1636
      %v1638 = vpop.xlane.xlu0 %1637
      %v1639 = vsel %vm1590, %v1574, -inf
      %1640 = vmax.xlane.f32.xlu0 %v1639
      %v1641 = vpop.xlane.xlu0 %1640
      %v1642 = vsel %vm1590, %v1575, -inf
      %1643 = vmax.xlane.f32.xlu0 %v1642
      %v1644 = vpop.xlane.xlu0 %1643
      %v1645 = vsel %vm1590, %v1576, -inf
      %1646 = vmax.xlane.f32.xlu0 %v1645
      %v1647 = vpop.xlane.xlu0 %1646
      %v1648 = vsel %vm1590, %v1577, -inf
      %1649 = vmax.xlane.f32.xlu0 %v1648
      %v1650 = vpop.xlane.xlu0 %1649
      %v1651 = vsel %vm1590, %v1578, -inf
      %1652 = vmax.xlane.f32.xlu0 %v1651
      %v1653 = vpop.xlane.xlu0 %1652
      %v1654 = vsel %vm1590, %v1579, -inf
      %1655 = vmax.xlane.f32.xlu0 %v1654
      %v1656 = vpop.xlane.xlu0 %1655
      %v1657 = vsel %vm1590, %v1580, -inf
      %1658 = vmax.xlane.f32.xlu0 %v1657
      %v1659 = vpop.xlane.xlu0 %1658
      %v1660 = vsel %vm1590, %v1581, -inf
      %1661 = vmax.xlane.f32.xlu0 %v1660
      %v1662 = vpop.xlane.xlu0 %1661
      %v1663 = vsel %vm1590, %v1582, -inf
      %1664 = vmax.xlane.f32.xlu0 %v1663
      %v1665 = vpop.xlane.xlu0 %1664
      %v1666 = vsel %vm1590, %v1583, -inf
      %1667 = vmax.xlane.f32.xlu0 %v1666
      %v1668 = vpop.xlane.xlu0 %1667
      %v1669 = vsel %vm1590, %v1584, -inf
      %1670 = vmax.xlane.f32.xlu0 %v1669
      %v1671 = vpop.xlane.xlu0 %1670
      %v1672 = vsel %vm1590, %v1585, -inf
      %1673 = vmax.xlane.f32.xlu0 %v1672
      %v1674 = vpop.xlane.xlu0 %1673
      %v1675 = vsel %vm1590, %v1586, -inf
      %1676 = vmax.xlane.f32.xlu0 %v1675
      %v1677 = vpop.xlane.xlu0 %1676
      %v1678 = vsel %vm1590, %v1587, -inf
      %1679 = vmax.xlane.f32.xlu0 %v1678
      %v1680 = vpop.xlane.xlu0 %1679
      %v1681 = vsel %vm1590, %v1588, -inf
      %1682 = vmax.xlane.f32.xlu0 %v1681
      %v1683 = vpop.xlane.xlu0 %1682
      %v1684 = vsel %vm1590, %v1589, -inf
      %1685 = vmax.xlane.f32.xlu0 %v1684
      %v1686 = vpop.xlane.xlu0 %1685
      %v1687 = vsub.f32 %v1558, %v1593
      %v1688 = vsub.f32 %v1559, %v1596
      %v1689 = vsub.f32 %v1560, %v1599
      %v1690 = vsub.f32 %v1561, %v1602
      %v1691 = vsub.f32 %v1562, %v1605
      %v1692 = vsub.f32 %v1563, %v1608
      %v1693 = vsub.f32 %v1564, %v1611
      %v1694 = vsub.f32 %v1565, %v1614
      %v1695 = vsub.f32 %v1566, %v1617
      %v1696 = vsub.f32 %v1567, %v1620
      %v1697 = vsub.f32 %v1568, %v1623
      %v1698 = vsub.f32 %v1569, %v1626
      %v1699 = vsub.f32 %v1570, %v1629
      %v1700 = vsub.f32 %v1571, %v1632
      %v1701 = vsub.f32 %v1572, %v1635
      %v1702 = vsub.f32 %v1573, %v1638
      %v1703 = vsub.f32 %v1574, %v1641
      %v1704 = vsub.f32 %v1575, %v1644
      %v1705 = vsub.f32 %v1576, %v1647
      %v1706 = vsub.f32 %v1577, %v1650
      %v1707 = vsub.f32 %v1578, %v1653
      %v1708 = vsub.f32 %v1579, %v1656
      %v1709 = vsub.f32 %v1580, %v1659
      %v1710 = vsub.f32 %v1581, %v1662
      %v1711 = vsub.f32 %v1582, %v1665
      %v1712 = vsub.f32 %v1583, %v1668
      %v1713 = vsub.f32 %v1584, %v1671
      %v1714 = vsub.f32 %v1585, %v1674
      %v1715 = vsub.f32 %v1586, %v1677
      %v1716 = vsub.f32 %v1587, %v1680
      %v1717 = vsub.f32 %v1588, %v1683
      %v1718 = vsub.f32 %v1589, %v1686
      %v1719 = vmul.f32 %v1687, 1.442695
      %v1720 = vpow.pop %v1719
      %v1721 = vmul.f32 %v1688, 1.442695
      %v1722 = vpow.pop %v1721
      %v1723 = vmul.f32 %v1689, 1.442695
      %v1724 = vpow.pop %v1723
      %v1725 = vmul.f32 %v1690, 1.442695
      %v1726 = vpow.pop %v1725
      %v1727 = vmul.f32 %v1691, 1.442695
      %v1728 = vpow.pop %v1727
      %v1729 = vmul.f32 %v1692, 1.442695
      %v1730 = vpow.pop %v1729
      %v1731 = vmul.f32 %v1693, 1.442695
      %v1732 = vpow.pop %v1731
      %v1733 = vmul.f32 %v1694, 1.442695
      %v1734 = vpow.pop %v1733
      %v1735 = vmul.f32 %v1695, 1.442695
      %v1736 = vpow.pop %v1735
      %v1737 = vmul.f32 %v1696, 1.442695
      %v1738 = vpow.pop %v1737
      %v1739 = vmul.f32 %v1697, 1.442695
      %v1740 = vpow.pop %v1739
      %v1741 = vmul.f32 %v1698, 1.442695
      %v1742 = vpow.pop %v1741
      %v1743 = vmul.f32 %v1699, 1.442695
      %v1744 = vpow.pop %v1743
      %v1745 = vmul.f32 %v1700, 1.442695
      %v1746 = vpow.pop %v1745
      %v1747 = vmul.f32 %v1701, 1.442695
      %v1748 = vpow.pop %v1747
      %v1749 = vmul.f32 %v1702, 1.442695
      %v1750 = vpow.pop %v1749
      %v1751 = vmul.f32 %v1703, 1.442695
      %v1752 = vpow.pop %v1751
      %v1753 = vmul.f32 %v1704, 1.442695
      %v1754 = vpow.pop %v1753
      %v1755 = vmul.f32 %v1705, 1.442695
      %v1756 = vpow.pop %v1755
      %v1757 = vmul.f32 %v1706, 1.442695
      %v1758 = vpow.pop %v1757
      %v1759 = vmul.f32 %v1707, 1.442695
      %v1760 = vpow.pop %v1759
      %v1761 = vmul.f32 %v1708, 1.442695
      %v1762 = vpow.pop %v1761
      %v1763 = vmul.f32 %v1709, 1.442695
      %v1764 = vpow.pop %v1763
      %v1765 = vmul.f32 %v1710, 1.442695
      %v1766 = vpow.pop %v1765
      %v1767 = vmul.f32 %v1711, 1.442695
      %v1768 = vpow.pop %v1767
      %v1769 = vmul.f32 %v1712, 1.442695
      %v1770 = vpow.pop %v1769
      %v1771 = vmul.f32 %v1713, 1.442695
      %v1772 = vpow.pop %v1771
      %v1773 = vmul.f32 %v1714, 1.442695
      %v1774 = vpow.pop %v1773
      %v1775 = vmul.f32 %v1715, 1.442695
      %v1776 = vpow.pop %v1775
      %v1777 = vmul.f32 %v1716, 1.442695
      %v1778 = vpow.pop %v1777
      %v1779 = vmul.f32 %v1717, 1.442695
      %v1780 = vpow.pop %v1779
      %v1781 = vmul.f32 %v1718, 1.442695
      %v1782 = vpow.pop %v1781
      %v1783 = vsel %vm1590, %v1720, 0.0
      %1784 = vadd.xlane.f32.xlu0 %v1783
      %v1785 = vpop.xlane.xlu0 %1784
      %v1786 = vsel %vm1590, %v1722, 0.0
      %1787 = vadd.xlane.f32.xlu0 %v1786
      %v1788 = vpop.xlane.xlu0 %1787
      %v1789 = vsel %vm1590, %v1724, 0.0
      %1790 = vadd.xlane.f32.xlu0 %v1789
      %v1791 = vpop.xlane.xlu0 %1790
      %v1792 = vsel %vm1590, %v1726, 0.0
      %1793 = vadd.xlane.f32.xlu0 %v1792
      %v1794 = vpop.xlane.xlu0 %1793
      %v1795 = vsel %vm1590, %v1728, 0.0
      %1796 = vadd.xlane.f32.xlu0 %v1795
      %v1797 = vpop.xlane.xlu0 %1796
      %v1798 = vsel %vm1590, %v1730, 0.0
      %1799 = vadd.xlane.f32.xlu0 %v1798
      %v1800 = vpop.xlane.xlu0 %1799
      %v1801 = vsel %vm1590, %v1732, 0.0
      %1802 = vadd.xlane.f32.xlu0 %v1801
      %v1803 = vpop.xlane.xlu0 %1802
      %v1804 = vsel %vm1590, %v1734, 0.0
      %1805 = vadd.xlane.f32.xlu0 %v1804
      %v1806 = vpop.xlane.xlu0 %1805
      %v1807 = vsel %vm1590, %v1736, 0.0
      %1808 = vadd.xlane.f32.xlu0 %v1807
      %v1809 = vpop.xlane.xlu0 %1808
      %v1810 = vsel %vm1590, %v1738, 0.0
      %1811 = vadd.xlane.f32.xlu0 %v1810
      %v1812 = vpop.xlane.xlu0 %1811
      %v1813 = vsel %vm1590, %v1740, 0.0
      %1814 = vadd.xlane.f32.xlu0 %v1813
      %v1815 = vpop.xlane.xlu0 %1814
      %v1816 = vsel %vm1590, %v1742, 0.0
      %1817 = vadd.xlane.f32.xlu0 %v1816
      %v1818 = vpop.xlane.xlu0 %1817
      %v1819 = vsel %vm1590, %v1744, 0.0
      %1820 = vadd.xlane.f32.xlu0 %v1819
      %v1821 = vpop.xlane.xlu0 %1820
      %v1822 = vsel %vm1590, %v1746, 0.0
      %1823 = vadd.xlane.f32.xlu0 %v1822
      %v1824 = vpop.xlane.xlu0 %1823
      %v1825 = vsel %vm1590, %v1748, 0.0
      %1826 = vadd.xlane.f32.xlu0 %v1825
      %v1827 = vpop.xlane.xlu0 %1826
      %v1828 = vsel %vm1590, %v1750, 0.0
      %1829 = vadd.xlane.f32.xlu0 %v1828
      %v1830 = vpop.xlane.xlu0 %1829
      %v1831 = vsel %vm1590, %v1752, 0.0
      %1832 = vadd.xlane.f32.xlu0 %v1831
      %v1833 = vpop.xlane.xlu0 %1832
      %v1834 = vsel %vm1590, %v1754, 0.0
      %1835 = vadd.xlane.f32.xlu0 %v1834
      %v1836 = vpop.xlane.xlu0 %1835
      %v1837 = vsel %vm1590, %v1756, 0.0
      %1838 = vadd.xlane.f32.xlu0 %v1837
      %v1839 = vpop.xlane.xlu0 %1838
      %v1840 = vsel %vm1590, %v1758, 0.0
      %1841 = vadd.xlane.f32.xlu0 %v1840
      %v1842 = vpop.xlane.xlu0 %1841
      %v1843 = vsel %vm1590, %v1760, 0.0
      %1844 = vadd.xlane.f32.xlu0 %v1843
      %v1845 = vpop.xlane.xlu0 %1844
      %v1846 = vsel %vm1590, %v1762, 0.0
      %1847 = vadd.xlane.f32.xlu0 %v1846
      %v1848 = vpop.xlane.xlu0 %1847
      %v1849 = vsel %vm1590, %v1764, 0.0
      %1850 = vadd.xlane.f32.xlu0 %v1849
      %v1851 = vpop.xlane.xlu0 %1850
      %v1852 = vsel %vm1590, %v1766, 0.0
      %1853 = vadd.xlane.f32.xlu0 %v1852
      %v1854 = vpop.xlane.xlu0 %1853
      %v1855 = vsel %vm1590, %v1768, 0.0
      %1856 = vadd.xlane.f32.xlu0 %v1855
      %v1857 = vpop.xlane.xlu0 %1856
      %v1858 = vsel %vm1590, %v1770, 0.0
      %1859 = vadd.xlane.f32.xlu0 %v1858
      %v1860 = vpop.xlane.xlu0 %1859
      %v1861 = vsel %vm1590, %v1772, 0.0
      %1862 = vadd.xlane.f32.xlu0 %v1861
      %v1863 = vpop.xlane.xlu0 %1862
      %v1864 = vsel %vm1590, %v1774, 0.0
      %1865 = vadd.xlane.f32.xlu0 %v1864
      %v1866 = vpop.xlane.xlu0 %1865
      %v1867 = vsel %vm1590, %v1776, 0.0
      %1868 = vadd.xlane.f32.xlu0 %v1867
      %v1869 = vpop.xlane.xlu0 %1868
      %v1870 = vsel %vm1590, %v1778, 0.0
      %1871 = vadd.xlane.f32.xlu0 %v1870
      %v1872 = vpop.xlane.xlu0 %1871
      %v1873 = vsel %vm1590, %v1780, 0.0
      %1874 = vadd.xlane.f32.xlu0 %v1873
      %v1875 = vpop.xlane.xlu0 %1874
      %v1876 = vsel %vm1590, %v1782, 0.0
      %1877 = vadd.xlane.f32.xlu0 %v1876
      %v1878 = vpop.xlane.xlu0 %1877
      %v1879 = vrcp.pop %v1785
      %v1880 = vrcp.pop %v1788
      %v1881 = vrcp.pop %v1791
      %v1882 = vrcp.pop %v1794
      %v1883 = vrcp.pop %v1797
      %v1884 = vrcp.pop %v1800
      %v1885 = vrcp.pop %v1803
      %v1886 = vrcp.pop %v1806
      %v1887 = vrcp.pop %v1809
      %v1888 = vrcp.pop %v1812
      %v1889 = vrcp.pop %v1815
      %v1890 = vrcp.pop %v1818
      %v1891 = vrcp.pop %v1821
      %v1892 = vrcp.pop %v1824
      %v1893 = vrcp.pop %v1827
      %v1894 = vrcp.pop %v1830
      %v1895 = vrcp.pop %v1833
      %v1896 = vrcp.pop %v1836
      %v1897 = vrcp.pop %v1839
      %v1898 = vrcp.pop %v1842
      %v1899 = vrcp.pop %v1845
      %v1900 = vrcp.pop %v1848
      %v1901 = vrcp.pop %v1851
      %v1902 = vrcp.pop %v1854
      %v1903 = vrcp.pop %v1857
      %v1904 = vrcp.pop %v1860
      %v1905 = vrcp.pop %v1863
      %v1906 = vrcp.pop %v1866
      %v1907 = vrcp.pop %v1869
      %v1908 = vrcp.pop %v1872
      %v1909 = vrcp.pop %v1875
      %v1910 = vrcp.pop %v1878
      %v1911 = vmul.f32 %v1720, %v1879
      %v1912 = vmul.f32 %v1722, %v1880
      %v1913 = vmul.f32 %v1724, %v1881
      %v1914 = vmul.f32 %v1726, %v1882
      %v1915 = vmul.f32 %v1728, %v1883
      %v1916 = vmul.f32 %v1730, %v1884
      %v1917 = vmul.f32 %v1732, %v1885
      %v1918 = vmul.f32 %v1734, %v1886
      %v1919 = vmul.f32 %v1736, %v1887
      %v1920 = vmul.f32 %v1738, %v1888
      %v1921 = vmul.f32 %v1740, %v1889
      %v1922 = vmul.f32 %v1742, %v1890
      %v1923 = vmul.f32 %v1744, %v1891
      %v1924 = vmul.f32 %v1746, %v1892
      %v1925 = vmul.f32 %v1748, %v1893
      %v1926 = vmul.f32 %v1750, %v1894
      %v1927 = vmul.f32 %v1752, %v1895
      %v1928 = vmul.f32 %v1754, %v1896
      %v1929 = vmul.f32 %v1756, %v1897
      %v1930 = vmul.f32 %v1758, %v1898
      %v1931 = vmul.f32 %v1760, %v1899
      %v1932 = vmul.f32 %v1762, %v1900
      %v1933 = vmul.f32 %v1764, %v1901
      %v1934 = vmul.f32 %v1766, %v1902
      %v1935 = vmul.f32 %v1768, %v1903
      %v1936 = vmul.f32 %v1770, %v1904
      %v1937 = vmul.f32 %v1772, %v1905
      %v1938 = vmul.f32 %v1774, %v1906
      %v1939 = vmul.f32 %v1776, %v1907
      %v1940 = vmul.f32 %v1778, %v1908
      %v1941 = vmul.f32 %v1780, %v1909
      %v1942 = vmul.f32 %v1782, %v1910
      %v1943 = vpack.c.bf16 %v1912, %v1911
      %v1944 = vpack.c.bf16 %v1914, %v1913
      %v1945 = vpack.c.bf16 %v1916, %v1915
      %v1946 = vpack.c.bf16 %v1918, %v1917
      %v1947 = vpack.c.bf16 %v1920, %v1919
      %v1948 = vpack.c.bf16 %v1922, %v1921
      %v1949 = vpack.c.bf16 %v1924, %v1923
      %v1950 = vpack.c.bf16 %v1926, %v1925
      %v1951 = vpack.c.bf16 %v1928, %v1927
      %v1952 = vpack.c.bf16 %v1930, %v1929
      %v1953 = vpack.c.bf16 %v1932, %v1931
      %v1954 = vpack.c.bf16 %v1934, %v1933
      %v1955 = vpack.c.bf16 %v1936, %v1935
      %v1956 = vpack.c.bf16 %v1938, %v1937
      %v1957 = vpack.c.bf16 %v1940, %v1939
      %v1958 = vpack.c.bf16 %v1942, %v1941
      %1959 = vrot.lane.b32.xlu0 %v741, 64
      %v1960 = vpop.permute.xlu0 %1959
      %v1963 = vsel %vm1590, %v1943, 0
      %1965 = vmatprep.subr.bf16.mxu0 0
      %1966 = vmatpush1.bf16.msra.mxu0 %v1960
      %1967 = vmatprep.subr.bf16.mxu0 0
      %1968 = vmatpush1.bf16.msra.mxu0 0
      %1969 = vmatprep.subr.bf16.mxu0 0
      %1970 = vmatpush1.bf16.msra.mxu0 0
      %1971 = vmatprep.subr.bf16.mxu0 0
      %1972 = vmatpush1.bf16.msra.mxu0 0
      %1973 = vmatprep.subr.bf16.mxu0 0
      %1974 = vmatpush1.bf16.msra.mxu0 0
      %1975 = vmatprep.subr.bf16.mxu0 0
      %1976 = vmatpush1.bf16.msra.mxu0 0
      %1977 = vmatprep.subr.bf16.mxu0 0
      %1978 = vmatpush1.bf16.msra.mxu0 0
      %1979 = vmatprep.subr.bf16.mxu0 0
      %1980 = vmatpush1.bf16.msra.mxu0 0
      %1981 = vmatprep.subr.bf16.mxu0 0
      %1982 = vmatpush1.bf16.msra.mxu0 0
      %1983 = vmatprep.subr.bf16.mxu0 0
      %1984 = vmatpush1.bf16.msra.mxu0 0
      %1985 = vmatprep.subr.bf16.mxu0 0
      %1986 = vmatpush1.bf16.msra.mxu0 0
      %1987 = vmatprep.subr.bf16.mxu0 0
      %1988 = vmatpush1.bf16.msra.mxu0 0
      %1989 = vmatprep.subr.bf16.mxu0 0
      %1990 = vmatpush1.bf16.msra.mxu0 0
      %1991 = vmatprep.subr.bf16.mxu0 0
      %1992 = vmatpush1.bf16.msra.mxu0 0
      %1993 = vmatprep.subr.bf16.mxu0 0
      %1994 = vmatpush1.bf16.msra.mxu0 0
      %1995 = vmatprep.subr.bf16.mxu0 0
      %1996 = vmatpush1.bf16.msra.mxu0 0
      %1997 = vmatprep.mubr.bf16.mxu0 0
      %1998 = vmatmul.mubr.bf16.gmra.mrb[0].mxu0 %v1963
      %v1999 = vpop.f32.mrb[0].mxu0
      %v2000 = vadd.f32 0.0, %v1999
      %v2001 = vpop.f32.mrb[0].mxu0
      %v2002 = vpop.f32.mrb[0].mxu0
      %v2003 = vadd.f32 0.0, %v2002
      %v2004 = vpop.f32.mrb[0].mxu0
      %2005 = vdwg.mxu0
      %2006 = vrot.lane.b32.xlu0 %v742, 64
      %v2007 = vpop.permute.xlu0 %2006
      %v2010 = vsel %vm1590, %v1944, 0
      %2012 = vmatprep.subr.bf16.mxu0 0
      %2013 = vmatpush1.bf16.msra.mxu0 %v2007
      %2014 = vmatprep.subr.bf16.mxu0 0
      %2015 = vmatpush1.bf16.msra.mxu0 0
      %2016 = vmatprep.subr.bf16.mxu0 0
      %2017 = vmatpush1.bf16.msra.mxu0 0
      %2018 = vmatprep.subr.bf16.mxu0 0
      %2019 = vmatpush1.bf16.msra.mxu0 0
      %2020 = vmatprep.subr.bf16.mxu0 0
      %2021 = vmatpush1.bf16.msra.mxu0 0
      %2022 = vmatprep.subr.bf16.mxu0 0
      %2023 = vmatpush1.bf16.msra.mxu0 0
      %2024 = vmatprep.subr.bf16.mxu0 0
      %2025 = vmatpush1.bf16.msra.mxu0 0
      %2026 = vmatprep.subr.bf16.mxu0 0
      %2027 = vmatpush1.bf16.msra.mxu0 0
      %2028 = vmatprep.subr.bf16.mxu0 0
      %2029 = vmatpush1.bf16.msra.mxu0 0
      %2030 = vmatprep.subr.bf16.mxu0 0
      %2031 = vmatpush1.bf16.msra.mxu0 0
      %2032 = vmatprep.subr.bf16.mxu0 0
      %2033 = vmatpush1.bf16.msra.mxu0 0
      %2034 = vmatprep.subr.bf16.mxu0 0
      %2035 = vmatpush1.bf16.msra.mxu0 0
      %2036 = vmatprep.subr.bf16.mxu0 0
      %2037 = vmatpush1.bf16.msra.mxu0 0
      %2038 = vmatprep.subr.bf16.mxu0 0
      %2039 = vmatpush1.bf16.msra.mxu0 0
      %2040 = vmatprep.subr.bf16.mxu0 0
      %2041 = vmatpush1.bf16.msra.mxu0 0
      %2042 = vmatprep.subr.bf16.mxu0 0
      %2043 = vmatpush1.bf16.msra.mxu0 0
      %2044 = vmatprep.mubr.bf16.mxu0 0
      %2045 = vmatmul.mubr.bf16.gmra.mrb[0].mxu0 %v2010
      %v2046 = vpop.f32.mrb[0].mxu0
      %v2047 = vadd.f32 0.0, %v2046
      %v2048 = vpop.f32.mrb[0].mxu0
      %v2049 = vpop.f32.mrb[0].mxu0
      %v2050 = vadd.f32 0.0, %v2049
      %v2051 = vpop.f32.mrb[0].mxu0
      %2052 = vdwg.mxu0
      %2053 = vrot.lane.b32.xlu0 %v743, 64
      %v2054 = vpop.permute.xlu0 %2053
      %v2057 = vsel %vm1590, %v1945, 0
      %2059 = vmatprep.subr.bf16.mxu0 0
      %2060 = vmatpush1.bf16.msra.mxu0 %v2054
      %2061 = vmatprep.subr.bf16.mxu0 0
      %2062 = vmatpush1.bf16.msra.mxu0 0
      %2063 = vmatprep.subr.bf16.mxu0 0
      %2064 = vmatpush1.bf16.msra.mxu0 0
      %2065 = vmatprep.subr.bf16.mxu0 0
      %2066 = vmatpush1.bf16.msra.mxu0 0
      %2067 = vmatprep.subr.bf16.mxu0 0
      %2068 = vmatpush1.bf16.msra.mxu0 0
      %2069 = vmatprep.subr.bf16.mxu0 0
      %2070 = vmatpush1.bf16.msra.mxu0 0
      %2071 = vmatprep.subr.bf16.mxu0 0
      %2072 = vmatpush1.bf16.msra.mxu0 0
      %2073 = vmatprep.subr.bf16.mxu0 0
      %2074 = vmatpush1.bf16.msra.mxu0 0
      %2075 = vmatprep.subr.bf16.mxu0 0
      %2076 = vmatpush1.bf16.msra.mxu0 0
      %2077 = vmatprep.subr.bf16.mxu0 0
      %2078 = vmatpush1.bf16.msra.mxu0 0
      %2079 = vmatprep.subr.bf16.mxu0 0
      %2080 = vmatpush1.bf16.msra.mxu0 0
      %2081 = vmatprep.subr.bf16.mxu0 0
      %2082 = vmatpush1.bf16.msra.mxu0 0
      %2083 = vmatprep.subr.bf16.mxu0 0
      %2084 = vmatpush1.bf16.msra.mxu0 0
      %2085 = vmatprep.subr.bf16.mxu0 0
      %2086 = vmatpush1.bf16.msra.mxu0 0
      %2087 = vmatprep.subr.bf16.mxu0 0
      %2088 = vmatpush1.bf16.msra.mxu0 0
      %2089 = vmatprep.subr.bf16.mxu0 0
      %2090 = vmatpush1.bf16.msra.mxu0 0
      %2091 = vmatprep.mubr.bf16.mxu0 0
      %2092 = vmatmul.mubr.bf16.gmra.mrb[0].mxu0 %v2057
      %v2093 = vpop.f32.mrb[0].mxu0
      %v2094 = vadd.f32 0.0, %v2093
      %v2095 = vpop.f32.mrb[0].mxu0
      %v2096 = vpop.f32.mrb[0].mxu0
      %v2097 = vadd.f32 0.0, %v2096
      %v2098 = vpop.f32.mrb[0].mxu0
      %2099 = vdwg.mxu0
      %2100 = vrot.lane.b32.xlu0 %v744, 64
      %v2101 = vpop.permute.xlu0 %2100
      %v2104 = vsel %vm1590, %v1946, 0
      %2106 = vmatprep.subr.bf16.mxu0 0
      %2107 = vmatpush1.bf16.msra.mxu0 %v2101
      %2108 = vmatprep.subr.bf16.mxu0 0
      %2109 = vmatpush1.bf16.msra.mxu0 0
      %2110 = vmatprep.subr.bf16.mxu0 0
      %2111 = vmatpush1.bf16.msra.mxu0 0
      %2112 = vmatprep.subr.bf16.mxu0 0
      %2113 = vmatpush1.bf16.msra.mxu0 0
      %2114 = vmatprep.subr.bf16.mxu0 0
      %2115 = vmatpush1.bf16.msra.mxu0 0
      %2116 = vmatprep.subr.bf16.mxu0 0
      %2117 = vmatpush1.bf16.msra.mxu0 0
      %2118 = vmatprep.subr.bf16.mxu0 0
      %2119 = vmatpush1.bf16.msra.mxu0 0
      %2120 = vmatprep.subr.bf16.mxu0 0
      %2121 = vmatpush1.bf16.msra.mxu0 0
      %2122 = vmatprep.subr.bf16.mxu0 0
      %2123 = vmatpush1.bf16.msra.mxu0 0
      %2124 = vmatprep.subr.bf16.mxu0 0
      %2125 = vmatpush1.bf16.msra.mxu0 0
      %2126 = vmatprep.subr.bf16.mxu0 0
      %2127 = vmatpush1.bf16.msra.mxu0 0
      %2128 = vmatprep.subr.bf16.mxu0 0
      %2129 = vmatpush1.bf16.msra.mxu0 0
      %2130 = vmatprep.subr.bf16.mxu0 0
      %2131 = vmatpush1.bf16.msra.mxu0 0
      %2132 = vmatprep.subr.bf16.mxu0 0
      %2133 = vmatpush1.bf16.msra.mxu0 0
      %2134 = vmatprep.subr.bf16.mxu0 0
      %2135 = vmatpush1.bf16.msra.mxu0 0
      %2136 = vmatprep.subr.bf16.mxu0 0
      %2137 = vmatpush1.bf16.msra.mxu0 0
      %2138 = vmatprep.mubr.bf16.mxu0 0
      %2139 = vmatmul.mubr.bf16.gmra.mrb[0].mxu0 %v2104
      %v2140 = vpop.f32.mrb[0].mxu0
      %v2141 = vadd.f32 0.0, %v2140
      %v2142 = vpop.f32.mrb[0].mxu0
      %v2143 = vpop.f32.mrb[0].mxu0
      %v2144 = vadd.f32 0.0, %v2143
      %v2145 = vpop.f32.mrb[0].mxu0
      %2146 = vdwg.mxu0
      %2147 = vrot.lane.b32.xlu0 %v750, 64
      %v2148 = vpop.permute.xlu0 %2147
      %v2151 = vsel %vm1590, %v1947, 0
      %2153 = vmatprep.subr.bf16.mxu0 0
      %2154 = vmatpush1.bf16.msra.mxu0 %v2148
      %2155 = vmatprep.subr.bf16.mxu0 0
      %2156 = vmatpush1.bf16.msra.mxu0 0
      %2157 = vmatprep.subr.bf16.mxu0 0
      %2158 = vmatpush1.bf16.msra.mxu0 0
      %2159 = vmatprep.subr.bf16.mxu0 0
      %2160 = vmatpush1.bf16.msra.mxu0 0
      %2161 = vmatprep.subr.bf16.mxu0 0
      %2162 = vmatpush1.bf16.msra.mxu0 0
      %2163 = vmatprep.subr.bf16.mxu0 0
      %2164 = vmatpush1.bf16.msra.mxu0 0
      %2165 = vmatprep.subr.bf16.mxu0 0
      %2166 = vmatpush1.bf16.msra.mxu0 0
      %2167 = vmatprep.subr.bf16.mxu0 0
      %2168 = vmatpush1.bf16.msra.mxu0 0
      %2169 = vmatprep.subr.bf16.mxu0 0
      %2170 = vmatpush1.bf16.msra.mxu0 0
      %2171 = vmatprep.subr.bf16.mxu0 0
      %2172 = vmatpush1.bf16.msra.mxu0 0
      %2173 = vmatprep.subr.bf16.mxu0 0
      %2174 = vmatpush1.bf16.msra.mxu0 0
      %2175 = vmatprep.subr.bf16.mxu0 0
      %2176 = vmatpush1.bf16.msra.mxu0 0
      %2177 = vmatprep.subr.bf16.mxu0 0
      %2178 = vmatpush1.bf16.msra.mxu0 0
      %2179 = vmatprep.subr.bf16.mxu0 0
      %2180 = vmatpush1.bf16.msra.mxu0 0
      %2181 = vmatprep.subr.bf16.mxu0 0
      %2182 = vmatpush1.bf16.msra.mxu0 0
      %2183 = vmatprep.subr.bf16.mxu0 0
      %2184 = vmatpush1.bf16.msra.mxu0 0
      %2185 = vmatprep.mubr.bf16.mxu0 0
      %2186 = vmatmul.mubr.bf16.gmra.mrb[0].mxu0 %v2151
      %v2187 = vpop.f32.mrb[0].mxu0
      %v2188 = vadd.f32 0.0, %v2187
      %v2189 = vpop.f32.mrb[0].mxu0
      %v2190 = vpop.f32.mrb[0].mxu0
      %v2191 = vadd.f32 0.0, %v2190
      %v2192 = vpop.f32.mrb[0].mxu0
      %2193 = vdwg.mxu0
      %2194 = vrot.lane.b32.xlu0 %v752, 64
      %v2195 = vpop.permute.xlu0 %2194
      %v2198 = vsel %vm1590, %v1948, 0
      %2200 = vmatprep.subr.bf16.mxu0 0
      %2201 = vmatpush1.bf16.msra.mxu0 %v2195
      %2202 = vmatprep.subr.bf16.mxu0 0
      %2203 = vmatpush1.bf16.msra.mxu0 0
      %2204 = vmatprep.subr.bf16.mxu0 0
      %2205 = vmatpush1.bf16.msra.mxu0 0
      %2206 = vmatprep.subr.bf16.mxu0 0
      %2207 = vmatpush1.bf16.msra.mxu0 0
      %2208 = vmatprep.subr.bf16.mxu0 0
      %2209 = vmatpush1.bf16.msra.mxu0 0
      %2210 = vmatprep.subr.bf16.mxu0 0
      %2211 = vmatpush1.bf16.msra.mxu0 0
      %2212 = vmatprep.subr.bf16.mxu0 0
      %2213 = vmatpush1.bf16.msra.mxu0 0
      %2214 = vmatprep.subr.bf16.mxu0 0
      %2215 = vmatpush1.bf16.msra.mxu0 0
      %2216 = vmatprep.subr.bf16.mxu0 0
      %2217 = vmatpush1.bf16.msra.mxu0 0
      %2218 = vmatprep.subr.bf16.mxu0 0
      %2219 = vmatpush1.bf16.msra.mxu0 0
      %2220 = vmatprep.subr.bf16.mxu0 0
      %2221 = vmatpush1.bf16.msra.mxu0 0
      %2222 = vmatprep.subr.bf16.mxu0 0
      %2223 = vmatpush1.bf16.msra.mxu0 0
      %2224 = vmatprep.subr.bf16.mxu0 0
      %2225 = vmatpush1.bf16.msra.mxu0 0
      %2226 = vmatprep.subr.bf16.mxu0 0
      %2227 = vmatpush1.bf16.msra.mxu0 0
      %2228 = vmatprep.subr.bf16.mxu0 0
      %2229 = vmatpush1.bf16.msra.mxu0 0
      %2230 = vmatprep.subr.bf16.mxu0 0
      %2231 = vmatpush1.bf16.msra.mxu0 0
      %2232 = vmatprep.mubr.bf16.mxu0 0
      %2233 = vmatmul.mubr.bf16.gmra.mrb[0].mxu0 %v2198
      %v2234 = vpop.f32.mrb[0].mxu0
      %v2235 = vadd.f32 0.0, %v2234
      %v2236 = vpop.f32.mrb[0].mxu0
      %v2237 = vpop.f32.mrb[0].mxu0
      %v2238 = vadd.f32 0.0, %v2237
      %v2239 = vpop.f32.mrb[0].mxu0
      %2240 = vdwg.mxu0
      %2241 = vrot.lane.b32.xlu0 %v754, 64
      %v2242 = vpop.permute.xlu0 %2241
      %v2245 = vsel %vm1590, %v1949, 0
      %2247 = vmatprep.subr.bf16.mxu0 0
      %2248 = vmatpush1.bf16.msra.mxu0 %v2242
      %2249 = vmatprep.subr.bf16.mxu0 0
      %2250 = vmatpush1.bf16.msra.mxu0 0
      %2251 = vmatprep.subr.bf16.mxu0 0
      %2252 = vmatpush1.bf16.msra.mxu0 0
      %2253 = vmatprep.subr.bf16.mxu0 0
      %2254 = vmatpush1.bf16.msra.mxu0 0
      %2255 = vmatprep.subr.bf16.mxu0 0
      %2256 = vmatpush1.bf16.msra.mxu0 0
      %2257 = vmatprep.subr.bf16.mxu0 0
      %2258 = vmatpush1.bf16.msra.mxu0 0
      %2259 = vmatprep.subr.bf16.mxu0 0
      %2260 = vmatpush1.bf16.msra.mxu0 0
      %2261 = vmatprep.subr.bf16.mxu0 0
      %2262 = vmatpush1.bf16.msra.mxu0 0
      %2263 = vmatprep.subr.bf16.mxu0 0
      %2264 = vmatpush1.bf16.msra.mxu0 0
      %2265 = vmatprep.subr.bf16.mxu0 0
      %2266 = vmatpush1.bf16.msra.mxu0 0
      %2267 = vmatprep.subr.bf16.mxu0 0
      %2268 = vmatpush1.bf16.msra.mxu0 0
      %2269 = vmatprep.subr.bf16.mxu0 0
      %2270 = vmatpush1.bf16.msra.mxu0 0
      %2271 = vmatprep.subr.bf16.mxu0 0
      %2272 = vmatpush1.bf16.msra.mxu0 0
      %2273 = vmatprep.subr.bf16.mxu0 0
      %2274 = vmatpush1.bf16.msra.mxu0 0
      %2275 = vmatprep.subr.bf16.mxu0 0
      %2276 = vmatpush1.bf16.msra.mxu0 0
      %2277 = vmatprep.subr.bf16.mxu0 0
      %2278 = vmatpush1.bf16.msra.mxu0 0
      %2279 = vmatprep.mubr.bf16.mxu0 0
      %2280 = vmatmul.mubr.bf16.gmra.mrb[0].mxu0 %v2245
      %v2281 = vpop.f32.mrb[0].mxu0
      %v2282 = vadd.f32 0.0, %v2281
      %v2283 = vpop.f32.mrb[0].mxu0
      %v2284 = vpop.f32.mrb[0].mxu0
      %v2285 = vadd.f32 0.0, %v2284
      %v2286 = vpop.f32.mrb[0].mxu0
      %2287 = vdwg.mxu0
      %2288 = vrot.lane.b32.xlu0 %v756, 64
      %v2289 = vpop.permute.xlu0 %2288
      %v2292 = vsel %vm1590, %v1950, 0
      %2294 = vmatprep.subr.bf16.mxu0 0
      %2295 = vmatpush1.bf16.msra.mxu0 %v2289
      %2296 = vmatprep.subr.bf16.mxu0 0
      %2297 = vmatpush1.bf16.msra.mxu0 0
      %2298 = vmatprep.subr.bf16.mxu0 0
      %2299 = vmatpush1.bf16.msra.mxu0 0
      %2300 = vmatprep.subr.bf16.mxu0 0
      %2301 = vmatpush1.bf16.msra.mxu0 0
      %2302 = vmatprep.subr.bf16.mxu0 0
      %2303 = vmatpush1.bf16.msra.mxu0 0
      %2304 = vmatprep.subr.bf16.mxu0 0
      %2305 = vmatpush1.bf16.msra.mxu0 0
      %2306 = vmatprep.subr.bf16.mxu0 0
      %2307 = vmatpush1.bf16.msra.mxu0 0
      %2308 = vmatprep.subr.bf16.mxu0 0
      %2309 = vmatpush1.bf16.msra.mxu0 0
      %2310 = vmatprep.subr.bf16.mxu0 0
      %2311 = vmatpush1.bf16.msra.mxu0 0
      %2312 = vmatprep.subr.bf16.mxu0 0
      %2313 = vmatpush1.bf16.msra.mxu0 0
      %2314 = vmatprep.subr.bf16.mxu0 0
      %2315 = vmatpush1.bf16.msra.mxu0 0
      %2316 = vmatprep.subr.bf16.mxu0 0
      %2317 = vmatpush1.bf16.msra.mxu0 0
      %2318 = vmatprep.subr.bf16.mxu0 0
      %2319 = vmatpush1.bf16.msra.mxu0 0
      %2320 = vmatprep.subr.bf16.mxu0 0
      %2321 = vmatpush1.bf16.msra.mxu0 0
      %2322 = vmatprep.subr.bf16.mxu0 0
      %2323 = vmatpush1.bf16.msra.mxu0 0
      %2324 = vmatprep.subr.bf16.mxu0 0
      %2325 = vmatpush1.bf16.msra.mxu0 0
      %2326 = vmatprep.mubr.bf16.mxu0 0
      %2327 = vmatmul.mubr.bf16.gmra.mrb[0].mxu0 %v2292
      %v2328 = vpop.f32.mrb[0].mxu0
      %v2329 = vadd.f32 0.0, %v2328
      %v2330 = vpop.f32.mrb[0].mxu0
      %v2331 = vpop.f32.mrb[0].mxu0
      %v2332 = vadd.f32 0.0, %v2331
      %v2333 = vpop.f32.mrb[0].mxu0
      %2334 = vdwg.mxu0
      %2335 = vrot.lane.b32.xlu0 %v758, 64
      %v2336 = vpop.permute.xlu0 %2335
      %v2339 = vsel %vm1590, %v1951, 0
      %2341 = vmatprep.subr.bf16.mxu0 0
      %2342 = vmatpush1.bf16.msra.mxu0 %v2336
      %2343 = vmatprep.subr.bf16.mxu0 0
      %2344 = vmatpush1.bf16.msra.mxu0 0
      %2345 = vmatprep.subr.bf16.mxu0 0
      %2346 = vmatpush1.bf16.msra.mxu0 0
      %2347 = vmatprep.subr.bf16.mxu0 0
      %2348 = vmatpush1.bf16.msra.mxu0 0
      %2349 = vmatprep.subr.bf16.mxu0 0
      %2350 = vmatpush1.bf16.msra.mxu0 0
      %2351 = vmatprep.subr.bf16.mxu0 0
      %2352 = vmatpush1.bf16.msra.mxu0 0
      %2353 = vmatprep.subr.bf16.mxu0 0
      %2354 = vmatpush1.bf16.msra.mxu0 0
      %2355 = vmatprep.subr.bf16.mxu0 0
      %2356 = vmatpush1.bf16.msra.mxu0 0
      %2357 = vmatprep.subr.bf16.mxu0 0
      %2358 = vmatpush1.bf16.msra.mxu0 0
      %2359 = vmatprep.subr.bf16.mxu0 0
      %2360 = vmatpush1.bf16.msra.mxu0 0
      %2361 = vmatprep.subr.bf16.mxu0 0
      %2362 = vmatpush1.bf16.msra.mxu0 0
      %2363 = vmatprep.subr.bf16.mxu0 0
      %2364 = vmatpush1.bf16.msra.mxu0 0
      %2365 = vmatprep.subr.bf16.mxu0 0
      %2366 = vmatpush1.bf16.msra.mxu0 0
      %2367 = vmatprep.subr.bf16.mxu0 0
      %2368 = vmatpush1.bf16.msra.mxu0 0
      %2369 = vmatprep.subr.bf16.mxu0 0
      %2370 = vmatpush1.bf16.msra.mxu0 0
      %2371 = vmatprep.subr.bf16.mxu0 0
      %2372 = vmatpush1.bf16.msra.mxu0 0
      %2373 = vmatprep.mubr.bf16.mxu0 0
      %2374 = vmatmul.mubr.bf16.gmra.mrb[0].mxu0 %v2339
      %v2375 = vpop.f32.mrb[0].mxu0
      %v2376 = vadd.f32 0.0, %v2375
      %v2377 = vpop.f32.mrb[0].mxu0
      %v2378 = vpop.f32.mrb[0].mxu0
      %v2379 = vadd.f32 0.0, %v2378
      %v2380 = vpop.f32.mrb[0].mxu0
      %2381 = vdwg.mxu0
      %2382 = vrot.lane.b32.xlu0 %v760, 64
      %v2383 = vpop.permute.xlu0 %2382
      %v2386 = vsel %vm1590, %v1952, 0
      %2388 = vmatprep.subr.bf16.mxu0 0
      %2389 = vmatpush1.bf16.msra.mxu0 %v2383
      %2390 = vmatprep.subr.bf16.mxu0 0
      %2391 = vmatpush1.bf16.msra.mxu0 0
      %2392 = vmatprep.subr.bf16.mxu0 0
      %2393 = vmatpush1.bf16.msra.mxu0 0
      %2394 = vmatprep.subr.bf16.mxu0 0
      %2395 = vmatpush1.bf16.msra.mxu0 0
      %2396 = vmatprep.subr.bf16.mxu0 0
      %2397 = vmatpush1.bf16.msra.mxu0 0
      %2398 = vmatprep.subr.bf16.mxu0 0
      %2399 = vmatpush1.bf16.msra.mxu0 0
      %2400 = vmatprep.subr.bf16.mxu0 0
      %2401 = vmatpush1.bf16.msra.mxu0 0
      %2402 = vmatprep.subr.bf16.mxu0 0
      %2403 = vmatpush1.bf16.msra.mxu0 0
      %2404 = vmatprep.subr.bf16.mxu0 0
      %2405 = vmatpush1.bf16.msra.mxu0 0
      %2406 = vmatprep.subr.bf16.mxu0 0
      %2407 = vmatpush1.bf16.msra.mxu0 0
      %2408 = vmatprep.subr.bf16.mxu0 0
      %2409 = vmatpush1.bf16.msra.mxu0 0
      %2410 = vmatprep.subr.bf16.mxu0 0
      %2411 = vmatpush1.bf16.msra.mxu0 0
      %2412 = vmatprep.subr.bf16.mxu0 0
      %2413 = vmatpush1.bf16.msra.mxu0 0
      %2414 = vmatprep.subr.bf16.mxu0 0
      %2415 = vmatpush1.bf16.msra.mxu0 0
      %2416 = vmatprep.subr.bf16.mxu0 0
      %2417 = vmatpush1.bf16.msra.mxu0 0
      %2418 = vmatprep.subr.bf16.mxu0 0
      %2419 = vmatpush1.bf16.msra.mxu0 0
      %2420 = vmatprep.mubr.bf16.mxu0 0
      %2421 = vmatmul.mubr.bf16.gmra.mrb[0].mxu0 %v2386
      %v2422 = vpop.f32.mrb[0].mxu0
      %v2423 = vadd.f32 0.0, %v2422
      %v2424 = vpop.f32.mrb[0].mxu0
      %v2425 = vpop.f32.mrb[0].mxu0
      %v2426 = vadd.f32 0.0, %v2425
      %v2427 = vpop.f32.mrb[0].mxu0
      %2428 = vdwg.mxu0
      %2429 = vrot.lane.b32.xlu0 %v762, 64
      %v2430 = vpop.permute.xlu0 %2429
      %v2433 = vsel %vm1590, %v1953, 0
      %2435 = vmatprep.subr.bf16.mxu0 0
      %2436 = vmatpush1.bf16.msra.mxu0 %v2430
      %2437 = vmatprep.subr.bf16.mxu0 0
      %2438 = vmatpush1.bf16.msra.mxu0 0
      %2439 = vmatprep.subr.bf16.mxu0 0
      %2440 = vmatpush1.bf16.msra.mxu0 0
      %2441 = vmatprep.subr.bf16.mxu0 0
      %2442 = vmatpush1.bf16.msra.mxu0 0
      %2443 = vmatprep.subr.bf16.mxu0 0
      %2444 = vmatpush1.bf16.msra.mxu0 0
      %2445 = vmatprep.subr.bf16.mxu0 0
      %2446 = vmatpush1.bf16.msra.mxu0 0
      %2447 = vmatprep.subr.bf16.mxu0 0
      %2448 = vmatpush1.bf16.msra.mxu0 0
      %2449 = vmatprep.subr.bf16.mxu0 0
      %2450 = vmatpush1.bf16.msra.mxu0 0
      %2451 = vmatprep.subr.bf16.mxu0 0
      %2452 = vmatpush1.bf16.msra.mxu0 0
      %2453 = vmatprep.subr.bf16.mxu0 0
      %2454 = vmatpush1.bf16.msra.mxu0 0
      %2455 = vmatprep.subr.bf16.mxu0 0
      %2456 = vmatpush1.bf16.msra.mxu0 0
      %2457 = vmatprep.subr.bf16.mxu0 0
      %2458 = vmatpush1.bf16.msra.mxu0 0
      %2459 = vmatprep.subr.bf16.mxu0 0
      %2460 = vmatpush1.bf16.msra.mxu0 0
      %2461 = vmatprep.subr.bf16.mxu0 0
      %2462 = vmatpush1.bf16.msra.mxu0 0
      %2463 = vmatprep.subr.bf16.mxu0 0
      %2464 = vmatpush1.bf16.msra.mxu0 0
      %2465 = vmatprep.subr.bf16.mxu0 0
      %2466 = vmatpush1.bf16.msra.mxu0 0
      %2467 = vmatprep.mubr.bf16.mxu0 0
      %2468 = vmatmul.mubr.bf16.gmra.mrb[0].mxu0 %v2433
      %v2469 = vpop.f32.mrb[0].mxu0
      %v2470 = vadd.f32 0.0, %v2469
      %v2471 = vpop.f32.mrb[0].mxu0
      %v2472 = vpop.f32.mrb[0].mxu0
      %v2473 = vadd.f32 0.0, %v2472
      %v2474 = vpop.f32.mrb[0].mxu0
      %2475 = vdwg.mxu0
      %2476 = vrot.lane.b32.xlu0 %v764, 64
      %v2477 = vpop.permute.xlu0 %2476
      %v2480 = vsel %vm1590, %v1954, 0
      %2482 = vmatprep.subr.bf16.mxu0 0
      %2483 = vmatpush1.bf16.msra.mxu0 %v2477
      %2484 = vmatprep.subr.bf16.mxu0 0
      %2485 = vmatpush1.bf16.msra.mxu0 0
      %2486 = vmatprep.subr.bf16.mxu0 0
      %2487 = vmatpush1.bf16.msra.mxu0 0
      %2488 = vmatprep.subr.bf16.mxu0 0
      %2489 = vmatpush1.bf16.msra.mxu0 0
      %2490 = vmatprep.subr.bf16.mxu0 0
      %2491 = vmatpush1.bf16.msra.mxu0 0
      %2492 = vmatprep.subr.bf16.mxu0 0
      %2493 = vmatpush1.bf16.msra.mxu0 0
      %2494 = vmatprep.subr.bf16.mxu0 0
      %2495 = vmatpush1.bf16.msra.mxu0 0
      %2496 = vmatprep.subr.bf16.mxu0 0
      %2497 = vmatpush1.bf16.msra.mxu0 0
      %2498 = vmatprep.subr.bf16.mxu0 0
      %2499 = vmatpush1.bf16.msra.mxu0 0
      %2500 = vmatprep.subr.bf16.mxu0 0
      %2501 = vmatpush1.bf16.msra.mxu0 0
      %2502 = vmatprep.subr.bf16.mxu0 0
      %2503 = vmatpush1.bf16.msra.mxu0 0
      %2504 = vmatprep.subr.bf16.mxu0 0
      %2505 = vmatpush1.bf16.msra.mxu0 0
      %2506 = vmatprep.subr.bf16.mxu0 0
      %2507 = vmatpush1.bf16.msra.mxu0 0
      %2508 = vmatprep.subr.bf16.mxu0 0
      %2509 = vmatpush1.bf16.msra.mxu0 0
      %2510 = vmatprep.subr.bf16.mxu0 0
      %2511 = vmatpush1.bf16.msra.mxu0 0
      %2512 = vmatprep.subr.bf16.mxu0 0
      %2513 = vmatpush1.bf16.msra.mxu0 0
      %2514 = vmatprep.mubr.bf16.mxu0 0
      %2515 = vmatmul.mubr.bf16.gmra.mrb[0].mxu0 %v2480
      %v2516 = vpop.f32.mrb[0].mxu0
      %v2517 = vadd.f32 0.0, %v2516
      %v2518 = vpop.f32.mrb[0].mxu0
      %v2519 = vpop.f32.mrb[0].mxu0
      %v2520 = vadd.f32 0.0, %v2519
      %v2521 = vpop.f32.mrb[0].mxu0
      %2522 = vdwg.mxu0
      %2523 = vrot.lane.b32.xlu0 %v766, 64
      %v2524 = vpop.permute.xlu0 %2523
      %v2527 = vsel %vm1590, %v1955, 0
      %2529 = vmatprep.subr.bf16.mxu0 0
      %2530 = vmatpush1.bf16.msra.mxu0 %v2524
      %2531 = vmatprep.subr.bf16.mxu0 0
      %2532 = vmatpush1.bf16.msra.mxu0 0
      %2533 = vmatprep.subr.bf16.mxu0 0
      %2534 = vmatpush1.bf16.msra.mxu0 0
      %2535 = vmatprep.subr.bf16.mxu0 0
      %2536 = vmatpush1.bf16.msra.mxu0 0
      %2537 = vmatprep.subr.bf16.mxu0 0
      %2538 = vmatpush1.bf16.msra.mxu0 0
      %2539 = vmatprep.subr.bf16.mxu0 0
      %2540 = vmatpush1.bf16.msra.mxu0 0
      %2541 = vmatprep.subr.bf16.mxu0 0
      %2542 = vmatpush1.bf16.msra.mxu0 0
      %2543 = vmatprep.subr.bf16.mxu0 0
      %2544 = vmatpush1.bf16.msra.mxu0 0
      %2545 = vmatprep.subr.bf16.mxu0 0
      %2546 = vmatpush1.bf16.msra.mxu0 0
      %2547 = vmatprep.subr.bf16.mxu0 0
      %2548 = vmatpush1.bf16.msra.mxu0 0
      %2549 = vmatprep.subr.bf16.mxu0 0
      %2550 = vmatpush1.bf16.msra.mxu0 0
      %2551 = vmatprep.subr.bf16.mxu0 0
      %2552 = vmatpush1.bf16.msra.mxu0 0
      %2553 = vmatprep.subr.bf16.mxu0 0
      %2554 = vmatpush1.bf16.msra.mxu0 0
      %2555 = vmatprep.subr.bf16.mxu0 0
      %2556 = vmatpush1.bf16.msra.mxu0 0
      %2557 = vmatprep.subr.bf16.mxu0 0
      %2558 = vmatpush1.bf16.msra.mxu0 0
      %2559 = vmatprep.subr.bf16.mxu0 0
      %2560 = vmatpush1.bf16.msra.mxu0 0
      %2561 = vmatprep.mubr.bf16.mxu0 0
      %2562 = vmatmul.mubr.bf16.gmra.mrb[0].mxu0 %v2527
      %v2563 = vpop.f32.mrb[0].mxu0
      %v2564 = vadd.f32 0.0, %v2563
      %v2565 = vpop.f32.mrb[0].mxu0
      %v2566 = vpop.f32.mrb[0].mxu0
      %v2567 = vadd.f32 0.0, %v2566
      %v2568 = vpop.f32.mrb[0].mxu0
      %2569 = vdwg.mxu0
      %2570 = vrot.lane.b32.xlu0 %v768, 64
      %v2571 = vpop.permute.xlu0 %2570
      %v2574 = vsel %vm1590, %v1956, 0
      %2576 = vmatprep.subr.bf16.mxu0 0
      %2577 = vmatpush1.bf16.msra.mxu0 %v2571
      %2578 = vmatprep.subr.bf16.mxu0 0
      %2579 = vmatpush1.bf16.msra.mxu0 0
      %2580 = vmatprep.subr.bf16.mxu0 0
      %2581 = vmatpush1.bf16.msra.mxu0 0
      %2582 = vmatprep.subr.bf16.mxu0 0
      %2583 = vmatpush1.bf16.msra.mxu0 0
      %2584 = vmatprep.subr.bf16.mxu0 0
      %2585 = vmatpush1.bf16.msra.mxu0 0
      %2586 = vmatprep.subr.bf16.mxu0 0
      %2587 = vmatpush1.bf16.msra.mxu0 0
      %2588 = vmatprep.subr.bf16.mxu0 0
      %2589 = vmatpush1.bf16.msra.mxu0 0
      %2590 = vmatprep.subr.bf16.mxu0 0
      %2591 = vmatpush1.bf16.msra.mxu0 0
      %2592 = vmatprep.subr.bf16.mxu0 0
      %2593 = vmatpush1.bf16.msra.mxu0 0
      %2594 = vmatprep.subr.bf16.mxu0 0
      %2595 = vmatpush1.bf16.msra.mxu0 0
      %2596 = vmatprep.subr.bf16.mxu0 0
      %2597 = vmatpush1.bf16.msra.mxu0 0
      %2598 = vmatprep.subr.bf16.mxu0 0
      %2599 = vmatpush1.bf16.msra.mxu0 0
      %2600 = vmatprep.subr.bf16.mxu0 0
      %2601 = vmatpush1.bf16.msra.mxu0 0
      %2602 = vmatprep.subr.bf16.mxu0 0
      %2603 = vmatpush1.bf16.msra.mxu0 0
      %2604 = vmatprep.subr.bf16.mxu0 0
      %2605 = vmatpush1.bf16.msra.mxu0 0
      %2606 = vmatprep.subr.bf16.mxu0 0
      %2607 = vmatpush1.bf16.msra.mxu0 0
      %2608 = vmatprep.mubr.bf16.mxu0 0
      %2609 = vmatmul.mubr.bf16.gmra.mrb[0].mxu0 %v2574
      %v2610 = vpop.f32.mrb[0].mxu0
      %v2611 = vadd.f32 0.0, %v2610
      %v2612 = vpop.f32.mrb[0].mxu0
      %v2613 = vpop.f32.mrb[0].mxu0
      %v2614 = vadd.f32 0.0, %v2613
      %v2615 = vpop.f32.mrb[0].mxu0
      %2616 = vdwg.mxu0
      %2617 = vrot.lane.b32.xlu0 %v770, 64
      %v2618 = vpop.permute.xlu0 %2617
      %v2621 = vsel %vm1590, %v1957, 0
      %2623 = vmatprep.subr.bf16.mxu0 0
      %2624 = vmatpush1.bf16.msra.mxu0 %v2618
      %2625 = vmatprep.subr.bf16.mxu0 0
      %2626 = vmatpush1.bf16.msra.mxu0 0
      %2627 = vmatprep.subr.bf16.mxu0 0
      %2628 = vmatpush1.bf16.msra.mxu0 0
      %2629 = vmatprep.subr.bf16.mxu0 0
      %2630 = vmatpush1.bf16.msra.mxu0 0
      %2631 = vmatprep.subr.bf16.mxu0 0
      %2632 = vmatpush1.bf16.msra.mxu0 0
      %2633 = vmatprep.subr.bf16.mxu0 0
      %2634 = vmatpush1.bf16.msra.mxu0 0
      %2635 = vmatprep.subr.bf16.mxu0 0
      %2636 = vmatpush1.bf16.msra.mxu0 0
      %2637 = vmatprep.subr.bf16.mxu0 0
      %2638 = vmatpush1.bf16.msra.mxu0 0
      %2639 = vmatprep.subr.bf16.mxu0 0
      %2640 = vmatpush1.bf16.msra.mxu0 0
      %2641 = vmatprep.subr.bf16.mxu0 0
      %2642 = vmatpush1.bf16.msra.mxu0 0
      %2643 = vmatprep.subr.bf16.mxu0 0
      %2644 = vmatpush1.bf16.msra.mxu0 0
      %2645 = vmatprep.subr.bf16.mxu0 0
      %2646 = vmatpush1.bf16.msra.mxu0 0
      %2647 = vmatprep.subr.bf16.mxu0 0
      %2648 = vmatpush1.bf16.msra.mxu0 0
      %2649 = vmatprep.subr.bf16.mxu0 0
      %2650 = vmatpush1.bf16.msra.mxu0 0
      %2651 = vmatprep.subr.bf16.mxu0 0
      %2652 = vmatpush1.bf16.msra.mxu0 0
      %2653 = vmatprep.subr.bf16.mxu0 0
      %2654 = vmatpush1.bf16.msra.mxu0 0
      %2655 = vmatprep.mubr.bf16.mxu0 0
      %2656 = vmatmul.mubr.bf16.gmra.mrb[0].mxu0 %v2621
      %v2657 = vpop.f32.mrb[0].mxu0
      %v2658 = vadd.f32 0.0, %v2657
      %v2659 = vpop.f32.mrb[0].mxu0
      %v2660 = vpop.f32.mrb[0].mxu0
      %v2661 = vadd.f32 0.0, %v2660
      %v2662 = vpop.f32.mrb[0].mxu0
      %2663 = vdwg.mxu0
      %2664 = vrot.lane.b32.xlu0 %v772, 64
      %v2665 = vpop.permute.xlu0 %2664
      %v2668 = vsel %vm1590, %v1958, 0
      %2670 = vmatprep.subr.bf16.mxu0 0
      %2671 = vmatpush1.bf16.msra.mxu0 %v2665
      %2672 = vmatprep.subr.bf16.mxu0 0
      %2673 = vmatpush1.bf16.msra.mxu0 0
      %2674 = vmatprep.subr.bf16.mxu0 0
      %2675 = vmatpush1.bf16.msra.mxu0 0
      %2676 = vmatprep.subr.bf16.mxu0 0
      %2677 = vmatpush1.bf16.msra.mxu0 0
      %2678 = vmatprep.subr.bf16.mxu0 0
      %2679 = vmatpush1.bf16.msra.mxu0 0
      %2680 = vmatprep.subr.bf16.mxu0 0
      %2681 = vmatpush1.bf16.msra.mxu0 0
      %2682 = vmatprep.subr.bf16.mxu0 0
      %2683 = vmatpush1.bf16.msra.mxu0 0
      %2684 = vmatprep.subr.bf16.mxu0 0
      %2685 = vmatpush1.bf16.msra.mxu0 0
      %2686 = vmatprep.subr.bf16.mxu0 0
      %2687 = vmatpush1.bf16.msra.mxu0 0
      %2688 = vmatprep.subr.bf16.mxu0 0
      %2689 = vmatpush1.bf16.msra.mxu0 0
      %2690 = vmatprep.subr.bf16.mxu0 0
      %2691 = vmatpush1.bf16.msra.mxu0 0
      %2692 = vmatprep.subr.bf16.mxu0 0
      %2693 = vmatpush1.bf16.msra.mxu0 0
      %2694 = vmatprep.subr.bf16.mxu0 0
      %2695 = vmatpush1.bf16.msra.mxu0 0
      %2696 = vmatprep.subr.bf16.mxu0 0
      %2697 = vmatpush1.bf16.msra.mxu0 0
      %2698 = vmatprep.subr.bf16.mxu0 0
      %2699 = vmatpush1.bf16.msra.mxu0 0
      %2700 = vmatprep.subr.bf16.mxu0 0
      %2701 = vmatpush1.bf16.msra.mxu0 0
      %2702 = vmatprep.mubr.bf16.mxu0 0
      %2703 = vmatmul.mubr.bf16.gmra.mrb[0].mxu0 %v2668
      %v2704 = vpop.f32.mrb[0].mxu0
      %v2705 = vadd.f32 0.0, %v2704
      %v2706 = vpop.f32.mrb[0].mxu0
      %v2707 = vpop.f32.mrb[0].mxu0
      %v2708 = vadd.f32 0.0, %v2707
      %v2709 = vpop.f32.mrb[0].mxu0
      %2710 = vdwg.mxu0
      %2719 = vrot.lane.b32.xlu0 %v2188, 8
      %v2720 = vpop.permute.xlu0 %2719
      %2721 = vrot.lane.b32.xlu0 %v2191, 8
      %v2722 = vpop.permute.xlu0 %2721
      %2723 = vrot.lane.b32.xlu0 %v2235, 8
      %v2724 = vpop.permute.xlu0 %2723
      %2725 = vrot.lane.b32.xlu0 %v2238, 8
      %v2726 = vpop.permute.xlu0 %2725
      %2727 = vrot.lane.b32.xlu0 %v2282, 8
      %v2728 = vpop.permute.xlu0 %2727
      %2729 = vrot.lane.b32.xlu0 %v2285, 8
      %v2730 = vpop.permute.xlu0 %2729
      %2731 = vrot.lane.b32.xlu0 %v2329, 8
      %v2732 = vpop.permute.xlu0 %2731
      %2733 = vrot.lane.b32.xlu0 %v2332, 8
      %v2734 = vpop.permute.xlu0 %2733
      %2751 = vrot.lane.b32.xlu0 %v2376, 16
      %v2752 = vpop.permute.xlu0 %2751
      %2753 = vrot.lane.b32.xlu0 %v2379, 16
      %v2754 = vpop.permute.xlu0 %2753
      %2755 = vrot.lane.b32.xlu0 %v2423, 16
      %v2756 = vpop.permute.xlu0 %2755
      %2757 = vrot.lane.b32.xlu0 %v2426, 16
      %v2758 = vpop.permute.xlu0 %2757
      %2759 = vrot.lane.b32.xlu0 %v2470, 16
      %v2760 = vpop.permute.xlu0 %2759
      %2761 = vrot.lane.b32.xlu0 %v2473, 16
      %v2762 = vpop.permute.xlu0 %2761
      %2763 = vrot.lane.b32.xlu0 %v2517, 16
      %v2764 = vpop.permute.xlu0 %2763
      %2765 = vrot.lane.b32.xlu0 %v2520, 16
      %v2766 = vpop.permute.xlu0 %2765
      %2783 = vrot.lane.b32.xlu0 %v2564, 24
      %v2784 = vpop.permute.xlu0 %2783
      %2785 = vrot.lane.b32.xlu0 %v2567, 24
      %v2786 = vpop.permute.xlu0 %2785
      %2787 = vrot.lane.b32.xlu0 %v2611, 24
      %v2788 = vpop.permute.xlu0 %2787
      %2789 = vrot.lane.b32.xlu0 %v2614, 24
      %v2790 = vpop.permute.xlu0 %2789
      %2791 = vrot.lane.b32.xlu0 %v2658, 24
      %v2792 = vpop.permute.xlu0 %2791
      %2793 = vrot.lane.b32.xlu0 %v2661, 24
      %v2794 = vpop.permute.xlu0 %2793
      %2795 = vrot.lane.b32.xlu0 %v2705, 24
      %v2796 = vpop.permute.xlu0 %2795
      %2797 = vrot.lane.b32.xlu0 %v2708, 24
      %v2798 = vpop.permute.xlu0 %2797
      %v2807 = vsel %vm775, %v2000, %v2720
      %v2808 = vsel %vm775, %v2003, %v2722
      %v2809 = vsel %vm775, %v2047, %v2724
      %v2810 = vsel %vm775, %v2050, %v2726
      %v2811 = vsel %vm775, %v2094, %v2728
      %v2812 = vsel %vm775, %v2097, %v2730
      %v2813 = vsel %vm775, %v2141, %v2732
      %v2814 = vsel %vm775, %v2144, %v2734
      %v2815 = vsel %vm1590, %v2807, %v2752
      %v2816 = vsel %vm1590, %v2808, %v2754
      %v2817 = vsel %vm1590, %v2809, %v2756
      %v2818 = vsel %vm1590, %v2810, %v2758
      %v2819 = vsel %vm1590, %v2811, %v2760
      %v2820 = vsel %vm1590, %v2812, %v2762
      %v2821 = vsel %vm1590, %v2813, %v2764
      %v2822 = vsel %vm1590, %v2814, %v2766
      %vm2823 = vcmask 195584
      %v2824 = vsel %vm2823, %v2815, %v2784
      %v2825 = vsel %vm2823, %v2816, %v2786
      %v2826 = vsel %vm2823, %v2817, %v2788
      %v2827 = vsel %vm2823, %v2818, %v2790
      %v2828 = vsel %vm2823, %v2819, %v2792
      %v2829 = vsel %vm2823, %v2820, %v2794
      %v2830 = vsel %vm2823, %v2821, %v2796
      %v2831 = vsel %vm2823, %v2822, %v2798
      %v2832 = vpack.c.bf16 %v2825, %v2824
      %v2833 = vpack.c.bf16 %v2827, %v2826
      %v2834 = vpack.c.bf16 %v2829, %v2828
      %v2835 = vpack.c.bf16 %v2831, %v2830
      %v2836 = vld [vmem:[%s6] sm:$0xf]
      %v2837 = vld [vmem:[%s6 + $0x4] sm:$0xf]
      %v2838 = vld [vmem:[%s6 + $0x8] sm:$0xf]
      %v2839 = vld [vmem:[%s6 + $0xc] sm:$0xf]
      %v2841 = vlaneseq
      %v2842 = vshrl.u32 %v2841, 7
      %v2843 = vsub.s32 0, %v2842
      %v2844 = vrot.slane %v501, %v2843
      %v2850 = vunpack.c.l.b16 %v2836
      %v2851 = vunpack.c.l.b16 %v2837
      %v2852 = vunpack.c.l.b16 %v2838
      %v2853 = vunpack.c.l.b16 %v2839
      %v2854 = vpack.c.b16 %v2851, %v2850
      %v2855 = vpack.c.b16 %v2853, %v2852
      %v2859 = vsel %vm504, %v2832, 0
      %v2862 = vsel %vm504, %v2833, 0
      %v2865 = vsel %vm504, %v2834, 0
      %v2868 = vsel %vm504, %v2835, 0
      %2870 = vmatprep.subr.bf16.mxu0 0
      %2871 = vmatpush1.bf16.msra.mxu0 %v2854
      %2872 = vmatprep.subr.bf16.mxu0 0
      %2873 = vmatpush1.bf16.msra.mxu0 %v2855
      %2874 = vmatprep.subr.bf16.mxu0 0
      %2875 = vmatpush1.bf16.msra.mxu0 0
      %2876 = vmatprep.subr.bf16.mxu0 0
      %2877 = vmatpush1.bf16.msra.mxu0 0
      %2878 = vmatprep.subr.bf16.mxu0 0
      %2879 = vmatpush1.bf16.msra.mxu0 0
      %2880 = vmatprep.subr.bf16.mxu0 0
      %2881 = vmatpush1.bf16.msra.mxu0 0
      %2882 = vmatprep.subr.bf16.mxu0 0
      %2883 = vmatpush1.bf16.msra.mxu0 0
      %2884 = vmatprep.subr.bf16.mxu0 0
      %2885 = vmatpush1.bf16.msra.mxu0 0
      %2886 = vmatprep.subr.bf16.mxu0 0
      %2887 = vmatpush1.bf16.msra.mxu0 0
      %2888 = vmatprep.subr.bf16.mxu0 0
      %2889 = vmatpush1.bf16.msra.mxu0 0
      %2890 = vmatprep.subr.bf16.mxu0 0
      %2891 = vmatpush1.bf16.msra.mxu0 0
      %2892 = vmatprep.subr.bf16.mxu0 0
      %2893 = vmatpush1.bf16.msra.mxu0 0
      %2894 = vmatprep.subr.bf16.mxu0 0
      %2895 = vmatpush1.bf16.msra.mxu0 0
      %2896 = vmatprep.subr.bf16.mxu0 0
      %2897 = vmatpush1.bf16.msra.mxu0 0
      %2898 = vmatprep.subr.bf16.mxu0 0
      %2899 = vmatpush1.bf16.msra.mxu0 0
      %2900 = vmatprep.subr.bf16.mxu0 0
      %2901 = vmatpush1.bf16.msra.mxu0 0
      %2902 = vmatprep.mubr.bf16.mxu0 0
      %2903 = vmatmul.mubr.bf16.gmra.mrb[0].mxu0 %v2859
      %v2904 = vpop.f32.mrb[0].mxu0
      %v2905 = vadd.f32 %v2844, %v2904
      %v2906 = vpop.f32.mrb[0].mxu0
      %v2907 = vpop.f32.mrb[0].mxu0
      %v2908 = vadd.f32 %v2844, %v2907
      %v2909 = vpop.f32.mrb[0].mxu0
      %2910 = vmatprep.mubr.bf16.mxu0 0
      %2911 = vmatmul.mubr.bf16.gmra.mrb[0].mxu0 %v2862
      %v2912 = vpop.f32.mrb[0].mxu0
      %v2913 = vadd.f32 %v2844, %v2912
      %v2914 = vpop.f32.mrb[0].mxu0
      %v2915 = vpop.f32.mrb[0].mxu0
      %v2916 = vadd.f32 %v2844, %v2915
      %v2917 = vpop.f32.mrb[0].mxu0
      %2918 = vmatprep.mubr.bf16.mxu0 0
      %2919 = vmatmul.mubr.bf16.gmra.mrb[0].mxu0 %v2865
      %v2920 = vpop.f32.mrb[0].mxu0
      %v2921 = vadd.f32 %v2844, %v2920
      %v2922 = vpop.f32.mrb[0].mxu0
      %v2923 = vpop.f32.mrb[0].mxu0
      %v2924 = vadd.f32 %v2844, %v2923
      %v2925 = vpop.f32.mrb[0].mxu0
      %2926 = vmatprep.mubr.bf16.mxu0 0
      %2927 = vmatmul.mubr.bf16.gmra.mrb[0].mxu0 %v2868
      %v2928 = vpop.f32.mrb[0].mxu0
      %v2929 = vadd.f32 %v2844, %v2928
      %v2930 = vpop.f32.mrb[0].mxu0
      %v2931 = vpop.f32.mrb[0].mxu0
      %v2932 = vadd.f32 %v2844, %v2931
      %v2933 = vpop.f32.mrb[0].mxu0
      %2934 = vdwg.mxu0
      %v2935 = vadd.f32 %v472, %v2905
      %v2936 = vadd.f32 %v473, %v2908
      %v2937 = vadd.f32 %v474, %v2913
      %v2938 = vadd.f32 %v475, %v2916
      %v2939 = vadd.f32 %v476, %v2921
      %v2940 = vadd.f32 %v477, %v2924
      %v2941 = vadd.f32 %v478, %v2929
      %v2942 = vadd.f32 %v479, %v2932
      %v2943 = vsel %vm504, %v2935, 0.0
      %2944 = vadd.xlane.f32.xlu0 %v2943
      %v2945 = vpop.xlane.xlu0 %2944
      %v2946 = vsel %vm504, %v2936, 0.0
      %2947 = vadd.xlane.f32.xlu0 %v2946
      %v2948 = vpop.xlane.xlu0 %2947
      %v2949 = vsel %vm504, %v2937, 0.0
      %2950 = vadd.xlane.f32.xlu0 %v2949
      %v2951 = vpop.xlane.xlu0 %2950
      %v2952 = vsel %vm504, %v2938, 0.0
      %2953 = vadd.xlane.f32.xlu0 %v2952
      %v2954 = vpop.xlane.xlu0 %2953
      %v2955 = vsel %vm504, %v2939, 0.0
      %2956 = vadd.xlane.f32.xlu0 %v2955
      %v2957 = vpop.xlane.xlu0 %2956
      %v2958 = vsel %vm504, %v2940, 0.0
      %2959 = vadd.xlane.f32.xlu0 %v2958
      %v2960 = vpop.xlane.xlu0 %2959
      %v2961 = vsel %vm504, %v2941, 0.0
      %2962 = vadd.xlane.f32.xlu0 %v2961
      %v2963 = vpop.xlane.xlu0 %2962
      %v2964 = vsel %vm504, %v2942, 0.0
      %2965 = vadd.xlane.f32.xlu0 %v2964
      %v2966 = vpop.xlane.xlu0 %2965
      %v2967 = vmul.f32 %v2945, %v529
      %v2968 = vmul.f32 %v2948, %v529
      %v2969 = vmul.f32 %v2951, %v529
      %v2970 = vmul.f32 %v2954, %v529
      %v2971 = vmul.f32 %v2957, %v529
      %v2972 = vmul.f32 %v2960, %v529
      %v2973 = vmul.f32 %v2963, %v529
      %v2974 = vmul.f32 %v2966, %v529
      %v2975 = vsub.f32 %v2935, %v2967
      %v2976 = vsub.f32 %v2936, %v2968
      %v2977 = vsub.f32 %v2937, %v2969
      %v2978 = vsub.f32 %v2938, %v2970
      %v2979 = vsub.f32 %v2939, %v2971
      %v2980 = vsub.f32 %v2940, %v2972
      %v2981 = vsub.f32 %v2941, %v2973
      %v2982 = vsub.f32 %v2942, %v2974
      %v2983 = vmul.f32 %v2975, %v2975
      %v2984 = vmul.f32 %v2976, %v2976
      %v2985 = vmul.f32 %v2977, %v2977
      %v2986 = vmul.f32 %v2978, %v2978
      %v2987 = vmul.f32 %v2979, %v2979
      %v2988 = vmul.f32 %v2980, %v2980
      %v2989 = vmul.f32 %v2981, %v2981
      %v2990 = vmul.f32 %v2982, %v2982
      %v2991 = vsel %vm504, %v2983, 0.0
      %2992 = vadd.xlane.f32.xlu0 %v2991
      %v2993 = vpop.xlane.xlu0 %2992
      %v2994 = vsel %vm504, %v2984, 0.0
      %2995 = vadd.xlane.f32.xlu0 %v2994
      %v2996 = vpop.xlane.xlu0 %2995
      %v2997 = vsel %vm504, %v2985, 0.0
      %2998 = vadd.xlane.f32.xlu0 %v2997
      %v2999 = vpop.xlane.xlu0 %2998
      %v3000 = vsel %vm504, %v2986, 0.0
      %3001 = vadd.xlane.f32.xlu0 %v3000
      %v3002 = vpop.xlane.xlu0 %3001
      %v3003 = vsel %vm504, %v2987, 0.0
      %3004 = vadd.xlane.f32.xlu0 %v3003
      %v3005 = vpop.xlane.xlu0 %3004
      %v3006 = vsel %vm504, %v2988, 0.0
      %3007 = vadd.xlane.f32.xlu0 %v3006
      %v3008 = vpop.xlane.xlu0 %3007
      %v3009 = vsel %vm504, %v2989, 0.0
      %3010 = vadd.xlane.f32.xlu0 %v3009
      %v3011 = vpop.xlane.xlu0 %3010
      %v3012 = vsel %vm504, %v2990, 0.0
      %3013 = vadd.xlane.f32.xlu0 %v3012
      %v3014 = vpop.xlane.xlu0 %3013
      %v3015 = vmul.f32 %v2993, %v529
      %v3016 = vmul.f32 %v2996, %v529
      %v3017 = vmul.f32 %v2999, %v529
      %v3018 = vmul.f32 %v3002, %v529
      %v3019 = vmul.f32 %v3005, %v529
      %v3020 = vmul.f32 %v3008, %v529
      %v3021 = vmul.f32 %v3011, %v529
      %v3022 = vmul.f32 %v3014, %v529
      %v3023 = vadd.f32 %v3015, 1e-05
      %v3024 = vadd.f32 %v3016, 1e-05
      %v3025 = vadd.f32 %v3017, 1e-05
      %v3026 = vadd.f32 %v3018, 1e-05
      %v3027 = vadd.f32 %v3019, 1e-05
      %v3028 = vadd.f32 %v3020, 1e-05
      %v3029 = vadd.f32 %v3021, 1e-05
      %v3030 = vadd.f32 %v3022, 1e-05
      %v3031 = vrsqrt.pop %v3023
      %v3032 = vrsqrt.pop %v3024
      %v3033 = vrsqrt.pop %v3025
      %v3034 = vrsqrt.pop %v3026
      %v3035 = vrsqrt.pop %v3027
      %v3036 = vrsqrt.pop %v3028
      %v3037 = vrsqrt.pop %v3029
      %v3038 = vrsqrt.pop %v3030
      %v3039 = vmul.f32 %v2975, %v3031
      %v3040 = vmul.f32 %v2976, %v3032
      %v3041 = vmul.f32 %v2977, %v3033
      %v3042 = vmul.f32 %v2978, %v3034
      %v3043 = vmul.f32 %v2979, %v3035
      %v3044 = vmul.f32 %v2980, %v3036
      %v3045 = vmul.f32 %v2981, %v3037
      %v3046 = vmul.f32 %v2982, %v3038
      %v3048 = vlaneseq
      %v3049 = vshrl.u32 %v3048, 7
      %v3050 = vsub.s32 0, %v3049
      %v3051 = vrot.slane %v498, %v3050
      %v3053 = vmul.f32 %v3039, %v3051
      %v3054 = vmul.f32 %v3040, %v3051
      %v3055 = vmul.f32 %v3041, %v3051
      %v3056 = vmul.f32 %v3042, %v3051
      %v3057 = vmul.f32 %v3043, %v3051
      %v3058 = vmul.f32 %v3044, %v3051
      %v3059 = vmul.f32 %v3045, %v3051
      %v3060 = vmul.f32 %v3046, %v3051
      %v3062 = vlaneseq
      %v3063 = vshrl.u32 %v3062, 7
      %v3064 = vsub.s32 0, %v3063
      %v3065 = vrot.slane %v499, %v3064
      %v3067 = vadd.f32 %v3053, %v3065
      %v3068 = vadd.f32 %v3054, %v3065
      %v3069 = vadd.f32 %v3055, %v3065
      %v3070 = vadd.f32 %v3056, %v3065
      %v3071 = vadd.f32 %v3057, %v3065
      %v3072 = vadd.f32 %v3058, %v3065
      %v3073 = vadd.f32 %v3059, %v3065
      %v3074 = vadd.f32 %v3060, %v3065
      %v3075 = vpack.c.bf16 %v3068, %v3067
      %v3076 = vpack.c.bf16 %v3070, %v3069
      %v3077 = vpack.c.bf16 %v3072, %v3071
      %v3078 = vpack.c.bf16 %v3074, %v3073
      %v3079 = vld [vmem:[%s10] sm:$0xf]
      %v3080 = vld [vmem:[%s10 + $0x4] sm:$0xf]
      %v3081 = vld [vmem:[%s10 + $0x8] sm:$0xf]
      %v3082 = vld [vmem:[%s10 + $0xc] sm:$0xf]
      %v3084 = vlaneseq
      %v3085 = vshrl.u32 %v3084, 7
      %v3086 = vsub.s32 0, %v3085
      %v3087 = vrot.slane %v502, %v3086
      %v3093 = vunpack.c.l.b16 %v3079
      %v3094 = vunpack.c.l.b16 %v3080
      %v3095 = vunpack.c.l.b16 %v3081
      %v3096 = vunpack.c.l.b16 %v3082
      %v3097 = vpack.c.b16 %v3094, %v3093
      %v3098 = vpack.c.b16 %v3096, %v3095
      %v3102 = vsel %vm504, %v3075, 0
      %v3105 = vsel %vm504, %v3076, 0
      %v3108 = vsel %vm504, %v3077, 0
      %v3111 = vsel %vm504, %v3078, 0
      %3113 = vmatprep.subr.bf16.mxu0 0
      %3114 = vmatpush1.bf16.msra.mxu0 %v3097
      %3115 = vmatprep.subr.bf16.mxu0 0
      %3116 = vmatpush1.bf16.msra.mxu0 %v3098
      %3117 = vmatprep.subr.bf16.mxu0 0
      %3118 = vmatpush1.bf16.msra.mxu0 0
      %3119 = vmatprep.subr.bf16.mxu0 0
      %3120 = vmatpush1.bf16.msra.mxu0 0
      %3121 = vmatprep.subr.bf16.mxu0 0
      %3122 = vmatpush1.bf16.msra.mxu0 0
      %3123 = vmatprep.subr.bf16.mxu0 0
      %3124 = vmatpush1.bf16.msra.mxu0 0
      %3125 = vmatprep.subr.bf16.mxu0 0
      %3126 = vmatpush1.bf16.msra.mxu0 0
      %3127 = vmatprep.subr.bf16.mxu0 0
      %3128 = vmatpush1.bf16.msra.mxu0 0
      %3129 = vmatprep.subr.bf16.mxu0 0
      %3130 = vmatpush1.bf16.msra.mxu0 0
      %3131 = vmatprep.subr.bf16.mxu0 0
      %3132 = vmatpush1.bf16.msra.mxu0 0
      %3133 = vmatprep.subr.bf16.mxu0 0
      %3134 = vmatpush1.bf16.msra.mxu0 0
      %3135 = vmatprep.subr.bf16.mxu0 0
      %3136 = vmatpush1.bf16.msra.mxu0 0
      %3137 = vmatprep.subr.bf16.mxu0 0
      %3138 = vmatpush1.bf16.msra.mxu0 0
      %3139 = vmatprep.subr.bf16.mxu0 0
      %3140 = vmatpush1.bf16.msra.mxu0 0
      %3141 = vmatprep.subr.bf16.mxu0 0
      %3142 = vmatpush1.bf16.msra.mxu0 0
      %3143 = vmatprep.subr.bf16.mxu0 0
      %3144 = vmatpush1.bf16.msra.mxu0 0
      %3145 = vmatprep.mubr.bf16.mxu0 0
      %3146 = vmatmul.mubr.bf16.gmra.mrb[0].mxu0 %v3102
      %v3147 = vpop.f32.mrb[0].mxu0
      %v3148 = vadd.f32 %v3087, %v3147
      %v3149 = vpop.f32.mrb[0].mxu0
      %v3150 = vpop.f32.mrb[0].mxu0
      %v3151 = vadd.f32 %v3087, %v3150
      %v3152 = vpop.f32.mrb[0].mxu0
      %3153 = vmatprep.mubr.bf16.mxu0 0
      %3154 = vmatmul.mubr.bf16.gmra.mrb[0].mxu0 %v3105
      %v3155 = vpop.f32.mrb[0].mxu0
      %v3156 = vadd.f32 %v3087, %v3155
      %v3157 = vpop.f32.mrb[0].mxu0
      %v3158 = vpop.f32.mrb[0].mxu0
      %v3159 = vadd.f32 %v3087, %v3158
      %v3160 = vpop.f32.mrb[0].mxu0
      %3161 = vmatprep.mubr.bf16.mxu0 0
      %3162 = vmatmul.mubr.bf16.gmra.mrb[0].mxu0 %v3108
      %v3163 = vpop.f32.mrb[0].mxu0
      %v3164 = vadd.f32 %v3087, %v3163
      %v3165 = vpop.f32.mrb[0].mxu0
      %v3166 = vpop.f32.mrb[0].mxu0
      %v3167 = vadd.f32 %v3087, %v3166
      %v3168 = vpop.f32.mrb[0].mxu0
      %3169 = vmatprep.mubr.bf16.mxu0 0
      %3170 = vmatmul.mubr.bf16.gmra.mrb[0].mxu0 %v3111
      %v3171 = vpop.f32.mrb[0].mxu0
      %v3172 = vadd.f32 %v3087, %v3171
      %v3173 = vpop.f32.mrb[0].mxu0
      %v3174 = vpop.f32.mrb[0].mxu0
      %v3175 = vadd.f32 %v3087, %v3174
      %v3176 = vpop.f32.mrb[0].mxu0
      %3177 = vdwg.mxu0
      %v3178 = vmul.f32 %v3148, 0.5
      %v3179 = vmul.f32 %v3151, 0.5
      %v3180 = vmul.f32 %v3156, 0.5
      %v3181 = vmul.f32 %v3159, 0.5
      %v3182 = vmul.f32 %v3164, 0.5
      %v3183 = vmul.f32 %v3167, 0.5
      %v3184 = vmul.f32 %v3172, 0.5
      %v3185 = vmul.f32 %v3175, 0.5
      %v3186 = vmul.f32 %v3148, 0.044715
      %v3187 = vmul.f32 %v3151, 0.044715
      %v3188 = vmul.f32 %v3156, 0.044715
      %v3189 = vmul.f32 %v3159, 0.044715
      %v3190 = vmul.f32 %v3164, 0.044715
      %v3191 = vmul.f32 %v3167, 0.044715
      %v3192 = vmul.f32 %v3172, 0.044715
      %v3193 = vmul.f32 %v3175, 0.044715
      %v3194 = vmul.f32 %v3186, %v3148
      %v3195 = vmul.f32 %v3187, %v3151
      %v3196 = vmul.f32 %v3188, %v3156
      %v3197 = vmul.f32 %v3189, %v3159
      %v3198 = vmul.f32 %v3190, %v3164
      %v3199 = vmul.f32 %v3191, %v3167
      %v3200 = vmul.f32 %v3192, %v3172
      %v3201 = vmul.f32 %v3193, %v3175
      %v3202 = vmul.f32 %v3194, %v3148
      %v3203 = vmul.f32 %v3195, %v3151
      %v3204 = vmul.f32 %v3196, %v3156
      %v3205 = vmul.f32 %v3197, %v3159
      %v3206 = vmul.f32 %v3198, %v3164
      %v3207 = vmul.f32 %v3199, %v3167
      %v3208 = vmul.f32 %v3200, %v3172
      %v3209 = vmul.f32 %v3201, %v3175
      %v3210 = vadd.f32 %v3148, %v3202
      %v3211 = vadd.f32 %v3151, %v3203
      %v3212 = vadd.f32 %v3156, %v3204
      %v3213 = vadd.f32 %v3159, %v3205
      %v3214 = vadd.f32 %v3164, %v3206
      %v3215 = vadd.f32 %v3167, %v3207
      %v3216 = vadd.f32 %v3172, %v3208
      %v3217 = vadd.f32 %v3175, %v3209
      %v3218 = vmul.f32 %v3210, 0.7978846
      %v3219 = vmul.f32 %v3211, 0.7978846
      %v3220 = vmul.f32 %v3212, 0.7978846
      %v3221 = vmul.f32 %v3213, 0.7978846
      %v3222 = vmul.f32 %v3214, 0.7978846
      %v3223 = vmul.f32 %v3215, 0.7978846
      %v3224 = vmul.f32 %v3216, 0.7978846
      %v3225 = vmul.f32 %v3217, 0.7978846
      %v3226 = vtanh.pop %v3218
      %v3227 = vtanh.pop %v3219
      %v3228 = vtanh.pop %v3220
      %v3229 = vtanh.pop %v3221
      %v3230 = vtanh.pop %v3222
      %v3231 = vtanh.pop %v3223
      %v3232 = vtanh.pop %v3224
      %v3233 = vtanh.pop %v3225
      %v3234 = vadd.f32 %v3226, 1.0
      %v3235 = vadd.f32 %v3227, 1.0
      %v3236 = vadd.f32 %v3228, 1.0
      %v3237 = vadd.f32 %v3229, 1.0
      %v3238 = vadd.f32 %v3230, 1.0
      %v3239 = vadd.f32 %v3231, 1.0
      %v3240 = vadd.f32 %v3232, 1.0
      %v3241 = vadd.f32 %v3233, 1.0
      %v3242 = vmul.f32 %v3178, %v3234
      %v3243 = vmul.f32 %v3179, %v3235
      %v3244 = vmul.f32 %v3180, %v3236
      %v3245 = vmul.f32 %v3181, %v3237
      %v3246 = vmul.f32 %v3182, %v3238
      %v3247 = vmul.f32 %v3183, %v3239
      %v3248 = vmul.f32 %v3184, %v3240
      %v3249 = vmul.f32 %v3185, %v3241
      %v3250 = vpack.c.bf16 %v3243, %v3242
      %v3251 = vpack.c.bf16 %v3245, %v3244
      %v3252 = vpack.c.bf16 %v3247, %v3246
      %v3253 = vpack.c.bf16 %v3249, %v3248
      %v3254 = vld [vmem:[%s12] sm:$0xf]
      %v3255 = vld [vmem:[%s12 + $0x4] sm:$0xf]
      %v3256 = vld [vmem:[%s12 + $0x8] sm:$0xf]
      %v3257 = vld [vmem:[%s12 + $0xc] sm:$0xf]
      %v3258 = vld [vmem:[%s12 + $0x10] sm:$0xf]
      %v3259 = vld [vmem:[%s12 + $0x14] sm:$0xf]
      %v3260 = vld [vmem:[%s12 + $0x18] sm:$0xf]
      %v3261 = vld [vmem:[%s12 + $0x1c] sm:$0xf]
      %v3263 = vlaneseq
      %v3264 = vshrl.u32 %v3263, 7
      %v3265 = vsub.s32 0, %v3264
      %v3266 = vrot.slane %v503, %v3265
      %v3276 = vunpack.c.l.b16 %v3254
      %v3277 = vunpack.c.l.b16 %v3255
      %v3278 = vunpack.c.l.b16 %v3256
      %v3279 = vunpack.c.l.b16 %v3257
      %v3280 = vunpack.c.l.b16 %v3258
      %v3281 = vunpack.c.l.b16 %v3259
      %v3282 = vunpack.c.l.b16 %v3260
      %v3283 = vunpack.c.l.b16 %v3261
      %v3284 = vpack.c.b16 %v3277, %v3276
      %v3285 = vpack.c.b16 %v3279, %v3278
      %v3286 = vpack.c.b16 %v3281, %v3280
      %v3287 = vpack.c.b16 %v3283, %v3282
      %vm3292 = vcmask 523264
      %v3294 = vsel %vm3292, %v3250, 0
      %v3297 = vsel %vm3292, %v3251, 0
      %v3300 = vsel %vm3292, %v3252, 0
      %v3303 = vsel %vm3292, %v3253, 0
      %3305 = vmatprep.subr.bf16.mxu0 0
      %3306 = vmatpush1.bf16.msra.mxu0 %v3284
      %3307 = vmatprep.subr.bf16.mxu0 0
      %3308 = vmatpush1.bf16.msra.mxu0 %v3285
      %3309 = vmatprep.subr.bf16.mxu0 0
      %3310 = vmatpush1.bf16.msra.mxu0 %v3286
      %3311 = vmatprep.subr.bf16.mxu0 0
      %3312 = vmatpush1.bf16.msra.mxu0 %v3287
      %3313 = vmatprep.subr.bf16.mxu0 0
      %3314 = vmatpush1.bf16.msra.mxu0 0
      %3315 = vmatprep.subr.bf16.mxu0 0
      %3316 = vmatpush1.bf16.msra.mxu0 0
      %3317 = vmatprep.subr.bf16.mxu0 0
      %3318 = vmatpush1.bf16.msra.mxu0 0
      %3319 = vmatprep.subr.bf16.mxu0 0
      %3320 = vmatpush1.bf16.msra.mxu0 0
      %3321 = vmatprep.subr.bf16.mxu0 0
      %3322 = vmatpush1.bf16.msra.mxu0 0
      %3323 = vmatprep.subr.bf16.mxu0 0
      %3324 = vmatpush1.bf16.msra.mxu0 0
      %3325 = vmatprep.subr.bf16.mxu0 0
      %3326 = vmatpush1.bf16.msra.mxu0 0
      %3327 = vmatprep.subr.bf16.mxu0 0
      %3328 = vmatpush1.bf16.msra.mxu0 0
      %3329 = vmatprep.subr.bf16.mxu0 0
      %3330 = vmatpush1.bf16.msra.mxu0 0
      %3331 = vmatprep.subr.bf16.mxu0 0
      %3332 = vmatpush1.bf16.msra.mxu0 0
      %3333 = vmatprep.subr.bf16.mxu0 0
      %3334 = vmatpush1.bf16.msra.mxu0 0
      %3335 = vmatprep.subr.bf16.mxu0 0
      %3336 = vmatpush1.bf16.msra.mxu0 0
      %3337 = vmatprep.mubr.bf16.mxu0 0
      %3338 = vmatmul.mubr.bf16.gmra.mrb[0].mxu0 %v3294
      %v3339 = vpop.f32.mrb[0].mxu0
      %v3340 = vadd.f32 %v3266, %v3339
      %v3341 = vpop.f32.mrb[0].mxu0
      %v3342 = vpop.f32.mrb[0].mxu0
      %v3343 = vadd.f32 %v3266, %v3342
      %v3344 = vpop.f32.mrb[0].mxu0
      %3345 = vmatprep.mubr.bf16.mxu0 0
      %3346 = vmatmul.mubr.bf16.gmra.mrb[0].mxu0 %v3297
      %v3347 = vpop.f32.mrb[0].mxu0
      %v3348 = vadd.f32 %v3266, %v3347
      %v3349 = vpop.f32.mrb[0].mxu0
      %v3350 = vpop.f32.mrb[0].mxu0
      %v3351 = vadd.f32 %v3266, %v3350
      %v3352 = vpop.f32.mrb[0].mxu0
      %3353 = vmatprep.mubr.bf16.mxu0 0
      %3354 = vmatmul.mubr.bf16.gmra.mrb[0].mxu0 %v3300
      %v3355 = vpop.f32.mrb[0].mxu0
      %v3356 = vadd.f32 %v3266, %v3355
      %v3357 = vpop.f32.mrb[0].mxu0
      %v3358 = vpop.f32.mrb[0].mxu0
      %v3359 = vadd.f32 %v3266, %v3358
      %v3360 = vpop.f32.mrb[0].mxu0
      %3361 = vmatprep.mubr.bf16.mxu0 0
      %3362 = vmatmul.mubr.bf16.gmra.mrb[0].mxu0 %v3303
      %v3363 = vpop.f32.mrb[0].mxu0
      %v3364 = vadd.f32 %v3266, %v3363
      %v3365 = vpop.f32.mrb[0].mxu0
      %v3366 = vpop.f32.mrb[0].mxu0
      %v3367 = vadd.f32 %v3266, %v3366
      %v3368 = vpop.f32.mrb[0].mxu0
      %3369 = vdwg.mxu0
      %v3370 = vadd.f32 %v2935, %v3340
      %v3371 = vadd.f32 %v2936, %v3343
      %v3372 = vadd.f32 %v2937, %v3348
      %v3373 = vadd.f32 %v2938, %v3351
      %v3374 = vadd.f32 %v2939, %v3356
      %v3375 = vadd.f32 %v2940, %v3359
      %v3376 = vadd.f32 %v2941, %v3364
      %v3377 = vadd.f32 %v2942, %v3367
      %3378 = vst.msk [vmem:[%s469] sm:$0xff] %vm504, %v3370
      %3379 = vst.msk [vmem:[%s469 + $0x8] sm:$0xff] %vm504, %v3371
      %3380 = vst.msk [vmem:[%s469 + $0x10] sm:$0xff] %vm504, %v3372
      %3381 = vst.msk [vmem:[%s469 + $0x18] sm:$0xff] %vm504, %v3373
      %3382 = vst.msk [vmem:[%s469 + $0x20] sm:$0xff] %vm504, %v3374
      %3383 = vst.msk [vmem:[%s469 + $0x28] sm:$0xff] %vm504, %v3375
      %3384 = vst.msk [vmem:[%s469 + $0x30] sm:$0xff] %vm504, %v3376
      %3385 = vst.msk [vmem:[%s469 + $0x38] sm:$0xff] %vm504, %v3377
      %s3386 = smul.u32 8, %s25
      %p3387 = scmp.lt.s32.totalorder %s3386, 15
      %s3388 = scalar_select %p3387, %s3386, 15
      %s3389 = smul.addr %s3388, 8
      %s3390 = scalar_lea.vmem %s14, %s3389
      // Predicated region
      $region77: #{_lambda_.2} parent=75 // pred_check
        %p3391 = pneg %p342
      $region78: #{_lambda_.2} parent=75 // pred_check_branch
        %3393 = sbr.rel (%p3391) target = $region80
      $region79: #{_lambda_.2} parent=75 // pred_region
        %s3394 = smul.u32 8, %s25
      $region80: #{_lambda_.2} parent=75 // pred_fallthru
        _
    $region76: #{_lambda_.2} parent=5 // pred_fallthru
      _
    %p3395 = scmp.le.s32.totalorder 2, %s20
    // Predicated region
    $region81: #{_lambda_.2} parent=5 // pred_check
      %p3396 = pneg %p3395
    $region82: #{_lambda_.2} parent=5 // pred_check_branch
      %3398 = sbr.rel (%p3396) target = $region84
    $region83: #{_lambda_.2} parent=5 // pred_region
      %s3399 = ssub.s32 %s20, 2
      // Predicated region
      $region85: #{_lambda_.2} parent=83 // pred_check
        %p3400 = pneg %p348
      $region86: #{_lambda_.2} parent=83 // pred_check_branch
        %3402 = sbr.rel (%p3400) target = $region88
      $region87: #{_lambda_.2} parent=83 // pred_region
        %s3403 = smul.u32 8, %s26
        %p3404 = scmp.lt.s32.totalorder %s3403, 15
        %s3405 = scalar_select %p3404, %s3403, 15
        %s3406 = smul.addr %s3405, 8
        %s3407 = scalar_lea.vmem %s14, %s3406
      $region88: #{_lambda_.2} parent=83 // pred_fallthru
        _
    $region84: #{_lambda_.2} parent=5 // pred_fallthru
      _
  $region6: #{_lambda_.2} parent=0 // loop_footer
    %s24 = sadd.s32 1, %s20
  $region7: #{_lambda_.2} parent=0 // loop_footer_branch
    %19 = sbr.rel target = $region3
  $region8: #{_lambda_.2} parent=0 // loop_exit
    _

// kernel: _lambda_.3
$region0: #{_lambda_.3}
  #allocation0 [shape = 'u32[]', space=smem, size = 0x4, offset = 0x4, fixed_abs, tag = 'smem constant byte address 0x4 - core index']
  #allocation1 [shape = 'u32[144,128]{1,0:T(1,128)}', space=vmem, size = 0x12000, scoped, tag = 'internal scratch']
  %s0 = inlined_call_operand.vmem [shape: f32[128,32], index: 0, kind: input, shape index: {}]
  %s1 = inlined_call_operand.vmem [shape: bf16[4,16,16], index: 1, kind: input, shape index: {}]
  %s2 = inlined_call_operand.vmem [shape: bf16[4,16,16], index: 2, kind: input, shape index: {}]
  %s3 = inlined_call_operand.vmem [shape: f32[1,32], index: 3, kind: input, shape index: {}, may-alias: {3,9}]
  %s4 = inlined_call_operand.vmem [shape: f32[1,32], index: 4, kind: input, shape index: {}, may-alias: {4,10,14}]
  %s5 = inlined_call_operand.vmem [shape: bf16[32,96], index: 5, kind: input, shape index: {}]
  %s6 = inlined_call_operand.vmem [shape: f32[1,96], index: 6, kind: input, shape index: {}]
  %s7 = inlined_call_operand.vmem [shape: bf16[32,32], index: 7, kind: input, shape index: {}]
  %s8 = inlined_call_operand.vmem [shape: f32[1,32], index: 8, kind: input, shape index: {}]
  %s9 = inlined_call_operand.vmem [shape: f32[1,32], index: 9, kind: input, shape index: {}, may-alias: {3,9}]
  %s10 = inlined_call_operand.vmem [shape: f32[1,32], index: 10, kind: input, shape index: {}, may-alias: {4,10,14}]
  %s11 = inlined_call_operand.vmem [shape: bf16[32,64], index: 11, kind: input, shape index: {}]
  %s12 = inlined_call_operand.vmem [shape: f32[1,64], index: 12, kind: input, shape index: {}]
  %s13 = inlined_call_operand.vmem [shape: bf16[64,32], index: 13, kind: input, shape index: {}]
  %s14 = inlined_call_operand.vmem [shape: f32[1,32], index: 14, kind: input, shape index: {}, may-alias: {4,10,14}]
  %s15 = inlined_call_operand.vmem [shape: f32[128,32], index: 15, kind: output, shape index: {}]
  %s16 = sld [smem:[#allocation0]]
  $region93: #{_lambda_.3} parent=0
    _
  %s18 = ssub.s32 1, %s16
  %s19 = scalar_select 0, %s18, %s16
  loop: start=0, step=1, limit=4
  $region2: #{_lambda_.3} parent=0 // loop_pre_header
    _
  $region3: #{_lambda_.3} parent=0 // loop_header
    %s21 = sphi 0, %s25
    %p22 = scmp.ge.s32.totalorder %s21, 4
    %s31 = sphi 0, %s33
    %s34 = sphi 0, %s31
    %s35 = sphi 0, %s34
    %s51 = sphi 0, %s35
    %s55 = sphi 0, %s55
    %s57 = sphi 0, %s55
    %s58 = sphi 0, %s57
    %s72 = sphi 0, %s58
    %s76 = sphi 0, %s76
    %s78 = sphi 0, %s76
    %s79 = sphi 0, %s78
    %s93 = sphi 0, %s79
    %s97 = sphi 0, %s97
    %s99 = sphi 0, %s97
    %s100 = sphi 0, %s99
    %s114 = sphi 0, %s100
    %s118 = sphi 0, %s118
    %s120 = sphi 0, %s118
    %s121 = sphi 0, %s120
    %s135 = sphi 0, %s121
    %s139 = sphi 0, %s139
    %s141 = sphi 0, %s139
    %s142 = sphi 0, %s141
    %s156 = sphi 0, %s142
    %s160 = sphi 0, %s160
    %s162 = sphi 0, %s160
    %s163 = sphi 0, %s162
    %s177 = sphi 0, %s163
    %s181 = sphi 0, %s181
    %s183 = sphi 0, %s181
    %s184 = sphi 0, %s183
    %s198 = sphi 0, %s184
    %s202 = sphi 0, %s202
    %s204 = sphi 0, %s202
    %s205 = sphi 0, %s204
    %s219 = sphi 0, %s205
    %s223 = sphi 0, %s223
    %s225 = sphi 0, %s223
    %s226 = sphi 0, %s225
    %s240 = sphi 0, %s226
    %s244 = sphi 0, %s244
    %s246 = sphi 0, %s244
    %s247 = sphi 0, %s246
    %s261 = sphi 0, %s247
    %s265 = sphi 0, %s265
    %s267 = sphi 0, %s265
    %s268 = sphi 0, %s267
    %s282 = sphi 0, %s268
    %s286 = sphi 0, %s286
    %s288 = sphi 0, %s286
    %s289 = sphi 0, %s288
    %s303 = sphi 0, %s289
    %s307 = sphi 0, %s307
    %s309 = sphi 0, %s307
    %s310 = sphi 0, %s309
    %s324 = sphi 0, %s310
    %s328 = sphi 0, %s328
    %s330 = sphi 0, %s328
    %s331 = sphi 0, %s330
    %s345 = sphi 0, %s331
    %s351 = sphi 0, %s353
    %s354 = sphi 0, %s351
    %s355 = sphi 0, %s354
    %s371 = sphi 0, %s355
  $region4: #{_lambda_.3} parent=0 // loop_header_branch
    %24 = sbr.rel (%p22) target = $region8
  $region5: #{_lambda_.3} parent=0 // loop_body
    %s26 = ssub.s32 %s21, 1
    %s27 = ssub.s32 %s21, 2
    %s28 = sadd.s32 %s21, 1
    %s29 = ssub.s32 %s21, %s28
    %p30 = scmp.eq.s32.totalorder %s29, 0
    %s32 = sadd.s32 %s31, 1
    %s33 = scalar_select %p30, %s31, %s32
    %p36 = pneg %p30
    %p37 = scmp.eq.s32.totalorder %s21, 1
    %p38 = por %p36, %p37
    %p39 = scmp.ne.s32.totalorder %s31, %s34
    %p40 = scmp.eq.s32.totalorder %s21, 0
    %p41 = por %p39, %p40
    %p42 = scmp.ne.s32.totalorder %s31, %s34
    %p43 = scmp.eq.s32.totalorder %s26, 1
    %p44 = por %p42, %p43
    %p45 = scmp.ne.s32.totalorder %s34, %s35
    %p46 = scmp.eq.s32.totalorder %s26, 0
    %p47 = por %p45, %p46
    %p48 = scmp.ne.s32.totalorder %s34, %s35
    %p49 = scmp.eq.s32.totalorder %s27, 1
    %p50 = por %p48, %p49
    %p52 = scmp.ne.s32.totalorder %s35, %s51
    %p53 = scmp.eq.s32.totalorder %s27, 0
    %p54 = por %p52, %p53
    %s56 = sadd.s32 %s55, 1
    %p59 = scmp.eq.s32.totalorder %s21, 1
    %p60 = scmp.ne.s32.totalorder %s55, %s57
    %p61 = scmp.eq.s32.totalorder %s21, 0
    %p62 = por %p60, %p61
    %p63 = scmp.ne.s32.totalorder %s55, %s57
    %p64 = scmp.eq.s32.totalorder %s26, 1
    %p65 = por %p63, %p64
    %p66 = scmp.ne.s32.totalorder %s57, %s58
    %p67 = scmp.eq.s32.totalorder %s26, 0
    %p68 = por %p66, %p67
    %p69 = scmp.ne.s32.totalorder %s57, %s58
    %p70 = scmp.eq.s32.totalorder %s27, 1
    %p71 = por %p69, %p70
    %p73 = scmp.ne.s32.totalorder %s58, %s72
    %p74 = scmp.eq.s32.totalorder %s27, 0
    %p75 = por %p73, %p74
    %s77 = sadd.s32 %s76, 1
    %p80 = scmp.eq.s32.totalorder %s21, 1
    %p81 = scmp.ne.s32.totalorder %s76, %s78
    %p82 = scmp.eq.s32.totalorder %s21, 0
    %p83 = por %p81, %p82
    %p84 = scmp.ne.s32.totalorder %s76, %s78
    %p85 = scmp.eq.s32.totalorder %s26, 1
    %p86 = por %p84, %p85
    %p87 = scmp.ne.s32.totalorder %s78, %s79
    %p88 = scmp.eq.s32.totalorder %s26, 0
    %p89 = por %p87, %p88
    %p90 = scmp.ne.s32.totalorder %s78, %s79
    %p91 = scmp.eq.s32.totalorder %s27, 1
    %p92 = por %p90, %p91
    %p94 = scmp.ne.s32.totalorder %s79, %s93
    %p95 = scmp.eq.s32.totalorder %s27, 0
    %p96 = por %p94, %p95
    %s98 = sadd.s32 %s97, 1
    %p101 = scmp.eq.s32.totalorder %s21, 1
    %p102 = scmp.ne.s32.totalorder %s97, %s99
    %p103 = scmp.eq.s32.totalorder %s21, 0
    %p104 = por %p102, %p103
    %p105 = scmp.ne.s32.totalorder %s97, %s99
    %p106 = scmp.eq.s32.totalorder %s26, 1
    %p107 = por %p105, %p106
    %p108 = scmp.ne.s32.totalorder %s99, %s100
    %p109 = scmp.eq.s32.totalorder %s26, 0
    %p110 = por %p108, %p109
    %p111 = scmp.ne.s32.totalorder %s99, %s100
    %p112 = scmp.eq.s32.totalorder %s27, 1
    %p113 = por %p111, %p112
    %p115 = scmp.ne.s32.totalorder %s100, %s114
    %p116 = scmp.eq.s32.totalorder %s27, 0
    %p117 = por %p115, %p116
    %s119 = sadd.s32 %s118, 1
    %p122 = scmp.eq.s32.totalorder %s21, 1
    %p123 = scmp.ne.s32.totalorder %s118, %s120
    %p124 = scmp.eq.s32.totalorder %s21, 0
    %p125 = por %p123, %p124
    %p126 = scmp.ne.s32.totalorder %s118, %s120
    %p127 = scmp.eq.s32.totalorder %s26, 1
    %p128 = por %p126, %p127
    %p129 = scmp.ne.s32.totalorder %s120, %s121
    %p130 = scmp.eq.s32.totalorder %s26, 0
    %p131 = por %p129, %p130
    %p132 = scmp.ne.s32.totalorder %s120, %s121
    %p133 = scmp.eq.s32.totalorder %s27, 1
    %p134 = por %p132, %p133
    %p136 = scmp.ne.s32.totalorder %s121, %s135
    %p137 = scmp.eq.s32.totalorder %s27, 0
    %p138 = por %p136, %p137
    %s140 = sadd.s32 %s139, 1
    %p143 = scmp.eq.s32.totalorder %s21, 1
    %p144 = scmp.ne.s32.totalorder %s139, %s141
    %p145 = scmp.eq.s32.totalorder %s21, 0
    %p146 = por %p144, %p145
    %p147 = scmp.ne.s32.totalorder %s139, %s141
    %p148 = scmp.eq.s32.totalorder %s26, 1
    %p149 = por %p147, %p148
    %p150 = scmp.ne.s32.totalorder %s141, %s142
    %p151 = scmp.eq.s32.totalorder %s26, 0
    %p152 = por %p150, %p151
    %p153 = scmp.ne.s32.totalorder %s141, %s142
    %p154 = scmp.eq.s32.totalorder %s27, 1
    %p155 = por %p153, %p154
    %p157 = scmp.ne.s32.totalorder %s142, %s156
    %p158 = scmp.eq.s32.totalorder %s27, 0
    %p159 = por %p157, %p158
    %s161 = sadd.s32 %s160, 1
    %p164 = scmp.eq.s32.totalorder %s21, 1
    %p165 = scmp.ne.s32.totalorder %s160, %s162
    %p166 = scmp.eq.s32.totalorder %s21, 0
    %p167 = por %p165, %p166
    %p168 = scmp.ne.s32.totalorder %s160, %s162
    %p169 = scmp.eq.s32.totalorder %s26, 1
    %p170 = por %p168, %p169
    %p171 = scmp.ne.s32.totalorder %s162, %s163
    %p172 = scmp.eq.s32.totalorder %s26, 0
    %p173 = por %p171, %p172
    %p174 = scmp.ne.s32.totalorder %s162, %s163
    %p175 = scmp.eq.s32.totalorder %s27, 1
    %p176 = por %p174, %p175
    %p178 = scmp.ne.s32.totalorder %s163, %s177
    %p179 = scmp.eq.s32.totalorder %s27, 0
    %p180 = por %p178, %p179
    %s182 = sadd.s32 %s181, 1
    %p185 = scmp.eq.s32.totalorder %s21, 1
    %p186 = scmp.ne.s32.totalorder %s181, %s183
    %p187 = scmp.eq.s32.totalorder %s21, 0
    %p188 = por %p186, %p187
    %p189 = scmp.ne.s32.totalorder %s181, %s183
    %p190 = scmp.eq.s32.totalorder %s26, 1
    %p191 = por %p189, %p190
    %p192 = scmp.ne.s32.totalorder %s183, %s184
    %p193 = scmp.eq.s32.totalorder %s26, 0
    %p194 = por %p192, %p193
    %p195 = scmp.ne.s32.totalorder %s183, %s184
    %p196 = scmp.eq.s32.totalorder %s27, 1
    %p197 = por %p195, %p196
    %p199 = scmp.ne.s32.totalorder %s184, %s198
    %p200 = scmp.eq.s32.totalorder %s27, 0
    %p201 = por %p199, %p200
    %s203 = sadd.s32 %s202, 1
    %p206 = scmp.eq.s32.totalorder %s21, 1
    %p207 = scmp.ne.s32.totalorder %s202, %s204
    %p208 = scmp.eq.s32.totalorder %s21, 0
    %p209 = por %p207, %p208
    %p210 = scmp.ne.s32.totalorder %s202, %s204
    %p211 = scmp.eq.s32.totalorder %s26, 1
    %p212 = por %p210, %p211
    %p213 = scmp.ne.s32.totalorder %s204, %s205
    %p214 = scmp.eq.s32.totalorder %s26, 0
    %p215 = por %p213, %p214
    %p216 = scmp.ne.s32.totalorder %s204, %s205
    %p217 = scmp.eq.s32.totalorder %s27, 1
    %p218 = por %p216, %p217
    %p220 = scmp.ne.s32.totalorder %s205, %s219
    %p221 = scmp.eq.s32.totalorder %s27, 0
    %p222 = por %p220, %p221
    %s224 = sadd.s32 %s223, 1
    %p227 = scmp.eq.s32.totalorder %s21, 1
    %p228 = scmp.ne.s32.totalorder %s223, %s225
    %p229 = scmp.eq.s32.totalorder %s21, 0
    %p230 = por %p228, %p229
    %p231 = scmp.ne.s32.totalorder %s223, %s225
    %p232 = scmp.eq.s32.totalorder %s26, 1
    %p233 = por %p231, %p232
    %p234 = scmp.ne.s32.totalorder %s225, %s226
    %p235 = scmp.eq.s32.totalorder %s26, 0
    %p236 = por %p234, %p235
    %p237 = scmp.ne.s32.totalorder %s225, %s226
    %p238 = scmp.eq.s32.totalorder %s27, 1
    %p239 = por %p237, %p238
    %p241 = scmp.ne.s32.totalorder %s226, %s240
    %p242 = scmp.eq.s32.totalorder %s27, 0
    %p243 = por %p241, %p242
    %s245 = sadd.s32 %s244, 1
    %p248 = scmp.eq.s32.totalorder %s21, 1
    %p249 = scmp.ne.s32.totalorder %s244, %s246
    %p250 = scmp.eq.s32.totalorder %s21, 0
    %p251 = por %p249, %p250
    %p252 = scmp.ne.s32.totalorder %s244, %s246
    %p253 = scmp.eq.s32.totalorder %s26, 1
    %p254 = por %p252, %p253
    %p255 = scmp.ne.s32.totalorder %s246, %s247
    %p256 = scmp.eq.s32.totalorder %s26, 0
    %p257 = por %p255, %p256
    %p258 = scmp.ne.s32.totalorder %s246, %s247
    %p259 = scmp.eq.s32.totalorder %s27, 1
    %p260 = por %p258, %p259
    %p262 = scmp.ne.s32.totalorder %s247, %s261
    %p263 = scmp.eq.s32.totalorder %s27, 0
    %p264 = por %p262, %p263
    %s266 = sadd.s32 %s265, 1
    %p269 = scmp.eq.s32.totalorder %s21, 1
    %p270 = scmp.ne.s32.totalorder %s265, %s267
    %p271 = scmp.eq.s32.totalorder %s21, 0
    %p272 = por %p270, %p271
    %p273 = scmp.ne.s32.totalorder %s265, %s267
    %p274 = scmp.eq.s32.totalorder %s26, 1
    %p275 = por %p273, %p274
    %p276 = scmp.ne.s32.totalorder %s267, %s268
    %p277 = scmp.eq.s32.totalorder %s26, 0
    %p278 = por %p276, %p277
    %p279 = scmp.ne.s32.totalorder %s267, %s268
    %p280 = scmp.eq.s32.totalorder %s27, 1
    %p281 = por %p279, %p280
    %p283 = scmp.ne.s32.totalorder %s268, %s282
    %p284 = scmp.eq.s32.totalorder %s27, 0
    %p285 = por %p283, %p284
    %s287 = sadd.s32 %s286, 1
    %p290 = scmp.eq.s32.totalorder %s21, 1
    %p291 = scmp.ne.s32.totalorder %s286, %s288
    %p292 = scmp.eq.s32.totalorder %s21, 0
    %p293 = por %p291, %p292
    %p294 = scmp.ne.s32.totalorder %s286, %s288
    %p295 = scmp.eq.s32.totalorder %s26, 1
    %p296 = por %p294, %p295
    %p297 = scmp.ne.s32.totalorder %s288, %s289
    %p298 = scmp.eq.s32.totalorder %s26, 0
    %p299 = por %p297, %p298
    %p300 = scmp.ne.s32.totalorder %s288, %s289
    %p301 = scmp.eq.s32.totalorder %s27, 1
    %p302 = por %p300, %p301
    %p304 = scmp.ne.s32.totalorder %s289, %s303
    %p305 = scmp.eq.s32.totalorder %s27, 0
    %p306 = por %p304, %p305
    %s308 = sadd.s32 %s307, 1
    %p311 = scmp.eq.s32.totalorder %s21, 1
    %p312 = scmp.ne.s32.totalorder %s307, %s309
    %p313 = scmp.eq.s32.totalorder %s21, 0
    %p314 = por %p312, %p313
    %p315 = scmp.ne.s32.totalorder %s307, %s309
    %p316 = scmp.eq.s32.totalorder %s26, 1
    %p317 = por %p315, %p316
    %p318 = scmp.ne.s32.totalorder %s309, %s310
    %p319 = scmp.eq.s32.totalorder %s26, 0
    %p320 = por %p318, %p319
    %p321 = scmp.ne.s32.totalorder %s309, %s310
    %p322 = scmp.eq.s32.totalorder %s27, 1
    %p323 = por %p321, %p322
    %p325 = scmp.ne.s32.totalorder %s310, %s324
    %p326 = scmp.eq.s32.totalorder %s27, 0
    %p327 = por %p325, %p326
    %s329 = sadd.s32 %s328, 1
    %p332 = scmp.eq.s32.totalorder %s21, 1
    %p333 = scmp.ne.s32.totalorder %s328, %s330
    %p334 = scmp.eq.s32.totalorder %s21, 0
    %p335 = por %p333, %p334
    %p336 = scmp.ne.s32.totalorder %s328, %s330
    %p337 = scmp.eq.s32.totalorder %s26, 1
    %p338 = por %p336, %p337
    %p339 = scmp.ne.s32.totalorder %s330, %s331
    %p340 = scmp.eq.s32.totalorder %s26, 0
    %p341 = por %p339, %p340
    %p342 = scmp.ne.s32.totalorder %s330, %s331
    %p343 = scmp.eq.s32.totalorder %s27, 1
    %p344 = por %p342, %p343
    %p346 = scmp.ne.s32.totalorder %s331, %s345
    %p347 = scmp.eq.s32.totalorder %s27, 0
    %p348 = por %p346, %p347
    %s349 = ssub.s32 %s21, %s28
    %p350 = scmp.eq.s32.totalorder %s349, 0
    %s352 = sadd.s32 %s351, 1
    %s353 = scalar_select %p350, %s351, %s352
    %p356 = pneg %p350
    %p357 = scmp.eq.s32.totalorder %s21, 1
    %p358 = por %p356, %p357
    %p359 = scmp.ne.s32.totalorder %s351, %s354
    %p360 = scmp.eq.s32.totalorder %s21, 0
    %p361 = por %p359, %p360
    %p362 = scmp.ne.s32.totalorder %s351, %s354
    %p363 = scmp.eq.s32.totalorder %s26, 1
    %p364 = por %p362, %p363
    %p365 = scmp.ne.s32.totalorder %s354, %s355
    %p366 = scmp.eq.s32.totalorder %s26, 0
    %p367 = por %p365, %p366
    %p368 = scmp.ne.s32.totalorder %s354, %s355
    %p369 = scmp.eq.s32.totalorder %s27, 1
    %p370 = por %p368, %p369
    %p372 = scmp.ne.s32.totalorder %s355, %s371
    %p373 = scmp.eq.s32.totalorder %s27, 0
    %p374 = por %p372, %p373
    %p375 = scmp.le.s32.totalorder 1, %s21
    %p376 = scmp.lt.s32.totalorder %s21, 3
    %p377 = pnand %p375, %p376
    %p378 = pneg %p377
    // Predicated region
    $region9: #{_lambda_.3} parent=5 // pred_check
      _
    $region10: #{_lambda_.3} parent=5 // pred_check_branch
      %380 = sbr.rel (%p377) target = $region12
    $region11: #{_lambda_.3} parent=5 // pred_region
      %s381 = ssub.s32 %s21, 1
      // Predicated region
      $region13: #{_lambda_.3} parent=11 // pred_check
        %p382 = pneg %p68
      $region14: #{_lambda_.3} parent=11 // pred_check_branch
        %384 = sbr.rel (%p382) target = $region16
      $region15: #{_lambda_.3} parent=11 // pred_region
        _
      $region16: #{_lambda_.3} parent=11 // pred_fallthru
        _
      // Predicated region
      $region17: #{_lambda_.3} parent=11 // pred_check
        %p385 = pneg %p89
      $region18: #{_lambda_.3} parent=11 // pred_check_branch
        %387 = sbr.rel (%p385) target = $region20
      $region19: #{_lambda_.3} parent=11 // pred_region
        _
      $region20: #{_lambda_.3} parent=11 // pred_fallthru
        _
      // Predicated region
      $region21: #{_lambda_.3} parent=11 // pred_check
        %p388 = pneg %p110
      $region22: #{_lambda_.3} parent=11 // pred_check_branch
        %390 = sbr.rel (%p388) target = $region24
      $region23: #{_lambda_.3} parent=11 // pred_region
        _
      $region24: #{_lambda_.3} parent=11 // pred_fallthru
        _
      // Predicated region
      $region25: #{_lambda_.3} parent=11 // pred_check
        %p391 = pneg %p131
      $region26: #{_lambda_.3} parent=11 // pred_check_branch
        %393 = sbr.rel (%p391) target = $region28
      $region27: #{_lambda_.3} parent=11 // pred_region
        _
      $region28: #{_lambda_.3} parent=11 // pred_fallthru
        _
      // Predicated region
      $region29: #{_lambda_.3} parent=11 // pred_check
        %p394 = pneg %p152
      $region30: #{_lambda_.3} parent=11 // pred_check_branch
        %396 = sbr.rel (%p394) target = $region32
      $region31: #{_lambda_.3} parent=11 // pred_region
        _
      $region32: #{_lambda_.3} parent=11 // pred_fallthru
        _
      // Predicated region
      $region33: #{_lambda_.3} parent=11 // pred_check
        %p397 = pneg %p173
      $region34: #{_lambda_.3} parent=11 // pred_check_branch
        %399 = sbr.rel (%p397) target = $region36
      $region35: #{_lambda_.3} parent=11 // pred_region
        _
      $region36: #{_lambda_.3} parent=11 // pred_fallthru
        _
      // Predicated region
      $region37: #{_lambda_.3} parent=11 // pred_check
        %p400 = pneg %p194
      $region38: #{_lambda_.3} parent=11 // pred_check_branch
        %402 = sbr.rel (%p400) target = $region40
      $region39: #{_lambda_.3} parent=11 // pred_region
        _
      $region40: #{_lambda_.3} parent=11 // pred_fallthru
        _
      // Predicated region
      $region41: #{_lambda_.3} parent=11 // pred_check
        %p403 = pneg %p215
      $region42: #{_lambda_.3} parent=11 // pred_check_branch
        %405 = sbr.rel (%p403) target = $region44
      $region43: #{_lambda_.3} parent=11 // pred_region
        _
      $region44: #{_lambda_.3} parent=11 // pred_fallthru
        _
      // Predicated region
      $region45: #{_lambda_.3} parent=11 // pred_check
        %p406 = pneg %p236
      $region46: #{_lambda_.3} parent=11 // pred_check_branch
        %408 = sbr.rel (%p406) target = $region48
      $region47: #{_lambda_.3} parent=11 // pred_region
        _
      $region48: #{_lambda_.3} parent=11 // pred_fallthru
        _
      // Predicated region
      $region49: #{_lambda_.3} parent=11 // pred_check
        %p409 = pneg %p257
      $region50: #{_lambda_.3} parent=11 // pred_check_branch
        %411 = sbr.rel (%p409) target = $region52
      $region51: #{_lambda_.3} parent=11 // pred_region
        _
      $region52: #{_lambda_.3} parent=11 // pred_fallthru
        _
      // Predicated region
      $region53: #{_lambda_.3} parent=11 // pred_check
        %p412 = pneg %p278
      $region54: #{_lambda_.3} parent=11 // pred_check_branch
        %414 = sbr.rel (%p412) target = $region56
      $region55: #{_lambda_.3} parent=11 // pred_region
        _
      $region56: #{_lambda_.3} parent=11 // pred_fallthru
        _
      // Predicated region
      $region57: #{_lambda_.3} parent=11 // pred_check
        %p415 = pneg %p299
      $region58: #{_lambda_.3} parent=11 // pred_check_branch
        %417 = sbr.rel (%p415) target = $region60
      $region59: #{_lambda_.3} parent=11 // pred_region
        _
      $region60: #{_lambda_.3} parent=11 // pred_fallthru
        _
      // Predicated region
      $region61: #{_lambda_.3} parent=11 // pred_check
        %p418 = pneg %p320
      $region62: #{_lambda_.3} parent=11 // pred_check_branch
        %420 = sbr.rel (%p418) target = $region64
      $region63: #{_lambda_.3} parent=11 // pred_region
        _
      $region64: #{_lambda_.3} parent=11 // pred_fallthru
        _
      // Predicated region
      $region65: #{_lambda_.3} parent=11 // pred_check
        %p421 = pneg %p341
      $region66: #{_lambda_.3} parent=11 // pred_check_branch
        %423 = sbr.rel (%p421) target = $region68
      $region67: #{_lambda_.3} parent=11 // pred_region
        _
      $region68: #{_lambda_.3} parent=11 // pred_fallthru
        _
    $region12: #{_lambda_.3} parent=5 // pred_fallthru
      _
    %p424 = scmp.lt.s32.totalorder %s21, 2
    // Predicated region
    $region69: #{_lambda_.3} parent=5 // pred_check
      %p425 = pneg %p424
    $region70: #{_lambda_.3} parent=5 // pred_check_branch
      %427 = sbr.rel (%p425) target = $region72
    $region71: #{_lambda_.3} parent=5 // pred_region
      // Predicated region
      $region73: #{_lambda_.3} parent=71 // pred_check
        %p428 = pneg %p41
      $region74: #{_lambda_.3} parent=71 // pred_check_branch
        %430 = sbr.rel (%p428) target = $region76
      $region75: #{_lambda_.3} parent=71 // pred_region
        %s431 = smul.u32 8, %s21
        %p432 = scmp.lt.s32.totalorder %s431, 15
        %s433 = scalar_select %p432, %s431, 15
        %s434 = smul.addr %s433, 8
        %s435 = scalar_lea.vmem %s0, %s434
        %s436 = smul.u32 8, %s21
      $region76: #{_lambda_.3} parent=71 // pred_fallthru
        _
    $region72: #{_lambda_.3} parent=5 // pred_fallthru
      _
    %p437 = scmp.le.s32.totalorder 1, %s21
    %p438 = scmp.lt.s32.totalorder %s21, 3
    %p439 = pnand %p437, %p438
    %p440 = pneg %p439
    // Predicated region
    $region77: #{_lambda_.3} parent=5 // pred_check
      _
    $region78: #{_lambda_.3} parent=5 // pred_check_branch
      %442 = sbr.rel (%p439) target = $region80
    $region79: #{_lambda_.3} parent=5 // pred_region
      %s443 = ssub.s32 %s21, 1
      %s444 = smul.u32 8, %s26
      %p445 = scmp.lt.s32.totalorder %s444, 15
      %s446 = scalar_select %p445, %s444, 15
      %s447 = smul.addr %s446, 8
      %s448 = scalar_lea.vmem %s0, %s447
      %p449 = pneg %p47
      %p450 = pneg %p44
      %p451 = pneg %p68
      %p452 = pneg %p65
      %p453 = pneg %p89
      %p454 = pneg %p86
      %p455 = pneg %p110
      %p456 = pneg %p107
      %p457 = pneg %p131
      %p458 = pneg %p128
      %p459 = pneg %p152
      %p460 = pneg %p149
      %p461 = pneg %p173
      %p462 = pneg %p170
      %p463 = pneg %p194
      %p464 = pneg %p191
      %p465 = pneg %p215
      %p466 = pneg %p212
      %p467 = pneg %p236
      %p468 = pneg %p233
      %p469 = pneg %p257
      %p470 = pneg %p254
      %p471 = pneg %p278
      %p472 = pneg %p275
      %p473 = pneg %p299
      %p474 = pneg %p296
      %p475 = pneg %p320
      %p476 = pneg %p317
      %p477 = pneg %p341
      %p478 = pneg %p338
      %p479 = pneg %p367
      %p480 = pneg %p364
      %s481 = smul.u32 8, %s26
      %p482 = scmp.lt.s32.totalorder %s481, 15
      %s483 = scalar_select %p482, %s481, 15
      %s484 = smul.addr %s483, 8
      %s485 = scalar_lea.vmem %s15, %s484
      %s486 = smul.u32 8, %s26
      %p487 = scmp.lt.s32.totalorder %s486, 15
      %s488 = scalar_select %p487, %s486, 15
      %s489 = smul.addr %s488, 8
      %s490 = scalar_lea.vmem %s0, %s489
      %s491 = smul.u32 8, %s26
      %s492 = smul.u32 8, %s26
      %p493 = scmp.lt.s32.totalorder %s492, 15
      %s494 = scalar_select %p493, %s492, 15
      %s495 = smul.addr %s494, 8
      %s496 = scalar_lea.vmem %s15, %s495
      %s497 = smul.u32 8, %s26
      %v499 = vld [vmem:[%s490] sm:$0xff]
      %v500 = vld [vmem:[%s490 + $0x8] sm:$0xff]
      %v501 = vld [vmem:[%s490 + $0x10] sm:$0xff]
      %v502 = vld [vmem:[%s490 + $0x18] sm:$0xff]
      %v503 = vld [vmem:[%s490 + $0x20] sm:$0xff]
      %v504 = vld [vmem:[%s490 + $0x28] sm:$0xff]
      %v505 = vld [vmem:[%s490 + $0x30] sm:$0xff]
      %v506 = vld [vmem:[%s490 + $0x38] sm:$0xff]
      %v507 = vld [vmem:[%s1] sm:$0xf]
      %v508 = vld [vmem:[%s1 + $0x4] sm:$0xf]
      %v509 = vld [vmem:[%s1 + $0x8] sm:$0xf]
      %v510 = vld [vmem:[%s1 + $0xc] sm:$0xf]
      %v511 = vld [vmem:[%s1 + $0x10] sm:$0xf]
      %v512 = vld [vmem:[%s1 + $0x14] sm:$0xf]
      %v513 = vld [vmem:[%s1 + $0x18] sm:$0xf]
      %v514 = vld [vmem:[%s1 + $0x1c] sm:$0xf]
      %v515 = vunpack.c.l.bf16 %v507
      %v516 = vunpack.c.l.bf16 %v508
      %v517 = vunpack.c.l.bf16 %v509
      %v518 = vunpack.c.l.bf16 %v510
      %v519 = vunpack.c.l.bf16 %v511
      %v520 = vunpack.c.l.bf16 %v512
      %v521 = vunpack.c.l.bf16 %v513
      %v522 = vunpack.c.l.bf16 %v514
      %v523 = vld [vmem:[%s3] sm:$0x1]
      %v524 = vld [vmem:[%s4] sm:$0x1]
      %v525 = vld [vmem:[%s9] sm:$0x1]
      %v526 = vld [vmem:[%s10] sm:$0x1]
      %v527 = vld [vmem:[%s6] sm:$0x1]
      %v528 = vld [vmem:[%s8] sm:$0x1]
      %v529 = vld [vmem:[%s12] sm:$0x1]
      %v530 = vld [vmem:[%s14] sm:$0x1]
      %vm531 = vcmask 261120
      %v532 = vsel %vm531, %v499, 0.0
      %533 = vadd.xlane.f32.xlu0 %v532
      %v534 = vpop.xlane.xlu0 %533
      %v535 = vsel %vm531, %v500, 0.0
      %536 = vadd.xlane.f32.xlu0 %v535
      %v537 = vpop.xlane.xlu0 %536
      %v538 = vsel %vm531, %v501, 0.0
      %539 = vadd.xlane.f32.xlu0 %v538
      %v540 = vpop.xlane.xlu0 %539
      %v541 = vsel %vm531, %v502, 0.0
      %542 = vadd.xlane.f32.xlu0 %v541
      %v543 = vpop.xlane.xlu0 %542
      %v544 = vsel %vm531, %v503, 0.0
      %545 = vadd.xlane.f32.xlu0 %v544
      %v546 = vpop.xlane.xlu0 %545
      %v547 = vsel %vm531, %v504, 0.0
      %548 = vadd.xlane.f32.xlu0 %v547
      %v549 = vpop.xlane.xlu0 %548
      %v550 = vsel %vm531, %v505, 0.0
      %551 = vadd.xlane.f32.xlu0 %v550
      %v552 = vpop.xlane.xlu0 %551
      %v553 = vsel %vm531, %v506, 0.0
      %554 = vadd.xlane.f32.xlu0 %v553
      %v555 = vpop.xlane.xlu0 %554
      %v556 = vrcp.pop 32.0
      %v557 = vmul.f32 %v534, %v556
      %v558 = vmul.f32 %v537, %v556
      %v559 = vmul.f32 %v540, %v556
      %v560 = vmul.f32 %v543, %v556
      %v561 = vmul.f32 %v546, %v556
      %v562 = vmul.f32 %v549, %v556
      %v563 = vmul.f32 %v552, %v556
      %v564 = vmul.f32 %v555, %v556
      %v565 = vsub.f32 %v499, %v557
      %v566 = vsub.f32 %v500, %v558
      %v567 = vsub.f32 %v501, %v559
      %v568 = vsub.f32 %v502, %v560
      %v569 = vsub.f32 %v503, %v561
      %v570 = vsub.f32 %v504, %v562
      %v571 = vsub.f32 %v505, %v563
      %v572 = vsub.f32 %v506, %v564
      %v573 = vmul.f32 %v565, %v565
      %v574 = vmul.f32 %v566, %v566
      %v575 = vmul.f32 %v567, %v567
      %v576 = vmul.f32 %v568, %v568
      %v577 = vmul.f32 %v569, %v569
      %v578 = vmul.f32 %v570, %v570
      %v579 = vmul.f32 %v571, %v571
      %v580 = vmul.f32 %v572, %v572
      %v581 = vsel %vm531, %v573, 0.0
      %582 = vadd.xlane.f32.xlu0 %v581
      %v583 = vpop.xlane.xlu0 %582
      %v584 = vsel %vm531, %v574, 0.0
      %585 = vadd.xlane.f32.xlu0 %v584
      %v586 = vpop.xlane.xlu0 %585
      %v587 = vsel %vm531, %v575, 0.0
      %588 = vadd.xlane.f32.xlu0 %v587
      %v589 = vpop.xlane.xlu0 %588
      %v590 = vsel %vm531, %v576, 0.0
      %591 = vadd.xlane.f32.xlu0 %v590
      %v592 = vpop.xlane.xlu0 %591
      %v593 = vsel %vm531, %v577, 0.0
      %594 = vadd.xlane.f32.xlu0 %v593
      %v595 = vpop.xlane.xlu0 %594
      %v596 = vsel %vm531, %v578, 0.0
      %597 = vadd.xlane.f32.xlu0 %v596
      %v598 = vpop.xlane.xlu0 %597
      %v599 = vsel %vm531, %v579, 0.0
      %600 = vadd.xlane.f32.xlu0 %v599
      %v601 = vpop.xlane.xlu0 %600
      %v602 = vsel %vm531, %v580, 0.0
      %603 = vadd.xlane.f32.xlu0 %v602
      %v604 = vpop.xlane.xlu0 %603
      %v605 = vmul.f32 %v583, %v556
      %v606 = vmul.f32 %v586, %v556
      %v607 = vmul.f32 %v589, %v556
      %v608 = vmul.f32 %v592, %v556
      %v609 = vmul.f32 %v595, %v556
      %v610 = vmul.f32 %v598, %v556
      %v611 = vmul.f32 %v601, %v556
      %v612 = vmul.f32 %v604, %v556
      %v613 = vadd.f32 %v605, 1e-05
      %v614 = vadd.f32 %v606, 1e-05
      %v615 = vadd.f32 %v607, 1e-05
      %v616 = vadd.f32 %v608, 1e-05
      %v617 = vadd.f32 %v609, 1e-05
      %v618 = vadd.f32 %v610, 1e-05
      %v619 = vadd.f32 %v611, 1e-05
      %v620 = vadd.f32 %v612, 1e-05
      %v621 = vrsqrt.pop %v613
      %v622 = vrsqrt.pop %v614
      %v623 = vrsqrt.pop %v615
      %v624 = vrsqrt.pop %v616
      %v625 = vrsqrt.pop %v617
      %v626 = vrsqrt.pop %v618
      %v627 = vrsqrt.pop %v619
      %v628 = vrsqrt.pop %v620
      %v629 = vmul.f32 %v565, %v621
      %v630 = vmul.f32 %v566, %v622
      %v631 = vmul.f32 %v567, %v623
      %v632 = vmul.f32 %v568, %v624
      %v633 = vmul.f32 %v569, %v625
      %v634 = vmul.f32 %v570, %v626
      %v635 = vmul.f32 %v571, %v627
      %v636 = vmul.f32 %v572, %v628
      %v638 = vlaneseq
      %v639 = vshrl.u32 %v638, 7
      %v640 = vsub.s32 0, %v639
      %v641 = vrot.slane %v523, %v640
      %v643 = vmul.f32 %v629, %v641
      %v644 = vmul.f32 %v630, %v641
      %v645 = vmul.f32 %v631, %v641
      %v646 = vmul.f32 %v632, %v641
      %v647 = vmul.f32 %v633, %v641
      %v648 = vmul.f32 %v634, %v641
      %v649 = vmul.f32 %v635, %v641
      %v650 = vmul.f32 %v636, %v641
      %v652 = vlaneseq
      %v653 = vshrl.u32 %v652, 7
      %v654 = vsub.s32 0, %v653
      %v655 = vrot.slane %v524, %v654
      %v657 = vadd.f32 %v643, %v655
      %v658 = vadd.f32 %v644, %v655
      %v659 = vadd.f32 %v645, %v655
      %v660 = vadd.f32 %v646, %v655
      %v661 = vadd.f32 %v647, %v655
      %v662 = vadd.f32 %v648, %v655
      %v663 = vadd.f32 %v649, %v655
      %v664 = vadd.f32 %v650, %v655
      %v665 = vpack.c.bf16 %v658, %v657
      %v666 = vpack.c.bf16 %v660, %v659
      %v667 = vpack.c.bf16 %v662, %v661
      %v668 = vpack.c.bf16 %v664, %v663
      %v669 = vld [vmem:[%s5] sm:$0xf]
      %v670 = vld [vmem:[%s5 + $0x4] sm:$0xf]
      %v671 = vld [vmem:[%s5 + $0x8] sm:$0xf]
      %v672 = vld [vmem:[%s5 + $0xc] sm:$0xf]
      %v674 = vlaneseq
      %v675 = vshrl.u32 %v674, 7
      %v676 = vsub.s32 0, %v675
      %v677 = vrot.slane %v527, %v676
      %v683 = vunpack.c.l.b16 %v669
      %v684 = vunpack.c.l.b16 %v670
      %v685 = vunpack.c.l.b16 %v671
      %v686 = vunpack.c.l.b16 %v672
      %v687 = vpack.c.b16 %v684, %v683
      %v688 = vpack.c.b16 %v686, %v685
      %v692 = vsel %vm531, %v665, 0
      %v695 = vsel %vm531, %v666, 0
      %v698 = vsel %vm531, %v667, 0
      %v701 = vsel %vm531, %v668, 0
      %703 = vmatprep.subr.bf16.mxu0 0
      %704 = vmatpush1.bf16.msra.mxu0 %v687
      %705 = vmatprep.subr.bf16.mxu0 0
      %706 = vmatpush1.bf16.msra.mxu0 %v688
      %707 = vmatprep.subr.bf16.mxu0 0
      %708 = vmatpush1.bf16.msra.mxu0 0
      %709 = vmatprep.subr.bf16.mxu0 0
      %710 = vmatpush1.bf16.msra.mxu0 0
      %711 = vmatprep.subr.bf16.mxu0 0
      %712 = vmatpush1.bf16.msra.mxu0 0
      %713 = vmatprep.subr.bf16.mxu0 0
      %714 = vmatpush1.bf16.msra.mxu0 0
      %715 = vmatprep.subr.bf16.mxu0 0
      %716 = vmatpush1.bf16.msra.mxu0 0
      %717 = vmatprep.subr.bf16.mxu0 0
      %718 = vmatpush1.bf16.msra.mxu0 0
      %719 = vmatprep.subr.bf16.mxu0 0
      %720 = vmatpush1.bf16.msra.mxu0 0
      %721 = vmatprep.subr.bf16.mxu0 0
      %722 = vmatpush1.bf16.msra.mxu0 0
      %723 = vmatprep.subr.bf16.mxu0 0
      %724 = vmatpush1.bf16.msra.mxu0 0
      %725 = vmatprep.subr.bf16.mxu0 0
      %726 = vmatpush1.bf16.msra.mxu0 0
      %727 = vmatprep.subr.bf16.mxu0 0
      %728 = vmatpush1.bf16.msra.mxu0 0
      %729 = vmatprep.subr.bf16.mxu0 0
      %730 = vmatpush1.bf16.msra.mxu0 0
      %731 = vmatprep.subr.bf16.mxu0 0
      %732 = vmatpush1.bf16.msra.mxu0 0
      %733 = vmatprep.subr.bf16.mxu0 0
      %734 = vmatpush1.bf16.msra.mxu0 0
      %735 = vmatprep.mubr.bf16.mxu0 0
      %736 = vmatmul.mubr.bf16.gmra.mrb[0].mxu0 %v692
      %v737 = vpop.f32.mrb[0].mxu0
      %v738 = vadd.f32 %v677, %v737
      %v739 = vpop.f32.mrb[0].mxu0
      %v740 = vpop.f32.mrb[0].mxu0
      %v741 = vadd.f32 %v677, %v740
      %v742 = vpop.f32.mrb[0].mxu0
      %743 = vmatprep.mubr.bf16.mxu0 0
      %744 = vmatmul.mubr.bf16.gmra.mrb[0].mxu0 %v695
      %v745 = vpop.f32.mrb[0].mxu0
      %v746 = vadd.f32 %v677, %v745
      %v747 = vpop.f32.mrb[0].mxu0
      %v748 = vpop.f32.mrb[0].mxu0
      %v749 = vadd.f32 %v677, %v748
      %v750 = vpop.f32.mrb[0].mxu0
      %751 = vmatprep.mubr.bf16.mxu0 0
      %752 = vmatmul.mubr.bf16.gmra.mrb[0].mxu0 %v698
      %v753 = vpop.f32.mrb[0].mxu0
      %v754 = vadd.f32 %v677, %v753
      %v755 = vpop.f32.mrb[0].mxu0
      %v756 = vpop.f32.mrb[0].mxu0
      %v757 = vadd.f32 %v677, %v756
      %v758 = vpop.f32.mrb[0].mxu0
      %759 = vmatprep.mubr.bf16.mxu0 0
      %760 = vmatmul.mubr.bf16.gmra.mrb[0].mxu0 %v701
      %v761 = vpop.f32.mrb[0].mxu0
      %v762 = vadd.f32 %v677, %v761
      %v763 = vpop.f32.mrb[0].mxu0
      %v764 = vpop.f32.mrb[0].mxu0
      %v765 = vadd.f32 %v677, %v764
      %v766 = vpop.f32.mrb[0].mxu0
      %767 = vdwg.mxu0
      %v768 = vpack.c.bf16 %v741, %v738
      %v769 = vpack.c.bf16 %v749, %v746
      %v770 = vpack.c.bf16 %v757, %v754
      %v771 = vpack.c.bf16 %v765, %v762
      %776 = vrot.lane.b32.xlu0 %v768, 120
      %v777 = vpop.permute.xlu0 %776
      %778 = vrot.lane.b32.xlu0 %v769, 120
      %v779 = vpop.permute.xlu0 %778
      %780 = vrot.lane.b32.xlu0 %v770, 120
      %v781 = vpop.permute.xlu0 %780
      %782 = vrot.lane.b32.xlu0 %v771, 120
      %v783 = vpop.permute.xlu0 %782
      %784 = vrot.lane.b32.xlu0 %v768, 112
      %v785 = vpop.permute.xlu0 %784
      %786 = vrot.lane.b32.xlu0 %v769, 112
      %v787 = vpop.permute.xlu0 %786
      %788 = vrot.lane.b32.xlu0 %v770, 112
      %v789 = vpop.permute.xlu0 %788
      %790 = vrot.lane.b32.xlu0 %v771, 112
      %v791 = vpop.permute.xlu0 %790
      %792 = vrot.lane.b32.xlu0 %v768, 104
      %v793 = vpop.permute.xlu0 %792
      %794 = vrot.lane.b32.xlu0 %v769, 104
      %v795 = vpop.permute.xlu0 %794
      %796 = vrot.lane.b32.xlu0 %v770, 104
      %v797 = vpop.permute.xlu0 %796
      %798 = vrot.lane.b32.xlu0 %v771, 104
      %v799 = vpop.permute.xlu0 %798
      %800 = vrot.lane.b32.xlu0 %v768, 96
      %v801 = vpop.permute.xlu0 %800
      %vm802 = vcmask 64512
      %v804 = vsel %vm802, %v768, 0
      %v807 = vsel %vm802, %v801, 0
      %809 = vmatprep.subr.bf16.mxu0 0
      %810 = vmatpush1.bf16.xpose.msra.mxu0 %v807
      %811 = vmatprep.subr.bf16.mxu0 0
      %812 = vmatpush1.bf16.xpose.msra.mxu0 0
      %813 = vmatprep.subr.bf16.mxu0 0
      %814 = vmatpush1.bf16.xpose.msra.mxu0 0
      %815 = vmatprep.subr.bf16.mxu0 0
      %816 = vmatpush1.bf16.xpose.msra.mxu0 0
      %817 = vmatprep.subr.bf16.mxu0 0
      %818 = vmatpush1.bf16.xpose.msra.mxu0 0
      %819 = vmatprep.subr.bf16.mxu0 0
      %820 = vmatpush1.bf16.xpose.msra.mxu0 0
      %821 = vmatprep.subr.bf16.mxu0 0
      %822 = vmatpush1.bf16.xpose.msra.mxu0 0
      %823 = vmatprep.subr.bf16.mxu0 0
      %824 = vmatpush1.bf16.xpose.msra.mxu0 0
      %825 = vmatprep.subr.bf16.mxu0 0
      %826 = vmatpush1.bf16.xpose.msra.mxu0 0
      %827 = vmatprep.subr.bf16.mxu0 0
      %828 = vmatpush1.bf16.xpose.msra.mxu0 0
      %829 = vmatprep.subr.bf16.mxu0 0
      %830 = vmatpush1.bf16.xpose.msra.mxu0 0
      %831 = vmatprep.subr.bf16.mxu0 0
      %832 = vmatpush1.bf16.xpose.msra.mxu0 0
      %833 = vmatprep.subr.bf16.mxu0 0
      %834 = vmatpush1.bf16.xpose.msra.mxu0 0
      %835 = vmatprep.subr.bf16.mxu0 0
      %836 = vmatpush1.bf16.xpose.msra.mxu0 0
      %837 = vmatprep.subr.bf16.mxu0 0
      %838 = vmatpush1.bf16.xpose.msra.mxu0 0
      %839 = vmatprep.subr.bf16.mxu0 0
      %840 = vmatpush1.bf16.xpose.msra.mxu0 0
      %841 = vmatprep.mubr.bf16.mxu0 0
      %842 = vmatmul.mubr.bf16.gmra.mrb[0].mxu0 %v804
      %v843 = vpop.f32.mrb[0].mxu0
      %v844 = vadd.f32 0.0, %v843
      %v845 = vpop.f32.mrb[0].mxu0
      %v846 = vpop.f32.mrb[0].mxu0
      %v847 = vadd.f32 0.0, %v846
      %v848 = vpop.f32.mrb[0].mxu0
      %849 = vdwg.mxu0
      %850 = vrot.lane.b32.xlu0 %v769, 96
      %v851 = vpop.permute.xlu0 %850
      %v853 = vsel %vm802, %v769, 0
      %v856 = vsel %vm802, %v851, 0
      %858 = vmatprep.subr.bf16.mxu0 0
      %859 = vmatpush1.bf16.xpose.msra.mxu0 %v856
      %860 = vmatprep.subr.bf16.mxu0 0
      %861 = vmatpush1.bf16.xpose.msra.mxu0 0
      %862 = vmatprep.subr.bf16.mxu0 0
      %863 = vmatpush1.bf16.xpose.msra.mxu0 0
      %864 = vmatprep.subr.bf16.mxu0 0
      %865 = vmatpush1.bf16.xpose.msra.mxu0 0
      %866 = vmatprep.subr.bf16.mxu0 0
      %867 = vmatpush1.bf16.xpose.msra.mxu0 0
      %868 = vmatprep.subr.bf16.mxu0 0
      %869 = vmatpush1.bf16.xpose.msra.mxu0 0
      %870 = vmatprep.subr.bf16.mxu0 0
      %871 = vmatpush1.bf16.xpose.msra.mxu0 0
      %872 = vmatprep.subr.bf16.mxu0 0
      %873 = vmatpush1.bf16.xpose.msra.mxu0 0
      %874 = vmatprep.subr.bf16.mxu0 0
      %875 = vmatpush1.bf16.xpose.msra.mxu0 0
      %876 = vmatprep.subr.bf16.mxu0 0
      %877 = vmatpush1.bf16.xpose.msra.mxu0 0
      %878 = vmatprep.subr.bf16.mxu0 0
      %879 = vmatpush1.bf16.xpose.msra.mxu0 0
      %880 = vmatprep.subr.bf16.mxu0 0
      %881 = vmatpush1.bf16.xpose.msra.mxu0 0
      %882 = vmatprep.subr.bf16.mxu0 0
      %883 = vmatpush1.bf16.xpose.msra.mxu0 0
      %884 = vmatprep.subr.bf16.mxu0 0
      %885 = vmatpush1.bf16.xpose.msra.mxu0 0
      %886 = vmatprep.subr.bf16.mxu0 0
      %887 = vmatpush1.bf16.xpose.msra.mxu0 0
      %888 = vmatprep.subr.bf16.mxu0 0
      %889 = vmatpush1.bf16.xpose.msra.mxu0 0
      %890 = vmatprep.mubr.bf16.mxu0 0
      %891 = vmatmul.mubr.bf16.gmra.mrb[0].mxu0 %v853
      %v892 = vpop.f32.mrb[0].mxu0
      %v893 = vadd.f32 0.0, %v892
      %v894 = vpop.f32.mrb[0].mxu0
      %v895 = vpop.f32.mrb[0].mxu0
      %v896 = vadd.f32 0.0, %v895
      %v897 = vpop.f32.mrb[0].mxu0
      %898 = vdwg.mxu0
      %899 = vrot.lane.b32.xlu0 %v770, 96
      %v900 = vpop.permute.xlu0 %899
      %v902 = vsel %vm802, %v770, 0
      %v905 = vsel %vm802, %v900, 0
      %907 = vmatprep.subr.bf16.mxu0 0
      %908 = vmatpush1.bf16.xpose.msra.mxu0 %v905
      %909 = vmatprep.subr.bf16.mxu0 0
      %910 = vmatpush1.bf16.xpose.msra.mxu0 0
      %911 = vmatprep.subr.bf16.mxu0 0
      %912 = vmatpush1.bf16.xpose.msra.mxu0 0
      %913 = vmatprep.subr.bf16.mxu0 0
      %914 = vmatpush1.bf16.xpose.msra.mxu0 0
      %915 = vmatprep.subr.bf16.mxu0 0
      %916 = vmatpush1.bf16.xpose.msra.mxu0 0
      %917 = vmatprep.subr.bf16.mxu0 0
      %918 = vmatpush1.bf16.xpose.msra.mxu0 0
      %919 = vmatprep.subr.bf16.mxu0 0
      %920 = vmatpush1.bf16.xpose.msra.mxu0 0
      %921 = vmatprep.subr.bf16.mxu0 0
      %922 = vmatpush1.bf16.xpose.msra.mxu0 0
      %923 = vmatprep.subr.bf16.mxu0 0
      %924 = vmatpush1.bf16.xpose.msra.mxu0 0
      %925 = vmatprep.subr.bf16.mxu0 0
      %926 = vmatpush1.bf16.xpose.msra.mxu0 0
      %927 = vmatprep.subr.bf16.mxu0 0
      %928 = vmatpush1.bf16.xpose.msra.mxu0 0
      %929 = vmatprep.subr.bf16.mxu0 0
      %930 = vmatpush1.bf16.xpose.msra.mxu0 0
      %931 = vmatprep.subr.bf16.mxu0 0
      %932 = vmatpush1.bf16.xpose.msra.mxu0 0
      %933 = vmatprep.subr.bf16.mxu0 0
      %934 = vmatpush1.bf16.xpose.msra.mxu0 0
      %935 = vmatprep.subr.bf16.mxu0 0
      %936 = vmatpush1.bf16.xpose.msra.mxu0 0
      %937 = vmatprep.subr.bf16.mxu0 0
      %938 = vmatpush1.bf16.xpose.msra.mxu0 0
      %939 = vmatprep.mubr.bf16.mxu0 0
      %940 = vmatmul.mubr.bf16.gmra.mrb[0].mxu0 %v902
      %v941 = vpop.f32.mrb[0].mxu0
      %v942 = vadd.f32 0.0, %v941
      %v943 = vpop.f32.mrb[0].mxu0
      %v944 = vpop.f32.mrb[0].mxu0
      %v945 = vadd.f32 0.0, %v944
      %v946 = vpop.f32.mrb[0].mxu0
      %947 = vdwg.mxu0
      %948 = vrot.lane.b32.xlu0 %v771, 96
      %v949 = vpop.permute.xlu0 %948
      %v951 = vsel %vm802, %v771, 0
      %v954 = vsel %vm802, %v949, 0
      %956 = vmatprep.subr.bf16.mxu0 0
      %957 = vmatpush1.bf16.xpose.msra.mxu0 %v954
      %958 = vmatprep.subr.bf16.mxu0 0
      %959 = vmatpush1.bf16.xpose.msra.mxu0 0
      %960 = vmatprep.subr.bf16.mxu0 0
      %961 = vmatpush1.bf16.xpose.msra.mxu0 0
      %962 = vmatprep.subr.bf16.mxu0 0
      %963 = vmatpush1.bf16.xpose.msra.mxu0 0
      %964 = vmatprep.subr.bf16.mxu0 0
      %965 = vmatpush1.bf16.xpose.msra.mxu0 0
      %966 = vmatprep.subr.bf16.mxu0 0
      %967 = vmatpush1.bf16.xpose.msra.mxu0 0
      %968 = vmatprep.subr.bf16.mxu0 0
      %969 = vmatpush1.bf16.xpose.msra.mxu0 0
      %970 = vmatprep.subr.bf16.mxu0 0
      %971 = vmatpush1.bf16.xpose.msra.mxu0 0
      %972 = vmatprep.subr.bf16.mxu0 0
      %973 = vmatpush1.bf16.xpose.msra.mxu0 0
      %974 = vmatprep.subr.bf16.mxu0 0
      %975 = vmatpush1.bf16.xpose.msra.mxu0 0
      %976 = vmatprep.subr.bf16.mxu0 0
      %977 = vmatpush1.bf16.xpose.msra.mxu0 0
      %978 = vmatprep.subr.bf16.mxu0 0
      %979 = vmatpush1.bf16.xpose.msra.mxu0 0
      %980 = vmatprep.subr.bf16.mxu0 0
      %981 = vmatpush1.bf16.xpose.msra.mxu0 0
      %982 = vmatprep.subr.bf16.mxu0 0
      %983 = vmatpush1.bf16.xpose.msra.mxu0 0
      %984 = vmatprep.subr.bf16.mxu0 0
      %985 = vmatpush1.bf16.xpose.msra.mxu0 0
      %986 = vmatprep.subr.bf16.mxu0 0
      %987 = vmatpush1.bf16.xpose.msra.mxu0 0
      %988 = vmatprep.mubr.bf16.mxu0 0
      %989 = vmatmul.mubr.bf16.gmra.mrb[0].mxu0 %v951
      %v990 = vpop.f32.mrb[0].mxu0
      %v991 = vadd.f32 0.0, %v990
      %v992 = vpop.f32.mrb[0].mxu0
      %v993 = vpop.f32.mrb[0].mxu0
      %v994 = vadd.f32 0.0, %v993
      %v995 = vpop.f32.mrb[0].mxu0
      %996 = vdwg.mxu0
      %997 = vrot.lane.b32.xlu0 %v777, 96
      %v998 = vpop.permute.xlu0 %997
      %v1000 = vsel %vm802, %v777, 0
      %v1003 = vsel %vm802, %v998, 0
      %1005 = vmatprep.subr.bf16.mxu0 0
      %1006 = vmatpush1.bf16.xpose.msra.mxu0 %v1003
      %1007 = vmatprep.subr.bf16.mxu0 0
      %1008 = vmatpush1.bf16.xpose.msra.mxu0 0
      %1009 = vmatprep.subr.bf16.mxu0 0
      %1010 = vmatpush1.bf16.xpose.msra.mxu0 0
      %1011 = vmatprep.subr.bf16.mxu0 0
      %1012 = vmatpush1.bf16.xpose.msra.mxu0 0
      %1013 = vmatprep.subr.bf16.mxu0 0
      %1014 = vmatpush1.bf16.xpose.msra.mxu0 0
      %1015 = vmatprep.subr.bf16.mxu0 0
      %1016 = vmatpush1.bf16.xpose.msra.mxu0 0
      %1017 = vmatprep.subr.bf16.mxu0 0
      %1018 = vmatpush1.bf16.xpose.msra.mxu0 0
      %1019 = vmatprep.subr.bf16.mxu0 0
      %1020 = vmatpush1.bf16.xpose.msra.mxu0 0
      %1021 = vmatprep.subr.bf16.mxu0 0
      %1022 = vmatpush1.bf16.xpose.msra.mxu0 0
      %1023 = vmatprep.subr.bf16.mxu0 0
      %1024 = vmatpush1.bf16.xpose.msra.mxu0 0
      %1025 = vmatprep.subr.bf16.mxu0 0
      %1026 = vmatpush1.bf16.xpose.msra.mxu0 0
      %1027 = vmatprep.subr.bf16.mxu0 0
      %1028 = vmatpush1.bf16.xpose.msra.mxu0 0
      %1029 = vmatprep.subr.bf16.mxu0 0
      %1030 = vmatpush1.bf16.xpose.msra.mxu0 0
      %1031 = vmatprep.subr.bf16.mxu0 0
      %1032 = vmatpush1.bf16.xpose.msra.mxu0 0
      %1033 = vmatprep.subr.bf16.mxu0 0
      %1034 = vmatpush1.bf16.xpose.msra.mxu0 0
      %1035 = vmatprep.subr.bf16.mxu0 0
      %1036 = vmatpush1.bf16.xpose.msra.mxu0 0
      %1037 = vmatprep.mubr.bf16.mxu0 0
      %1038 = vmatmul.mubr.bf16.gmra.mrb[0].mxu0 %v1000
      %v1039 = vpop.f32.mrb[0].mxu0
      %v1040 = vadd.f32 0.0, %v1039
      %v1041 = vpop.f32.mrb[0].mxu0
      %v1042 = vpop.f32.mrb[0].mxu0
      %v1043 = vadd.f32 0.0, %v1042
      %v1044 = vpop.f32.mrb[0].mxu0
      %1045 = vdwg.mxu0
      %1046 = vrot.lane.b32.xlu0 %v779, 96
      %v1047 = vpop.permute.xlu0 %1046
      %v1049 = vsel %vm802, %v779, 0
      %v1052 = vsel %vm802, %v1047, 0
      %1054 = vmatprep.subr.bf16.mxu0 0
      %1055 = vmatpush1.bf16.xpose.msra.mxu0 %v1052
      %1056 = vmatprep.subr.bf16.mxu0 0
      %1057 = vmatpush1.bf16.xpose.msra.mxu0 0
      %1058 = vmatprep.subr.bf16.mxu0 0
      %1059 = vmatpush1.bf16.xpose.msra.mxu0 0
      %1060 = vmatprep.subr.bf16.mxu0 0
      %1061 = vmatpush1.bf16.xpose.msra.mxu0 0
      %1062 = vmatprep.subr.bf16.mxu0 0
      %1063 = vmatpush1.bf16.xpose.msra.mxu0 0
      %1064 = vmatprep.subr.bf16.mxu0 0
      %1065 = vmatpush1.bf16.xpose.msra.mxu0 0
      %1066 = vmatprep.subr.bf16.mxu0 0
      %1067 = vmatpush1.bf16.xpose.msra.mxu0 0
      %1068 = vmatprep.subr.bf16.mxu0 0
      %1069 = vmatpush1.bf16.xpose.msra.mxu0 0
      %1070 = vmatprep.subr.bf16.mxu0 0
      %1071 = vmatpush1.bf16.xpose.msra.mxu0 0
      %1072 = vmatprep.subr.bf16.mxu0 0
      %1073 = vmatpush1.bf16.xpose.msra.mxu0 0
      %1074 = vmatprep.subr.bf16.mxu0 0
      %1075 = vmatpush1.bf16.xpose.msra.mxu0 0
      %1076 = vmatprep.subr.bf16.mxu0 0
      %1077 = vmatpush1.bf16.xpose.msra.mxu0 0
      %1078 = vmatprep.subr.bf16.mxu0 0
      %1079 = vmatpush1.bf16.xpose.msra.mxu0 0
      %1080 = vmatprep.subr.bf16.mxu0 0
      %1081 = vmatpush1.bf16.xpose.msra.mxu0 0
      %1082 = vmatprep.subr.bf16.mxu0 0
      %1083 = vmatpush1.bf16.xpose.msra.mxu0 0
      %1084 = vmatprep.subr.bf16.mxu0 0
      %1085 = vmatpush1.bf16.xpose.msra.mxu0 0
      %1086 = vmatprep.mubr.bf16.mxu0 0
      %1087 = vmatmul.mubr.bf16.gmra.mrb[0].mxu0 %v1049
      %v1088 = vpop.f32.mrb[0].mxu0
      %v1089 = vadd.f32 0.0, %v1088
      %v1090 = vpop.f32.mrb[0].mxu0
      %v1091 = vpop.f32.mrb[0].mxu0
      %v1092 = vadd.f32 0.0, %v1091
      %v1093 = vpop.f32.mrb[0].mxu0
      %1094 = vdwg.mxu0
      %1095 = vrot.lane.b32.xlu0 %v781, 96
      %v1096 = vpop.permute.xlu0 %1095
      %v1098 = vsel %vm802, %v781, 0
      %v1101 = vsel %vm802, %v1096, 0
      %1103 = vmatprep.subr.bf16.mxu0 0
      %1104 = vmatpush1.bf16.xpose.msra.mxu0 %v1101
      %1105 = vmatprep.subr.bf16.mxu0 0
      %1106 = vmatpush1.bf16.xpose.msra.mxu0 0
      %1107 = vmatprep.subr.bf16.mxu0 0
      %1108 = vmatpush1.bf16.xpose.msra.mxu0 0
      %1109 = vmatprep.subr.bf16.mxu0 0
      %1110 = vmatpush1.bf16.xpose.msra.mxu0 0
      %1111 = vmatprep.subr.bf16.mxu0 0
      %1112 = vmatpush1.bf16.xpose.msra.mxu0 0
      %1113 = vmatprep.subr.bf16.mxu0 0
      %1114 = vmatpush1.bf16.xpose.msra.mxu0 0
      %1115 = vmatprep.subr.bf16.mxu0 0
      %1116 = vmatpush1.bf16.xpose.msra.mxu0 0
      %1117 = vmatprep.subr.bf16.mxu0 0
      %1118 = vmatpush1.bf16.xpose.msra.mxu0 0
      %1119 = vmatprep.subr.bf16.mxu0 0
      %1120 = vmatpush1.bf16.xpose.msra.mxu0 0
      %1121 = vmatprep.subr.bf16.mxu0 0
      %1122 = vmatpush1.bf16.xpose.msra.mxu0 0
      %1123 = vmatprep.subr.bf16.mxu0 0
      %1124 = vmatpush1.bf16.xpose.msra.mxu0 0
      %1125 = vmatprep.subr.bf16.mxu0 0
      %1126 = vmatpush1.bf16.xpose.msra.mxu0 0
      %1127 = vmatprep.subr.bf16.mxu0 0
      %1128 = vmatpush1.bf16.xpose.msra.mxu0 0
      %1129 = vmatprep.subr.bf16.mxu0 0
      %1130 = vmatpush1.bf16.xpose.msra.mxu0 0
      %1131 = vmatprep.subr.bf16.mxu0 0
      %1132 = vmatpush1.bf16.xpose.msra.mxu0 0
      %1133 = vmatprep.subr.bf16.mxu0 0
      %1134 = vmatpush1.bf16.xpose.msra.mxu0 0
      %1135 = vmatprep.mubr.bf16.mxu0 0
      %1136 = vmatmul.mubr.bf16.gmra.mrb[0].mxu0 %v1098
      %v1137 = vpop.f32.mrb[0].mxu0
      %v1138 = vadd.f32 0.0, %v1137
      %v1139 = vpop.f32.mrb[0].mxu0
      %v1140 = vpop.f32.mrb[0].mxu0
      %v1141 = vadd.f32 0.0, %v1140
      %v1142 = vpop.f32.mrb[0].mxu0
      %1143 = vdwg.mxu0
      %1144 = vrot.lane.b32.xlu0 %v783, 96
      %v1145 = vpop.permute.xlu0 %1144
      %v1147 = vsel %vm802, %v783, 0
      %v1150 = vsel %vm802, %v1145, 0
      %1152 = vmatprep.subr.bf16.mxu0 0
      %1153 = vmatpush1.bf16.xpose.msra.mxu0 %v1150
      %1154 = vmatprep.subr.bf16.mxu0 0
      %1155 = vmatpush1.bf16.xpose.msra.mxu0 0
      %1156 = vmatprep.subr.bf16.mxu0 0
      %1157 = vmatpush1.bf16.xpose.msra.mxu0 0
      %1158 = vmatprep.subr.bf16.mxu0 0
      %1159 = vmatpush1.bf16.xpose.msra.mxu0 0
      %1160 = vmatprep.subr.bf16.mxu0 0
      %1161 = vmatpush1.bf16.xpose.msra.mxu0 0
      %1162 = vmatprep.subr.bf16.mxu0 0
      %1163 = vmatpush1.bf16.xpose.msra.mxu0 0
      %1164 = vmatprep.subr.bf16.mxu0 0
      %1165 = vmatpush1.bf16.xpose.msra.mxu0 0
      %1166 = vmatprep.subr.bf16.mxu0 0
      %1167 = vmatpush1.bf16.xpose.msra.mxu0 0
      %1168 = vmatprep.subr.bf16.mxu0 0
      %1169 = vmatpush1.bf16.xpose.msra.mxu0 0
      %1170 = vmatprep.subr.bf16.mxu0 0
      %1171 = vmatpush1.bf16.xpose.msra.mxu0 0
      %1172 = vmatprep.subr.bf16.mxu0 0
      %1173 = vmatpush1.bf16.xpose.msra.mxu0 0
      %1174 = vmatprep.subr.bf16.mxu0 0
      %1175 = vmatpush1.bf16.xpose.msra.mxu0 0
      %1176 = vmatprep.subr.bf16.mxu0 0
      %1177 = vmatpush1.bf16.xpose.msra.mxu0 0
      %1178 = vmatprep.subr.bf16.mxu0 0
      %1179 = vmatpush1.bf16.xpose.msra.mxu0 0
      %1180 = vmatprep.subr.bf16.mxu0 0
      %1181 = vmatpush1.bf16.xpose.msra.mxu0 0
      %1182 = vmatprep.subr.bf16.mxu0 0
      %1183 = vmatpush1.bf16.xpose.msra.mxu0 0
      %1184 = vmatprep.mubr.bf16.mxu0 0
      %1185 = vmatmul.mubr.bf16.gmra.mrb[0].mxu0 %v1147
      %v1186 = vpop.f32.mrb[0].mxu0
      %v1187 = vadd.f32 0.0, %v1186
      %v1188 = vpop.f32.mrb[0].mxu0
      %v1189 = vpop.f32.mrb[0].mxu0
      %v1190 = vadd.f32 0.0, %v1189
      %v1191 = vpop.f32.mrb[0].mxu0
      %1192 = vdwg.mxu0
      %1193 = vrot.lane.b32.xlu0 %v785, 96
      %v1194 = vpop.permute.xlu0 %1193
      %v1196 = vsel %vm802, %v785, 0
      %v1199 = vsel %vm802, %v1194, 0
      %1201 = vmatprep.subr.bf16.mxu0 0
      %1202 = vmatpush1.bf16.xpose.msra.mxu0 %v1199
      %1203 = vmatprep.subr.bf16.mxu0 0
      %1204 = vmatpush1.bf16.xpose.msra.mxu0 0
      %1205 = vmatprep.subr.bf16.mxu0 0
      %1206 = vmatpush1.bf16.xpose.msra.mxu0 0
      %1207 = vmatprep.subr.bf16.mxu0 0
      %1208 = vmatpush1.bf16.xpose.msra.mxu0 0
      %1209 = vmatprep.subr.bf16.mxu0 0
      %1210 = vmatpush1.bf16.xpose.msra.mxu0 0
      %1211 = vmatprep.subr.bf16.mxu0 0
      %1212 = vmatpush1.bf16.xpose.msra.mxu0 0
      %1213 = vmatprep.subr.bf16.mxu0 0
      %1214 = vmatpush1.bf16.xpose.msra.mxu0 0
      %1215 = vmatprep.subr.bf16.mxu0 0
      %1216 = vmatpush1.bf16.xpose.msra.mxu0 0
      %1217 = vmatprep.subr.bf16.mxu0 0
      %1218 = vmatpush1.bf16.xpose.msra.mxu0 0
      %1219 = vmatprep.subr.bf16.mxu0 0
      %1220 = vmatpush1.bf16.xpose.msra.mxu0 0
      %1221 = vmatprep.subr.bf16.mxu0 0
      %1222 = vmatpush1.bf16.xpose.msra.mxu0 0
      %1223 = vmatprep.subr.bf16.mxu0 0
      %1224 = vmatpush1.bf16.xpose.msra.mxu0 0
      %1225 = vmatprep.subr.bf16.mxu0 0
      %1226 = vmatpush1.bf16.xpose.msra.mxu0 0
      %1227 = vmatprep.subr.bf16.mxu0 0
      %1228 = vmatpush1.bf16.xpose.msra.mxu0 0
      %1229 = vmatprep.subr.bf16.mxu0 0
      %1230 = vmatpush1.bf16.xpose.msra.mxu0 0
      %1231 = vmatprep.subr.bf16.mxu0 0
      %1232 = vmatpush1.bf16.xpose.msra.mxu0 0
      %1233 = vmatprep.mubr.bf16.mxu0 0
      %1234 = vmatmul.mubr.bf16.gmra.mrb[0].mxu0 %v1196
      %v1235 = vpop.f32.mrb[0].mxu0
      %v1236 = vadd.f32 0.0, %v1235
      %v1237 = vpop.f32.mrb[0].mxu0
      %v1238 = vpop.f32.mrb[0].mxu0
      %v1239 = vadd.f32 0.0, %v1238
      %v1240 = vpop.f32.mrb[0].mxu0
      %1241 = vdwg.mxu0
      %1242 = vrot.lane.b32.xlu0 %v787, 96
      %v1243 = vpop.permute.xlu0 %1242
      %v1245 = vsel %vm802, %v787, 0
      %v1248 = vsel %vm802, %v1243, 0
      %1250 = vmatprep.subr.bf16.mxu0 0
      %1251 = vmatpush1.bf16.xpose.msra.mxu0 %v1248
      %1252 = vmatprep.subr.bf16.mxu0 0
      %1253 = vmatpush1.bf16.xpose.msra.mxu0 0
      %1254 = vmatprep.subr.bf16.mxu0 0
      %1255 = vmatpush1.bf16.xpose.msra.mxu0 0
      %1256 = vmatprep.subr.bf16.mxu0 0
      %1257 = vmatpush1.bf16.xpose.msra.mxu0 0
      %1258 = vmatprep.subr.bf16.mxu0 0
      %1259 = vmatpush1.bf16.xpose.msra.mxu0 0
      %1260 = vmatprep.subr.bf16.mxu0 0
      %1261 = vmatpush1.bf16.xpose.msra.mxu0 0
      %1262 = vmatprep.subr.bf16.mxu0 0
      %1263 = vmatpush1.bf16.xpose.msra.mxu0 0
      %1264 = vmatprep.subr.bf16.mxu0 0
      %1265 = vmatpush1.bf16.xpose.msra.mxu0 0
      %1266 = vmatprep.subr.bf16.mxu0 0
      %1267 = vmatpush1.bf16.xpose.msra.mxu0 0
      %1268 = vmatprep.subr.bf16.mxu0 0
      %1269 = vmatpush1.bf16.xpose.msra.mxu0 0
      %1270 = vmatprep.subr.bf16.mxu0 0
      %1271 = vmatpush1.bf16.xpose.msra.mxu0 0
      %1272 = vmatprep.subr.bf16.mxu0 0
      %1273 = vmatpush1.bf16.xpose.msra.mxu0 0
      %1274 = vmatprep.subr.bf16.mxu0 0
      %1275 = vmatpush1.bf16.xpose.msra.mxu0 0
      %1276 = vmatprep.subr.bf16.mxu0 0
      %1277 = vmatpush1.bf16.xpose.msra.mxu0 0
      %1278 = vmatprep.subr.bf16.mxu0 0
      %1279 = vmatpush1.bf16.xpose.msra.mxu0 0
      %1280 = vmatprep.subr.bf16.mxu0 0
      %1281 = vmatpush1.bf16.xpose.msra.mxu0 0
      %1282 = vmatprep.mubr.bf16.mxu0 0
      %1283 = vmatmul.mubr.bf16.gmra.mrb[0].mxu0 %v1245
      %v1284 = vpop.f32.mrb[0].mxu0
      %v1285 = vadd.f32 0.0, %v1284
      %v1286 = vpop.f32.mrb[0].mxu0
      %v1287 = vpop.f32.mrb[0].mxu0
      %v1288 = vadd.f32 0.0, %v1287
      %v1289 = vpop.f32.mrb[0].mxu0
      %1290 = vdwg.mxu0
      %1291 = vrot.lane.b32.xlu0 %v789, 96
      %v1292 = vpop.permute.xlu0 %1291
      %v1294 = vsel %vm802, %v789, 0
      %v1297 = vsel %vm802, %v1292, 0
      %1299 = vmatprep.subr.bf16.mxu0 0
      %1300 = vmatpush1.bf16.xpose.msra.mxu0 %v1297
      %1301 = vmatprep.subr.bf16.mxu0 0
      %1302 = vmatpush1.bf16.xpose.msra.mxu0 0
      %1303 = vmatprep.subr.bf16.mxu0 0
      %1304 = vmatpush1.bf16.xpose.msra.mxu0 0
      %1305 = vmatprep.subr.bf16.mxu0 0
      %1306 = vmatpush1.bf16.xpose.msra.mxu0 0
      %1307 = vmatprep.subr.bf16.mxu0 0
      %1308 = vmatpush1.bf16.xpose.msra.mxu0 0
      %1309 = vmatprep.subr.bf16.mxu0 0
      %1310 = vmatpush1.bf16.xpose.msra.mxu0 0
      %1311 = vmatprep.subr.bf16.mxu0 0
      %1312 = vmatpush1.bf16.xpose.msra.mxu0 0
      %1313 = vmatprep.subr.bf16.mxu0 0
      %1314 = vmatpush1.bf16.xpose.msra.mxu0 0
      %1315 = vmatprep.subr.bf16.mxu0 0
      %1316 = vmatpush1.bf16.xpose.msra.mxu0 0
      %1317 = vmatprep.subr.bf16.mxu0 0
      %1318 = vmatpush1.bf16.xpose.msra.mxu0 0
      %1319 = vmatprep.subr.bf16.mxu0 0
      %1320 = vmatpush1.bf16.xpose.msra.mxu0 0
      %1321 = vmatprep.subr.bf16.mxu0 0
      %1322 = vmatpush1.bf16.xpose.msra.mxu0 0
      %1323 = vmatprep.subr.bf16.mxu0 0
      %1324 = vmatpush1.bf16.xpose.msra.mxu0 0
      %1325 = vmatprep.subr.bf16.mxu0 0
      %1326 = vmatpush1.bf16.xpose.msra.mxu0 0
      %1327 = vmatprep.subr.bf16.mxu0 0
      %1328 = vmatpush1.bf16.xpose.msra.mxu0 0
      %1329 = vmatprep.subr.bf16.mxu0 0
      %1330 = vmatpush1.bf16.xpose.msra.mxu0 0
      %1331 = vmatprep.mubr.bf16.mxu0 0
      %1332 = vmatmul.mubr.bf16.gmra.mrb[0].mxu0 %v1294
      %v1333 = vpop.f32.mrb[0].mxu0
      %v1334 = vadd.f32 0.0, %v1333
      %v1335 = vpop.f32.mrb[0].mxu0
      %v1336 = vpop.f32.mrb[0].mxu0
      %v1337 = vadd.f32 0.0, %v1336
      %v1338 = vpop.f32.mrb[0].mxu0
      %1339 = vdwg.mxu0
      %1340 = vrot.lane.b32.xlu0 %v791, 96
      %v1341 = vpop.permute.xlu0 %1340
      %v1343 = vsel %vm802, %v791, 0
      %v1346 = vsel %vm802, %v1341, 0
      %1348 = vmatprep.subr.bf16.mxu0 0
      %1349 = vmatpush1.bf16.xpose.msra.mxu0 %v1346
      %1350 = vmatprep.subr.bf16.mxu0 0
      %1351 = vmatpush1.bf16.xpose.msra.mxu0 0
      %1352 = vmatprep.subr.bf16.mxu0 0
      %1353 = vmatpush1.bf16.xpose.msra.mxu0 0
      %1354 = vmatprep.subr.bf16.mxu0 0
      %1355 = vmatpush1.bf16.xpose.msra.mxu0 0
      %1356 = vmatprep.subr.bf16.mxu0 0
      %1357 = vmatpush1.bf16.xpose.msra.mxu0 0
      %1358 = vmatprep.subr.bf16.mxu0 0
      %1359 = vmatpush1.bf16.xpose.msra.mxu0 0
      %1360 = vmatprep.subr.bf16.mxu0 0
      %1361 = vmatpush1.bf16.xpose.msra.mxu0 0
      %1362 = vmatprep.subr.bf16.mxu0 0
      %1363 = vmatpush1.bf16.xpose.msra.mxu0 0
      %1364 = vmatprep.subr.bf16.mxu0 0
      %1365 = vmatpush1.bf16.xpose.msra.mxu0 0
      %1366 = vmatprep.subr.bf16.mxu0 0
      %1367 = vmatpush1.bf16.xpose.msra.mxu0 0
      %1368 = vmatprep.subr.bf16.mxu0 0
      %1369 = vmatpush1.bf16.xpose.msra.mxu0 0
      %1370 = vmatprep.subr.bf16.mxu0 0
      %1371 = vmatpush1.bf16.xpose.msra.mxu0 0
      %1372 = vmatprep.subr.bf16.mxu0 0
      %1373 = vmatpush1.bf16.xpose.msra.mxu0 0
      %1374 = vmatprep.subr.bf16.mxu0 0
      %1375 = vmatpush1.bf16.xpose.msra.mxu0 0
      %1376 = vmatprep.subr.bf16.mxu0 0
      %1377 = vmatpush1.bf16.xpose.msra.mxu0 0
      %1378 = vmatprep.subr.bf16.mxu0 0
      %1379 = vmatpush1.bf16.xpose.msra.mxu0 0
      %1380 = vmatprep.mubr.bf16.mxu0 0
      %1381 = vmatmul.mubr.bf16.gmra.mrb[0].mxu0 %v1343
      %v1382 = vpop.f32.mrb[0].mxu0
      %v1383 = vadd.f32 0.0, %v1382
      %v1384 = vpop.f32.mrb[0].mxu0
      %v1385 = vpop.f32.mrb[0].mxu0
      %v1386 = vadd.f32 0.0, %v1385
      %v1387 = vpop.f32.mrb[0].mxu0
      %1388 = vdwg.mxu0
      %1389 = vrot.lane.b32.xlu0 %v793, 96
      %v1390 = vpop.permute.xlu0 %1389
      %v1392 = vsel %vm802, %v793, 0
      %v1395 = vsel %vm802, %v1390, 0
      %1397 = vmatprep.subr.bf16.mxu0 0
      %1398 = vmatpush1.bf16.xpose.msra.mxu0 %v1395
      %1399 = vmatprep.subr.bf16.mxu0 0
      %1400 = vmatpush1.bf16.xpose.msra.mxu0 0
      %1401 = vmatprep.subr.bf16.mxu0 0
      %1402 = vmatpush1.bf16.xpose.msra.mxu0 0
      %1403 = vmatprep.subr.bf16.mxu0 0
      %1404 = vmatpush1.bf16.xpose.msra.mxu0 0
      %1405 = vmatprep.subr.bf16.mxu0 0
      %1406 = vmatpush1.bf16.xpose.msra.mxu0 0
      %1407 = vmatprep.subr.bf16.mxu0 0
      %1408 = vmatpush1.bf16.xpose.msra.mxu0 0
      %1409 = vmatprep.subr.bf16.mxu0 0
      %1410 = vmatpush1.bf16.xpose.msra.mxu0 0
      %1411 = vmatprep.subr.bf16.mxu0 0
      %1412 = vmatpush1.bf16.xpose.msra.mxu0 0
      %1413 = vmatprep.subr.bf16.mxu0 0
      %1414 = vmatpush1.bf16.xpose.msra.mxu0 0
      %1415 = vmatprep.subr.bf16.mxu0 0
      %1416 = vmatpush1.bf16.xpose.msra.mxu0 0
      %1417 = vmatprep.subr.bf16.mxu0 0
      %1418 = vmatpush1.bf16.xpose.msra.mxu0 0
      %1419 = vmatprep.subr.bf16.mxu0 0
      %1420 = vmatpush1.bf16.xpose.msra.mxu0 0
      %1421 = vmatprep.subr.bf16.mxu0 0
      %1422 = vmatpush1.bf16.xpose.msra.mxu0 0
      %1423 = vmatprep.subr.bf16.mxu0 0
      %1424 = vmatpush1.bf16.xpose.msra.mxu0 0
      %1425 = vmatprep.subr.bf16.mxu0 0
      %1426 = vmatpush1.bf16.xpose.msra.mxu0 0
      %1427 = vmatprep.subr.bf16.mxu0 0
      %1428 = vmatpush1.bf16.xpose.msra.mxu0 0
      %1429 = vmatprep.mubr.bf16.mxu0 0
      %1430 = vmatmul.mubr.bf16.gmra.mrb[0].mxu0 %v1392
      %v1431 = vpop.f32.mrb[0].mxu0
      %v1432 = vadd.f32 0.0, %v1431
      %v1433 = vpop.f32.mrb[0].mxu0
      %v1434 = vpop.f32.mrb[0].mxu0
      %v1435 = vadd.f32 0.0, %v1434
      %v1436 = vpop.f32.mrb[0].mxu0
      %1437 = vdwg.mxu0
      %1438 = vrot.lane.b32.xlu0 %v795, 96
      %v1439 = vpop.permute.xlu0 %1438
      %v1441 = vsel %vm802, %v795, 0
      %v1444 = vsel %vm802, %v1439, 0
      %1446 = vmatprep.subr.bf16.mxu0 0
      %1447 = vmatpush1.bf16.xpose.msra.mxu0 %v1444
      %1448 = vmatprep.subr.bf16.mxu0 0
      %1449 = vmatpush1.bf16.xpose.msra.mxu0 0
      %1450 = vmatprep.subr.bf16.mxu0 0
      %1451 = vmatpush1.bf16.xpose.msra.mxu0 0
      %1452 = vmatprep.subr.bf16.mxu0 0
      %1453 = vmatpush1.bf16.xpose.msra.mxu0 0
      %1454 = vmatprep.subr.bf16.mxu0 0
      %1455 = vmatpush1.bf16.xpose.msra.mxu0 0
      %1456 = vmatprep.subr.bf16.mxu0 0
      %1457 = vmatpush1.bf16.xpose.msra.mxu0 0
      %1458 = vmatprep.subr.bf16.mxu0 0
      %1459 = vmatpush1.bf16.xpose.msra.mxu0 0
      %1460 = vmatprep.subr.bf16.mxu0 0
      %1461 = vmatpush1.bf16.xpose.msra.mxu0 0
      %1462 = vmatprep.subr.bf16.mxu0 0
      %1463 = vmatpush1.bf16.xpose.msra.mxu0 0
      %1464 = vmatprep.subr.bf16.mxu0 0
      %1465 = vmatpush1.bf16.xpose.msra.mxu0 0
      %1466 = vmatprep.subr.bf16.mxu0 0
      %1467 = vmatpush1.bf16.xpose.msra.mxu0 0
      %1468 = vmatprep.subr.bf16.mxu0 0
      %1469 = vmatpush1.bf16.xpose.msra.mxu0 0
      %1470 = vmatprep.subr.bf16.mxu0 0
      %1471 = vmatpush1.bf16.xpose.msra.mxu0 0
      %1472 = vmatprep.subr.bf16.mxu0 0
      %1473 = vmatpush1.bf16.xpose.msra.mxu0 0
      %1474 = vmatprep.subr.bf16.mxu0 0
      %1475 = vmatpush1.bf16.xpose.msra.mxu0 0
      %1476 = vmatprep.subr.bf16.mxu0 0
      %1477 = vmatpush1.bf16.xpose.msra.mxu0 0
      %1478 = vmatprep.mubr.bf16.mxu0 0
      %1479 = vmatmul.mubr.bf16.gmra.mrb[0].mxu0 %v1441
      %v1480 = vpop.f32.mrb[0].mxu0
      %v1481 = vadd.f32 0.0, %v1480
      %v1482 = vpop.f32.mrb[0].mxu0
      %v1483 = vpop.f32.mrb[0].mxu0
      %v1484 = vadd.f32 0.0, %v1483
      %v1485 = vpop.f32.mrb[0].mxu0
      %1486 = vdwg.mxu0
      %1487 = vrot.lane.b32.xlu0 %v797, 96
      %v1488 = vpop.permute.xlu0 %1487
      %v1490 = vsel %vm802, %v797, 0
      %v1493 = vsel %vm802, %v1488, 0
      %1495 = vmatprep.subr.bf16.mxu0 0
      %1496 = vmatpush1.bf16.xpose.msra.mxu0 %v1493
      %1497 = vmatprep.subr.bf16.mxu0 0
      %1498 = vmatpush1.bf16.xpose.msra.mxu0 0
      %1499 = vmatprep.subr.bf16.mxu0 0
      %1500 = vmatpush1.bf16.xpose.msra.mxu0 0
      %1501 = vmatprep.subr.bf16.mxu0 0
      %1502 = vmatpush1.bf16.xpose.msra.mxu0 0
      %1503 = vmatprep.subr.bf16.mxu0 0
      %1504 = vmatpush1.bf16.xpose.msra.mxu0 0
      %1505 = vmatprep.subr.bf16.mxu0 0
      %1506 = vmatpush1.bf16.xpose.msra.mxu0 0
      %1507 = vmatprep.subr.bf16.mxu0 0
      %1508 = vmatpush1.bf16.xpose.msra.mxu0 0
      %1509 = vmatprep.subr.bf16.mxu0 0
      %1510 = vmatpush1.bf16.xpose.msra.mxu0 0
      %1511 = vmatprep.subr.bf16.mxu0 0
      %1512 = vmatpush1.bf16.xpose.msra.mxu0 0
      %1513 = vmatprep.subr.bf16.mxu0 0
      %1514 = vmatpush1.bf16.xpose.msra.mxu0 0
      %1515 = vmatprep.subr.bf16.mxu0 0
      %1516 = vmatpush1.bf16.xpose.msra.mxu0 0
      %1517 = vmatprep.subr.bf16.mxu0 0
      %1518 = vmatpush1.bf16.xpose.msra.mxu0 0
      %1519 = vmatprep.subr.bf16.mxu0 0
      %1520 = vmatpush1.bf16.xpose.msra.mxu0 0
      %1521 = vmatprep.subr.bf16.mxu0 0
      %1522 = vmatpush1.bf16.xpose.msra.mxu0 0
      %1523 = vmatprep.subr.bf16.mxu0 0
      %1524 = vmatpush1.bf16.xpose.msra.mxu0 0
      %1525 = vmatprep.subr.bf16.mxu0 0
      %1526 = vmatpush1.bf16.xpose.msra.mxu0 0
      %1527 = vmatprep.mubr.bf16.mxu0 0
      %1528 = vmatmul.mubr.bf16.gmra.mrb[0].mxu0 %v1490
      %v1529 = vpop.f32.mrb[0].mxu0
      %v1530 = vadd.f32 0.0, %v1529
      %v1531 = vpop.f32.mrb[0].mxu0
      %v1532 = vpop.f32.mrb[0].mxu0
      %v1533 = vadd.f32 0.0, %v1532
      %v1534 = vpop.f32.mrb[0].mxu0
      %1535 = vdwg.mxu0
      %1536 = vrot.lane.b32.xlu0 %v799, 96
      %v1537 = vpop.permute.xlu0 %1536
      %v1539 = vsel %vm802, %v799, 0
      %v1542 = vsel %vm802, %v1537, 0
      %1544 = vmatprep.subr.bf16.mxu0 0
      %1545 = vmatpush1.bf16.xpose.msra.mxu0 %v1542
      %1546 = vmatprep.subr.bf16.mxu0 0
      %1547 = vmatpush1.bf16.xpose.msra.mxu0 0
      %1548 = vmatprep.subr.bf16.mxu0 0
      %1549 = vmatpush1.bf16.xpose.msra.mxu0 0
      %1550 = vmatprep.subr.bf16.mxu0 0
      %1551 = vmatpush1.bf16.xpose.msra.mxu0 0
      %1552 = vmatprep.subr.bf16.mxu0 0
      %1553 = vmatpush1.bf16.xpose.msra.mxu0 0
      %1554 = vmatprep.subr.bf16.mxu0 0
      %1555 = vmatpush1.bf16.xpose.msra.mxu0 0
      %1556 = vmatprep.subr.bf16.mxu0 0
      %1557 = vmatpush1.bf16.xpose.msra.mxu0 0
      %1558 = vmatprep.subr.bf16.mxu0 0
      %1559 = vmatpush1.bf16.xpose.msra.mxu0 0
      %1560 = vmatprep.subr.bf16.mxu0 0
      %1561 = vmatpush1.bf16.xpose.msra.mxu0 0
      %1562 = vmatprep.subr.bf16.mxu0 0
      %1563 = vmatpush1.bf16.xpose.msra.mxu0 0
      %1564 = vmatprep.subr.bf16.mxu0 0
      %1565 = vmatpush1.bf16.xpose.msra.mxu0 0
      %1566 = vmatprep.subr.bf16.mxu0 0
      %1567 = vmatpush1.bf16.xpose.msra.mxu0 0
      %1568 = vmatprep.subr.bf16.mxu0 0
      %1569 = vmatpush1.bf16.xpose.msra.mxu0 0
      %1570 = vmatprep.subr.bf16.mxu0 0
      %1571 = vmatpush1.bf16.xpose.msra.mxu0 0
      %1572 = vmatprep.subr.bf16.mxu0 0
      %1573 = vmatpush1.bf16.xpose.msra.mxu0 0
      %1574 = vmatprep.subr.bf16.mxu0 0
      %1575 = vmatpush1.bf16.xpose.msra.mxu0 0
      %1576 = vmatprep.mubr.bf16.mxu0 0
      %1577 = vmatmul.mubr.bf16.gmra.mrb[0].mxu0 %v1539
      %v1578 = vpop.f32.mrb[0].mxu0
      %v1579 = vadd.f32 0.0, %v1578
      %v1580 = vpop.f32.mrb[0].mxu0
      %v1581 = vpop.f32.mrb[0].mxu0
      %v1582 = vadd.f32 0.0, %v1581
      %v1583 = vpop.f32.mrb[0].mxu0
      %1584 = vdwg.mxu0
      %v1585 = vadd.f32 %v844, %v515
      %v1586 = vadd.f32 %v847, %v516
      %v1587 = vadd.f32 %v893, %v515
      %v1588 = vadd.f32 %v896, %v516
      %v1589 = vadd.f32 %v942, %v515
      %v1590 = vadd.f32 %v945, %v516
      %v1591 = vadd.f32 %v991, %v515
      %v1592 = vadd.f32 %v994, %v516
      %v1593 = vadd.f32 %v1040, %v517
      %v1594 = vadd.f32 %v1043, %v518
      %v1595 = vadd.f32 %v1089, %v517
      %v1596 = vadd.f32 %v1092, %v518
      %v1597 = vadd.f32 %v1138, %v517
      %v1598 = vadd.f32 %v1141, %v518
      %v1599 = vadd.f32 %v1187, %v517
      %v1600 = vadd.f32 %v1190, %v518
      %v1601 = vadd.f32 %v1236, %v519
      %v1602 = vadd.f32 %v1239, %v520
      %v1603 = vadd.f32 %v1285, %v519
      %v1604 = vadd.f32 %v1288, %v520
      %v1605 = vadd.f32 %v1334, %v519
      %v1606 = vadd.f32 %v1337, %v520
      %v1607 = vadd.f32 %v1383, %v519
      %v1608 = vadd.f32 %v1386, %v520
      %v1609 = vadd.f32 %v1432, %v521
      %v1610 = vadd.f32 %v1435, %v522
      %v1611 = vadd.f32 %v1481, %v521
      %v1612 = vadd.f32 %v1484, %v522
      %v1613 = vadd.f32 %v1530, %v521
      %v1614 = vadd.f32 %v1533, %v522
      %v1615 = vadd.f32 %v1579, %v521
      %v1616 = vadd.f32 %v1582, %v522
      %v1617 = vld [vmem:[%s2] sm:$0xf]
      %v1618 = vld [vmem:[%s2 + $0x4] sm:$0xf]
      %v1619 = vld [vmem:[%s2 + $0x8] sm:$0xf]
      %v1620 = vld [vmem:[%s2 + $0xc] sm:$0xf]
      %v1621 = vld [vmem:[%s2 + $0x10] sm:$0xf]
      %v1622 = vld [vmem:[%s2 + $0x14] sm:$0xf]
      %v1623 = vld [vmem:[%s2 + $0x18] sm:$0xf]
      %v1624 = vld [vmem:[%s2 + $0x1c] sm:$0xf]
      %v1625 = vunpack.c.l.bf16 %v1617
      %v1626 = vunpack.c.l.bf16 %v1618
      %v1627 = vunpack.c.l.bf16 %v1619
      %v1628 = vunpack.c.l.bf16 %v1620
      %v1629 = vunpack.c.l.bf16 %v1621
      %v1630 = vunpack.c.l.bf16 %v1622
      %v1631 = vunpack.c.l.bf16 %v1623
      %v1632 = vunpack.c.l.bf16 %v1624
      %v1633 = vadd.f32 %v1585, %v1625
      %v1634 = vadd.f32 %v1586, %v1626
      %v1635 = vadd.f32 %v1587, %v1627
      %v1636 = vadd.f32 %v1588, %v1628
      %v1637 = vadd.f32 %v1589, %v1629
      %v1638 = vadd.f32 %v1590, %v1630
      %v1639 = vadd.f32 %v1591, %v1631
      %v1640 = vadd.f32 %v1592, %v1632
      %v1641 = vadd.f32 %v1593, %v1625
      %v1642 = vadd.f32 %v1594, %v1626
      %v1643 = vadd.f32 %v1595, %v1627
      %v1644 = vadd.f32 %v1596, %v1628
      %v1645 = vadd.f32 %v1597, %v1629
      %v1646 = vadd.f32 %v1598, %v1630
      %v1647 = vadd.f32 %v1599, %v1631
      %v1648 = vadd.f32 %v1600, %v1632
      %v1649 = vadd.f32 %v1601, %v1625
      %v1650 = vadd.f32 %v1602, %v1626
      %v1651 = vadd.f32 %v1603, %v1627
      %v1652 = vadd.f32 %v1604, %v1628
      %v1653 = vadd.f32 %v1605, %v1629
      %v1654 = vadd.f32 %v1606, %v1630
      %v1655 = vadd.f32 %v1607, %v1631
      %v1656 = vadd.f32 %v1608, %v1632
      %v1657 = vadd.f32 %v1609, %v1625
      %v1658 = vadd.f32 %v1610, %v1626
      %v1659 = vadd.f32 %v1611, %v1627
      %v1660 = vadd.f32 %v1612, %v1628
      %v1661 = vadd.f32 %v1613, %v1629
      %v1662 = vadd.f32 %v1614, %v1630
      %v1663 = vadd.f32 %v1615, %v1631
      %v1664 = vadd.f32 %v1616, %v1632
      %vm1665 = vcmask 130048
      %v1666 = vsel %vm1665, %v1633, -inf
      %1667 = vmax.xlane.f32.xlu0 %v1666
      %v1668 = vpop.xlane.xlu0 %1667
      %v1669 = vsel %vm1665, %v1634, -inf
      %1670 = vmax.xlane.f32.xlu0 %v1669
      %v1671 = vpop.xlane.xlu0 %1670
      %v1672 = vsel %vm1665, %v1635, -inf
      %1673 = vmax.xlane.f32.xlu0 %v1672
      %v1674 = vpop.xlane.xlu0 %1673
      %v1675 = vsel %vm1665, %v1636, -inf
      %1676 = vmax.xlane.f32.xlu0 %v1675
      %v1677 = vpop.xlane.xlu0 %1676
      %v1678 = vsel %vm1665, %v1637, -inf
      %1679 = vmax.xlane.f32.xlu0 %v1678
      %v1680 = vpop.xlane.xlu0 %1679
      %v1681 = vsel %vm1665, %v1638, -inf
      %1682 = vmax.xlane.f32.xlu0 %v1681
      %v1683 = vpop.xlane.xlu0 %1682
      %v1684 = vsel %vm1665, %v1639, -inf
      %1685 = vmax.xlane.f32.xlu0 %v1684
      %v1686 = vpop.xlane.xlu0 %1685
      %v1687 = vsel %vm1665, %v1640, -inf
      %1688 = vmax.xlane.f32.xlu0 %v1687
      %v1689 = vpop.xlane.xlu0 %1688
      %v1690 = vsel %vm1665, %v1641, -inf
      %1691 = vmax.xlane.f32.xlu0 %v1690
      %v1692 = vpop.xlane.xlu0 %1691
      %v1693 = vsel %vm1665, %v1642, -inf
      %1694 = vmax.xlane.f32.xlu0 %v1693
      %v1695 = vpop.xlane.xlu0 %1694
      %v1696 = vsel %vm1665, %v1643, -inf
      %1697 = vmax.xlane.f32.xlu0 %v1696
      %v1698 = vpop.xlane.xlu0 %1697
      %v1699 = vsel %vm1665, %v1644, -inf
      %1700 = vmax.xlane.f32.xlu0 %v1699
      %v1701 = vpop.xlane.xlu0 %1700
      %v1702 = vsel %vm1665, %v1645, -inf
      %1703 = vmax.xlane.f32.xlu0 %v1702
      %v1704 = vpop.xlane.xlu0 %1703
      %v1705 = vsel %vm1665, %v1646, -inf
      %1706 = vmax.xlane.f32.xlu0 %v1705
      %v1707 = vpop.xlane.xlu0 %1706
      %v1708 = vsel %vm1665, %v1647, -inf
      %1709 = vmax.xlane.f32.xlu0 %v1708
      %v1710 = vpop.xlane.xlu0 %1709
      %v1711 = vsel %vm1665, %v1648, -inf
      %1712 = vmax.xlane.f32.xlu0 %v1711
      %v1713 = vpop.xlane.xlu0 %1712
      %v1714 = vsel %vm1665, %v1649, -inf
      %1715 = vmax.xlane.f32.xlu0 %v1714
      %v1716 = vpop.xlane.xlu0 %1715
      %v1717 = vsel %vm1665, %v1650, -inf
      %1718 = vmax.xlane.f32.xlu0 %v1717
      %v1719 = vpop.xlane.xlu0 %1718
      %v1720 = vsel %vm1665, %v1651, -inf
      %1721 = vmax.xlane.f32.xlu0 %v1720
      %v1722 = vpop.xlane.xlu0 %1721
      %v1723 = vsel %vm1665, %v1652, -inf
      %1724 = vmax.xlane.f32.xlu0 %v1723
      %v1725 = vpop.xlane.xlu0 %1724
      %v1726 = vsel %vm1665, %v1653, -inf
      %1727 = vmax.xlane.f32.xlu0 %v1726
      %v1728 = vpop.xlane.xlu0 %1727
      %v1729 = vsel %vm1665, %v1654, -inf
      %1730 = vmax.xlane.f32.xlu0 %v1729
      %v1731 = vpop.xlane.xlu0 %1730
      %v1732 = vsel %vm1665, %v1655, -inf
      %1733 = vmax.xlane.f32.xlu0 %v1732
      %v1734 = vpop.xlane.xlu0 %1733
      %v1735 = vsel %vm1665, %v1656, -inf
      %1736 = vmax.xlane.f32.xlu0 %v1735
      %v1737 = vpop.xlane.xlu0 %1736
      %v1738 = vsel %vm1665, %v1657, -inf
      %1739 = vmax.xlane.f32.xlu0 %v1738
      %v1740 = vpop.xlane.xlu0 %1739
      %v1741 = vsel %vm1665, %v1658, -inf
      %1742 = vmax.xlane.f32.xlu0 %v1741
      %v1743 = vpop.xlane.xlu0 %1742
      %v1744 = vsel %vm1665, %v1659, -inf
      %1745 = vmax.xlane.f32.xlu0 %v1744
      %v1746 = vpop.xlane.xlu0 %1745
      %v1747 = vsel %vm1665, %v1660, -inf
      %1748 = vmax.xlane.f32.xlu0 %v1747
      %v1749 = vpop.xlane.xlu0 %1748
      %v1750 = vsel %vm1665, %v1661, -inf
      %1751 = vmax.xlane.f32.xlu0 %v1750
      %v1752 = vpop.xlane.xlu0 %1751
      %v1753 = vsel %vm1665, %v1662, -inf
      %1754 = vmax.xlane.f32.xlu0 %v1753
      %v1755 = vpop.xlane.xlu0 %1754
      %v1756 = vsel %vm1665, %v1663, -inf
      %1757 = vmax.xlane.f32.xlu0 %v1756
      %v1758 = vpop.xlane.xlu0 %1757
      %v1759 = vsel %vm1665, %v1664, -inf
      %1760 = vmax.xlane.f32.xlu0 %v1759
      %v1761 = vpop.xlane.xlu0 %1760
      %v1762 = vsub.f32 %v1633, %v1668
      %v1763 = vsub.f32 %v1634, %v1671
      %v1764 = vsub.f32 %v1635, %v1674
      %v1765 = vsub.f32 %v1636, %v1677
      %v1766 = vsub.f32 %v1637, %v1680
      %v1767 = vsub.f32 %v1638, %v1683
      %v1768 = vsub.f32 %v1639, %v1686
      %v1769 = vsub.f32 %v1640, %v1689
      %v1770 = vsub.f32 %v1641, %v1692
      %v1771 = vsub.f32 %v1642, %v1695
      %v1772 = vsub.f32 %v1643, %v1698
      %v1773 = vsub.f32 %v1644, %v1701
      %v1774 = vsub.f32 %v1645, %v1704
      %v1775 = vsub.f32 %v1646, %v1707
      %v1776 = vsub.f32 %v1647, %v1710
      %v1777 = vsub.f32 %v1648, %v1713
      %v1778 = vsub.f32 %v1649, %v1716
      %v1779 = vsub.f32 %v1650, %v1719
      %v1780 = vsub.f32 %v1651, %v1722
      %v1781 = vsub.f32 %v1652, %v1725
      %v1782 = vsub.f32 %v1653, %v1728
      %v1783 = vsub.f32 %v1654, %v1731
      %v1784 = vsub.f32 %v1655, %v1734
      %v1785 = vsub.f32 %v1656, %v1737
      %v1786 = vsub.f32 %v1657, %v1740
      %v1787 = vsub.f32 %v1658, %v1743
      %v1788 = vsub.f32 %v1659, %v1746
      %v1789 = vsub.f32 %v1660, %v1749
      %v1790 = vsub.f32 %v1661, %v1752
      %v1791 = vsub.f32 %v1662, %v1755
      %v1792 = vsub.f32 %v1663, %v1758
      %v1793 = vsub.f32 %v1664, %v1761
      %v1794 = vmul.f32 %v1762, 1.442695
      %v1795 = vpow.pop %v1794
      %v1796 = vmul.f32 %v1763, 1.442695
      %v1797 = vpow.pop %v1796
      %v1798 = vmul.f32 %v1764, 1.442695
      %v1799 = vpow.pop %v1798
      %v1800 = vmul.f32 %v1765, 1.442695
      %v1801 = vpow.pop %v1800
      %v1802 = vmul.f32 %v1766, 1.442695
      %v1803 = vpow.pop %v1802
      %v1804 = vmul.f32 %v1767, 1.442695
      %v1805 = vpow.pop %v1804
      %v1806 = vmul.f32 %v1768, 1.442695
      %v1807 = vpow.pop %v1806
      %v1808 = vmul.f32 %v1769, 1.442695
      %v1809 = vpow.pop %v1808
      %v1810 = vmul.f32 %v1770, 1.442695
      %v1811 = vpow.pop %v1810
      %v1812 = vmul.f32 %v1771, 1.442695
      %v1813 = vpow.pop %v1812
      %v1814 = vmul.f32 %v1772, 1.442695
      %v1815 = vpow.pop %v1814
      %v1816 = vmul.f32 %v1773, 1.442695
      %v1817 = vpow.pop %v1816
      %v1818 = vmul.f32 %v1774, 1.442695
      %v1819 = vpow.pop %v1818
      %v1820 = vmul.f32 %v1775, 1.442695
      %v1821 = vpow.pop %v1820
      %v1822 = vmul.f32 %v1776, 1.442695
      %v1823 = vpow.pop %v1822
      %v1824 = vmul.f32 %v1777, 1.442695
      %v1825 = vpow.pop %v1824
      %v1826 = vmul.f32 %v1778, 1.442695
      %v1827 = vpow.pop %v1826
      %v1828 = vmul.f32 %v1779, 1.442695
      %v1829 = vpow.pop %v1828
      %v1830 = vmul.f32 %v1780, 1.442695
      %v1831 = vpow.pop %v1830
      %v1832 = vmul.f32 %v1781, 1.442695
      %v1833 = vpow.pop %v1832
      %v1834 = vmul.f32 %v1782, 1.442695
      %v1835 = vpow.pop %v1834
      %v1836 = vmul.f32 %v1783, 1.442695
      %v1837 = vpow.pop %v1836
      %v1838 = vmul.f32 %v1784, 1.442695
      %v1839 = vpow.pop %v1838
      %v1840 = vmul.f32 %v1785, 1.442695
      %v1841 = vpow.pop %v1840
      %v1842 = vmul.f32 %v1786, 1.442695
      %v1843 = vpow.pop %v1842
      %v1844 = vmul.f32 %v1787, 1.442695
      %v1845 = vpow.pop %v1844
      %v1846 = vmul.f32 %v1788, 1.442695
      %v1847 = vpow.pop %v1846
      %v1848 = vmul.f32 %v1789, 1.442695
      %v1849 = vpow.pop %v1848
      %v1850 = vmul.f32 %v1790, 1.442695
      %v1851 = vpow.pop %v1850
      %v1852 = vmul.f32 %v1791, 1.442695
      %v1853 = vpow.pop %v1852
      %v1854 = vmul.f32 %v1792, 1.442695
      %v1855 = vpow.pop %v1854
      %v1856 = vmul.f32 %v1793, 1.442695
      %v1857 = vpow.pop %v1856
      %v1858 = vsel %vm1665, %v1795, 0.0
      %1859 = vadd.xlane.f32.xlu0 %v1858
      %v1860 = vpop.xlane.xlu0 %1859
      %v1861 = vsel %vm1665, %v1797, 0.0
      %1862 = vadd.xlane.f32.xlu0 %v1861
      %v1863 = vpop.xlane.xlu0 %1862
      %v1864 = vsel %vm1665, %v1799, 0.0
      %1865 = vadd.xlane.f32.xlu0 %v1864
      %v1866 = vpop.xlane.xlu0 %1865
      %v1867 = vsel %vm1665, %v1801, 0.0
      %1868 = vadd.xlane.f32.xlu0 %v1867
      %v1869 = vpop.xlane.xlu0 %1868
      %v1870 = vsel %vm1665, %v1803, 0.0
      %1871 = vadd.xlane.f32.xlu0 %v1870
      %v1872 = vpop.xlane.xlu0 %1871
      %v1873 = vsel %vm1665, %v1805, 0.0
      %1874 = vadd.xlane.f32.xlu0 %v1873
      %v1875 = vpop.xlane.xlu0 %1874
      %v1876 = vsel %vm1665, %v1807, 0.0
      %1877 = vadd.xlane.f32.xlu0 %v1876
      %v1878 = vpop.xlane.xlu0 %1877
      %v1879 = vsel %vm1665, %v1809, 0.0
      %1880 = vadd.xlane.f32.xlu0 %v1879
      %v1881 = vpop.xlane.xlu0 %1880
      %v1882 = vsel %vm1665, %v1811, 0.0
      %1883 = vadd.xlane.f32.xlu0 %v1882
      %v1884 = vpop.xlane.xlu0 %1883
      %v1885 = vsel %vm1665, %v1813, 0.0
      %1886 = vadd.xlane.f32.xlu0 %v1885
      %v1887 = vpop.xlane.xlu0 %1886
      %v1888 = vsel %vm1665, %v1815, 0.0
      %1889 = vadd.xlane.f32.xlu0 %v1888
      %v1890 = vpop.xlane.xlu0 %1889
      %v1891 = vsel %vm1665, %v1817, 0.0
      %1892 = vadd.xlane.f32.xlu0 %v1891
      %v1893 = vpop.xlane.xlu0 %1892
      %v1894 = vsel %vm1665, %v1819, 0.0
      %1895 = vadd.xlane.f32.xlu0 %v1894
      %v1896 = vpop.xlane.xlu0 %1895
      %v1897 = vsel %vm1665, %v1821, 0.0
      %1898 = vadd.xlane.f32.xlu0 %v1897
      %v1899 = vpop.xlane.xlu0 %1898
      %v1900 = vsel %vm1665, %v1823, 0.0
      %1901 = vadd.xlane.f32.xlu0 %v1900
      %v1902 = vpop.xlane.xlu0 %1901
      %v1903 = vsel %vm1665, %v1825, 0.0
      %1904 = vadd.xlane.f32.xlu0 %v1903
      %v1905 = vpop.xlane.xlu0 %1904
      %v1906 = vsel %vm1665, %v1827, 0.0
      %1907 = vadd.xlane.f32.xlu0 %v1906
      %v1908 = vpop.xlane.xlu0 %1907
      %v1909 = vsel %vm1665, %v1829, 0.0
      %1910 = vadd.xlane.f32.xlu0 %v1909
      %v1911 = vpop.xlane.xlu0 %1910
      %v1912 = vsel %vm1665, %v1831, 0.0
      %1913 = vadd.xlane.f32.xlu0 %v1912
      %v1914 = vpop.xlane.xlu0 %1913
      %v1915 = vsel %vm1665, %v1833, 0.0
      %1916 = vadd.xlane.f32.xlu0 %v1915
      %v1917 = vpop.xlane.xlu0 %1916
      %v1918 = vsel %vm1665, %v1835, 0.0
      %1919 = vadd.xlane.f32.xlu0 %v1918
      %v1920 = vpop.xlane.xlu0 %1919
      %v1921 = vsel %vm1665, %v1837, 0.0
      %1922 = vadd.xlane.f32.xlu0 %v1921
      %v1923 = vpop.xlane.xlu0 %1922
      %v1924 = vsel %vm1665, %v1839, 0.0
      %1925 = vadd.xlane.f32.xlu0 %v1924
      %v1926 = vpop.xlane.xlu0 %1925
      %v1927 = vsel %vm1665, %v1841, 0.0
      %1928 = vadd.xlane.f32.xlu0 %v1927
      %v1929 = vpop.xlane.xlu0 %1928
      %v1930 = vsel %vm1665, %v1843, 0.0
      %1931 = vadd.xlane.f32.xlu0 %v1930
      %v1932 = vpop.xlane.xlu0 %1931
      %v1933 = vsel %vm1665, %v1845, 0.0
      %1934 = vadd.xlane.f32.xlu0 %v1933
      %v1935 = vpop.xlane.xlu0 %1934
      %v1936 = vsel %vm1665, %v1847, 0.0
      %1937 = vadd.xlane.f32.xlu0 %v1936
      %v1938 = vpop.xlane.xlu0 %1937
      %v1939 = vsel %vm1665, %v1849, 0.0
      %1940 = vadd.xlane.f32.xlu0 %v1939
      %v1941 = vpop.xlane.xlu0 %1940
      %v1942 = vsel %vm1665, %v1851, 0.0
      %1943 = vadd.xlane.f32.xlu0 %v1942
      %v1944 = vpop.xlane.xlu0 %1943
      %v1945 = vsel %vm1665, %v1853, 0.0
      %1946 = vadd.xlane.f32.xlu0 %v1945
      %v1947 = vpop.xlane.xlu0 %1946
      %v1948 = vsel %vm1665, %v1855, 0.0
      %1949 = vadd.xlane.f32.xlu0 %v1948
      %v1950 = vpop.xlane.xlu0 %1949
      %v1951 = vsel %vm1665, %v1857, 0.0
      %1952 = vadd.xlane.f32.xlu0 %v1951
      %v1953 = vpop.xlane.xlu0 %1952
      %v1954 = vrcp.pop %v1860
      %v1955 = vrcp.pop %v1863
      %v1956 = vrcp.pop %v1866
      %v1957 = vrcp.pop %v1869
      %v1958 = vrcp.pop %v1872
      %v1959 = vrcp.pop %v1875
      %v1960 = vrcp.pop %v1878
      %v1961 = vrcp.pop %v1881
      %v1962 = vrcp.pop %v1884
      %v1963 = vrcp.pop %v1887
      %v1964 = vrcp.pop %v1890
      %v1965 = vrcp.pop %v1893
      %v1966 = vrcp.pop %v1896
      %v1967 = vrcp.pop %v1899
      %v1968 = vrcp.pop %v1902
      %v1969 = vrcp.pop %v1905
      %v1970 = vrcp.pop %v1908
      %v1971 = vrcp.pop %v1911
      %v1972 = vrcp.pop %v1914
      %v1973 = vrcp.pop %v1917
      %v1974 = vrcp.pop %v1920
      %v1975 = vrcp.pop %v1923
      %v1976 = vrcp.pop %v1926
      %v1977 = vrcp.pop %v1929
      %v1978 = vrcp.pop %v1932
      %v1979 = vrcp.pop %v1935
      %v1980 = vrcp.pop %v1938
      %v1981 = vrcp.pop %v1941
      %v1982 = vrcp.pop %v1944
      %v1983 = vrcp.pop %v1947
      %v1984 = vrcp.pop %v1950
      %v1985 = vrcp.pop %v1953
      %v1986 = vmul.f32 %v1795, %v1954
      %v1987 = vmul.f32 %v1797, %v1955
      %v1988 = vmul.f32 %v1799, %v1956
      %v1989 = vmul.f32 %v1801, %v1957
      %v1990 = vmul.f32 %v1803, %v1958
      %v1991 = vmul.f32 %v1805, %v1959
      %v1992 = vmul.f32 %v1807, %v1960
      %v1993 = vmul.f32 %v1809, %v1961
      %v1994 = vmul.f32 %v1811, %v1962
      %v1995 = vmul.f32 %v1813, %v1963
      %v1996 = vmul.f32 %v1815, %v1964
      %v1997 = vmul.f32 %v1817, %v1965
      %v1998 = vmul.f32 %v1819, %v1966
      %v1999 = vmul.f32 %v1821, %v1967
      %v2000 = vmul.f32 %v1823, %v1968
      %v2001 = vmul.f32 %v1825, %v1969
      %v2002 = vmul.f32 %v1827, %v1970
      %v2003 = vmul.f32 %v1829, %v1971
      %v2004 = vmul.f32 %v1831, %v1972
      %v2005 = vmul.f32 %v1833, %v1973
      %v2006 = vmul.f32 %v1835, %v1974
      %v2007 = vmul.f32 %v1837, %v1975
      %v2008 = vmul.f32 %v1839, %v1976
      %v2009 = vmul.f32 %v1841, %v1977
      %v2010 = vmul.f32 %v1843, %v1978
      %v2011 = vmul.f32 %v1845, %v1979
      %v2012 = vmul.f32 %v1847, %v1980
      %v2013 = vmul.f32 %v1849, %v1981
      %v2014 = vmul.f32 %v1851, %v1982
      %v2015 = vmul.f32 %v1853, %v1983
      %v2016 = vmul.f32 %v1855, %v1984
      %v2017 = vmul.f32 %v1857, %v1985
      %v2018 = vpack.c.bf16 %v1987, %v1986
      %v2019 = vpack.c.bf16 %v1989, %v1988
      %v2020 = vpack.c.bf16 %v1991, %v1990
      %v2021 = vpack.c.bf16 %v1993, %v1992
      %v2022 = vpack.c.bf16 %v1995, %v1994
      %v2023 = vpack.c.bf16 %v1997, %v1996
      %v2024 = vpack.c.bf16 %v1999, %v1998
      %v2025 = vpack.c.bf16 %v2001, %v2000
      %v2026 = vpack.c.bf16 %v2003, %v2002
      %v2027 = vpack.c.bf16 %v2005, %v2004
      %v2028 = vpack.c.bf16 %v2007, %v2006
      %v2029 = vpack.c.bf16 %v2009, %v2008
      %v2030 = vpack.c.bf16 %v2011, %v2010
      %v2031 = vpack.c.bf16 %v2013, %v2012
      %v2032 = vpack.c.bf16 %v2015, %v2014
      %v2033 = vpack.c.bf16 %v2017, %v2016
      %2034 = vrot.lane.b32.xlu0 %v768, 64
      %v2035 = vpop.permute.xlu0 %2034
      %v2038 = vsel %vm1665, %v2018, 0
      %2040 = vmatprep.subr.bf16.mxu0 0
      %2041 = vmatpush1.bf16.msra.mxu0 %v2035
      %2042 = vmatprep.subr.bf16.mxu0 0
      %2043 = vmatpush1.bf16.msra.mxu0 0
      %2044 = vmatprep.subr.bf16.mxu0 0
      %2045 = vmatpush1.bf16.msra.mxu0 0
      %2046 = vmatprep.subr.bf16.mxu0 0
      %2047 = vmatpush1.bf16.msra.mxu0 0
      %2048 = vmatprep.subr.bf16.mxu0 0
      %2049 = vmatpush1.bf16.msra.mxu0 0
      %2050 = vmatprep.subr.bf16.mxu0 0
      %2051 = vmatpush1.bf16.msra.mxu0 0
      %2052 = vmatprep.subr.bf16.mxu0 0
      %2053 = vmatpush1.bf16.msra.mxu0 0
      %2054 = vmatprep.subr.bf16.mxu0 0
      %2055 = vmatpush1.bf16.msra.mxu0 0
      %2056 = vmatprep.subr.bf16.mxu0 0
      %2057 = vmatpush1.bf16.msra.mxu0 0
      %2058 = vmatprep.subr.bf16.mxu0 0
      %2059 = vmatpush1.bf16.msra.mxu0 0
      %2060 = vmatprep.subr.bf16.mxu0 0
      %2061 = vmatpush1.bf16.msra.mxu0 0
      %2062 = vmatprep.subr.bf16.mxu0 0
      %2063 = vmatpush1.bf16.msra.mxu0 0
      %2064 = vmatprep.subr.bf16.mxu0 0
      %2065 = vmatpush1.bf16.msra.mxu0 0
      %2066 = vmatprep.subr.bf16.mxu0 0
      %2067 = vmatpush1.bf16.msra.mxu0 0
      %2068 = vmatprep.subr.bf16.mxu0 0
      %2069 = vmatpush1.bf16.msra.mxu0 0
      %2070 = vmatprep.subr.bf16.mxu0 0
      %2071 = vmatpush1.bf16.msra.mxu0 0
      %2072 = vmatprep.mubr.bf16.mxu0 0
      %2073 = vmatmul.mubr.bf16.gmra.mrb[0].mxu0 %v2038
      %v2074 = vpop.f32.mrb[0].mxu0
      %v2075 = vadd.f32 0.0, %v2074
      %v2076 = vpop.f32.mrb[0].mxu0
      %v2077 = vpop.f32.mrb[0].mxu0
      %v2078 = vadd.f32 0.0, %v2077
      %v2079 = vpop.f32.mrb[0].mxu0
      %2080 = vdwg.mxu0
      %2081 = vrot.lane.b32.xlu0 %v769, 64
      %v2082 = vpop.permute.xlu0 %2081
      %v2085 = vsel %vm1665, %v2019, 0
      %2087 = vmatprep.subr.bf16.mxu0 0
      %2088 = vmatpush1.bf16.msra.mxu0 %v2082
      %2089 = vmatprep.subr.bf16.mxu0 0
      %2090 = vmatpush1.bf16.msra.mxu0 0
      %2091 = vmatprep.subr.bf16.mxu0 0
      %2092 = vmatpush1.bf16.msra.mxu0 0
      %2093 = vmatprep.subr.bf16.mxu0 0
      %2094 = vmatpush1.bf16.msra.mxu0 0
      %2095 = vmatprep.subr.bf16.mxu0 0
      %2096 = vmatpush1.bf16.msra.mxu0 0
      %2097 = vmatprep.subr.bf16.mxu0 0
      %2098 = vmatpush1.bf16.msra.mxu0 0
      %2099 = vmatprep.subr.bf16.mxu0 0
      %2100 = vmatpush1.bf16.msra.mxu0 0
      %2101 = vmatprep.subr.bf16.mxu0 0
      %2102 = vmatpush1.bf16.msra.mxu0 0
      %2103 = vmatprep.subr.bf16.mxu0 0
      %2104 = vmatpush1.bf16.msra.mxu0 0
      %2105 = vmatprep.subr.bf16.mxu0 0
      %2106 = vmatpush1.bf16.msra.mxu0 0
      %2107 = vmatprep.subr.bf16.mxu0 0
      %2108 = vmatpush1.bf16.msra.mxu0 0
      %2109 = vmatprep.subr.bf16.mxu0 0
      %2110 = vmatpush1.bf16.msra.mxu0 0
      %2111 = vmatprep.subr.bf16.mxu0 0
      %2112 = vmatpush1.bf16.msra.mxu0 0
      %2113 = vmatprep.subr.bf16.mxu0 0
      %2114 = vmatpush1.bf16.msra.mxu0 0
      %2115 = vmatprep.subr.bf16.mxu0 0
      %2116 = vmatpush1.bf16.msra.mxu0 0
      %2117 = vmatprep.subr.bf16.mxu0 0
      %2118 = vmatpush1.bf16.msra.mxu0 0
      %2119 = vmatprep.mubr.bf16.mxu0 0
      %2120 = vmatmul.mubr.bf16.gmra.mrb[0].mxu0 %v2085
      %v2121 = vpop.f32.mrb[0].mxu0
      %v2122 = vadd.f32 0.0, %v2121
      %v2123 = vpop.f32.mrb[0].mxu0
      %v2124 = vpop.f32.mrb[0].mxu0
      %v2125 = vadd.f32 0.0, %v2124
      %v2126 = vpop.f32.mrb[0].mxu0
      %2127 = vdwg.mxu0
      %2128 = vrot.lane.b32.xlu0 %v770, 64
      %v2129 = vpop.permute.xlu0 %2128
      %v2132 = vsel %vm1665, %v2020, 0
      %2134 = vmatprep.subr.bf16.mxu0 0
      %2135 = vmatpush1.bf16.msra.mxu0 %v2129
      %2136 = vmatprep.subr.bf16.mxu0 0
      %2137 = vmatpush1.bf16.msra.mxu0 0
      %2138 = vmatprep.subr.bf16.mxu0 0
      %2139 = vmatpush1.bf16.msra.mxu0 0
      %2140 = vmatprep.subr.bf16.mxu0 0
      %2141 = vmatpush1.bf16.msra.mxu0 0
      %2142 = vmatprep.subr.bf16.mxu0 0
      %2143 = vmatpush1.bf16.msra.mxu0 0
      %2144 = vmatprep.subr.bf16.mxu0 0
      %2145 = vmatpush1.bf16.msra.mxu0 0
      %2146 = vmatprep.subr.bf16.mxu0 0
      %2147 = vmatpush1.bf16.msra.mxu0 0
      %2148 = vmatprep.subr.bf16.mxu0 0
      %2149 = vmatpush1.bf16.msra.mxu0 0
      %2150 = vmatprep.subr.bf16.mxu0 0
      %2151 = vmatpush1.bf16.msra.mxu0 0
      %2152 = vmatprep.subr.bf16.mxu0 0
      %2153 = vmatpush1.bf16.msra.mxu0 0
      %2154 = vmatprep.subr.bf16.mxu0 0
      %2155 = vmatpush1.bf16.msra.mxu0 0
      %2156 = vmatprep.subr.bf16.mxu0 0
      %2157 = vmatpush1.bf16.msra.mxu0 0
      %2158 = vmatprep.subr.bf16.mxu0 0
      %2159 = vmatpush1.bf16.msra.mxu0 0
      %2160 = vmatprep.subr.bf16.mxu0 0
      %2161 = vmatpush1.bf16.msra.mxu0 0
      %2162 = vmatprep.subr.bf16.mxu0 0
      %2163 = vmatpush1.bf16.msra.mxu0 0
      %2164 = vmatprep.subr.bf16.mxu0 0
      %2165 = vmatpush1.bf16.msra.mxu0 0
      %2166 = vmatprep.mubr.bf16.mxu0 0
      %2167 = vmatmul.mubr.bf16.gmra.mrb[0].mxu0 %v2132
      %v2168 = vpop.f32.mrb[0].mxu0
      %v2169 = vadd.f32 0.0, %v2168
      %v2170 = vpop.f32.mrb[0].mxu0
      %v2171 = vpop.f32.mrb[0].mxu0
      %v2172 = vadd.f32 0.0, %v2171
      %v2173 = vpop.f32.mrb[0].mxu0
      %2174 = vdwg.mxu0
      %2175 = vrot.lane.b32.xlu0 %v771, 64
      %v2176 = vpop.permute.xlu0 %2175
      %v2179 = vsel %vm1665, %v2021, 0
      %2181 = vmatprep.subr.bf16.mxu0 0
      %2182 = vmatpush1.bf16.msra.mxu0 %v2176
      %2183 = vmatprep.subr.bf16.mxu0 0
      %2184 = vmatpush1.bf16.msra.mxu0 0
      %2185 = vmatprep.subr.bf16.mxu0 0
      %2186 = vmatpush1.bf16.msra.mxu0 0
      %2187 = vmatprep.subr.bf16.mxu0 0
      %2188 = vmatpush1.bf16.msra.mxu0 0
      %2189 = vmatprep.subr.bf16.mxu0 0
      %2190 = vmatpush1.bf16.msra.mxu0 0
      %2191 = vmatprep.subr.bf16.mxu0 0
      %2192 = vmatpush1.bf16.msra.mxu0 0
      %2193 = vmatprep.subr.bf16.mxu0 0
      %2194 = vmatpush1.bf16.msra.mxu0 0
      %2195 = vmatprep.subr.bf16.mxu0 0
      %2196 = vmatpush1.bf16.msra.mxu0 0
      %2197 = vmatprep.subr.bf16.mxu0 0
      %2198 = vmatpush1.bf16.msra.mxu0 0
      %2199 = vmatprep.subr.bf16.mxu0 0
      %2200 = vmatpush1.bf16.msra.mxu0 0
      %2201 = vmatprep.subr.bf16.mxu0 0
      %2202 = vmatpush1.bf16.msra.mxu0 0
      %2203 = vmatprep.subr.bf16.mxu0 0
      %2204 = vmatpush1.bf16.msra.mxu0 0
      %2205 = vmatprep.subr.bf16.mxu0 0
      %2206 = vmatpush1.bf16.msra.mxu0 0
      %2207 = vmatprep.subr.bf16.mxu0 0
      %2208 = vmatpush1.bf16.msra.mxu0 0
      %2209 = vmatprep.subr.bf16.mxu0 0
      %2210 = vmatpush1.bf16.msra.mxu0 0
      %2211 = vmatprep.subr.bf16.mxu0 0
      %2212 = vmatpush1.bf16.msra.mxu0 0
      %2213 = vmatprep.mubr.bf16.mxu0 0
      %2214 = vmatmul.mubr.bf16.gmra.mrb[0].mxu0 %v2179
      %v2215 = vpop.f32.mrb[0].mxu0
      %v2216 = vadd.f32 0.0, %v2215
      %v2217 = vpop.f32.mrb[0].mxu0
      %v2218 = vpop.f32.mrb[0].mxu0
      %v2219 = vadd.f32 0.0, %v2218
      %v2220 = vpop.f32.mrb[0].mxu0
      %2221 = vdwg.mxu0
      %2222 = vrot.lane.b32.xlu0 %v777, 64
      %v2223 = vpop.permute.xlu0 %2222
      %v2226 = vsel %vm1665, %v2022, 0
      %2228 = vmatprep.subr.bf16.mxu0 0
      %2229 = vmatpush1.bf16.msra.mxu0 %v2223
      %2230 = vmatprep.subr.bf16.mxu0 0
      %2231 = vmatpush1.bf16.msra.mxu0 0
      %2232 = vmatprep.subr.bf16.mxu0 0
      %2233 = vmatpush1.bf16.msra.mxu0 0
      %2234 = vmatprep.subr.bf16.mxu0 0
      %2235 = vmatpush1.bf16.msra.mxu0 0
      %2236 = vmatprep.subr.bf16.mxu0 0
      %2237 = vmatpush1.bf16.msra.mxu0 0
      %2238 = vmatprep.subr.bf16.mxu0 0
      %2239 = vmatpush1.bf16.msra.mxu0 0
      %2240 = vmatprep.subr.bf16.mxu0 0
      %2241 = vmatpush1.bf16.msra.mxu0 0
      %2242 = vmatprep.subr.bf16.mxu0 0
      %2243 = vmatpush1.bf16.msra.mxu0 0
      %2244 = vmatprep.subr.bf16.mxu0 0
      %2245 = vmatpush1.bf16.msra.mxu0 0
      %2246 = vmatprep.subr.bf16.mxu0 0
      %2247 = vmatpush1.bf16.msra.mxu0 0
      %2248 = vmatprep.subr.bf16.mxu0 0
      %2249 = vmatpush1.bf16.msra.mxu0 0
      %2250 = vmatprep.subr.bf16.mxu0 0
      %2251 = vmatpush1.bf16.msra.mxu0 0
      %2252 = vmatprep.subr.bf16.mxu0 0
      %2253 = vmatpush1.bf16.msra.mxu0 0
      %2254 = vmatprep.subr.bf16.mxu0 0
      %2255 = vmatpush1.bf16.msra.mxu0 0
      %2256 = vmatprep.subr.bf16.mxu0 0
      %2257 = vmatpush1.bf16.msra.mxu0 0
      %2258 = vmatprep.subr.bf16.mxu0 0
      %2259 = vmatpush1.bf16.msra.mxu0 0
      %2260 = vmatprep.mubr.bf16.mxu0 0
      %2261 = vmatmul.mubr.bf16.gmra.mrb[0].mxu0 %v2226
      %v2262 = vpop.f32.mrb[0].mxu0
      %v2263 = vadd.f32 0.0, %v2262
      %v2264 = vpop.f32.mrb[0].mxu0
      %v2265 = vpop.f32.mrb[0].mxu0
      %v2266 = vadd.f32 0.0, %v2265
      %v2267 = vpop.f32.mrb[0].mxu0
      %2268 = vdwg.mxu0
      %2269 = vrot.lane.b32.xlu0 %v779, 64
      %v2270 = vpop.permute.xlu0 %2269
      %v2273 = vsel %vm1665, %v2023, 0
      %2275 = vmatprep.subr.bf16.mxu0 0
      %2276 = vmatpush1.bf16.msra.mxu0 %v2270
      %2277 = vmatprep.subr.bf16.mxu0 0
      %2278 = vmatpush1.bf16.msra.mxu0 0
      %2279 = vmatprep.subr.bf16.mxu0 0
      %2280 = vmatpush1.bf16.msra.mxu0 0
      %2281 = vmatprep.subr.bf16.mxu0 0
      %2282 = vmatpush1.bf16.msra.mxu0 0
      %2283 = vmatprep.subr.bf16.mxu0 0
      %2284 = vmatpush1.bf16.msra.mxu0 0
      %2285 = vmatprep.subr.bf16.mxu0 0
      %2286 = vmatpush1.bf16.msra.mxu0 0
      %2287 = vmatprep.subr.bf16.mxu0 0
      %2288 = vmatpush1.bf16.msra.mxu0 0
      %2289 = vmatprep.subr.bf16.mxu0 0
      %2290 = vmatpush1.bf16.msra.mxu0 0
      %2291 = vmatprep.subr.bf16.mxu0 0
      %2292 = vmatpush1.bf16.msra.mxu0 0
      %2293 = vmatprep.subr.bf16.mxu0 0
      %2294 = vmatpush1.bf16.msra.mxu0 0
      %2295 = vmatprep.subr.bf16.mxu0 0
      %2296 = vmatpush1.bf16.msra.mxu0 0
      %2297 = vmatprep.subr.bf16.mxu0 0
      %2298 = vmatpush1.bf16.msra.mxu0 0
      %2299 = vmatprep.subr.bf16.mxu0 0
      %2300 = vmatpush1.bf16.msra.mxu0 0
      %2301 = vmatprep.subr.bf16.mxu0 0
      %2302 = vmatpush1.bf16.msra.mxu0 0
      %2303 = vmatprep.subr.bf16.mxu0 0
      %2304 = vmatpush1.bf16.msra.mxu0 0
      %2305 = vmatprep.subr.bf16.mxu0 0
      %2306 = vmatpush1.bf16.msra.mxu0 0
      %2307 = vmatprep.mubr.bf16.mxu0 0
      %2308 = vmatmul.mubr.bf16.gmra.mrb[0].mxu0 %v2273
      %v2309 = vpop.f32.mrb[0].mxu0
      %v2310 = vadd.f32 0.0, %v2309
      %v2311 = vpop.f32.mrb[0].mxu0
      %v2312 = vpop.f32.mrb[0].mxu0
      %v2313 = vadd.f32 0.0, %v2312
      %v2314 = vpop.f32.mrb[0].mxu0
      %2315 = vdwg.mxu0
      %2316 = vrot.lane.b32.xlu0 %v781, 64
      %v2317 = vpop.permute.xlu0 %2316
      %v2320 = vsel %vm1665, %v2024, 0
      %2322 = vmatprep.subr.bf16.mxu0 0
      %2323 = vmatpush1.bf16.msra.mxu0 %v2317
      %2324 = vmatprep.subr.bf16.mxu0 0
      %2325 = vmatpush1.bf16.msra.mxu0 0
      %2326 = vmatprep.subr.bf16.mxu0 0
      %2327 = vmatpush1.bf16.msra.mxu0 0
      %2328 = vmatprep.subr.bf16.mxu0 0
      %2329 = vmatpush1.bf16.msra.mxu0 0
      %2330 = vmatprep.subr.bf16.mxu0 0
      %2331 = vmatpush1.bf16.msra.mxu0 0
      %2332 = vmatprep.subr.bf16.mxu0 0
      %2333 = vmatpush1.bf16.msra.mxu0 0
      %2334 = vmatprep.subr.bf16.mxu0 0
      %2335 = vmatpush1.bf16.msra.mxu0 0
      %2336 = vmatprep.subr.bf16.mxu0 0
      %2337 = vmatpush1.bf16.msra.mxu0 0
      %2338 = vmatprep.subr.bf16.mxu0 0
      %2339 = vmatpush1.bf16.msra.mxu0 0
      %2340 = vmatprep.subr.bf16.mxu0 0
      %2341 = vmatpush1.bf16.msra.mxu0 0
      %2342 = vmatprep.subr.bf16.mxu0 0
      %2343 = vmatpush1.bf16.msra.mxu0 0
      %2344 = vmatprep.subr.bf16.mxu0 0
      %2345 = vmatpush1.bf16.msra.mxu0 0
      %2346 = vmatprep.subr.bf16.mxu0 0
      %2347 = vmatpush1.bf16.msra.mxu0 0
      %2348 = vmatprep.subr.bf16.mxu0 0
      %2349 = vmatpush1.bf16.msra.mxu0 0
      %2350 = vmatprep.subr.bf16.mxu0 0
      %2351 = vmatpush1.bf16.msra.mxu0 0
      %2352 = vmatprep.subr.bf16.mxu0 0
      %2353 = vmatpush1.bf16.msra.mxu0 0
      %2354 = vmatprep.mubr.bf16.mxu0 0
      %2355 = vmatmul.mubr.bf16.gmra.mrb[0].mxu0 %v2320
      %v2356 = vpop.f32.mrb[0].mxu0
      %v2357 = vadd.f32 0.0, %v2356
      %v2358 = vpop.f32.mrb[0].mxu0
      %v2359 = vpop.f32.mrb[0].mxu0
      %v2360 = vadd.f32 0.0, %v2359
      %v2361 = vpop.f32.mrb[0].mxu0
      %2362 = vdwg.mxu0
      %2363 = vrot.lane.b32.xlu0 %v783, 64
      %v2364 = vpop.permute.xlu0 %2363
      %v2367 = vsel %vm1665, %v2025, 0
      %2369 = vmatprep.subr.bf16.mxu0 0
      %2370 = vmatpush1.bf16.msra.mxu0 %v2364
      %2371 = vmatprep.subr.bf16.mxu0 0
      %2372 = vmatpush1.bf16.msra.mxu0 0
      %2373 = vmatprep.subr.bf16.mxu0 0
      %2374 = vmatpush1.bf16.msra.mxu0 0
      %2375 = vmatprep.subr.bf16.mxu0 0
      %2376 = vmatpush1.bf16.msra.mxu0 0
      %2377 = vmatprep.subr.bf16.mxu0 0
      %2378 = vmatpush1.bf16.msra.mxu0 0
      %2379 = vmatprep.subr.bf16.mxu0 0
      %2380 = vmatpush1.bf16.msra.mxu0 0
      %2381 = vmatprep.subr.bf16.mxu0 0
      %2382 = vmatpush1.bf16.msra.mxu0 0
      %2383 = vmatprep.subr.bf16.mxu0 0
      %2384 = vmatpush1.bf16.msra.mxu0 0
      %2385 = vmatprep.subr.bf16.mxu0 0
      %2386 = vmatpush1.bf16.msra.mxu0 0
      %2387 = vmatprep.subr.bf16.mxu0 0
      %2388 = vmatpush1.bf16.msra.mxu0 0
      %2389 = vmatprep.subr.bf16.mxu0 0
      %2390 = vmatpush1.bf16.msra.mxu0 0
      %2391 = vmatprep.subr.bf16.mxu0 0
      %2392 = vmatpush1.bf16.msra.mxu0 0
      %2393 = vmatprep.subr.bf16.mxu0 0
      %2394 = vmatpush1.bf16.msra.mxu0 0
      %2395 = vmatprep.subr.bf16.mxu0 0
      %2396 = vmatpush1.bf16.msra.mxu0 0
      %2397 = vmatprep.subr.bf16.mxu0 0
      %2398 = vmatpush1.bf16.msra.mxu0 0
      %2399 = vmatprep.subr.bf16.mxu0 0
      %2400 = vmatpush1.bf16.msra.mxu0 0
      %2401 = vmatprep.mubr.bf16.mxu0 0
      %2402 = vmatmul.mubr.bf16.gmra.mrb[0].mxu0 %v2367
      %v2403 = vpop.f32.mrb[0].mxu0
      %v2404 = vadd.f32 0.0, %v2403
      %v2405 = vpop.f32.mrb[0].mxu0
      %v2406 = vpop.f32.mrb[0].mxu0
      %v2407 = vadd.f32 0.0, %v2406
      %v2408 = vpop.f32.mrb[0].mxu0
      %2409 = vdwg.mxu0
      %2410 = vrot.lane.b32.xlu0 %v785, 64
      %v2411 = vpop.permute.xlu0 %2410
      %v2414 = vsel %vm1665, %v2026, 0
      %2416 = vmatprep.subr.bf16.mxu0 0
      %2417 = vmatpush1.bf16.msra.mxu0 %v2411
      %2418 = vmatprep.subr.bf16.mxu0 0
      %2419 = vmatpush1.bf16.msra.mxu0 0
      %2420 = vmatprep.subr.bf16.mxu0 0
      %2421 = vmatpush1.bf16.msra.mxu0 0
      %2422 = vmatprep.subr.bf16.mxu0 0
      %2423 = vmatpush1.bf16.msra.mxu0 0
      %2424 = vmatprep.subr.bf16.mxu0 0
      %2425 = vmatpush1.bf16.msra.mxu0 0
      %2426 = vmatprep.subr.bf16.mxu0 0
      %2427 = vmatpush1.bf16.msra.mxu0 0
      %2428 = vmatprep.subr.bf16.mxu0 0
      %2429 = vmatpush1.bf16.msra.mxu0 0
      %2430 = vmatprep.subr.bf16.mxu0 0
      %2431 = vmatpush1.bf16.msra.mxu0 0
      %2432 = vmatprep.subr.bf16.mxu0 0
      %2433 = vmatpush1.bf16.msra.mxu0 0
      %2434 = vmatprep.subr.bf16.mxu0 0
      %2435 = vmatpush1.bf16.msra.mxu0 0
      %2436 = vmatprep.subr.bf16.mxu0 0
      %2437 = vmatpush1.bf16.msra.mxu0 0
      %2438 = vmatprep.subr.bf16.mxu0 0
      %2439 = vmatpush1.bf16.msra.mxu0 0
      %2440 = vmatprep.subr.bf16.mxu0 0
      %2441 = vmatpush1.bf16.msra.mxu0 0
      %2442 = vmatprep.subr.bf16.mxu0 0
      %2443 = vmatpush1.bf16.msra.mxu0 0
      %2444 = vmatprep.subr.bf16.mxu0 0
      %2445 = vmatpush1.bf16.msra.mxu0 0
      %2446 = vmatprep.subr.bf16.mxu0 0
      %2447 = vmatpush1.bf16.msra.mxu0 0
      %2448 = vmatprep.mubr.bf16.mxu0 0
      %2449 = vmatmul.mubr.bf16.gmra.mrb[0].mxu0 %v2414
      %v2450 = vpop.f32.mrb[0].mxu0
      %v2451 = vadd.f32 0.0, %v2450
      %v2452 = vpop.f32.mrb[0].mxu0
      %v2453 = vpop.f32.mrb[0].mxu0
      %v2454 = vadd.f32 0.0, %v2453
      %v2455 = vpop.f32.mrb[0].mxu0
      %2456 = vdwg.mxu0
      %2457 = vrot.lane.b32.xlu0 %v787, 64
      %v2458 = vpop.permute.xlu0 %2457
      %v2461 = vsel %vm1665, %v2027, 0
      %2463 = vmatprep.subr.bf16.mxu0 0
      %2464 = vmatpush1.bf16.msra.mxu0 %v2458
      %2465 = vmatprep.subr.bf16.mxu0 0
      %2466 = vmatpush1.bf16.msra.mxu0 0
      %2467 = vmatprep.subr.bf16.mxu0 0
      %2468 = vmatpush1.bf16.msra.mxu0 0
      %2469 = vmatprep.subr.bf16.mxu0 0
      %2470 = vmatpush1.bf16.msra.mxu0 0
      %2471 = vmatprep.subr.bf16.mxu0 0
      %2472 = vmatpush1.bf16.msra.mxu0 0
      %2473 = vmatprep.subr.bf16.mxu0 0
      %2474 = vmatpush1.bf16.msra.mxu0 0
      %2475 = vmatprep.subr.bf16.mxu0 0
      %2476 = vmatpush1.bf16.msra.mxu0 0
      %2477 = vmatprep.subr.bf16.mxu0 0
      %2478 = vmatpush1.bf16.msra.mxu0 0
      %2479 = vmatprep.subr.bf16.mxu0 0
      %2480 = vmatpush1.bf16.msra.mxu0 0
      %2481 = vmatprep.subr.bf16.mxu0 0
      %2482 = vmatpush1.bf16.msra.mxu0 0
      %2483 = vmatprep.subr.bf16.mxu0 0
      %2484 = vmatpush1.bf16.msra.mxu0 0
      %2485 = vmatprep.subr.bf16.mxu0 0
      %2486 = vmatpush1.bf16.msra.mxu0 0
      %2487 = vmatprep.subr.bf16.mxu0 0
      %2488 = vmatpush1.bf16.msra.mxu0 0
      %2489 = vmatprep.subr.bf16.mxu0 0
      %2490 = vmatpush1.bf16.msra.mxu0 0
      %2491 = vmatprep.subr.bf16.mxu0 0
      %2492 = vmatpush1.bf16.msra.mxu0 0
      %2493 = vmatprep.subr.bf16.mxu0 0
      %2494 = vmatpush1.bf16.msra.mxu0 0
      %2495 = vmatprep.mubr.bf16.mxu0 0
      %2496 = vmatmul.mubr.bf16.gmra.mrb[0].mxu0 %v2461
      %v2497 = vpop.f32.mrb[0].mxu0
      %v2498 = vadd.f32 0.0, %v2497
      %v2499 = vpop.f32.mrb[0].mxu0
      %v2500 = vpop.f32.mrb[0].mxu0
      %v2501 = vadd.f32 0.0, %v2500
      %v2502 = vpop.f32.mrb[0].mxu0
      %2503 = vdwg.mxu0
      %2504 = vrot.lane.b32.xlu0 %v789, 64
      %v2505 = vpop.permute.xlu0 %2504
      %v2508 = vsel %vm1665, %v2028, 0
      %2510 = vmatprep.subr.bf16.mxu0 0
      %2511 = vmatpush1.bf16.msra.mxu0 %v2505
      %2512 = vmatprep.subr.bf16.mxu0 0
      %2513 = vmatpush1.bf16.msra.mxu0 0
      %2514 = vmatprep.subr.bf16.mxu0 0
      %2515 = vmatpush1.bf16.msra.mxu0 0
      %2516 = vmatprep.subr.bf16.mxu0 0
      %2517 = vmatpush1.bf16.msra.mxu0 0
      %2518 = vmatprep.subr.bf16.mxu0 0
      %2519 = vmatpush1.bf16.msra.mxu0 0
      %2520 = vmatprep.subr.bf16.mxu0 0
      %2521 = vmatpush1.bf16.msra.mxu0 0
      %2522 = vmatprep.subr.bf16.mxu0 0
      %2523 = vmatpush1.bf16.msra.mxu0 0
      %2524 = vmatprep.subr.bf16.mxu0 0
      %2525 = vmatpush1.bf16.msra.mxu0 0
      %2526 = vmatprep.subr.bf16.mxu0 0
      %2527 = vmatpush1.bf16.msra.mxu0 0
      %2528 = vmatprep.subr.bf16.mxu0 0
      %2529 = vmatpush1.bf16.msra.mxu0 0
      %2530 = vmatprep.subr.bf16.mxu0 0
      %2531 = vmatpush1.bf16.msra.mxu0 0
      %2532 = vmatprep.subr.bf16.mxu0 0
      %2533 = vmatpush1.bf16.msra.mxu0 0
      %2534 = vmatprep.subr.bf16.mxu0 0
      %2535 = vmatpush1.bf16.msra.mxu0 0
      %2536 = vmatprep.subr.bf16.mxu0 0
      %2537 = vmatpush1.bf16.msra.mxu0 0
      %2538 = vmatprep.subr.bf16.mxu0 0
      %2539 = vmatpush1.bf16.msra.mxu0 0
      %2540 = vmatprep.subr.bf16.mxu0 0
      %2541 = vmatpush1.bf16.msra.mxu0 0
      %2542 = vmatprep.mubr.bf16.mxu0 0
      %2543 = vmatmul.mubr.bf16.gmra.mrb[0].mxu0 %v2508
      %v2544 = vpop.f32.mrb[0].mxu0
      %v2545 = vadd.f32 0.0, %v2544
      %v2546 = vpop.f32.mrb[0].mxu0
      %v2547 = vpop.f32.mrb[0].mxu0
      %v2548 = vadd.f32 0.0, %v2547
      %v2549 = vpop.f32.mrb[0].mxu0
      %2550 = vdwg.mxu0
      %2551 = vrot.lane.b32.xlu0 %v791, 64
      %v2552 = vpop.permute.xlu0 %2551
      %v2555 = vsel %vm1665, %v2029, 0
      %2557 = vmatprep.subr.bf16.mxu0 0
      %2558 = vmatpush1.bf16.msra.mxu0 %v2552
      %2559 = vmatprep.subr.bf16.mxu0 0
      %2560 = vmatpush1.bf16.msra.mxu0 0
      %2561 = vmatprep.subr.bf16.mxu0 0
      %2562 = vmatpush1.bf16.msra.mxu0 0
      %2563 = vmatprep.subr.bf16.mxu0 0
      %2564 = vmatpush1.bf16.msra.mxu0 0
      %2565 = vmatprep.subr.bf16.mxu0 0
      %2566 = vmatpush1.bf16.msra.mxu0 0
      %2567 = vmatprep.subr.bf16.mxu0 0
      %2568 = vmatpush1.bf16.msra.mxu0 0
      %2569 = vmatprep.subr.bf16.mxu0 0
      %2570 = vmatpush1.bf16.msra.mxu0 0
      %2571 = vmatprep.subr.bf16.mxu0 0
      %2572 = vmatpush1.bf16.msra.mxu0 0
      %2573 = vmatprep.subr.bf16.mxu0 0
      %2574 = vmatpush1.bf16.msra.mxu0 0
      %2575 = vmatprep.subr.bf16.mxu0 0
      %2576 = vmatpush1.bf16.msra.mxu0 0
      %2577 = vmatprep.subr.bf16.mxu0 0
      %2578 = vmatpush1.bf16.msra.mxu0 0
      %2579 = vmatprep.subr.bf16.mxu0 0
      %2580 = vmatpush1.bf16.msra.mxu0 0
      %2581 = vmatprep.subr.bf16.mxu0 0
      %2582 = vmatpush1.bf16.msra.mxu0 0
      %2583 = vmatprep.subr.bf16.mxu0 0
      %2584 = vmatpush1.bf16.msra.mxu0 0
      %2585 = vmatprep.subr.bf16.mxu0 0
      %2586 = vmatpush1.bf16.msra.mxu0 0
      %2587 = vmatprep.subr.bf16.mxu0 0
      %2588 = vmatpush1.bf16.msra.mxu0 0
      %2589 = vmatprep.mubr.bf16.mxu0 0
      %2590 = vmatmul.mubr.bf16.gmra.mrb[0].mxu0 %v2555
      %v2591 = vpop.f32.mrb[0].mxu0
      %v2592 = vadd.f32 0.0, %v2591
      %v2593 = vpop.f32.mrb[0].mxu0
      %v2594 = vpop.f32.mrb[0].mxu0
      %v2595 = vadd.f32 0.0, %v2594
      %v2596 = vpop.f32.mrb[0].mxu0
      %2597 = vdwg.mxu0
      %2598 = vrot.lane.b32.xlu0 %v793, 64
      %v2599 = vpop.permute.xlu0 %2598
      %v2602 = vsel %vm1665, %v2030, 0
      %2604 = vmatprep.subr.bf16.mxu0 0
      %2605 = vmatpush1.bf16.msra.mxu0 %v2599
      %2606 = vmatprep.subr.bf16.mxu0 0
      %2607 = vmatpush1.bf16.msra.mxu0 0
      %2608 = vmatprep.subr.bf16.mxu0 0
      %2609 = vmatpush1.bf16.msra.mxu0 0
      %2610 = vmatprep.subr.bf16.mxu0 0
      %2611 = vmatpush1.bf16.msra.mxu0 0
      %2612 = vmatprep.subr.bf16.mxu0 0
      %2613 = vmatpush1.bf16.msra.mxu0 0
      %2614 = vmatprep.subr.bf16.mxu0 0
      %2615 = vmatpush1.bf16.msra.mxu0 0
      %2616 = vmatprep.subr.bf16.mxu0 0
      %2617 = vmatpush1.bf16.msra.mxu0 0
      %2618 = vmatprep.subr.bf16.mxu0 0
      %2619 = vmatpush1.bf16.msra.mxu0 0
      %2620 = vmatprep.subr.bf16.mxu0 0
      %2621 = vmatpush1.bf16.msra.mxu0 0
      %2622 = vmatprep.subr.bf16.mxu0 0
      %2623 = vmatpush1.bf16.msra.mxu0 0
      %2624 = vmatprep.subr.bf16.mxu0 0
      %2625 = vmatpush1.bf16.msra.mxu0 0
      %2626 = vmatprep.subr.bf16.mxu0 0
      %2627 = vmatpush1.bf16.msra.mxu0 0
      %2628 = vmatprep.subr.bf16.mxu0 0
      %2629 = vmatpush1.bf16.msra.mxu0 0
      %2630 = vmatprep.subr.bf16.mxu0 0
      %2631 = vmatpush1.bf16.msra.mxu0 0
      %2632 = vmatprep.subr.bf16.mxu0 0
      %2633 = vmatpush1.bf16.msra.mxu0 0
      %2634 = vmatprep.subr.bf16.mxu0 0
      %2635 = vmatpush1.bf16.msra.mxu0 0
      %2636 = vmatprep.mubr.bf16.mxu0 0
      %2637 = vmatmul.mubr.bf16.gmra.mrb[0].mxu0 %v2602
      %v2638 = vpop.f32.mrb[0].mxu0
      %v2639 = vadd.f32 0.0, %v2638
      %v2640 = vpop.f32.mrb[0].mxu0
      %v2641 = vpop.f32.mrb[0].mxu0
      %v2642 = vadd.f32 0.0, %v2641
      %v2643 = vpop.f32.mrb[0].mxu0
      %2644 = vdwg.mxu0
      %2645 = vrot.lane.b32.xlu0 %v795, 64
      %v2646 = vpop.permute.xlu0 %2645
      %v2649 = vsel %vm1665, %v2031, 0
      %2651 = vmatprep.subr.bf16.mxu0 0
      %2652 = vmatpush1.bf16.msra.mxu0 %v2646
      %2653 = vmatprep.subr.bf16.mxu0 0
      %2654 = vmatpush1.bf16.msra.mxu0 0
      %2655 = vmatprep.subr.bf16.mxu0 0
      %2656 = vmatpush1.bf16.msra.mxu0 0
      %2657 = vmatprep.subr.bf16.mxu0 0
      %2658 = vmatpush1.bf16.msra.mxu0 0
      %2659 = vmatprep.subr.bf16.mxu0 0
      %2660 = vmatpush1.bf16.msra.mxu0 0
      %2661 = vmatprep.subr.bf16.mxu0 0
      %2662 = vmatpush1.bf16.msra.mxu0 0
      %2663 = vmatprep.subr.bf16.mxu0 0
      %2664 = vmatpush1.bf16.msra.mxu0 0
      %2665 = vmatprep.subr.bf16.mxu0 0
      %2666 = vmatpush1.bf16.msra.mxu0 0
      %2667 = vmatprep.subr.bf16.mxu0 0
      %2668 = vmatpush1.bf16.msra.mxu0 0
      %2669 = vmatprep.subr.bf16.mxu0 0
      %2670 = vmatpush1.bf16.msra.mxu0 0
      %2671 = vmatprep.subr.bf16.mxu0 0
      %2672 = vmatpush1.bf16.msra.mxu0 0
      %2673 = vmatprep.subr.bf16.mxu0 0
      %2674 = vmatpush1.bf16.msra.mxu0 0
      %2675 = vmatprep.subr.bf16.mxu0 0
      %2676 = vmatpush1.bf16.msra.mxu0 0
      %2677 = vmatprep.subr.bf16.mxu0 0
      %2678 = vmatpush1.bf16.msra.mxu0 0
      %2679 = vmatprep.subr.bf16.mxu0 0
      %2680 = vmatpush1.bf16.msra.mxu0 0
      %2681 = vmatprep.subr.bf16.mxu0 0
      %2682 = vmatpush1.bf16.msra.mxu0 0
      %2683 = vmatprep.mubr.bf16.mxu0 0
      %2684 = vmatmul.mubr.bf16.gmra.mrb[0].mxu0 %v2649
      %v2685 = vpop.f32.mrb[0].mxu0
      %v2686 = vadd.f32 0.0, %v2685
      %v2687 = vpop.f32.mrb[0].mxu0
      %v2688 = vpop.f32.mrb[0].mxu0
      %v2689 = vadd.f32 0.0, %v2688
      %v2690 = vpop.f32.mrb[0].mxu0
      %2691 = vdwg.mxu0
      %2692 = vrot.lane.b32.xlu0 %v797, 64
      %v2693 = vpop.permute.xlu0 %2692
      %v2696 = vsel %vm1665, %v2032, 0
      %2698 = vmatprep.subr.bf16.mxu0 0
      %2699 = vmatpush1.bf16.msra.mxu0 %v2693
      %2700 = vmatprep.subr.bf16.mxu0 0
      %2701 = vmatpush1.bf16.msra.mxu0 0
      %2702 = vmatprep.subr.bf16.mxu0 0
      %2703 = vmatpush1.bf16.msra.mxu0 0
      %2704 = vmatprep.subr.bf16.mxu0 0
      %2705 = vmatpush1.bf16.msra.mxu0 0
      %2706 = vmatprep.subr.bf16.mxu0 0
      %2707 = vmatpush1.bf16.msra.mxu0 0
      %2708 = vmatprep.subr.bf16.mxu0 0
      %2709 = vmatpush1.bf16.msra.mxu0 0
      %2710 = vmatprep.subr.bf16.mxu0 0
      %2711 = vmatpush1.bf16.msra.mxu0 0
      %2712 = vmatprep.subr.bf16.mxu0 0
      %2713 = vmatpush1.bf16.msra.mxu0 0
      %2714 = vmatprep.subr.bf16.mxu0 0
      %2715 = vmatpush1.bf16.msra.mxu0 0
      %2716 = vmatprep.subr.bf16.mxu0 0
      %2717 = vmatpush1.bf16.msra.mxu0 0
      %2718 = vmatprep.subr.bf16.mxu0 0
      %2719 = vmatpush1.bf16.msra.mxu0 0
      %2720 = vmatprep.subr.bf16.mxu0 0
      %2721 = vmatpush1.bf16.msra.mxu0 0
      %2722 = vmatprep.subr.bf16.mxu0 0
      %2723 = vmatpush1.bf16.msra.mxu0 0
      %2724 = vmatprep.subr.bf16.mxu0 0
      %2725 = vmatpush1.bf16.msra.mxu0 0
      %2726 = vmatprep.subr.bf16.mxu0 0
      %2727 = vmatpush1.bf16.msra.mxu0 0
      %2728 = vmatprep.subr.bf16.mxu0 0
      %2729 = vmatpush1.bf16.msra.mxu0 0
      %2730 = vmatprep.mubr.bf16.mxu0 0
      %2731 = vmatmul.mubr.bf16.gmra.mrb[0].mxu0 %v2696
      %v2732 = vpop.f32.mrb[0].mxu0
      %v2733 = vadd.f32 0.0, %v2732
      %v2734 = vpop.f32.mrb[0].mxu0
      %v2735 = vpop.f32.mrb[0].mxu0
      %v2736 = vadd.f32 0.0, %v2735
      %v2737 = vpop.f32.mrb[0].mxu0
      %2738 = vdwg.mxu0
      %2739 = vrot.lane.b32.xlu0 %v799, 64
      %v2740 = vpop.permute.xlu0 %2739
      %v2743 = vsel %vm1665, %v2033, 0
      %2745 = vmatprep.subr.bf16.mxu0 0
      %2746 = vmatpush1.bf16.msra.mxu0 %v2740
      %2747 = vmatprep.subr.bf16.mxu0 0
      %2748 = vmatpush1.bf16.msra.mxu0 0
      %2749 = vmatprep.subr.bf16.mxu0 0
      %2750 = vmatpush1.bf16.msra.mxu0 0
      %2751 = vmatprep.subr.bf16.mxu0 0
      %2752 = vmatpush1.bf16.msra.mxu0 0
      %2753 = vmatprep.subr.bf16.mxu0 0
      %2754 = vmatpush1.bf16.msra.mxu0 0
      %2755 = vmatprep.subr.bf16.mxu0 0
      %2756 = vmatpush1.bf16.msra.mxu0 0
      %2757 = vmatprep.subr.bf16.mxu0 0
      %2758 = vmatpush1.bf16.msra.mxu0 0
      %2759 = vmatprep.subr.bf16.mxu0 0
      %2760 = vmatpush1.bf16.msra.mxu0 0
      %2761 = vmatprep.subr.bf16.mxu0 0
      %2762 = vmatpush1.bf16.msra.mxu0 0
      %2763 = vmatprep.subr.bf16.mxu0 0
      %2764 = vmatpush1.bf16.msra.mxu0 0
      %2765 = vmatprep.subr.bf16.mxu0 0
      %2766 = vmatpush1.bf16.msra.mxu0 0
      %2767 = vmatprep.subr.bf16.mxu0 0
      %2768 = vmatpush1.bf16.msra.mxu0 0
      %2769 = vmatprep.subr.bf16.mxu0 0
      %2770 = vmatpush1.bf16.msra.mxu0 0
      %2771 = vmatprep.subr.bf16.mxu0 0
      %2772 = vmatpush1.bf16.msra.mxu0 0
      %2773 = vmatprep.subr.bf16.mxu0 0
      %2774 = vmatpush1.bf16.msra.mxu0 0
      %2775 = vmatprep.subr.bf16.mxu0 0
      %2776 = vmatpush1.bf16.msra.mxu0 0
      %2777 = vmatprep.mubr.bf16.mxu0 0
      %2778 = vmatmul.mubr.bf16.gmra.mrb[0].mxu0 %v2743
      %v2779 = vpop.f32.mrb[0].mxu0
      %v2780 = vadd.f32 0.0, %v2779
      %v2781 = vpop.f32.mrb[0].mxu0
      %v2782 = vpop.f32.mrb[0].mxu0
      %v2783 = vadd.f32 0.0, %v2782
      %v2784 = vpop.f32.mrb[0].mxu0
      %2785 = vdwg.mxu0
      %2794 = vrot.lane.b32.xlu0 %v2263, 8
      %v2795 = vpop.permute.xlu0 %2794
      %2796 = vrot.lane.b32.xlu0 %v2266, 8
      %v2797 = vpop.permute.xlu0 %2796
      %2798 = vrot.lane.b32.xlu0 %v2310, 8
      %v2799 = vpop.permute.xlu0 %2798
      %2800 = vrot.lane.b32.xlu0 %v2313, 8
      %v2801 = vpop.permute.xlu0 %2800
      %2802 = vrot.lane.b32.xlu0 %v2357, 8
      %v2803 = vpop.permute.xlu0 %2802
      %2804 = vrot.lane.b32.xlu0 %v2360, 8
      %v2805 = vpop.permute.xlu0 %2804
      %2806 = vrot.lane.b32.xlu0 %v2404, 8
      %v2807 = vpop.permute.xlu0 %2806
      %2808 = vrot.lane.b32.xlu0 %v2407, 8
      %v2809 = vpop.permute.xlu0 %2808
      %2826 = vrot.lane.b32.xlu0 %v2451, 16
      %v2827 = vpop.permute.xlu0 %2826
      %2828 = vrot.lane.b32.xlu0 %v2454, 16
      %v2829 = vpop.permute.xlu0 %2828
      %2830 = vrot.lane.b32.xlu0 %v2498, 16
      %v2831 = vpop.permute.xlu0 %2830
      %2832 = vrot.lane.b32.xlu0 %v2501, 16
      %v2833 = vpop.permute.xlu0 %2832
      %2834 = vrot.lane.b32.xlu0 %v2545, 16
      %v2835 = vpop.permute.xlu0 %2834
      %2836 = vrot.lane.b32.xlu0 %v2548, 16
      %v2837 = vpop.permute.xlu0 %2836
      %2838 = vrot.lane.b32.xlu0 %v2592, 16
      %v2839 = vpop.permute.xlu0 %2838
      %2840 = vrot.lane.b32.xlu0 %v2595, 16
      %v2841 = vpop.permute.xlu0 %2840
      %2858 = vrot.lane.b32.xlu0 %v2639, 24
      %v2859 = vpop.permute.xlu0 %2858
      %2860 = vrot.lane.b32.xlu0 %v2642, 24
      %v2861 = vpop.permute.xlu0 %2860
      %2862 = vrot.lane.b32.xlu0 %v2686, 24
      %v2863 = vpop.permute.xlu0 %2862
      %2864 = vrot.lane.b32.xlu0 %v2689, 24
      %v2865 = vpop.permute.xlu0 %2864
      %2866 = vrot.lane.b32.xlu0 %v2733, 24
      %v2867 = vpop.permute.xlu0 %2866
      %2868 = vrot.lane.b32.xlu0 %v2736, 24
      %v2869 = vpop.permute.xlu0 %2868
      %2870 = vrot.lane.b32.xlu0 %v2780, 24
      %v2871 = vpop.permute.xlu0 %2870
      %2872 = vrot.lane.b32.xlu0 %v2783, 24
      %v2873 = vpop.permute.xlu0 %2872
      %v2882 = vsel %vm802, %v2075, %v2795
      %v2883 = vsel %vm802, %v2078, %v2797
      %v2884 = vsel %vm802, %v2122, %v2799
      %v2885 = vsel %vm802, %v2125, %v2801
      %v2886 = vsel %vm802, %v2169, %v2803
      %v2887 = vsel %vm802, %v2172, %v2805
      %v2888 = vsel %vm802, %v2216, %v2807
      %v2889 = vsel %vm802, %v2219, %v2809
      %v2890 = vsel %vm1665, %v2882, %v2827
      %v2891 = vsel %vm1665, %v2883, %v2829
      %v2892 = vsel %vm1665, %v2884, %v2831
      %v2893 = vsel %vm1665, %v2885, %v2833
      %v2894 = vsel %vm1665, %v2886, %v2835
      %v2895 = vsel %vm1665, %v2887, %v2837
      %v2896 = vsel %vm1665, %v2888, %v2839
      %v2897 = vsel %vm1665, %v2889, %v2841
      %vm2898 = vcmask 195584
      %v2899 = vsel %vm2898, %v2890, %v2859
      %v2900 = vsel %vm2898, %v2891, %v2861
      %v2901 = vsel %vm2898, %v2892, %v2863
      %v2902 = vsel %vm2898, %v2893, %v2865
      %v2903 = vsel %vm2898, %v2894, %v2867
      %v2904 = vsel %vm2898, %v2895, %v2869
      %v2905 = vsel %vm2898, %v2896, %v2871
      %v2906 = vsel %vm2898, %v2897, %v2873
      %v2907 = vpack.c.bf16 %v2900, %v2899
      %v2908 = vpack.c.bf16 %v2902, %v2901
      %v2909 = vpack.c.bf16 %v2904, %v2903
      %v2910 = vpack.c.bf16 %v2906, %v2905
      %v2911 = vld [vmem:[%s7] sm:$0xf]
      %v2912 = vld [vmem:[%s7 + $0x4] sm:$0xf]
      %v2913 = vld [vmem:[%s7 + $0x8] sm:$0xf]
      %v2914 = vld [vmem:[%s7 + $0xc] sm:$0xf]
      %v2916 = vlaneseq
      %v2917 = vshrl.u32 %v2916, 7
      %v2918 = vsub.s32 0, %v2917
      %v2919 = vrot.slane %v528, %v2918
      %v2925 = vunpack.c.l.b16 %v2911
      %v2926 = vunpack.c.l.b16 %v2912
      %v2927 = vunpack.c.l.b16 %v2913
      %v2928 = vunpack.c.l.b16 %v2914
      %v2929 = vpack.c.b16 %v2926, %v2925
      %v2930 = vpack.c.b16 %v2928, %v2927
      %v2934 = vsel %vm531, %v2907, 0
      %v2937 = vsel %vm531, %v2908, 0
      %v2940 = vsel %vm531, %v2909, 0
      %v2943 = vsel %vm531, %v2910, 0
      %2945 = vmatprep.subr.bf16.mxu0 0
      %2946 = vmatpush1.bf16.msra.mxu0 %v2929
      %2947 = vmatprep.subr.bf16.mxu0 0
      %2948 = vmatpush1.bf16.msra.mxu0 %v2930
      %2949 = vmatprep.subr.bf16.mxu0 0
      %2950 = vmatpush1.bf16.msra.mxu0 0
      %2951 = vmatprep.subr.bf16.mxu0 0
      %2952 = vmatpush1.bf16.msra.mxu0 0
      %2953 = vmatprep.subr.bf16.mxu0 0
      %2954 = vmatpush1.bf16.msra.mxu0 0
      %2955 = vmatprep.subr.bf16.mxu0 0
      %2956 = vmatpush1.bf16.msra.mxu0 0
      %2957 = vmatprep.subr.bf16.mxu0 0
      %2958 = vmatpush1.bf16.msra.mxu0 0
      %2959 = vmatprep.subr.bf16.mxu0 0
      %2960 = vmatpush1.bf16.msra.mxu0 0
      %2961 = vmatprep.subr.bf16.mxu0 0
      %2962 = vmatpush1.bf16.msra.mxu0 0
      %2963 = vmatprep.subr.bf16.mxu0 0
      %2964 = vmatpush1.bf16.msra.mxu0 0
      %2965 = vmatprep.subr.bf16.mxu0 0
      %2966 = vmatpush1.bf16.msra.mxu0 0
      %2967 = vmatprep.subr.bf16.mxu0 0
      %2968 = vmatpush1.bf16.msra.mxu0 0
      %2969 = vmatprep.subr.bf16.mxu0 0
      %2970 = vmatpush1.bf16.msra.mxu0 0
      %2971 = vmatprep.subr.bf16.mxu0 0
      %2972 = vmatpush1.bf16.msra.mxu0 0
      %2973 = vmatprep.subr.bf16.mxu0 0
      %2974 = vmatpush1.bf16.msra.mxu0 0
      %2975 = vmatprep.subr.bf16.mxu0 0
      %2976 = vmatpush1.bf16.msra.mxu0 0
      %2977 = vmatprep.mubr.bf16.mxu0 0
      %2978 = vmatmul.mubr.bf16.gmra.mrb[0].mxu0 %v2934
      %v2979 = vpop.f32.mrb[0].mxu0
      %v2980 = vadd.f32 %v2919, %v2979
      %v2981 = vpop.f32.mrb[0].mxu0
      %v2982 = vpop.f32.mrb[0].mxu0
      %v2983 = vadd.f32 %v2919, %v2982
      %v2984 = vpop.f32.mrb[0].mxu0
      %2985 = vmatprep.mubr.bf16.mxu0 0
      %2986 = vmatmul.mubr.bf16.gmra.mrb[0].mxu0 %v2937
      %v2987 = vpop.f32.mrb[0].mxu0
      %v2988 = vadd.f32 %v2919, %v2987
      %v2989 = vpop.f32.mrb[0].mxu0
      %v2990 = vpop.f32.mrb[0].mxu0
      %v2991 = vadd.f32 %v2919, %v2990
      %v2992 = vpop.f32.mrb[0].mxu0
      %2993 = vmatprep.mubr.bf16.mxu0 0
      %2994 = vmatmul.mubr.bf16.gmra.mrb[0].mxu0 %v2940
      %v2995 = vpop.f32.mrb[0].mxu0
      %v2996 = vadd.f32 %v2919, %v2995
      %v2997 = vpop.f32.mrb[0].mxu0
      %v2998 = vpop.f32.mrb[0].mxu0
      %v2999 = vadd.f32 %v2919, %v2998
      %v3000 = vpop.f32.mrb[0].mxu0
      %3001 = vmatprep.mubr.bf16.mxu0 0
      %3002 = vmatmul.mubr.bf16.gmra.mrb[0].mxu0 %v2943
      %v3003 = vpop.f32.mrb[0].mxu0
      %v3004 = vadd.f32 %v2919, %v3003
      %v3005 = vpop.f32.mrb[0].mxu0
      %v3006 = vpop.f32.mrb[0].mxu0
      %v3007 = vadd.f32 %v2919, %v3006
      %v3008 = vpop.f32.mrb[0].mxu0
      %3009 = vdwg.mxu0
      %v3010 = vadd.f32 %v499, %v2980
      %v3011 = vadd.f32 %v500, %v2983
      %v3012 = vadd.f32 %v501, %v2988
      %v3013 = vadd.f32 %v502, %v2991
      %v3014 = vadd.f32 %v503, %v2996
      %v3015 = vadd.f32 %v504, %v2999
      %v3016 = vadd.f32 %v505, %v3004
      %v3017 = vadd.f32 %v506, %v3007
      %v3018 = vsel %vm531, %v3010, 0.0
      %3019 = vadd.xlane.f32.xlu0 %v3018
      %v3020 = vpop.xlane.xlu0 %3019
      %v3021 = vsel %vm531, %v3011, 0.0
      %3022 = vadd.xlane.f32.xlu0 %v3021
      %v3023 = vpop.xlane.xlu0 %3022
      %v3024 = vsel %vm531, %v3012, 0.0
      %3025 = vadd.xlane.f32.xlu0 %v3024
      %v3026 = vpop.xlane.xlu0 %3025
      %v3027 = vsel %vm531, %v3013, 0.0
      %3028 = vadd.xlane.f32.xlu0 %v3027
      %v3029 = vpop.xlane.xlu0 %3028
      %v3030 = vsel %vm531, %v3014, 0.0
      %3031 = vadd.xlane.f32.xlu0 %v3030
      %v3032 = vpop.xlane.xlu0 %3031
      %v3033 = vsel %vm531, %v3015, 0.0
      %3034 = vadd.xlane.f32.xlu0 %v3033
      %v3035 = vpop.xlane.xlu0 %3034
      %v3036 = vsel %vm531, %v3016, 0.0
      %3037 = vadd.xlane.f32.xlu0 %v3036
      %v3038 = vpop.xlane.xlu0 %3037
      %v3039 = vsel %vm531, %v3017, 0.0
      %3040 = vadd.xlane.f32.xlu0 %v3039
      %v3041 = vpop.xlane.xlu0 %3040
      %v3042 = vmul.f32 %v3020, %v556
      %v3043 = vmul.f32 %v3023, %v556
      %v3044 = vmul.f32 %v3026, %v556
      %v3045 = vmul.f32 %v3029, %v556
      %v3046 = vmul.f32 %v3032, %v556
      %v3047 = vmul.f32 %v3035, %v556
      %v3048 = vmul.f32 %v3038, %v556
      %v3049 = vmul.f32 %v3041, %v556
      %v3050 = vsub.f32 %v3010, %v3042
      %v3051 = vsub.f32 %v3011, %v3043
      %v3052 = vsub.f32 %v3012, %v3044
      %v3053 = vsub.f32 %v3013, %v3045
      %v3054 = vsub.f32 %v3014, %v3046
      %v3055 = vsub.f32 %v3015, %v3047
      %v3056 = vsub.f32 %v3016, %v3048
      %v3057 = vsub.f32 %v3017, %v3049
      %v3058 = vmul.f32 %v3050, %v3050
      %v3059 = vmul.f32 %v3051, %v3051
      %v3060 = vmul.f32 %v3052, %v3052
      %v3061 = vmul.f32 %v3053, %v3053
      %v3062 = vmul.f32 %v3054, %v3054
      %v3063 = vmul.f32 %v3055, %v3055
      %v3064 = vmul.f32 %v3056, %v3056
      %v3065 = vmul.f32 %v3057, %v3057
      %v3066 = vsel %vm531, %v3058, 0.0
      %3067 = vadd.xlane.f32.xlu0 %v3066
      %v3068 = vpop.xlane.xlu0 %3067
      %v3069 = vsel %vm531, %v3059, 0.0
      %3070 = vadd.xlane.f32.xlu0 %v3069
      %v3071 = vpop.xlane.xlu0 %3070
      %v3072 = vsel %vm531, %v3060, 0.0
      %3073 = vadd.xlane.f32.xlu0 %v3072
      %v3074 = vpop.xlane.xlu0 %3073
      %v3075 = vsel %vm531, %v3061, 0.0
      %3076 = vadd.xlane.f32.xlu0 %v3075
      %v3077 = vpop.xlane.xlu0 %3076
      %v3078 = vsel %vm531, %v3062, 0.0
      %3079 = vadd.xlane.f32.xlu0 %v3078
      %v3080 = vpop.xlane.xlu0 %3079
      %v3081 = vsel %vm531, %v3063, 0.0
      %3082 = vadd.xlane.f32.xlu0 %v3081
      %v3083 = vpop.xlane.xlu0 %3082
      %v3084 = vsel %vm531, %v3064, 0.0
      %3085 = vadd.xlane.f32.xlu0 %v3084
      %v3086 = vpop.xlane.xlu0 %3085
      %v3087 = vsel %vm531, %v3065, 0.0
      %3088 = vadd.xlane.f32.xlu0 %v3087
      %v3089 = vpop.xlane.xlu0 %3088
      %v3090 = vmul.f32 %v3068, %v556
      %v3091 = vmul.f32 %v3071, %v556
      %v3092 = vmul.f32 %v3074, %v556
      %v3093 = vmul.f32 %v3077, %v556
      %v3094 = vmul.f32 %v3080, %v556
      %v3095 = vmul.f32 %v3083, %v556
      %v3096 = vmul.f32 %v3086, %v556
      %v3097 = vmul.f32 %v3089, %v556
      %v3098 = vadd.f32 %v3090, 1e-05
      %v3099 = vadd.f32 %v3091, 1e-05
      %v3100 = vadd.f32 %v3092, 1e-05
      %v3101 = vadd.f32 %v3093, 1e-05
      %v3102 = vadd.f32 %v3094, 1e-05
      %v3103 = vadd.f32 %v3095, 1e-05
      %v3104 = vadd.f32 %v3096, 1e-05
      %v3105 = vadd.f32 %v3097, 1e-05
      %v3106 = vrsqrt.pop %v3098
      %v3107 = vrsqrt.pop %v3099
      %v3108 = vrsqrt.pop %v3100
      %v3109 = vrsqrt.pop %v3101
      %v3110 = vrsqrt.pop %v3102
      %v3111 = vrsqrt.pop %v3103
      %v3112 = vrsqrt.pop %v3104
      %v3113 = vrsqrt.pop %v3105
      %v3114 = vmul.f32 %v3050, %v3106
      %v3115 = vmul.f32 %v3051, %v3107
      %v3116 = vmul.f32 %v3052, %v3108
      %v3117 = vmul.f32 %v3053, %v3109
      %v3118 = vmul.f32 %v3054, %v3110
      %v3119 = vmul.f32 %v3055, %v3111
      %v3120 = vmul.f32 %v3056, %v3112
      %v3121 = vmul.f32 %v3057, %v3113
      %v3123 = vlaneseq
      %v3124 = vshrl.u32 %v3123, 7
      %v3125 = vsub.s32 0, %v3124
      %v3126 = vrot.slane %v525, %v3125
      %v3128 = vmul.f32 %v3114, %v3126
      %v3129 = vmul.f32 %v3115, %v3126
      %v3130 = vmul.f32 %v3116, %v3126
      %v3131 = vmul.f32 %v3117, %v3126
      %v3132 = vmul.f32 %v3118, %v3126
      %v3133 = vmul.f32 %v3119, %v3126
      %v3134 = vmul.f32 %v3120, %v3126
      %v3135 = vmul.f32 %v3121, %v3126
      %v3137 = vlaneseq
      %v3138 = vshrl.u32 %v3137, 7
      %v3139 = vsub.s32 0, %v3138
      %v3140 = vrot.slane %v526, %v3139
      %v3142 = vadd.f32 %v3128, %v3140
      %v3143 = vadd.f32 %v3129, %v3140
      %v3144 = vadd.f32 %v3130, %v3140
      %v3145 = vadd.f32 %v3131, %v3140
      %v3146 = vadd.f32 %v3132, %v3140
      %v3147 = vadd.f32 %v3133, %v3140
      %v3148 = vadd.f32 %v3134, %v3140
      %v3149 = vadd.f32 %v3135, %v3140
      %v3150 = vpack.c.bf16 %v3143, %v3142
      %v3151 = vpack.c.bf16 %v3145, %v3144
      %v3152 = vpack.c.bf16 %v3147, %v3146
      %v3153 = vpack.c.bf16 %v3149, %v3148
      %v3154 = vld [vmem:[%s11] sm:$0xf]
      %v3155 = vld [vmem:[%s11 + $0x4] sm:$0xf]
      %v3156 = vld [vmem:[%s11 + $0x8] sm:$0xf]
      %v3157 = vld [vmem:[%s11 + $0xc] sm:$0xf]
      %v3159 = vlaneseq
      %v3160 = vshrl.u32 %v3159, 7
      %v3161 = vsub.s32 0, %v3160
      %v3162 = vrot.slane %v529, %v3161
      %v3168 = vunpack.c.l.b16 %v3154
      %v3169 = vunpack.c.l.b16 %v3155
      %v3170 = vunpack.c.l.b16 %v3156
      %v3171 = vunpack.c.l.b16 %v3157
      %v3172 = vpack.c.b16 %v3169, %v3168
      %v3173 = vpack.c.b16 %v3171, %v3170
      %v3177 = vsel %vm531, %v3150, 0
      %v3180 = vsel %vm531, %v3151, 0
      %v3183 = vsel %vm531, %v3152, 0
      %v3186 = vsel %vm531, %v3153, 0
      %3188 = vmatprep.subr.bf16.mxu0 0
      %3189 = vmatpush1.bf16.msra.mxu0 %v3172
      %3190 = vmatprep.subr.bf16.mxu0 0
      %3191 = vmatpush1.bf16.msra.mxu0 %v3173
      %3192 = vmatprep.subr.bf16.mxu0 0
      %3193 = vmatpush1.bf16.msra.mxu0 0
      %3194 = vmatprep.subr.bf16.mxu0 0
      %3195 = vmatpush1.bf16.msra.mxu0 0
      %3196 = vmatprep.subr.bf16.mxu0 0
      %3197 = vmatpush1.bf16.msra.mxu0 0
      %3198 = vmatprep.subr.bf16.mxu0 0
      %3199 = vmatpush1.bf16.msra.mxu0 0
      %3200 = vmatprep.subr.bf16.mxu0 0
      %3201 = vmatpush1.bf16.msra.mxu0 0
      %3202 = vmatprep.subr.bf16.mxu0 0
      %3203 = vmatpush1.bf16.msra.mxu0 0
      %3204 = vmatprep.subr.bf16.mxu0 0
      %3205 = vmatpush1.bf16.msra.mxu0 0
      %3206 = vmatprep.subr.bf16.mxu0 0
      %3207 = vmatpush1.bf16.msra.mxu0 0
      %3208 = vmatprep.subr.bf16.mxu0 0
      %3209 = vmatpush1.bf16.msra.mxu0 0
      %3210 = vmatprep.subr.bf16.mxu0 0
      %3211 = vmatpush1.bf16.msra.mxu0 0
      %3212 = vmatprep.subr.bf16.mxu0 0
      %3213 = vmatpush1.bf16.msra.mxu0 0
      %3214 = vmatprep.subr.bf16.mxu0 0
      %3215 = vmatpush1.bf16.msra.mxu0 0
      %3216 = vmatprep.subr.bf16.mxu0 0
      %3217 = vmatpush1.bf16.msra.mxu0 0
      %3218 = vmatprep.subr.bf16.mxu0 0
      %3219 = vmatpush1.bf16.msra.mxu0 0
      %3220 = vmatprep.mubr.bf16.mxu0 0
      %3221 = vmatmul.mubr.bf16.gmra.mrb[0].mxu0 %v3177
      %v3222 = vpop.f32.mrb[0].mxu0
      %v3223 = vadd.f32 %v3162, %v3222
      %v3224 = vpop.f32.mrb[0].mxu0
      %v3225 = vpop.f32.mrb[0].mxu0
      %v3226 = vadd.f32 %v3162, %v3225
      %v3227 = vpop.f32.mrb[0].mxu0
      %3228 = vmatprep.mubr.bf16.mxu0 0
      %3229 = vmatmul.mubr.bf16.gmra.mrb[0].mxu0 %v3180
      %v3230 = vpop.f32.mrb[0].mxu0
      %v3231 = vadd.f32 %v3162, %v3230
      %v3232 = vpop.f32.mrb[0].mxu0
      %v3233 = vpop.f32.mrb[0].mxu0
      %v3234 = vadd.f32 %v3162, %v3233
      %v3235 = vpop.f32.mrb[0].mxu0
      %3236 = vmatprep.mubr.bf16.mxu0 0
      %3237 = vmatmul.mubr.bf16.gmra.mrb[0].mxu0 %v3183
      %v3238 = vpop.f32.mrb[0].mxu0
      %v3239 = vadd.f32 %v3162, %v3238
      %v3240 = vpop.f32.mrb[0].mxu0
      %v3241 = vpop.f32.mrb[0].mxu0
      %v3242 = vadd.f32 %v3162, %v3241
      %v3243 = vpop.f32.mrb[0].mxu0
      %3244 = vmatprep.mubr.bf16.mxu0 0
      %3245 = vmatmul.mubr.bf16.gmra.mrb[0].mxu0 %v3186
      %v3246 = vpop.f32.mrb[0].mxu0
      %v3247 = vadd.f32 %v3162, %v3246
      %v3248 = vpop.f32.mrb[0].mxu0
      %v3249 = vpop.f32.mrb[0].mxu0
      %v3250 = vadd.f32 %v3162, %v3249
      %v3251 = vpop.f32.mrb[0].mxu0
      %3252 = vdwg.mxu0
      %v3253 = vmul.f32 %v3223, 0.5
      %v3254 = vmul.f32 %v3226, 0.5
      %v3255 = vmul.f32 %v3231, 0.5
      %v3256 = vmul.f32 %v3234, 0.5
      %v3257 = vmul.f32 %v3239, 0.5
      %v3258 = vmul.f32 %v3242, 0.5
      %v3259 = vmul.f32 %v3247, 0.5
      %v3260 = vmul.f32 %v3250, 0.5
      %v3261 = vmul.f32 %v3223, 0.044715
      %v3262 = vmul.f32 %v3226, 0.044715
      %v3263 = vmul.f32 %v3231, 0.044715
      %v3264 = vmul.f32 %v3234, 0.044715
      %v3265 = vmul.f32 %v3239, 0.044715
      %v3266 = vmul.f32 %v3242, 0.044715
      %v3267 = vmul.f32 %v3247, 0.044715
      %v3268 = vmul.f32 %v3250, 0.044715
      %v3269 = vmul.f32 %v3261, %v3223
      %v3270 = vmul.f32 %v3262, %v3226
      %v3271 = vmul.f32 %v3263, %v3231
      %v3272 = vmul.f32 %v3264, %v3234
      %v3273 = vmul.f32 %v3265, %v3239
      %v3274 = vmul.f32 %v3266, %v3242
      %v3275 = vmul.f32 %v3267, %v3247
      %v3276 = vmul.f32 %v3268, %v3250
      %v3277 = vmul.f32 %v3269, %v3223
      %v3278 = vmul.f32 %v3270, %v3226
      %v3279 = vmul.f32 %v3271, %v3231
      %v3280 = vmul.f32 %v3272, %v3234
      %v3281 = vmul.f32 %v3273, %v3239
      %v3282 = vmul.f32 %v3274, %v3242
      %v3283 = vmul.f32 %v3275, %v3247
      %v3284 = vmul.f32 %v3276, %v3250
      %v3285 = vadd.f32 %v3223, %v3277
      %v3286 = vadd.f32 %v3226, %v3278
      %v3287 = vadd.f32 %v3231, %v3279
      %v3288 = vadd.f32 %v3234, %v3280
      %v3289 = vadd.f32 %v3239, %v3281
      %v3290 = vadd.f32 %v3242, %v3282
      %v3291 = vadd.f32 %v3247, %v3283
      %v3292 = vadd.f32 %v3250, %v3284
      %v3293 = vmul.f32 %v3285, 0.7978846
      %v3294 = vmul.f32 %v3286, 0.7978846
      %v3295 = vmul.f32 %v3287, 0.7978846
      %v3296 = vmul.f32 %v3288, 0.7978846
      %v3297 = vmul.f32 %v3289, 0.7978846
      %v3298 = vmul.f32 %v3290, 0.7978846
      %v3299 = vmul.f32 %v3291, 0.7978846
      %v3300 = vmul.f32 %v3292, 0.7978846
      %v3301 = vtanh.pop %v3293
      %v3302 = vtanh.pop %v3294
      %v3303 = vtanh.pop %v3295
      %v3304 = vtanh.pop %v3296
      %v3305 = vtanh.pop %v3297
      %v3306 = vtanh.pop %v3298
      %v3307 = vtanh.pop %v3299
      %v3308 = vtanh.pop %v3300
      %v3309 = vadd.f32 %v3301, 1.0
      %v3310 = vadd.f32 %v3302, 1.0
      %v3311 = vadd.f32 %v3303, 1.0
      %v3312 = vadd.f32 %v3304, 1.0
      %v3313 = vadd.f32 %v3305, 1.0
      %v3314 = vadd.f32 %v3306, 1.0
      %v3315 = vadd.f32 %v3307, 1.0
      %v3316 = vadd.f32 %v3308, 1.0
      %v3317 = vmul.f32 %v3253, %v3309
      %v3318 = vmul.f32 %v3254, %v3310
      %v3319 = vmul.f32 %v3255, %v3311
      %v3320 = vmul.f32 %v3256, %v3312
      %v3321 = vmul.f32 %v3257, %v3313
      %v3322 = vmul.f32 %v3258, %v3314
      %v3323 = vmul.f32 %v3259, %v3315
      %v3324 = vmul.f32 %v3260, %v3316
      %v3325 = vpack.c.bf16 %v3318, %v3317
      %v3326 = vpack.c.bf16 %v3320, %v3319
      %v3327 = vpack.c.bf16 %v3322, %v3321
      %v3328 = vpack.c.bf16 %v3324, %v3323
      %v3329 = vld [vmem:[%s13] sm:$0xf]
      %v3330 = vld [vmem:[%s13 + $0x4] sm:$0xf]
      %v3331 = vld [vmem:[%s13 + $0x8] sm:$0xf]
      %v3332 = vld [vmem:[%s13 + $0xc] sm:$0xf]
      %v3333 = vld [vmem:[%s13 + $0x10] sm:$0xf]
      %v3334 = vld [vmem:[%s13 + $0x14] sm:$0xf]
      %v3335 = vld [vmem:[%s13 + $0x18] sm:$0xf]
      %v3336 = vld [vmem:[%s13 + $0x1c] sm:$0xf]
      %v3338 = vlaneseq
      %v3339 = vshrl.u32 %v3338, 7
      %v3340 = vsub.s32 0, %v3339
      %v3341 = vrot.slane %v530, %v3340
      %v3351 = vunpack.c.l.b16 %v3329
      %v3352 = vunpack.c.l.b16 %v3330
      %v3353 = vunpack.c.l.b16 %v3331
      %v3354 = vunpack.c.l.b16 %v3332
      %v3355 = vunpack.c.l.b16 %v3333
      %v3356 = vunpack.c.l.b16 %v3334
      %v3357 = vunpack.c.l.b16 %v3335
      %v3358 = vunpack.c.l.b16 %v3336
      %v3359 = vpack.c.b16 %v3352, %v3351
      %v3360 = vpack.c.b16 %v3354, %v3353
      %v3361 = vpack.c.b16 %v3356, %v3355
      %v3362 = vpack.c.b16 %v3358, %v3357
      %vm3367 = vcmask 523264
      %v3369 = vsel %vm3367, %v3325, 0
      %v3372 = vsel %vm3367, %v3326, 0
      %v3375 = vsel %vm3367, %v3327, 0
      %v3378 = vsel %vm3367, %v3328, 0
      %3380 = vmatprep.subr.bf16.mxu0 0
      %3381 = vmatpush1.bf16.msra.mxu0 %v3359
      %3382 = vmatprep.subr.bf16.mxu0 0
      %3383 = vmatpush1.bf16.msra.mxu0 %v3360
      %3384 = vmatprep.subr.bf16.mxu0 0
      %3385 = vmatpush1.bf16.msra.mxu0 %v3361
      %3386 = vmatprep.subr.bf16.mxu0 0
      %3387 = vmatpush1.bf16.msra.mxu0 %v3362
      %3388 = vmatprep.subr.bf16.mxu0 0
      %3389 = vmatpush1.bf16.msra.mxu0 0
      %3390 = vmatprep.subr.bf16.mxu0 0
      %3391 = vmatpush1.bf16.msra.mxu0 0
      %3392 = vmatprep.subr.bf16.mxu0 0
      %3393 = vmatpush1.bf16.msra.mxu0 0
      %3394 = vmatprep.subr.bf16.mxu0 0
      %3395 = vmatpush1.bf16.msra.mxu0 0
      %3396 = vmatprep.subr.bf16.mxu0 0
      %3397 = vmatpush1.bf16.msra.mxu0 0
      %3398 = vmatprep.subr.bf16.mxu0 0
      %3399 = vmatpush1.bf16.msra.mxu0 0
      %3400 = vmatprep.subr.bf16.mxu0 0
      %3401 = vmatpush1.bf16.msra.mxu0 0
      %3402 = vmatprep.subr.bf16.mxu0 0
      %3403 = vmatpush1.bf16.msra.mxu0 0
      %3404 = vmatprep.subr.bf16.mxu0 0
      %3405 = vmatpush1.bf16.msra.mxu0 0
      %3406 = vmatprep.subr.bf16.mxu0 0
      %3407 = vmatpush1.bf16.msra.mxu0 0
      %3408 = vmatprep.subr.bf16.mxu0 0
      %3409 = vmatpush1.bf16.msra.mxu0 0
      %3410 = vmatprep.subr.bf16.mxu0 0
      %3411 = vmatpush1.bf16.msra.mxu0 0
      %3412 = vmatprep.mubr.bf16.mxu0 0
      %3413 = vmatmul.mubr.bf16.gmra.mrb[0].mxu0 %v3369
      %v3414 = vpop.f32.mrb[0].mxu0
      %v3415 = vadd.f32 %v3341, %v3414
      %v3416 = vpop.f32.mrb[0].mxu0
      %v3417 = vpop.f32.mrb[0].mxu0
      %v3418 = vadd.f32 %v3341, %v3417
      %v3419 = vpop.f32.mrb[0].mxu0
      %3420 = vmatprep.mubr.bf16.mxu0 0
      %3421 = vmatmul.mubr.bf16.gmra.mrb[0].mxu0 %v3372
      %v3422 = vpop.f32.mrb[0].mxu0
      %v3423 = vadd.f32 %v3341, %v3422
      %v3424 = vpop.f32.mrb[0].mxu0
      %v3425 = vpop.f32.mrb[0].mxu0
      %v3426 = vadd.f32 %v3341, %v3425
      %v3427 = vpop.f32.mrb[0].mxu0
      %3428 = vmatprep.mubr.bf16.mxu0 0
      %3429 = vmatmul.mubr.bf16.gmra.mrb[0].mxu0 %v3375
      %v3430 = vpop.f32.mrb[0].mxu0
      %v3431 = vadd.f32 %v3341, %v3430
      %v3432 = vpop.f32.mrb[0].mxu0
      %v3433 = vpop.f32.mrb[0].mxu0
      %v3434 = vadd.f32 %v3341, %v3433
      %v3435 = vpop.f32.mrb[0].mxu0
      %3436 = vmatprep.mubr.bf16.mxu0 0
      %3437 = vmatmul.mubr.bf16.gmra.mrb[0].mxu0 %v3378
      %v3438 = vpop.f32.mrb[0].mxu0
      %v3439 = vadd.f32 %v3341, %v3438
      %v3440 = vpop.f32.mrb[0].mxu0
      %v3441 = vpop.f32.mrb[0].mxu0
      %v3442 = vadd.f32 %v3341, %v3441
      %v3443 = vpop.f32.mrb[0].mxu0
      %3444 = vdwg.mxu0
      %v3445 = vadd.f32 %v3010, %v3415
      %v3446 = vadd.f32 %v3011, %v3418
      %v3447 = vadd.f32 %v3012, %v3423
      %v3448 = vadd.f32 %v3013, %v3426
      %v3449 = vadd.f32 %v3014, %v3431
      %v3450 = vadd.f32 %v3015, %v3434
      %v3451 = vadd.f32 %v3016, %v3439
      %v3452 = vadd.f32 %v3017, %v3442
      %3453 = vst.msk [vmem:[%s496] sm:$0xff] %vm531, %v3445
      %3454 = vst.msk [vmem:[%s496 + $0x8] sm:$0xff] %vm531, %v3446
      %3455 = vst.msk [vmem:[%s496 + $0x10] sm:$0xff] %vm531, %v3447
      %3456 = vst.msk [vmem:[%s496 + $0x18] sm:$0xff] %vm531, %v3448
      %3457 = vst.msk [vmem:[%s496 + $0x20] sm:$0xff] %vm531, %v3449
      %3458 = vst.msk [vmem:[%s496 + $0x28] sm:$0xff] %vm531, %v3450
      %3459 = vst.msk [vmem:[%s496 + $0x30] sm:$0xff] %vm531, %v3451
      %3460 = vst.msk [vmem:[%s496 + $0x38] sm:$0xff] %vm531, %v3452
      %s3461 = smul.u32 8, %s26
      %p3462 = scmp.lt.s32.totalorder %s3461, 15
      %s3463 = scalar_select %p3462, %s3461, 15
      %s3464 = smul.addr %s3463, 8
      %s3465 = scalar_lea.vmem %s15, %s3464
      // Predicated region
      $region81: #{_lambda_.3} parent=79 // pred_check
        %p3466 = pneg %p364
      $region82: #{_lambda_.3} parent=79 // pred_check_branch
        %3468 = sbr.rel (%p3466) target = $region84
      $region83: #{_lambda_.3} parent=79 // pred_region
        %s3469 = smul.u32 8, %s26
      $region84: #{_lambda_.3} parent=79 // pred_fallthru
        _
    $region80: #{_lambda_.3} parent=5 // pred_fallthru
      _
    %p3470 = scmp.le.s32.totalorder 2, %s21
    // Predicated region
    $region85: #{_lambda_.3} parent=5 // pred_check
      %p3471 = pneg %p3470
    $region86: #{_lambda_.3} parent=5 // pred_check_branch
      %3473 = sbr.rel (%p3471) target = $region88
    $region87: #{_lambda_.3} parent=5 // pred_region
      %s3474 = ssub.s32 %s21, 2
      // Predicated region
      $region89: #{_lambda_.3} parent=87 // pred_check
        %p3475 = pneg %p370
      $region90: #{_lambda_.3} parent=87 // pred_check_branch
        %3477 = sbr.rel (%p3475) target = $region92
      $region91: #{_lambda_.3} parent=87 // pred_region
        %s3478 = smul.u32 8, %s27
        %p3479 = scmp.lt.s32.totalorder %s3478, 15
        %s3480 = scalar_select %p3479, %s3478, 15
        %s3481 = smul.addr %s3480, 8
        %s3482 = scalar_lea.vmem %s15, %s3481
      $region92: #{_lambda_.3} parent=87 // pred_fallthru
        _
    $region88: #{_lambda_.3} parent=5 // pred_fallthru
      _
  $region6: #{_lambda_.3} parent=0 // loop_footer
    %s25 = sadd.s32 1, %s21
  $region7: #{_lambda_.3} parent=0 // loop_footer_branch
    %20 = sbr.rel target = $region3
  $region8: #{_lambda_.3} parent=0 // loop_exit
    _

</llo_original>
